<compile_context>
chip_gen: v6e
topology: v6e:2x2x1
jax: 0.10.0
libtpu: 0.0.40
codegen_flags: <defaults>
</compile_context>

<pallas_src>
import jax
import jax.numpy as jnp
from jax import lax
from jax.experimental import pallas as pl
from jax.experimental.pallas import tpu as pltpu

# SELU constants (match torch.nn.functional.selu)
_SELU_ALPHA = 1.6732632423543772
_SELU_SCALE = 1.0507009873554805

IN_F = 32
H1_F = 6144
H2_F = 256
NB_OUT = 32

TK = 2048       # in-kernel chunk of the shared 6144 dim (3 chunks)
TB_MAX = 512    # max batch tile; keeps per-tile VMEM well under 64 MiB (v7x)


def _selu(x):
    # Clamp exp argument so the masked negative branch never overflows.
    neg = _SELU_ALPHA * (jnp.exp(jnp.minimum(x, 0.0)) - 1.0)
    return _SELU_SCALE * jnp.where(x > 0, x, neg)


def _mlp_kernel(x_ref, w1_ref, b1_ref, w2_ref, b2_ref, w3_ref, b3_ref, o_ref):
    x_bf = x_ref[...]                     # (tb, 32) bf16
    tb = x_ref.shape[0]
    nk = H1_F // TK

    def body(k, acc):
        off = pl.multiple_of(k * TK, TK)
        # Layer 1 chunk: (tb, 32) @ (32, TK) + b1_chunk -> SELU   (f32 math)
        h1 = jnp.dot(x_bf, w1_ref[:, pl.ds(off, TK)],
                     preferred_element_type=jnp.float32)
        h1 = _selu(h1 + b1_ref[:, pl.ds(off, TK)])
        # dropout(p=0.25, training=False) -> identity
        # Layer 2 partial: (tb, TK) @ (TK, 256) accumulated in f32.
        return acc + jnp.dot(h1.astype(jnp.bfloat16), w2_ref[pl.ds(off, TK), :],
                             preferred_element_type=jnp.float32)

    acc = lax.fori_loop(0, nk, body, jnp.zeros((tb, H2_F), jnp.float32),
                        unroll=True)

    h2 = _selu(acc + b2_ref[...])
    # dropout(p=0.25, training=False) -> identity
    out = jnp.dot(h2.astype(jnp.bfloat16), w3_ref[...],
                  preferred_element_type=jnp.float32) + b3_ref[...]
    o_ref[...] = out.astype(o_ref.dtype)


def _round_up(a, m):
    return ((a + m - 1) // m) * m


def _choose_batch_tiling(B):
    """Balanced batch tiles; >=2 tiles when B>=16 so v7x megacore gets work."""
    nb = max(-(-B // TB_MAX), 2 if B >= 16 else 1)
    tb = _round_up(-(-B // nb), 8)        # multiple of 8 sublanes
    nb = -(-B // tb)                      # re-derive after rounding up
    return tb, nb, tb * nb


def mydensenet_dens_forward(x, params):
    """x: (B, 32) float32. params: dict of bf16 weights (in,out) + f32 biases."""
    B = x.shape[0]
    w1, b1 = params["w1"], params["b1"]
    w2, b2 = params["w2"], params["b2"]
    w3, b3 = params["w3"], params["b3"]

    tb, nb, b_pad = _choose_batch_tiling(B)

    x_bf = x.astype(jnp.bfloat16)
    if b_pad != B:
        x_bf = jnp.pad(x_bf, ((0, b_pad - B), (0, 0)))

    flops = 2 * b_pad * (IN_F * H1_F + H1_F * H2_F + H2_F * NB_OUT)
    transcendentals = b_pad * (H1_F + H2_F)
    bytes_accessed = (b_pad * IN_F * 2 + b_pad * NB_OUT * 4   # x in, out
                      + w1.size * 2 + w2.size * 2 + w3.size * 2
                      + b1.size * 4 + b2.size * 4 + b3.size * 4)

    out = pl.pallas_call(
        _mlp_kernel,
        out_shape=jax.ShapeDtypeStruct((b_pad, NB_OUT), jnp.float32),
        grid_spec=pltpu.PrefetchScalarGridSpec(
            num_scalar_prefetch=0,
            grid=(nb,),
            in_specs=[
                pl.BlockSpec((tb, IN_F),     lambda i: (i, 0)),  # x tile
                pl.BlockSpec((IN_F, H1_F),   lambda i: (0, 0)),  # w1 (resident)
                pl.BlockSpec((1, H1_F),      lambda i: (0, 0)),  # b1 (resident)
                pl.BlockSpec((H1_F, H2_F),   lambda i: (0, 0)),  # w2 (resident)
                pl.BlockSpec((1, H2_F),      lambda i: (0, 0)),  # b2 (resident)
                pl.BlockSpec((H2_F, NB_OUT), lambda i: (0, 0)),  # w3 (resident)
                pl.BlockSpec((1, NB_OUT),    lambda i: (0, 0)),  # b3 (resident)
            ],
            out_specs=pl.BlockSpec((tb, NB_OUT), lambda i: (i, 0)),
        ),
        compiler_params=pltpu.CompilerParams(
            dimension_semantics=("parallel",),
            vmem_limit_bytes=40 << 20,
        ),
        cost_estimate=pl.CostEstimate(
            flops=flops,
            transcendentals=transcendentals,
            bytes_accessed=bytes_accessed,
        ),
    )(x_bf, w1, b1, w2, b2, w3, b3)

    return out[:B] if b_pad != B else out


def init_params(key):
    """Mirror torch.nn.Linear default init (uniform +-1/sqrt(fan_in)).
    Weights stored transposed (in_features, out_features) as bf16; biases f32."""
    ks = jax.random.split(key, 6)

    def lin(kw, kb, fan_in, fan_out):
        bound = 1.0 / jnp.sqrt(fan_in)
        w = jax.random.uniform(kw, (fan_in, fan_out), jnp.float32, -bound, bound)
        b = jax.random.uniform(kb, (1, fan_out), jnp.float32, -bound, bound)
        return w.astype(jnp.bfloat16), b

    w1, b1 = lin(ks[0], ks[1], IN_F, H1_F)
    w2, b2 = lin(ks[2], ks[3], H1_F, H2_F)
    w3, b3 = lin(ks[4], ks[5], H2_F, NB_OUT)
    return {"w1": w1, "b1": b1, "w2": w2, "b2": b2, "w3": w3, "b3": b3}


def _reference(x, p):
    """Pure-JAX reference mirroring the kernel's bf16-weight / f32-acc math."""
    xb = x.astype(jnp.bfloat16)
    h1 = _selu(jnp.dot(xb, p["w1"], preferred_element_type=jnp.float32) + p["b1"])
    h2 = _selu(jnp.dot(h1.astype(jnp.bfloat16), p["w2"],
                       preferred_element_type=jnp.float32) + p["b2"])
    return jnp.dot(h2.astype(jnp.bfloat16), p["w3"],
                   preferred_element_type=jnp.float32) + p["b3"]


if __name__ == "__main__":
    key = jax.random.PRNGKey(0)
    kx, kp = jax.random.split(key)

    # B=20 exercises both the multi-tile path (nb=2) and batch padding.
    B = 20
    x = jax.random.normal(kx, (B, IN_F), jnp.float32)
    params = init_params(kp)

    out = mydensenet_dens_forward(x, params)
    out = jax.block_until_ready(out)

    ref = _reference(x, params)
    assert out.shape == (B, NB_OUT)
    assert jnp.allclose(out, ref, atol=1e-2, rtol=1e-2), "mismatch vs JAX reference"

    print("KERNEL_OK")
</pallas_src>

<mosaic_0001>
module attributes {stable_mosaic.version = 11 : i64} {
  func.func @_mlp_kernel(%arg0: i32, %arg1: memref<16x32xbf16, #tpu.memory_space<vmem>>, %arg2: memref<32x6144xbf16, #tpu.memory_space<vmem>>, %arg3: memref<1x6144xf32, #tpu.memory_space<vmem>>, %arg4: memref<6144x256xbf16, #tpu.memory_space<vmem>>, %arg5: memref<1x256xf32, #tpu.memory_space<vmem>>, %arg6: memref<256x32xbf16, #tpu.memory_space<vmem>>, %arg7: memref<1x32xf32, #tpu.memory_space<vmem>>, %arg8: memref<16x32xf32, #tpu.memory_space<vmem>>) attributes {dimension_semantics = [#tpu.dimension_semantics<parallel>], iteration_bounds = array<i64: 2>, scalar_prefetch = 0 : i64, scratch_operands = 0 : i64, tpu.core_type = #tpu.core_type<tc>, window_params = [{transform_indices = @transform_0, window_bounds = array<i64: 16, 32>}, {pipeline_mode = #tpu.pipeline_mode<synchronous>, transform_indices = @transform_1, window_bounds = array<i64: 32, 6144>}, {pipeline_mode = #tpu.pipeline_mode<synchronous>, transform_indices = @transform_2, window_bounds = array<i64: 1, 6144>}, {pipeline_mode = #tpu.pipeline_mode<synchronous>, transform_indices = @transform_3, window_bounds = array<i64: 6144, 256>}, {pipeline_mode = #tpu.pipeline_mode<synchronous>, transform_indices = @transform_4, window_bounds = array<i64: 1, 256>}, {pipeline_mode = #tpu.pipeline_mode<synchronous>, transform_indices = @transform_5, window_bounds = array<i64: 256, 32>}, {pipeline_mode = #tpu.pipeline_mode<synchronous>, transform_indices = @transform_6, window_bounds = array<i64: 1, 32>}, {transform_indices = @transform_7, window_bounds = array<i64: 16, 32>}]} {
    %c0 = arith.constant 0 : index
    %c0_0 = arith.constant 0 : index
    %0 = vector.load %arg1[%c0, %c0_0] : memref<16x32xbf16, #tpu.memory_space<vmem>>, vector<16x32xbf16>
    %cst = arith.constant 0.000000e+00 : f32
    %1 = vector.broadcast %cst : f32 to vector<16x256xf32>
    %c0_i32 = arith.constant 0 : i32
    %c2048_i32 = arith.constant 2048 : i32
    %2 = arith.muli %c0_i32, %c2048_i32 : i32
    %3 = tpu.assume_multiple %2, 2048 : i32
    %c0_1 = arith.constant 0 : index
    %4 = arith.index_cast %3 : i32 to index
    %5 = vector.load %arg2[%c0_1, %4] : memref<32x6144xbf16, #tpu.memory_space<vmem>>, vector<32x2048xbf16>
    %cst_2 = arith.constant dense<0.000000e+00> : vector<16x2048xf32>
    %6 = tpu.matmul %0, %5, %cst_2 {dimension_numbers = #tpu.dot_dimension_numbers<[1], [0], [0], [1], [0, 0, 1, 1], [], []>} : vector<16x32xbf16>, vector<32x2048xbf16>, vector<16x2048xf32> -> vector<16x2048xf32>
    %c0_3 = arith.constant 0 : index
    %7 = arith.index_cast %3 : i32 to index
    %8 = vector.load %arg3[%c0_3, %7] : memref<1x6144xf32, #tpu.memory_space<vmem>>, vector<1x2048xf32>
    %9 = vector.broadcast %8 : vector<1x2048xf32> to vector<16x2048xf32>
    %10 = arith.addf %6, %9 : vector<16x2048xf32>
    %cst_4 = arith.constant 0.000000e+00 : f32
    %11 = vector.broadcast %cst_4 : f32 to vector<16x2048xf32>
    %12 = arith.minimumf %10, %11 : vector<16x2048xf32>
    %13 = math.exp %12 : vector<16x2048xf32>
    %cst_5 = arith.constant 1.000000e+00 : f32
    %14 = vector.broadcast %cst_5 : f32 to vector<16x2048xf32>
    %15 = arith.subf %13, %14 : vector<16x2048xf32>
    %cst_6 = arith.constant 1.67326319 : f32
    %16 = vector.broadcast %cst_6 : f32 to vector<16x2048xf32>
    %17 = arith.mulf %16, %15 : vector<16x2048xf32>
    %cst_7 = arith.constant 0.000000e+00 : f32
    %18 = vector.broadcast %cst_7 : f32 to vector<16x2048xf32>
    %19 = arith.cmpf ogt, %10, %18 : vector<16x2048xf32>
    %20 = arith.select %19, %10, %17 : vector<16x2048xi1>, vector<16x2048xf32>
    %cst_8 = arith.constant 1.05070102 : f32
    %21 = vector.broadcast %cst_8 : f32 to vector<16x2048xf32>
    %22 = arith.mulf %21, %20 : vector<16x2048xf32>
    %23 = arith.truncf %22 : vector<16x2048xf32> to vector<16x2048xbf16>
    %24 = arith.index_cast %3 : i32 to index
    %c0_9 = arith.constant 0 : index
    %25 = vector.load %arg4[%24, %c0_9] : memref<6144x256xbf16, #tpu.memory_space<vmem>>, vector<2048x256xbf16>
    %cst_10 = arith.constant dense<0.000000e+00> : vector<16x256xf32>
    %26 = tpu.matmul %23, %25, %cst_10 {dimension_numbers = #tpu.dot_dimension_numbers<[1], [0], [0], [1], [0, 0, 1, 1], [], []>} : vector<16x2048xbf16>, vector<2048x256xbf16>, vector<16x256xf32> -> vector<16x256xf32>
    %27 = arith.addf %1, %26 : vector<16x256xf32>
    %c1_i32 = arith.constant 1 : i32
    %c2048_i32_11 = arith.constant 2048 : i32
    %28 = arith.muli %c1_i32, %c2048_i32_11 : i32
    %29 = tpu.assume_multiple %28, 2048 : i32
    %c0_12 = arith.constant 0 : index
    %30 = arith.index_cast %29 : i32 to index
    %31 = vector.load %arg2[%c0_12, %30] : memref<32x6144xbf16, #tpu.memory_space<vmem>>, vector<32x2048xbf16>
    %cst_13 = arith.constant dense<0.000000e+00> : vector<16x2048xf32>
    %32 = tpu.matmul %0, %31, %cst_13 {dimension_numbers = #tpu.dot_dimension_numbers<[1], [0], [0], [1], [0, 0, 1, 1], [], []>} : vector<16x32xbf16>, vector<32x2048xbf16>, vector<16x2048xf32> -> vector<16x2048xf32>
    %c0_14 = arith.constant 0 : index
    %33 = arith.index_cast %29 : i32 to index
    %34 = vector.load %arg3[%c0_14, %33] : memref<1x6144xf32, #tpu.memory_space<vmem>>, vector<1x2048xf32>
    %35 = vector.broadcast %34 : vector<1x2048xf32> to vector<16x2048xf32>
    %36 = arith.addf %32, %35 : vector<16x2048xf32>
    %cst_15 = arith.constant 0.000000e+00 : f32
    %37 = vector.broadcast %cst_15 : f32 to vector<16x2048xf32>
    %38 = arith.minimumf %36, %37 : vector<16x2048xf32>
    %39 = math.exp %38 : vector<16x2048xf32>
    %cst_16 = arith.constant 1.000000e+00 : f32
    %40 = vector.broadcast %cst_16 : f32 to vector<16x2048xf32>
    %41 = arith.subf %39, %40 : vector<16x2048xf32>
    %cst_17 = arith.constant 1.67326319 : f32
    %42 = vector.broadcast %cst_17 : f32 to vector<16x2048xf32>
    %43 = arith.mulf %42, %41 : vector<16x2048xf32>
    %cst_18 = arith.constant 0.000000e+00 : f32
    %44 = vector.broadcast %cst_18 : f32 to vector<16x2048xf32>
    %45 = arith.cmpf ogt, %36, %44 : vector<16x2048xf32>
    %46 = arith.select %45, %36, %43 : vector<16x2048xi1>, vector<16x2048xf32>
    %cst_19 = arith.constant 1.05070102 : f32
    %47 = vector.broadcast %cst_19 : f32 to vector<16x2048xf32>
    %48 = arith.mulf %47, %46 : vector<16x2048xf32>
    %49 = arith.truncf %48 : vector<16x2048xf32> to vector<16x2048xbf16>
    %50 = arith.index_cast %29 : i32 to index
    %c0_20 = arith.constant 0 : index
    %51 = vector.load %arg4[%50, %c0_20] : memref<6144x256xbf16, #tpu.memory_space<vmem>>, vector<2048x256xbf16>
    %cst_21 = arith.constant dense<0.000000e+00> : vector<16x256xf32>
    %52 = tpu.matmul %49, %51, %cst_21 {dimension_numbers = #tpu.dot_dimension_numbers<[1], [0], [0], [1], [0, 0, 1, 1], [], []>} : vector<16x2048xbf16>, vector<2048x256xbf16>, vector<16x256xf32> -> vector<16x256xf32>
    %53 = arith.addf %27, %52 : vector<16x256xf32>
    %c2_i32 = arith.constant 2 : i32
    %c2048_i32_22 = arith.constant 2048 : i32
    %54 = arith.muli %c2_i32, %c2048_i32_22 : i32
    %55 = tpu.assume_multiple %54, 2048 : i32
    %c0_23 = arith.constant 0 : index
    %56 = arith.index_cast %55 : i32 to index
    %57 = vector.load %arg2[%c0_23, %56] : memref<32x6144xbf16, #tpu.memory_space<vmem>>, vector<32x2048xbf16>
    %cst_24 = arith.constant dense<0.000000e+00> : vector<16x2048xf32>
    %58 = tpu.matmul %0, %57, %cst_24 {dimension_numbers = #tpu.dot_dimension_numbers<[1], [0], [0], [1], [0, 0, 1, 1], [], []>} : vector<16x32xbf16>, vector<32x2048xbf16>, vector<16x2048xf32> -> vector<16x2048xf32>
    %c0_25 = arith.constant 0 : index
    %59 = arith.index_cast %55 : i32 to index
    %60 = vector.load %arg3[%c0_25, %59] : memref<1x6144xf32, #tpu.memory_space<vmem>>, vector<1x2048xf32>
    %61 = vector.broadcast %60 : vector<1x2048xf32> to vector<16x2048xf32>
    %62 = arith.addf %58, %61 : vector<16x2048xf32>
    %cst_26 = arith.constant 0.000000e+00 : f32
    %63 = vector.broadcast %cst_26 : f32 to vector<16x2048xf32>
    %64 = arith.minimumf %62, %63 : vector<16x2048xf32>
    %65 = math.exp %64 : vector<16x2048xf32>
    %cst_27 = arith.constant 1.000000e+00 : f32
    %66 = vector.broadcast %cst_27 : f32 to vector<16x2048xf32>
    %67 = arith.subf %65, %66 : vector<16x2048xf32>
    %cst_28 = arith.constant 1.67326319 : f32
    %68 = vector.broadcast %cst_28 : f32 to vector<16x2048xf32>
    %69 = arith.mulf %68, %67 : vector<16x2048xf32>
    %cst_29 = arith.constant 0.000000e+00 : f32
    %70 = vector.broadcast %cst_29 : f32 to vector<16x2048xf32>
    %71 = arith.cmpf ogt, %62, %70 : vector<16x2048xf32>
    %72 = arith.select %71, %62, %69 : vector<16x2048xi1>, vector<16x2048xf32>
    %cst_30 = arith.constant 1.05070102 : f32
    %73 = vector.broadcast %cst_30 : f32 to vector<16x2048xf32>
    %74 = arith.mulf %73, %72 : vector<16x2048xf32>
    %75 = arith.truncf %74 : vector<16x2048xf32> to vector<16x2048xbf16>
    %76 = arith.index_cast %55 : i32 to index
    %c0_31 = arith.constant 0 : index
    %77 = vector.load %arg4[%76, %c0_31] : memref<6144x256xbf16, #tpu.memory_space<vmem>>, vector<2048x256xbf16>
    %cst_32 = arith.constant dense<0.000000e+00> : vector<16x256xf32>
    %78 = tpu.matmul %75, %77, %cst_32 {dimension_numbers = #tpu.dot_dimension_numbers<[1], [0], [0], [1], [0, 0, 1, 1], [], []>} : vector<16x2048xbf16>, vector<2048x256xbf16>, vector<16x256xf32> -> vector<16x256xf32>
    %79 = arith.addf %53, %78 : vector<16x256xf32>
    %c3_i32 = arith.constant 3 : i32
    %c0_33 = arith.constant 0 : index
    %c0_34 = arith.constant 0 : index
    %80 = vector.load %arg5[%c0_33, %c0_34] : memref<1x256xf32, #tpu.memory_space<vmem>>, vector<1x256xf32>
    %81 = vector.broadcast %80 : vector<1x256xf32> to vector<16x256xf32>
    %82 = arith.addf %79, %81 : vector<16x256xf32>
    %cst_35 = arith.constant 0.000000e+00 : f32
    %83 = vector.broadcast %cst_35 : f32 to vector<16x256xf32>
    %84 = arith.minimumf %82, %83 : vector<16x256xf32>
    %85 = math.exp %84 : vector<16x256xf32>
    %cst_36 = arith.constant 1.000000e+00 : f32
    %86 = vector.broadcast %cst_36 : f32 to vector<16x256xf32>
    %87 = arith.subf %85, %86 : vector<16x256xf32>
    %cst_37 = arith.constant 1.67326319 : f32
    %88 = vector.broadcast %cst_37 : f32 to vector<16x256xf32>
    %89 = arith.mulf %88, %87 : vector<16x256xf32>
    %cst_38 = arith.constant 0.000000e+00 : f32
    %90 = vector.broadcast %cst_38 : f32 to vector<16x256xf32>
    %91 = arith.cmpf ogt, %82, %90 : vector<16x256xf32>
    %92 = arith.select %91, %82, %89 : vector<16x256xi1>, vector<16x256xf32>
    %cst_39 = arith.constant 1.05070102 : f32
    %93 = vector.broadcast %cst_39 : f32 to vector<16x256xf32>
    %94 = arith.mulf %93, %92 : vector<16x256xf32>
    %95 = arith.truncf %94 : vector<16x256xf32> to vector<16x256xbf16>
    %c0_40 = arith.constant 0 : index
    %c0_41 = arith.constant 0 : index
    %96 = vector.load %arg6[%c0_40, %c0_41] : memref<256x32xbf16, #tpu.memory_space<vmem>>, vector<256x32xbf16>
    %cst_42 = arith.constant dense<0.000000e+00> : vector<16x32xf32>
    %97 = tpu.matmul %95, %96, %cst_42 {dimension_numbers = #tpu.dot_dimension_numbers<[1], [0], [0], [1], [0, 0, 1, 1], [], []>} : vector<16x256xbf16>, vector<256x32xbf16>, vector<16x32xf32> -> vector<16x32xf32>
    %c0_43 = arith.constant 0 : index
    %c0_44 = arith.constant 0 : index
    %98 = vector.load %arg7[%c0_43, %c0_44] : memref<1x32xf32, #tpu.memory_space<vmem>>, vector<1x32xf32>
    %99 = vector.broadcast %98 : vector<1x32xf32> to vector<16x32xf32>
    %100 = arith.addf %97, %99 : vector<16x32xf32>
    %c0_45 = arith.constant 0 : index
    %c0_46 = arith.constant 0 : index
    %101 = vector.load %arg8[%c0_45, %c0_46] : memref<16x32xf32, #tpu.memory_space<vmem>>, vector<16x32xf32>
    tpu.vector_store %arg8[%c0_45, %c0_46], %100 {strides = array<i32>} : memref<16x32xf32, #tpu.memory_space<vmem>>, vector<16x32xf32>,
    return
  }
  func.func @transform_0(%arg0: i32) -> (i32, i32) {
    %c0_i32 = arith.constant 0 : i32
    %c0_i32_0 = arith.constant 0 : i32
    return %arg0, %c0_i32 : i32, i32
  }
  func.func @transform_1(%arg0: i32) -> (i32, i32) {
    %c0_i32 = arith.constant 0 : i32
    %c0_i32_0 = arith.constant 0 : i32
    %c0_i32_1 = arith.constant 0 : i32
    return %c0_i32, %c0_i32_0 : i32, i32
  }
  func.func @transform_2(%arg0: i32) -> (i32, i32) {
    %c0_i32 = arith.constant 0 : i32
    %c0_i32_0 = arith.constant 0 : i32
    %c0_i32_1 = arith.constant 0 : i32
    return %c0_i32, %c0_i32_0 : i32, i32
  }
  func.func @transform_3(%arg0: i32) -> (i32, i32) {
    %c0_i32 = arith.constant 0 : i32
    %c0_i32_0 = arith.constant 0 : i32
    %c0_i32_1 = arith.constant 0 : i32
    return %c0_i32, %c0_i32_0 : i32, i32
  }
  func.func @transform_4(%arg0: i32) -> (i32, i32) {
    %c0_i32 = arith.constant 0 : i32
    %c0_i32_0 = arith.constant 0 : i32
    %c0_i32_1 = arith.constant 0 : i32
    return %c0_i32, %c0_i32_0 : i32, i32
  }
  func.func @transform_5(%arg0: i32) -> (i32, i32) {
    %c0_i32 = arith.constant 0 : i32
    %c0_i32_0 = arith.constant 0 : i32
    %c0_i32_1 = arith.constant 0 : i32
    return %c0_i32, %c0_i32_0 : i32, i32
  }
  func.func @transform_6(%arg0: i32) -> (i32, i32) {
    %c0_i32 = arith.constant 0 : i32
    %c0_i32_0 = arith.constant 0 : i32
    %c0_i32_1 = arith.constant 0 : i32
    return %c0_i32, %c0_i32_0 : i32, i32
  }
  func.func @transform_7(%arg0: i32) -> (i32, i32) {
    %c0_i32 = arith.constant 0 : i32
    %c0_i32_0 = arith.constant 0 : i32
    return %arg0, %c0_i32 : i32, i32
  }
}

</mosaic_0001>

<llo_original>
// kernel: tpu_custom_call.1
$region0: #{tpu_custom_call.1}
  #allocation0 [shape = 'u32[]', space=smem, size = 0x4, offset = 0x4, fixed_abs, tag = 'smem constant byte address 0x4 - core index']
  #allocation1 [shape = 'u32[144,128]{1,0:T(1,128)}', space=vmem, size = 0x12000, scoped, tag = 'internal scratch']
  %s0 = inlined_call_operand.hbm [shape: bf16[32,32], index: 0, kind: input, shape index: {}]
  %s1 = inlined_call_operand.hbm [shape: bf16[32,6144], index: 1, kind: input, shape index: {}]
  %s2 = inlined_call_operand.hbm [shape: f32[1,6144], index: 2, kind: input, shape index: {}]
  %s3 = inlined_call_operand.hbm [shape: bf16[6144,256], index: 3, kind: input, shape index: {}]
  %s4 = inlined_call_operand.hbm [shape: f32[1,256], index: 4, kind: input, shape index: {}]
  %s5 = inlined_call_operand.vmem [shape: bf16[256,32], index: 5, kind: input, shape index: {}]
  %s6 = inlined_call_operand.hbm [shape: f32[1,32], index: 6, kind: input, shape index: {}]
  %s7 = inlined_call_operand.hbm [shape: f32[32,32], index: 7, kind: output, shape index: {}]
  %s8 = sld [smem:[#allocation0]]
  $region85: #{tpu_custom_call.1} parent=0
    _
  %s10 = ssub.s32 1, %s8
  %s11 = scalar_select 0, %s10, %s8
  $region1: #{tpu_custom_call.1} parent=0
    #allocation2 [shape = 'u8[8192]{0}', space=vmem, size = 0x2000, scoped, tag = 'input window, operand 0']
    #allocation3 [shape = 's32[2]{0}', space=sflag, size = 0x8, scoped, tag = 'scoped memory for tpu_custom_call.1']
    #allocation4 [shape = 's32[2]{0}', space=sflag, size = 0x8, scoped, tag = 'scoped memory for tpu_custom_call.1']
    #allocation5 [shape = 'u8[393216]{0}', space=vmem, size = 0x60000, scoped, tag = 'input window, operand 1, single buffered']
    #allocation6 [shape = 's32[1]{0}', space=sflag, size = 0x4, scoped, tag = 'scoped memory for tpu_custom_call.1']
    #allocation7 [shape = 'u8[24576]{0}', space=vmem, size = 0x6000, scoped, tag = 'input window, operand 2, single buffered']
    #allocation8 [shape = 'u8[3145728]{0}', space=vmem, size = 0x300000, scoped, tag = 'input window, operand 3, single buffered']
    #allocation9 [shape = 's32[1]{0}', space=sflag, size = 0x4, scoped, tag = 'scoped memory for tpu_custom_call.1']
    #allocation10 [shape = 'u8[1024]{0}', space=vmem, size = 0x400, scoped, tag = 'input window, operand 4, single buffered']
    #allocation11 [shape = 'u8[512]{0}', space=vmem, size = 0x400, scoped, tag = 'input window, operand 6, single buffered']
    #allocation12 [shape = 's32[1]{0}', space=sflag, size = 0x4, scoped, tag = 'scoped memory for tpu_custom_call.1']
    #allocation13 [shape = 'u8[16384]{0}', space=vmem, size = 0x4000, scoped, tag = 'output window, operand 0']
    %12 = vsyncpa [#allocation3], 0
    %s13 = scalar_lea.sflag [#allocation3], 1
    %14 = vsyncpa %s13, 0
    %15 = vsyncpa [#allocation6], 0
    %16 = vsyncpa [#allocation9], 0
    %17 = vsyncpa [#allocation12], 0
    %18 = vsyncpa [#allocation4], 0
    %s19 = scalar_lea.sflag [#allocation4], 1
    %20 = vsyncpa %s19, 0
    loop: start=0, step=1, limit=4
    $region2: #{tpu_custom_call.1} parent=1 // loop_pre_header
      _
    $region3: #{tpu_custom_call.1} parent=1 // loop_header
      %s22 = sphi 0, %s26
      %p23 = scmp.ge.s32.totalorder %s22, 4
      %s32 = sphi 0, %s34
      %s35 = sphi 0, %s32
      %s36 = sphi 0, %s35
      %s52 = sphi 0, %s36
      %s56 = sphi 0, %s56
      %s58 = sphi 0, %s56
      %s59 = sphi 0, %s58
      %s73 = sphi 0, %s59
      %s77 = sphi 0, %s77
      %s79 = sphi 0, %s77
      %s80 = sphi 0, %s79
      %s94 = sphi 0, %s80
      %s98 = sphi 0, %s98
      %s100 = sphi 0, %s98
      %s101 = sphi 0, %s100
      %s115 = sphi 0, %s101
      %s119 = sphi 0, %s119
      %s121 = sphi 0, %s119
      %s122 = sphi 0, %s121
      %s136 = sphi 0, %s122
      %s140 = sphi 0, %s140
      %s142 = sphi 0, %s140
      %s143 = sphi 0, %s142
      %s157 = sphi 0, %s143
      %s161 = sphi 0, %s161
      %s163 = sphi 0, %s161
      %s164 = sphi 0, %s163
      %s178 = sphi 0, %s164
      %s184 = sphi 0, %s186
      %s187 = sphi 0, %s184
      %s188 = sphi 0, %s187
      %s204 = sphi 0, %s188
    $region4: #{tpu_custom_call.1} parent=1 // loop_header_branch
      %25 = sbr.rel (%p23) target = $region8
    $region5: #{tpu_custom_call.1} parent=1 // loop_body
      %s27 = ssub.s32 %s22, 1
      %s28 = ssub.s32 %s22, 2
      %s29 = sadd.s32 %s22, 1
      %s30 = ssub.s32 %s22, %s29
      %p31 = scmp.eq.s32.totalorder %s30, 0
      %s33 = sadd.s32 %s32, 1
      %s34 = scalar_select %p31, %s32, %s33
      %p37 = pneg %p31
      %p38 = scmp.eq.s32.totalorder %s22, 1
      %p39 = por %p37, %p38
      %p40 = scmp.ne.s32.totalorder %s32, %s35
      %p41 = scmp.eq.s32.totalorder %s22, 0
      %p42 = por %p40, %p41
      %p43 = scmp.ne.s32.totalorder %s32, %s35
      %p44 = scmp.eq.s32.totalorder %s27, 1
      %p45 = por %p43, %p44
      %p46 = scmp.ne.s32.totalorder %s35, %s36
      %p47 = scmp.eq.s32.totalorder %s27, 0
      %p48 = por %p46, %p47
      %p49 = scmp.ne.s32.totalorder %s35, %s36
      %p50 = scmp.eq.s32.totalorder %s28, 1
      %p51 = por %p49, %p50
      %p53 = scmp.ne.s32.totalorder %s36, %s52
      %p54 = scmp.eq.s32.totalorder %s28, 0
      %p55 = por %p53, %p54
      %s57 = sadd.s32 %s56, 1
      %p60 = scmp.eq.s32.totalorder %s22, 1
      %p61 = scmp.ne.s32.totalorder %s56, %s58
      %p62 = scmp.eq.s32.totalorder %s22, 0
      %p63 = por %p61, %p62
      %p64 = scmp.ne.s32.totalorder %s56, %s58
      %p65 = scmp.eq.s32.totalorder %s27, 1
      %p66 = por %p64, %p65
      %p67 = scmp.ne.s32.totalorder %s58, %s59
      %p68 = scmp.eq.s32.totalorder %s27, 0
      %p69 = por %p67, %p68
      %p70 = scmp.ne.s32.totalorder %s58, %s59
      %p71 = scmp.eq.s32.totalorder %s28, 1
      %p72 = por %p70, %p71
      %p74 = scmp.ne.s32.totalorder %s59, %s73
      %p75 = scmp.eq.s32.totalorder %s28, 0
      %p76 = por %p74, %p75
      %s78 = sadd.s32 %s77, 1
      %p81 = scmp.eq.s32.totalorder %s22, 1
      %p82 = scmp.ne.s32.totalorder %s77, %s79
      %p83 = scmp.eq.s32.totalorder %s22, 0
      %p84 = por %p82, %p83
      %p85 = scmp.ne.s32.totalorder %s77, %s79
      %p86 = scmp.eq.s32.totalorder %s27, 1
      %p87 = por %p85, %p86
      %p88 = scmp.ne.s32.totalorder %s79, %s80
      %p89 = scmp.eq.s32.totalorder %s27, 0
      %p90 = por %p88, %p89
      %p91 = scmp.ne.s32.totalorder %s79, %s80
      %p92 = scmp.eq.s32.totalorder %s28, 1
      %p93 = por %p91, %p92
      %p95 = scmp.ne.s32.totalorder %s80, %s94
      %p96 = scmp.eq.s32.totalorder %s28, 0
      %p97 = por %p95, %p96
      %s99 = sadd.s32 %s98, 1
      %p102 = scmp.eq.s32.totalorder %s22, 1
      %p103 = scmp.ne.s32.totalorder %s98, %s100
      %p104 = scmp.eq.s32.totalorder %s22, 0
      %p105 = por %p103, %p104
      %p106 = scmp.ne.s32.totalorder %s98, %s100
      %p107 = scmp.eq.s32.totalorder %s27, 1
      %p108 = por %p106, %p107
      %p109 = scmp.ne.s32.totalorder %s100, %s101
      %p110 = scmp.eq.s32.totalorder %s27, 0
      %p111 = por %p109, %p110
      %p112 = scmp.ne.s32.totalorder %s100, %s101
      %p113 = scmp.eq.s32.totalorder %s28, 1
      %p114 = por %p112, %p113
      %p116 = scmp.ne.s32.totalorder %s101, %s115
      %p117 = scmp.eq.s32.totalorder %s28, 0
      %p118 = por %p116, %p117
      %s120 = sadd.s32 %s119, 1
      %p123 = scmp.eq.s32.totalorder %s22, 1
      %p124 = scmp.ne.s32.totalorder %s119, %s121
      %p125 = scmp.eq.s32.totalorder %s22, 0
      %p126 = por %p124, %p125
      %p127 = scmp.ne.s32.totalorder %s119, %s121
      %p128 = scmp.eq.s32.totalorder %s27, 1
      %p129 = por %p127, %p128
      %p130 = scmp.ne.s32.totalorder %s121, %s122
      %p131 = scmp.eq.s32.totalorder %s27, 0
      %p132 = por %p130, %p131
      %p133 = scmp.ne.s32.totalorder %s121, %s122
      %p134 = scmp.eq.s32.totalorder %s28, 1
      %p135 = por %p133, %p134
      %p137 = scmp.ne.s32.totalorder %s122, %s136
      %p138 = scmp.eq.s32.totalorder %s28, 0
      %p139 = por %p137, %p138
      %s141 = sadd.s32 %s140, 1
      %p144 = scmp.eq.s32.totalorder %s22, 1
      %p145 = scmp.ne.s32.totalorder %s140, %s142
      %p146 = scmp.eq.s32.totalorder %s22, 0
      %p147 = por %p145, %p146
      %p148 = scmp.ne.s32.totalorder %s140, %s142
      %p149 = scmp.eq.s32.totalorder %s27, 1
      %p150 = por %p148, %p149
      %p151 = scmp.ne.s32.totalorder %s142, %s143
      %p152 = scmp.eq.s32.totalorder %s27, 0
      %p153 = por %p151, %p152
      %p154 = scmp.ne.s32.totalorder %s142, %s143
      %p155 = scmp.eq.s32.totalorder %s28, 1
      %p156 = por %p154, %p155
      %p158 = scmp.ne.s32.totalorder %s143, %s157
      %p159 = scmp.eq.s32.totalorder %s28, 0
      %p160 = por %p158, %p159
      %s162 = sadd.s32 %s161, 1
      %p165 = scmp.eq.s32.totalorder %s22, 1
      %p166 = scmp.ne.s32.totalorder %s161, %s163
      %p167 = scmp.eq.s32.totalorder %s22, 0
      %p168 = por %p166, %p167
      %p169 = scmp.ne.s32.totalorder %s161, %s163
      %p170 = scmp.eq.s32.totalorder %s27, 1
      %p171 = por %p169, %p170
      %p172 = scmp.ne.s32.totalorder %s163, %s164
      %p173 = scmp.eq.s32.totalorder %s27, 0
      %p174 = por %p172, %p173
      %p175 = scmp.ne.s32.totalorder %s163, %s164
      %p176 = scmp.eq.s32.totalorder %s28, 1
      %p177 = por %p175, %p176
      %p179 = scmp.ne.s32.totalorder %s164, %s178
      %p180 = scmp.eq.s32.totalorder %s28, 0
      %p181 = por %p179, %p180
      %s182 = ssub.s32 %s22, %s29
      %p183 = scmp.eq.s32.totalorder %s182, 0
      %s185 = sadd.s32 %s184, 1
      %s186 = scalar_select %p183, %s184, %s185
      %p189 = pneg %p183
      %p190 = scmp.eq.s32.totalorder %s22, 1
      %p191 = por %p189, %p190
      %p192 = scmp.ne.s32.totalorder %s184, %s187
      %p193 = scmp.eq.s32.totalorder %s22, 0
      %p194 = por %p192, %p193
      %p195 = scmp.ne.s32.totalorder %s184, %s187
      %p196 = scmp.eq.s32.totalorder %s27, 1
      %p197 = por %p195, %p196
      %p198 = scmp.ne.s32.totalorder %s187, %s188
      %p199 = scmp.eq.s32.totalorder %s27, 0
      %p200 = por %p198, %p199
      %p201 = scmp.ne.s32.totalorder %s187, %s188
      %p202 = scmp.eq.s32.totalorder %s28, 1
      %p203 = por %p201, %p202
      %p205 = scmp.ne.s32.totalorder %s188, %s204
      %p206 = scmp.eq.s32.totalorder %s28, 0
      %p207 = por %p205, %p206
      %p208 = scmp.le.s32.totalorder 1, %s22
      %p209 = scmp.lt.s32.totalorder %s22, 3
      %p210 = pnand %p208, %p209
      %p211 = pneg %p210
      // Predicated region
      $region9: #{tpu_custom_call.1} parent=5 // pred_check
        _
      $region10: #{tpu_custom_call.1} parent=5 // pred_check_branch
        %213 = sbr.rel (%p210) target = $region12
      $region11: #{tpu_custom_call.1} parent=5 // pred_region
        %s214 = ssub.s32 %s22, 1
        // Predicated region
        $region13: #{tpu_custom_call.1} parent=11 // pred_check
          %p215 = pneg %p69
        $region14: #{tpu_custom_call.1} parent=11 // pred_check_branch
          %217 = sbr.rel (%p215) target = $region16
        $region15: #{tpu_custom_call.1} parent=11 // pred_region
          %s219 = ssub.s32 12288, 12288
          %220 = vsyncadd [#allocation6], %s219
          %s221 = sshll.u32 [#allocation5], 4
          %s222 = int_to_ptr.vmem [resolvable:$true] %s221
          %227 = dma.hbm_to_vmem [thread:$0]  %s1, 12288, %s222, [#allocation6], 3072, 3072, 192
        $region16: #{tpu_custom_call.1} parent=11 // pred_fallthru
          _
        // Predicated region
        $region17: #{tpu_custom_call.1} parent=11 // pred_check
          %p228 = pneg %p90
        $region18: #{tpu_custom_call.1} parent=11 // pred_check_branch
          %230 = sbr.rel (%p228) target = $region20
        $region19: #{tpu_custom_call.1} parent=11 // pred_region
          %s232 = ssub.s32 768, 768
          %233 = vsyncadd [#allocation6], %s232
          %s235 = sshll.u32 [#allocation7], 4
          %s236 = int_to_ptr.vmem [resolvable:$true] %s235
          %238 = dma.hbm_to_vmem [thread:$0]  %s2, 768, %s236, [#allocation6]
        $region20: #{tpu_custom_call.1} parent=11 // pred_fallthru
          _
        // Predicated region
        $region21: #{tpu_custom_call.1} parent=11 // pred_check
          %p239 = pneg %p111
        $region22: #{tpu_custom_call.1} parent=11 // pred_check_branch
          %241 = sbr.rel (%p239) target = $region24
        $region23: #{tpu_custom_call.1} parent=11 // pred_region
          %s243 = ssub.s32 98304, 98304
          %244 = vsyncadd [#allocation9], %s243
          %s245 = sshll.u32 [#allocation8], 4
          %s246 = int_to_ptr.vmem [resolvable:$true] %s245
          %251 = dma.hbm_to_vmem [thread:$0]  %s3, 98304, %s246, [#allocation9], 128, 128, 8
        $region24: #{tpu_custom_call.1} parent=11 // pred_fallthru
          _
        // Predicated region
        $region25: #{tpu_custom_call.1} parent=11 // pred_check
          %p252 = pneg %p132
        $region26: #{tpu_custom_call.1} parent=11 // pred_check_branch
          %254 = sbr.rel (%p252) target = $region28
        $region27: #{tpu_custom_call.1} parent=11 // pred_region
          %s256 = ssub.s32 32, 32
          %257 = vsyncadd [#allocation9], %s256
          %s259 = sshll.u32 [#allocation10], 4
          %s260 = int_to_ptr.vmem [resolvable:$true] %s259
          %262 = dma.hbm_to_vmem [thread:$0]  %s4, 32, %s260, [#allocation9]
        $region28: #{tpu_custom_call.1} parent=11 // pred_fallthru
          _
        // Predicated region
        $region29: #{tpu_custom_call.1} parent=11 // pred_check
          %p263 = pneg %p153
        $region30: #{tpu_custom_call.1} parent=11 // pred_check_branch
          %265 = sbr.rel (%p263) target = $region32
        $region31: #{tpu_custom_call.1} parent=11 // pred_region
          _
        $region32: #{tpu_custom_call.1} parent=11 // pred_fallthru
          _
        // Predicated region
        $region33: #{tpu_custom_call.1} parent=11 // pred_check
          %p266 = pneg %p174
        $region34: #{tpu_custom_call.1} parent=11 // pred_check_branch
          %268 = sbr.rel (%p266) target = $region36
        $region35: #{tpu_custom_call.1} parent=11 // pred_region
          %s270 = ssub.s32 16, 16
          %271 = vsyncadd [#allocation12], %s270
          %s273 = sshll.u32 [#allocation11], 4
          %s274 = int_to_ptr.vmem [resolvable:$true] %s273
          %276 = dma.hbm_to_vmem [thread:$0]  %s6, 16, %s274, [#allocation12]
        $region36: #{tpu_custom_call.1} parent=11 // pred_fallthru
          _
      $region12: #{tpu_custom_call.1} parent=5 // pred_fallthru
        _
      %p277 = scmp.lt.s32.totalorder %s22, 2
      // Predicated region
      $region37: #{tpu_custom_call.1} parent=5 // pred_check
        %p278 = pneg %p277
      $region38: #{tpu_custom_call.1} parent=5 // pred_check_branch
        %280 = sbr.rel (%p278) target = $region40
      $region39: #{tpu_custom_call.1} parent=5 // pred_region
        // Predicated region
        $region41: #{tpu_custom_call.1} parent=39 // pred_check
          %p281 = pneg %p42
        $region42: #{tpu_custom_call.1} parent=39 // pred_check_branch
          %283 = sbr.rel (%p281) target = $region44
        $region43: #{tpu_custom_call.1} parent=39 // pred_region
          %s284 = sand.u32 %s32, 1
          %s285 = scalar_lea.sflag [#allocation3], %s284
          %s286 = sand.u32 %s32, 1
          %s287 = smul.addr %s286, 8
          %s288 = scalar_lea.vmem [#allocation2], %s287
          %s289 = smul.u32 2, %s22
          %s291 = ssub.s32 128, 128
          %292 = vsyncadd %s285, %s291
          %s293 = smul.addr %s289, 64
          %s294 = scalar_lea.hbm %s0, %s293
          %s295 = sshll.u32 %s288, 4
          %s296 = int_to_ptr.vmem [resolvable:$true] %s295
          %301 = dma.hbm_to_vmem [thread:$0]  %s294, 128, %s296, %s285, 64, 64, 4
        $region44: #{tpu_custom_call.1} parent=39 // pred_fallthru
          _
      $region40: #{tpu_custom_call.1} parent=5 // pred_fallthru
        _
      %p302 = scmp.le.s32.totalorder 1, %s22
      %p303 = scmp.lt.s32.totalorder %s22, 3
      %p304 = pnand %p302, %p303
      %p305 = pneg %p304
      // Predicated region
      $region45: #{tpu_custom_call.1} parent=5 // pred_check
        _
      $region46: #{tpu_custom_call.1} parent=5 // pred_check_branch
        %307 = sbr.rel (%p304) target = $region48
      $region47: #{tpu_custom_call.1} parent=5 // pred_region
        %s308 = ssub.s32 %s22, 1
        %s309 = sand.u32 %s35, 1
        %s310 = scalar_lea.sflag [#allocation3], %s309
        %s311 = sand.u32 %s35, 1
        %s312 = smul.addr %s311, 8
        %s313 = scalar_lea.vmem [#allocation2], %s312
        // Predicated region
        $region49: #{tpu_custom_call.1} parent=47 // pred_check
          %p314 = pneg %p48
        $region50: #{tpu_custom_call.1} parent=47 // pred_check_branch
          %316 = sbr.rel (%p314) target = $region52
        $region51: #{tpu_custom_call.1} parent=47 // pred_region
          %317 = dma.done %s310, 128
        $region52: #{tpu_custom_call.1} parent=47 // pred_fallthru
          _
        // Predicated region
        $region53: #{tpu_custom_call.1} parent=47 // pred_check
          %p318 = pneg %p69
        $region54: #{tpu_custom_call.1} parent=47 // pred_check_branch
          %320 = sbr.rel (%p318) target = $region56
        $region55: #{tpu_custom_call.1} parent=47 // pred_region
          %321 = dma.done [#allocation6], 12288
        $region56: #{tpu_custom_call.1} parent=47 // pred_fallthru
          _
        // Predicated region
        $region57: #{tpu_custom_call.1} parent=47 // pred_check
          %p322 = pneg %p90
        $region58: #{tpu_custom_call.1} parent=47 // pred_check_branch
          %324 = sbr.rel (%p322) target = $region60
        $region59: #{tpu_custom_call.1} parent=47 // pred_region
          %325 = dma.done [#allocation6], 768
        $region60: #{tpu_custom_call.1} parent=47 // pred_fallthru
          _
        // Predicated region
        $region61: #{tpu_custom_call.1} parent=47 // pred_check
          %p326 = pneg %p111
        $region62: #{tpu_custom_call.1} parent=47 // pred_check_branch
          %328 = sbr.rel (%p326) target = $region64
        $region63: #{tpu_custom_call.1} parent=47 // pred_region
          %329 = dma.done [#allocation9], 98304
        $region64: #{tpu_custom_call.1} parent=47 // pred_fallthru
          _
        // Predicated region
        $region65: #{tpu_custom_call.1} parent=47 // pred_check
          %p330 = pneg %p132
        $region66: #{tpu_custom_call.1} parent=47 // pred_check_branch
          %332 = sbr.rel (%p330) target = $region68
        $region67: #{tpu_custom_call.1} parent=47 // pred_region
          %333 = dma.done [#allocation9], 32
        $region68: #{tpu_custom_call.1} parent=47 // pred_fallthru
          _
        // Predicated region
        $region69: #{tpu_custom_call.1} parent=47 // pred_check
          %p334 = pneg %p174
        $region70: #{tpu_custom_call.1} parent=47 // pred_check_branch
          %336 = sbr.rel (%p334) target = $region72
        $region71: #{tpu_custom_call.1} parent=47 // pred_region
          %337 = dma.done [#allocation12], 16
        $region72: #{tpu_custom_call.1} parent=47 // pred_fallthru
          _
        %s338 = sand.u32 %s35, 1
        %s339 = scalar_lea.sflag [#allocation3], %s338
        %s340 = sand.u32 %s35, 1
        %s341 = smul.addr %s340, 8
        %s342 = scalar_lea.vmem [#allocation2], %s341
        %p343 = pneg %p48
        %p344 = pneg %p45
        %p345 = pneg %p69
        %p346 = pneg %p66
        %p347 = pneg %p90
        %p348 = pneg %p87
        %p349 = pneg %p111
        %p350 = pneg %p108
        %p351 = pneg %p132
        %p352 = pneg %p129
        %p353 = pneg %p153
        %p354 = pneg %p150
        %p355 = pneg %p174
        %p356 = pneg %p171
        %p357 = pneg %p200
        %p358 = pneg %p197
        %s359 = sand.u32 %s187, 1
        %s360 = scalar_lea.sflag [#allocation4], %s359
        %s361 = sand.u32 %s187, 1
        %s362 = smul.addr %s361, 16
        %s363 = scalar_lea.vmem [#allocation13], %s362
        %s364 = smul.u32 2, %s27
        %s365 = smul.u32 2, %s27
        %v367 = vld [vmem:[%s313] sm:$0xf]
        %v368 = vld [vmem:[%s313 + $0x4] sm:$0xf]
        %v369 = vld [vmem:[#allocation5] sm:$0xff]
        %v370 = vld [vmem:[#allocation5 + $0x8] sm:$0xff]
        %v371 = vld [vmem:[#allocation5 + $0x10] sm:$0xff]
        %v372 = vld [vmem:[#allocation5 + $0x18] sm:$0xff]
        %v373 = vld [vmem:[#allocation5 + $0x20] sm:$0xff]
        %v374 = vld [vmem:[#allocation5 + $0x28] sm:$0xff]
        %v375 = vld [vmem:[#allocation5 + $0x30] sm:$0xff]
        %v376 = vld [vmem:[#allocation5 + $0x38] sm:$0xff]
        %v377 = vld [vmem:[#allocation5 + $0xc0] sm:$0xff]
        %v378 = vld [vmem:[#allocation5 + $0xc8] sm:$0xff]
        %v379 = vld [vmem:[#allocation5 + $0xd0] sm:$0xff]
        %v380 = vld [vmem:[#allocation5 + $0xd8] sm:$0xff]
        %v381 = vld [vmem:[#allocation5 + $0xe0] sm:$0xff]
        %v382 = vld [vmem:[#allocation5 + $0xe8] sm:$0xff]
        %v383 = vld [vmem:[#allocation5 + $0xf0] sm:$0xff]
        %v384 = vld [vmem:[#allocation5 + $0xf8] sm:$0xff]
        %v385 = vld [vmem:[#allocation5 + $0x180] sm:$0xff]
        %v386 = vld [vmem:[#allocation5 + $0x188] sm:$0xff]
        %v387 = vld [vmem:[#allocation5 + $0x190] sm:$0xff]
        %v388 = vld [vmem:[#allocation5 + $0x198] sm:$0xff]
        %v389 = vld [vmem:[#allocation5 + $0x1a0] sm:$0xff]
        %v390 = vld [vmem:[#allocation5 + $0x1a8] sm:$0xff]
        %v391 = vld [vmem:[#allocation5 + $0x1b0] sm:$0xff]
        %v392 = vld [vmem:[#allocation5 + $0x1b8] sm:$0xff]
        %v393 = vld [vmem:[#allocation5 + $0x240] sm:$0xff]
        %v394 = vld [vmem:[#allocation5 + $0x248] sm:$0xff]
        %v395 = vld [vmem:[#allocation5 + $0x250] sm:$0xff]
        %v396 = vld [vmem:[#allocation5 + $0x258] sm:$0xff]
        %v397 = vld [vmem:[#allocation5 + $0x260] sm:$0xff]
        %v398 = vld [vmem:[#allocation5 + $0x268] sm:$0xff]
        %v399 = vld [vmem:[#allocation5 + $0x270] sm:$0xff]
        %v400 = vld [vmem:[#allocation5 + $0x278] sm:$0xff]
        %v401 = vld [vmem:[#allocation7] sm:$0xff]
        %v402 = vld [vmem:[#allocation7 + $0x8] sm:$0xff]
        %v405 = vlaneseq
        %v406 = vshrl.u32 %v405, 7
        %v407 = vsub.s32 0, %v406
        %v408 = vrot.slane %v401, %v407
        %v409 = vlaneseq
        %v410 = vshrl.u32 %v409, 7
        %v411 = vsub.s32 1, %v410
        %v412 = vrot.slane %v401, %v411
        %v413 = vlaneseq
        %v414 = vshrl.u32 %v413, 7
        %v415 = vsub.s32 2, %v414
        %v416 = vrot.slane %v401, %v415
        %v417 = vlaneseq
        %v418 = vshrl.u32 %v417, 7
        %v419 = vsub.s32 3, %v418
        %v420 = vrot.slane %v401, %v419
        %v421 = vlaneseq
        %v422 = vshrl.u32 %v421, 7
        %v423 = vsub.s32 4, %v422
        %v424 = vrot.slane %v401, %v423
        %v425 = vlaneseq
        %v426 = vshrl.u32 %v425, 7
        %v427 = vsub.s32 5, %v426
        %v428 = vrot.slane %v401, %v427
        %v429 = vlaneseq
        %v430 = vshrl.u32 %v429, 7
        %v431 = vsub.s32 6, %v430
        %v432 = vrot.slane %v401, %v431
        %v433 = vlaneseq
        %v434 = vshrl.u32 %v433, 7
        %v435 = vsub.s32 7, %v434
        %v436 = vrot.slane %v401, %v435
        %v437 = vlaneseq
        %v438 = vshrl.u32 %v437, 7
        %v439 = vsub.s32 0, %v438
        %v440 = vrot.slane %v402, %v439
        %v441 = vlaneseq
        %v442 = vshrl.u32 %v441, 7
        %v443 = vsub.s32 1, %v442
        %v444 = vrot.slane %v402, %v443
        %v445 = vlaneseq
        %v446 = vshrl.u32 %v445, 7
        %v447 = vsub.s32 2, %v446
        %v448 = vrot.slane %v402, %v447
        %v449 = vlaneseq
        %v450 = vshrl.u32 %v449, 7
        %v451 = vsub.s32 3, %v450
        %v452 = vrot.slane %v402, %v451
        %v453 = vlaneseq
        %v454 = vshrl.u32 %v453, 7
        %v455 = vsub.s32 4, %v454
        %v456 = vrot.slane %v402, %v455
        %v457 = vlaneseq
        %v458 = vshrl.u32 %v457, 7
        %v459 = vsub.s32 5, %v458
        %v460 = vrot.slane %v402, %v459
        %v461 = vlaneseq
        %v462 = vshrl.u32 %v461, 7
        %v463 = vsub.s32 6, %v462
        %v464 = vrot.slane %v402, %v463
        %v465 = vlaneseq
        %v466 = vshrl.u32 %v465, 7
        %v467 = vsub.s32 7, %v466
        %v468 = vrot.slane %v402, %v467
        %v487 = vunpack.c.l.b16 %v367
        %v488 = vunpack.c.l.b16 %v368
        %v489 = vpack.c.b16 %v488, %v487
        %v522 = vunpack.c.l.b16 %v369
        %v523 = vunpack.c.h.b16 %v369
        %v524 = vunpack.c.l.b16 %v370
        %v525 = vunpack.c.h.b16 %v370
        %v526 = vunpack.c.l.b16 %v371
        %v527 = vunpack.c.h.b16 %v371
        %v528 = vunpack.c.l.b16 %v372
        %v529 = vunpack.c.h.b16 %v372
        %v530 = vunpack.c.l.b16 %v373
        %v531 = vunpack.c.h.b16 %v373
        %v532 = vunpack.c.l.b16 %v374
        %v533 = vunpack.c.h.b16 %v374
        %v534 = vunpack.c.l.b16 %v375
        %v535 = vunpack.c.h.b16 %v375
        %v536 = vunpack.c.l.b16 %v376
        %v537 = vunpack.c.h.b16 %v376
        %v538 = vunpack.c.l.b16 %v377
        %v539 = vunpack.c.h.b16 %v377
        %v540 = vunpack.c.l.b16 %v378
        %v541 = vunpack.c.h.b16 %v378
        %v542 = vunpack.c.l.b16 %v379
        %v543 = vunpack.c.h.b16 %v379
        %v544 = vunpack.c.l.b16 %v380
        %v545 = vunpack.c.h.b16 %v380
        %v546 = vunpack.c.l.b16 %v381
        %v547 = vunpack.c.h.b16 %v381
        %v548 = vunpack.c.l.b16 %v382
        %v549 = vunpack.c.h.b16 %v382
        %v550 = vunpack.c.l.b16 %v383
        %v551 = vunpack.c.h.b16 %v383
        %v552 = vunpack.c.l.b16 %v384
        %v553 = vunpack.c.h.b16 %v384
        %v554 = vunpack.c.l.b16 %v385
        %v555 = vunpack.c.h.b16 %v385
        %v556 = vunpack.c.l.b16 %v386
        %v557 = vunpack.c.h.b16 %v386
        %v558 = vunpack.c.l.b16 %v387
        %v559 = vunpack.c.h.b16 %v387
        %v560 = vunpack.c.l.b16 %v388
        %v561 = vunpack.c.h.b16 %v388
        %v562 = vunpack.c.l.b16 %v389
        %v563 = vunpack.c.h.b16 %v389
        %v564 = vunpack.c.l.b16 %v390
        %v565 = vunpack.c.h.b16 %v390
        %v566 = vunpack.c.l.b16 %v391
        %v567 = vunpack.c.h.b16 %v391
        %v568 = vunpack.c.l.b16 %v392
        %v569 = vunpack.c.h.b16 %v392
        %v570 = vunpack.c.l.b16 %v393
        %v571 = vunpack.c.h.b16 %v393
        %v572 = vunpack.c.l.b16 %v394
        %v573 = vunpack.c.h.b16 %v394
        %v574 = vunpack.c.l.b16 %v395
        %v575 = vunpack.c.h.b16 %v395
        %v576 = vunpack.c.l.b16 %v396
        %v577 = vunpack.c.h.b16 %v396
        %v578 = vunpack.c.l.b16 %v397
        %v579 = vunpack.c.h.b16 %v397
        %v580 = vunpack.c.l.b16 %v398
        %v581 = vunpack.c.h.b16 %v398
        %v582 = vunpack.c.l.b16 %v399
        %v583 = vunpack.c.h.b16 %v399
        %v584 = vunpack.c.l.b16 %v400
        %v585 = vunpack.c.h.b16 %v400
        %v586 = vpack.c.b16 %v538, %v522
        %v587 = vpack.c.b16 %v539, %v523
        %v588 = vpack.c.b16 %v540, %v524
        %v589 = vpack.c.b16 %v541, %v525
        %v590 = vpack.c.b16 %v542, %v526
        %v591 = vpack.c.b16 %v543, %v527
        %v592 = vpack.c.b16 %v544, %v528
        %v593 = vpack.c.b16 %v545, %v529
        %v594 = vpack.c.b16 %v546, %v530
        %v595 = vpack.c.b16 %v547, %v531
        %v596 = vpack.c.b16 %v548, %v532
        %v597 = vpack.c.b16 %v549, %v533
        %v598 = vpack.c.b16 %v550, %v534
        %v599 = vpack.c.b16 %v551, %v535
        %v600 = vpack.c.b16 %v552, %v536
        %v601 = vpack.c.b16 %v553, %v537
        %v602 = vpack.c.b16 %v570, %v554
        %v603 = vpack.c.b16 %v571, %v555
        %v604 = vpack.c.b16 %v572, %v556
        %v605 = vpack.c.b16 %v573, %v557
        %v606 = vpack.c.b16 %v574, %v558
        %v607 = vpack.c.b16 %v575, %v559
        %v608 = vpack.c.b16 %v576, %v560
        %v609 = vpack.c.b16 %v577, %v561
        %v610 = vpack.c.b16 %v578, %v562
        %v611 = vpack.c.b16 %v579, %v563
        %v612 = vpack.c.b16 %v580, %v564
        %v613 = vpack.c.b16 %v581, %v565
        %v614 = vpack.c.b16 %v582, %v566
        %v615 = vpack.c.b16 %v583, %v567
        %v616 = vpack.c.b16 %v584, %v568
        %v617 = vpack.c.b16 %v585, %v569
        %vm650 = vcmask 261120
        %v652 = vsel %vm650, %v489, 0
        %654 = vmatprep.subr.bf16.mxu0 0
        %655 = vmatpush1.bf16.msra.mxu0 0
        %656 = vmatprep.subr.bf16.mxu0 0
        %657 = vmatpush1.bf16.msra.mxu0 0
        %658 = vmatprep.subr.bf16.mxu0 0
        %659 = vmatpush1.bf16.msra.mxu0 0
        %660 = vmatprep.subr.bf16.mxu0 0
        %661 = vmatpush1.bf16.msra.mxu0 0
        %662 = vmatprep.subr.bf16.mxu0 0
        %663 = vmatpush1.bf16.msra.mxu0 0
        %664 = vmatprep.subr.bf16.mxu0 0
        %665 = vmatpush1.bf16.msra.mxu0 0
        %666 = vmatprep.subr.bf16.mxu0 %v603
        %667 = vmatpush1.bf16.msra.mxu0 %v602
        %668 = vmatprep.subr.bf16.mxu0 %v587
        %669 = vmatpush1.bf16.msra.mxu0 %v586
        %670 = vmatprep.subr.bf16.mxu0 0
        %671 = vmatpush2.bf16.msra.mxu0 0
        %672 = vmatprep.subr.bf16.mxu0 0
        %673 = vmatpush2.bf16.msra.mxu0 0
        %674 = vmatprep.subr.bf16.mxu0 0
        %675 = vmatpush2.bf16.msra.mxu0 0
        %676 = vmatprep.subr.bf16.mxu0 0
        %677 = vmatpush2.bf16.msra.mxu0 0
        %678 = vmatprep.subr.bf16.mxu0 0
        %679 = vmatpush2.bf16.msra.mxu0 0
        %680 = vmatprep.subr.bf16.mxu0 0
        %681 = vmatpush2.bf16.msra.mxu0 0
        %682 = vmatprep.subr.bf16.mxu0 0
        %683 = vmatpush2.bf16.msra.mxu0 0
        %684 = vmatprep.subr.bf16.mxu0 0
        %685 = vmatpush2.bf16.msra.mxu0 0
        %686 = vmatprep.mubr.bf16.mxu0 0
        %687 = vmatmul.mubr.bf16.gmra.mxu0 %v652
        %v688 = vpop.f32.mrf.mxu0
        %v689 = vadd.f32 %v408, %v688
        %v690 = vpop.f32.mrf.mxu0
        %v691 = vadd.f32 %v412, %v690
        %v692 = vpop.f32.mrf.mxu0
        %v693 = vadd.f32 %v408, %v692
        %v694 = vpop.f32.mrf.mxu0
        %v695 = vadd.f32 %v412, %v694
        %696 = vdwg.mxu0
        %697 = vmatprep.subr.bf16.mxu0 0
        %698 = vmatpush1.bf16.msra.mxu0 0
        %699 = vmatprep.subr.bf16.mxu0 0
        %700 = vmatpush1.bf16.msra.mxu0 0
        %701 = vmatprep.subr.bf16.mxu0 0
        %702 = vmatpush1.bf16.msra.mxu0 0
        %703 = vmatprep.subr.bf16.mxu0 0
        %704 = vmatpush1.bf16.msra.mxu0 0
        %705 = vmatprep.subr.bf16.mxu0 0
        %706 = vmatpush1.bf16.msra.mxu0 0
        %707 = vmatprep.subr.bf16.mxu0 0
        %708 = vmatpush1.bf16.msra.mxu0 0
        %709 = vmatprep.subr.bf16.mxu0 %v605
        %710 = vmatpush1.bf16.msra.mxu0 %v604
        %711 = vmatprep.subr.bf16.mxu0 %v589
        %712 = vmatpush1.bf16.msra.mxu0 %v588
        %713 = vmatprep.subr.bf16.mxu0 0
        %714 = vmatpush2.bf16.msra.mxu0 0
        %715 = vmatprep.subr.bf16.mxu0 0
        %716 = vmatpush2.bf16.msra.mxu0 0
        %717 = vmatprep.subr.bf16.mxu0 0
        %718 = vmatpush2.bf16.msra.mxu0 0
        %719 = vmatprep.subr.bf16.mxu0 0
        %720 = vmatpush2.bf16.msra.mxu0 0
        %721 = vmatprep.subr.bf16.mxu0 0
        %722 = vmatpush2.bf16.msra.mxu0 0
        %723 = vmatprep.subr.bf16.mxu0 0
        %724 = vmatpush2.bf16.msra.mxu0 0
        %725 = vmatprep.subr.bf16.mxu0 0
        %726 = vmatpush2.bf16.msra.mxu0 0
        %727 = vmatprep.subr.bf16.mxu0 0
        %728 = vmatpush2.bf16.msra.mxu0 0
        %729 = vmatprep.mubr.bf16.mxu0 0
        %730 = vmatmul.mubr.bf16.gmra.mxu0 %v652
        %v731 = vpop.f32.mrf.mxu0
        %v732 = vadd.f32 %v416, %v731
        %v733 = vpop.f32.mrf.mxu0
        %v734 = vadd.f32 %v420, %v733
        %v735 = vpop.f32.mrf.mxu0
        %v736 = vadd.f32 %v416, %v735
        %v737 = vpop.f32.mrf.mxu0
        %v738 = vadd.f32 %v420, %v737
        %739 = vdwg.mxu0
        %740 = vmatprep.subr.bf16.mxu0 0
        %741 = vmatpush1.bf16.msra.mxu0 0
        %742 = vmatprep.subr.bf16.mxu0 0
        %743 = vmatpush1.bf16.msra.mxu0 0
        %744 = vmatprep.subr.bf16.mxu0 0
        %745 = vmatpush1.bf16.msra.mxu0 0
        %746 = vmatprep.subr.bf16.mxu0 0
        %747 = vmatpush1.bf16.msra.mxu0 0
        %748 = vmatprep.subr.bf16.mxu0 0
        %749 = vmatpush1.bf16.msra.mxu0 0
        %750 = vmatprep.subr.bf16.mxu0 0
        %751 = vmatpush1.bf16.msra.mxu0 0
        %752 = vmatprep.subr.bf16.mxu0 %v607
        %753 = vmatpush1.bf16.msra.mxu0 %v606
        %754 = vmatprep.subr.bf16.mxu0 %v591
        %755 = vmatpush1.bf16.msra.mxu0 %v590
        %756 = vmatprep.subr.bf16.mxu0 0
        %757 = vmatpush2.bf16.msra.mxu0 0
        %758 = vmatprep.subr.bf16.mxu0 0
        %759 = vmatpush2.bf16.msra.mxu0 0
        %760 = vmatprep.subr.bf16.mxu0 0
        %761 = vmatpush2.bf16.msra.mxu0 0
        %762 = vmatprep.subr.bf16.mxu0 0
        %763 = vmatpush2.bf16.msra.mxu0 0
        %764 = vmatprep.subr.bf16.mxu0 0
        %765 = vmatpush2.bf16.msra.mxu0 0
        %766 = vmatprep.subr.bf16.mxu0 0
        %767 = vmatpush2.bf16.msra.mxu0 0
        %768 = vmatprep.subr.bf16.mxu0 0
        %769 = vmatpush2.bf16.msra.mxu0 0
        %770 = vmatprep.subr.bf16.mxu0 0
        %771 = vmatpush2.bf16.msra.mxu0 0
        %772 = vmatprep.mubr.bf16.mxu0 0
        %773 = vmatmul.mubr.bf16.gmra.mxu0 %v652
        %v774 = vpop.f32.mrf.mxu0
        %v775 = vadd.f32 %v424, %v774
        %v776 = vpop.f32.mrf.mxu0
        %v777 = vadd.f32 %v428, %v776
        %v778 = vpop.f32.mrf.mxu0
        %v779 = vadd.f32 %v424, %v778
        %v780 = vpop.f32.mrf.mxu0
        %v781 = vadd.f32 %v428, %v780
        %782 = vdwg.mxu0
        %783 = vmatprep.subr.bf16.mxu0 0
        %784 = vmatpush1.bf16.msra.mxu0 0
        %785 = vmatprep.subr.bf16.mxu0 0
        %786 = vmatpush1.bf16.msra.mxu0 0
        %787 = vmatprep.subr.bf16.mxu0 0
        %788 = vmatpush1.bf16.msra.mxu0 0
        %789 = vmatprep.subr.bf16.mxu0 0
        %790 = vmatpush1.bf16.msra.mxu0 0
        %791 = vmatprep.subr.bf16.mxu0 0
        %792 = vmatpush1.bf16.msra.mxu0 0
        %793 = vmatprep.subr.bf16.mxu0 0
        %794 = vmatpush1.bf16.msra.mxu0 0
        %795 = vmatprep.subr.bf16.mxu0 %v609
        %796 = vmatpush1.bf16.msra.mxu0 %v608
        %797 = vmatprep.subr.bf16.mxu0 %v593
        %798 = vmatpush1.bf16.msra.mxu0 %v592
        %799 = vmatprep.subr.bf16.mxu0 0
        %800 = vmatpush2.bf16.msra.mxu0 0
        %801 = vmatprep.subr.bf16.mxu0 0
        %802 = vmatpush2.bf16.msra.mxu0 0
        %803 = vmatprep.subr.bf16.mxu0 0
        %804 = vmatpush2.bf16.msra.mxu0 0
        %805 = vmatprep.subr.bf16.mxu0 0
        %806 = vmatpush2.bf16.msra.mxu0 0
        %807 = vmatprep.subr.bf16.mxu0 0
        %808 = vmatpush2.bf16.msra.mxu0 0
        %809 = vmatprep.subr.bf16.mxu0 0
        %810 = vmatpush2.bf16.msra.mxu0 0
        %811 = vmatprep.subr.bf16.mxu0 0
        %812 = vmatpush2.bf16.msra.mxu0 0
        %813 = vmatprep.subr.bf16.mxu0 0
        %814 = vmatpush2.bf16.msra.mxu0 0
        %815 = vmatprep.mubr.bf16.mxu0 0
        %816 = vmatmul.mubr.bf16.gmra.mxu0 %v652
        %v817 = vpop.f32.mrf.mxu0
        %v818 = vadd.f32 %v432, %v817
        %v819 = vpop.f32.mrf.mxu0
        %v820 = vadd.f32 %v436, %v819
        %v821 = vpop.f32.mrf.mxu0
        %v822 = vadd.f32 %v432, %v821
        %v823 = vpop.f32.mrf.mxu0
        %v824 = vadd.f32 %v436, %v823
        %825 = vdwg.mxu0
        %826 = vmatprep.subr.bf16.mxu0 0
        %827 = vmatpush1.bf16.msra.mxu0 0
        %828 = vmatprep.subr.bf16.mxu0 0
        %829 = vmatpush1.bf16.msra.mxu0 0
        %830 = vmatprep.subr.bf16.mxu0 0
        %831 = vmatpush1.bf16.msra.mxu0 0
        %832 = vmatprep.subr.bf16.mxu0 0
        %833 = vmatpush1.bf16.msra.mxu0 0
        %834 = vmatprep.subr.bf16.mxu0 0
        %835 = vmatpush1.bf16.msra.mxu0 0
        %836 = vmatprep.subr.bf16.mxu0 0
        %837 = vmatpush1.bf16.msra.mxu0 0
        %838 = vmatprep.subr.bf16.mxu0 %v611
        %839 = vmatpush1.bf16.msra.mxu0 %v610
        %840 = vmatprep.subr.bf16.mxu0 %v595
        %841 = vmatpush1.bf16.msra.mxu0 %v594
        %842 = vmatprep.subr.bf16.mxu0 0
        %843 = vmatpush2.bf16.msra.mxu0 0
        %844 = vmatprep.subr.bf16.mxu0 0
        %845 = vmatpush2.bf16.msra.mxu0 0
        %846 = vmatprep.subr.bf16.mxu0 0
        %847 = vmatpush2.bf16.msra.mxu0 0
        %848 = vmatprep.subr.bf16.mxu0 0
        %849 = vmatpush2.bf16.msra.mxu0 0
        %850 = vmatprep.subr.bf16.mxu0 0
        %851 = vmatpush2.bf16.msra.mxu0 0
        %852 = vmatprep.subr.bf16.mxu0 0
        %853 = vmatpush2.bf16.msra.mxu0 0
        %854 = vmatprep.subr.bf16.mxu0 0
        %855 = vmatpush2.bf16.msra.mxu0 0
        %856 = vmatprep.subr.bf16.mxu0 0
        %857 = vmatpush2.bf16.msra.mxu0 0
        %858 = vmatprep.mubr.bf16.mxu0 0
        %859 = vmatmul.mubr.bf16.gmra.mxu0 %v652
        %v860 = vpop.f32.mrf.mxu0
        %v861 = vadd.f32 %v440, %v860
        %v862 = vpop.f32.mrf.mxu0
        %v863 = vadd.f32 %v444, %v862
        %v864 = vpop.f32.mrf.mxu0
        %v865 = vadd.f32 %v440, %v864
        %v866 = vpop.f32.mrf.mxu0
        %v867 = vadd.f32 %v444, %v866
        %868 = vdwg.mxu0
        %869 = vmatprep.subr.bf16.mxu0 0
        %870 = vmatpush1.bf16.msra.mxu0 0
        %871 = vmatprep.subr.bf16.mxu0 0
        %872 = vmatpush1.bf16.msra.mxu0 0
        %873 = vmatprep.subr.bf16.mxu0 0
        %874 = vmatpush1.bf16.msra.mxu0 0
        %875 = vmatprep.subr.bf16.mxu0 0
        %876 = vmatpush1.bf16.msra.mxu0 0
        %877 = vmatprep.subr.bf16.mxu0 0
        %878 = vmatpush1.bf16.msra.mxu0 0
        %879 = vmatprep.subr.bf16.mxu0 0
        %880 = vmatpush1.bf16.msra.mxu0 0
        %881 = vmatprep.subr.bf16.mxu0 %v613
        %882 = vmatpush1.bf16.msra.mxu0 %v612
        %883 = vmatprep.subr.bf16.mxu0 %v597
        %884 = vmatpush1.bf16.msra.mxu0 %v596
        %885 = vmatprep.subr.bf16.mxu0 0
        %886 = vmatpush2.bf16.msra.mxu0 0
        %887 = vmatprep.subr.bf16.mxu0 0
        %888 = vmatpush2.bf16.msra.mxu0 0
        %889 = vmatprep.subr.bf16.mxu0 0
        %890 = vmatpush2.bf16.msra.mxu0 0
        %891 = vmatprep.subr.bf16.mxu0 0
        %892 = vmatpush2.bf16.msra.mxu0 0
        %893 = vmatprep.subr.bf16.mxu0 0
        %894 = vmatpush2.bf16.msra.mxu0 0
        %895 = vmatprep.subr.bf16.mxu0 0
        %896 = vmatpush2.bf16.msra.mxu0 0
        %897 = vmatprep.subr.bf16.mxu0 0
        %898 = vmatpush2.bf16.msra.mxu0 0
        %899 = vmatprep.subr.bf16.mxu0 0
        %900 = vmatpush2.bf16.msra.mxu0 0
        %901 = vmatprep.mubr.bf16.mxu0 0
        %902 = vmatmul.mubr.bf16.gmra.mxu0 %v652
        %v903 = vpop.f32.mrf.mxu0
        %v904 = vadd.f32 %v448, %v903
        %v905 = vpop.f32.mrf.mxu0
        %v906 = vadd.f32 %v452, %v905
        %v907 = vpop.f32.mrf.mxu0
        %v908 = vadd.f32 %v448, %v907
        %v909 = vpop.f32.mrf.mxu0
        %v910 = vadd.f32 %v452, %v909
        %911 = vdwg.mxu0
        %912 = vmatprep.subr.bf16.mxu0 0
        %913 = vmatpush1.bf16.msra.mxu0 0
        %914 = vmatprep.subr.bf16.mxu0 0
        %915 = vmatpush1.bf16.msra.mxu0 0
        %916 = vmatprep.subr.bf16.mxu0 0
        %917 = vmatpush1.bf16.msra.mxu0 0
        %918 = vmatprep.subr.bf16.mxu0 0
        %919 = vmatpush1.bf16.msra.mxu0 0
        %920 = vmatprep.subr.bf16.mxu0 0
        %921 = vmatpush1.bf16.msra.mxu0 0
        %922 = vmatprep.subr.bf16.mxu0 0
        %923 = vmatpush1.bf16.msra.mxu0 0
        %924 = vmatprep.subr.bf16.mxu0 %v615
        %925 = vmatpush1.bf16.msra.mxu0 %v614
        %926 = vmatprep.subr.bf16.mxu0 %v599
        %927 = vmatpush1.bf16.msra.mxu0 %v598
        %928 = vmatprep.subr.bf16.mxu0 0
        %929 = vmatpush2.bf16.msra.mxu0 0
        %930 = vmatprep.subr.bf16.mxu0 0
        %931 = vmatpush2.bf16.msra.mxu0 0
        %932 = vmatprep.subr.bf16.mxu0 0
        %933 = vmatpush2.bf16.msra.mxu0 0
        %934 = vmatprep.subr.bf16.mxu0 0
        %935 = vmatpush2.bf16.msra.mxu0 0
        %936 = vmatprep.subr.bf16.mxu0 0
        %937 = vmatpush2.bf16.msra.mxu0 0
        %938 = vmatprep.subr.bf16.mxu0 0
        %939 = vmatpush2.bf16.msra.mxu0 0
        %940 = vmatprep.subr.bf16.mxu0 0
        %941 = vmatpush2.bf16.msra.mxu0 0
        %942 = vmatprep.subr.bf16.mxu0 0
        %943 = vmatpush2.bf16.msra.mxu0 0
        %944 = vmatprep.mubr.bf16.mxu0 0
        %945 = vmatmul.mubr.bf16.gmra.mxu0 %v652
        %v946 = vpop.f32.mrf.mxu0
        %v947 = vadd.f32 %v456, %v946
        %v948 = vpop.f32.mrf.mxu0
        %v949 = vadd.f32 %v460, %v948
        %v950 = vpop.f32.mrf.mxu0
        %v951 = vadd.f32 %v456, %v950
        %v952 = vpop.f32.mrf.mxu0
        %v953 = vadd.f32 %v460, %v952
        %954 = vdwg.mxu0
        %955 = vmatprep.subr.bf16.mxu0 0
        %956 = vmatpush1.bf16.msra.mxu0 0
        %957 = vmatprep.subr.bf16.mxu0 0
        %958 = vmatpush1.bf16.msra.mxu0 0
        %959 = vmatprep.subr.bf16.mxu0 0
        %960 = vmatpush1.bf16.msra.mxu0 0
        %961 = vmatprep.subr.bf16.mxu0 0
        %962 = vmatpush1.bf16.msra.mxu0 0
        %963 = vmatprep.subr.bf16.mxu0 0
        %964 = vmatpush1.bf16.msra.mxu0 0
        %965 = vmatprep.subr.bf16.mxu0 0
        %966 = vmatpush1.bf16.msra.mxu0 0
        %967 = vmatprep.subr.bf16.mxu0 %v617
        %968 = vmatpush1.bf16.msra.mxu0 %v616
        %969 = vmatprep.subr.bf16.mxu0 %v601
        %970 = vmatpush1.bf16.msra.mxu0 %v600
        %971 = vmatprep.subr.bf16.mxu0 0
        %972 = vmatpush2.bf16.msra.mxu0 0
        %973 = vmatprep.subr.bf16.mxu0 0
        %974 = vmatpush2.bf16.msra.mxu0 0
        %975 = vmatprep.subr.bf16.mxu0 0
        %976 = vmatpush2.bf16.msra.mxu0 0
        %977 = vmatprep.subr.bf16.mxu0 0
        %978 = vmatpush2.bf16.msra.mxu0 0
        %979 = vmatprep.subr.bf16.mxu0 0
        %980 = vmatpush2.bf16.msra.mxu0 0
        %981 = vmatprep.subr.bf16.mxu0 0
        %982 = vmatpush2.bf16.msra.mxu0 0
        %983 = vmatprep.subr.bf16.mxu0 0
        %984 = vmatpush2.bf16.msra.mxu0 0
        %985 = vmatprep.subr.bf16.mxu0 0
        %986 = vmatpush2.bf16.msra.mxu0 0
        %987 = vmatprep.mubr.bf16.mxu0 0
        %988 = vmatmul.mubr.bf16.gmra.mxu0 %v652
        %v989 = vpop.f32.mrf.mxu0
        %v990 = vadd.f32 %v464, %v989
        %v991 = vpop.f32.mrf.mxu0
        %v992 = vadd.f32 %v468, %v991
        %v993 = vpop.f32.mrf.mxu0
        %v994 = vadd.f32 %v464, %v993
        %v995 = vpop.f32.mrf.mxu0
        %v996 = vadd.f32 %v468, %v995
        %997 = vdwg.mxu0
        %v998 = vmin.f32 %v689, 0.0
        %v999 = vmin.f32 %v691, 0.0
        %v1000 = vmin.f32 %v732, 0.0
        %v1001 = vmin.f32 %v734, 0.0
        %v1002 = vmin.f32 %v775, 0.0
        %v1003 = vmin.f32 %v777, 0.0
        %v1004 = vmin.f32 %v818, 0.0
        %v1005 = vmin.f32 %v820, 0.0
        %v1006 = vmin.f32 %v861, 0.0
        %v1007 = vmin.f32 %v863, 0.0
        %v1008 = vmin.f32 %v904, 0.0
        %v1009 = vmin.f32 %v906, 0.0
        %v1010 = vmin.f32 %v947, 0.0
        %v1011 = vmin.f32 %v949, 0.0
        %v1012 = vmin.f32 %v990, 0.0
        %v1013 = vmin.f32 %v992, 0.0
        %v1014 = vmin.f32 %v693, 0.0
        %v1015 = vmin.f32 %v695, 0.0
        %v1016 = vmin.f32 %v736, 0.0
        %v1017 = vmin.f32 %v738, 0.0
        %v1018 = vmin.f32 %v779, 0.0
        %v1019 = vmin.f32 %v781, 0.0
        %v1020 = vmin.f32 %v822, 0.0
        %v1021 = vmin.f32 %v824, 0.0
        %v1022 = vmin.f32 %v865, 0.0
        %v1023 = vmin.f32 %v867, 0.0
        %v1024 = vmin.f32 %v908, 0.0
        %v1025 = vmin.f32 %v910, 0.0
        %v1026 = vmin.f32 %v951, 0.0
        %v1027 = vmin.f32 %v953, 0.0
        %v1028 = vmin.f32 %v994, 0.0
        %v1029 = vmin.f32 %v996, 0.0
        %v1030 = vmul.f32 %v998, 1.442695
        %v1031 = vpow.pop %v1030
        %v1032 = vmul.f32 %v999, 1.442695
        %v1033 = vpow.pop %v1032
        %v1034 = vmul.f32 %v1000, 1.442695
        %v1035 = vpow.pop %v1034
        %v1036 = vmul.f32 %v1001, 1.442695
        %v1037 = vpow.pop %v1036
        %v1038 = vmul.f32 %v1002, 1.442695
        %v1039 = vpow.pop %v1038
        %v1040 = vmul.f32 %v1003, 1.442695
        %v1041 = vpow.pop %v1040
        %v1042 = vmul.f32 %v1004, 1.442695
        %v1043 = vpow.pop %v1042
        %v1044 = vmul.f32 %v1005, 1.442695
        %v1045 = vpow.pop %v1044
        %v1046 = vmul.f32 %v1006, 1.442695
        %v1047 = vpow.pop %v1046
        %v1048 = vmul.f32 %v1007, 1.442695
        %v1049 = vpow.pop %v1048
        %v1050 = vmul.f32 %v1008, 1.442695
        %v1051 = vpow.pop %v1050
        %v1052 = vmul.f32 %v1009, 1.442695
        %v1053 = vpow.pop %v1052
        %v1054 = vmul.f32 %v1010, 1.442695
        %v1055 = vpow.pop %v1054
        %v1056 = vmul.f32 %v1011, 1.442695
        %v1057 = vpow.pop %v1056
        %v1058 = vmul.f32 %v1012, 1.442695
        %v1059 = vpow.pop %v1058
        %v1060 = vmul.f32 %v1013, 1.442695
        %v1061 = vpow.pop %v1060
        %v1062 = vmul.f32 %v1014, 1.442695
        %v1063 = vpow.pop %v1062
        %v1064 = vmul.f32 %v1015, 1.442695
        %v1065 = vpow.pop %v1064
        %v1066 = vmul.f32 %v1016, 1.442695
        %v1067 = vpow.pop %v1066
        %v1068 = vmul.f32 %v1017, 1.442695
        %v1069 = vpow.pop %v1068
        %v1070 = vmul.f32 %v1018, 1.442695
        %v1071 = vpow.pop %v1070
        %v1072 = vmul.f32 %v1019, 1.442695
        %v1073 = vpow.pop %v1072
        %v1074 = vmul.f32 %v1020, 1.442695
        %v1075 = vpow.pop %v1074
        %v1076 = vmul.f32 %v1021, 1.442695
        %v1077 = vpow.pop %v1076
        %v1078 = vmul.f32 %v1022, 1.442695
        %v1079 = vpow.pop %v1078
        %v1080 = vmul.f32 %v1023, 1.442695
        %v1081 = vpow.pop %v1080
        %v1082 = vmul.f32 %v1024, 1.442695
        %v1083 = vpow.pop %v1082
        %v1084 = vmul.f32 %v1025, 1.442695
        %v1085 = vpow.pop %v1084
        %v1086 = vmul.f32 %v1026, 1.442695
        %v1087 = vpow.pop %v1086
        %v1088 = vmul.f32 %v1027, 1.442695
        %v1089 = vpow.pop %v1088
        %v1090 = vmul.f32 %v1028, 1.442695
        %v1091 = vpow.pop %v1090
        %v1092 = vmul.f32 %v1029, 1.442695
        %v1093 = vpow.pop %v1092
        %v1094 = vsub.f32 %v1031, 1.0
        %v1095 = vsub.f32 %v1033, 1.0
        %v1096 = vsub.f32 %v1035, 1.0
        %v1097 = vsub.f32 %v1037, 1.0
        %v1098 = vsub.f32 %v1039, 1.0
        %v1099 = vsub.f32 %v1041, 1.0
        %v1100 = vsub.f32 %v1043, 1.0
        %v1101 = vsub.f32 %v1045, 1.0
        %v1102 = vsub.f32 %v1047, 1.0
        %v1103 = vsub.f32 %v1049, 1.0
        %v1104 = vsub.f32 %v1051, 1.0
        %v1105 = vsub.f32 %v1053, 1.0
        %v1106 = vsub.f32 %v1055, 1.0
        %v1107 = vsub.f32 %v1057, 1.0
        %v1108 = vsub.f32 %v1059, 1.0
        %v1109 = vsub.f32 %v1061, 1.0
        %v1110 = vsub.f32 %v1063, 1.0
        %v1111 = vsub.f32 %v1065, 1.0
        %v1112 = vsub.f32 %v1067, 1.0
        %v1113 = vsub.f32 %v1069, 1.0
        %v1114 = vsub.f32 %v1071, 1.0
        %v1115 = vsub.f32 %v1073, 1.0
        %v1116 = vsub.f32 %v1075, 1.0
        %v1117 = vsub.f32 %v1077, 1.0
        %v1118 = vsub.f32 %v1079, 1.0
        %v1119 = vsub.f32 %v1081, 1.0
        %v1120 = vsub.f32 %v1083, 1.0
        %v1121 = vsub.f32 %v1085, 1.0
        %v1122 = vsub.f32 %v1087, 1.0
        %v1123 = vsub.f32 %v1089, 1.0
        %v1124 = vsub.f32 %v1091, 1.0
        %v1125 = vsub.f32 %v1093, 1.0
        %v1126 = vmul.f32 %v1094, 1.6732632
        %v1127 = vmul.f32 %v1095, 1.6732632
        %v1128 = vmul.f32 %v1096, 1.6732632
        %v1129 = vmul.f32 %v1097, 1.6732632
        %v1130 = vmul.f32 %v1098, 1.6732632
        %v1131 = vmul.f32 %v1099, 1.6732632
        %v1132 = vmul.f32 %v1100, 1.6732632
        %v1133 = vmul.f32 %v1101, 1.6732632
        %v1134 = vmul.f32 %v1102, 1.6732632
        %v1135 = vmul.f32 %v1103, 1.6732632
        %v1136 = vmul.f32 %v1104, 1.6732632
        %v1137 = vmul.f32 %v1105, 1.6732632
        %v1138 = vmul.f32 %v1106, 1.6732632
        %v1139 = vmul.f32 %v1107, 1.6732632
        %v1140 = vmul.f32 %v1108, 1.6732632
        %v1141 = vmul.f32 %v1109, 1.6732632
        %v1142 = vmul.f32 %v1110, 1.6732632
        %v1143 = vmul.f32 %v1111, 1.6732632
        %v1144 = vmul.f32 %v1112, 1.6732632
        %v1145 = vmul.f32 %v1113, 1.6732632
        %v1146 = vmul.f32 %v1114, 1.6732632
        %v1147 = vmul.f32 %v1115, 1.6732632
        %v1148 = vmul.f32 %v1116, 1.6732632
        %v1149 = vmul.f32 %v1117, 1.6732632
        %v1150 = vmul.f32 %v1118, 1.6732632
        %v1151 = vmul.f32 %v1119, 1.6732632
        %v1152 = vmul.f32 %v1120, 1.6732632
        %v1153 = vmul.f32 %v1121, 1.6732632
        %v1154 = vmul.f32 %v1122, 1.6732632
        %v1155 = vmul.f32 %v1123, 1.6732632
        %v1156 = vmul.f32 %v1124, 1.6732632
        %v1157 = vmul.f32 %v1125, 1.6732632
        %vm1158 = vcmp.gt.f32.partialorder %v689, 0.0
        %vm1159 = vcmp.gt.f32.partialorder %v691, 0.0
        %vm1160 = vcmp.gt.f32.partialorder %v732, 0.0
        %vm1161 = vcmp.gt.f32.partialorder %v734, 0.0
        %vm1162 = vcmp.gt.f32.partialorder %v775, 0.0
        %vm1163 = vcmp.gt.f32.partialorder %v777, 0.0
        %vm1164 = vcmp.gt.f32.partialorder %v818, 0.0
        %vm1165 = vcmp.gt.f32.partialorder %v820, 0.0
        %vm1166 = vcmp.gt.f32.partialorder %v861, 0.0
        %vm1167 = vcmp.gt.f32.partialorder %v863, 0.0
        %vm1168 = vcmp.gt.f32.partialorder %v904, 0.0
        %vm1169 = vcmp.gt.f32.partialorder %v906, 0.0
        %vm1170 = vcmp.gt.f32.partialorder %v947, 0.0
        %vm1171 = vcmp.gt.f32.partialorder %v949, 0.0
        %vm1172 = vcmp.gt.f32.partialorder %v990, 0.0
        %vm1173 = vcmp.gt.f32.partialorder %v992, 0.0
        %vm1174 = vcmp.gt.f32.partialorder %v693, 0.0
        %vm1175 = vcmp.gt.f32.partialorder %v695, 0.0
        %vm1176 = vcmp.gt.f32.partialorder %v736, 0.0
        %vm1177 = vcmp.gt.f32.partialorder %v738, 0.0
        %vm1178 = vcmp.gt.f32.partialorder %v779, 0.0
        %vm1179 = vcmp.gt.f32.partialorder %v781, 0.0
        %vm1180 = vcmp.gt.f32.partialorder %v822, 0.0
        %vm1181 = vcmp.gt.f32.partialorder %v824, 0.0
        %vm1182 = vcmp.gt.f32.partialorder %v865, 0.0
        %vm1183 = vcmp.gt.f32.partialorder %v867, 0.0
        %vm1184 = vcmp.gt.f32.partialorder %v908, 0.0
        %vm1185 = vcmp.gt.f32.partialorder %v910, 0.0
        %vm1186 = vcmp.gt.f32.partialorder %v951, 0.0
        %vm1187 = vcmp.gt.f32.partialorder %v953, 0.0
        %vm1188 = vcmp.gt.f32.partialorder %v994, 0.0
        %vm1189 = vcmp.gt.f32.partialorder %v996, 0.0
        %v1190 = vsel %vm1158, %v689, %v1126
        %v1191 = vsel %vm1159, %v691, %v1127
        %v1192 = vsel %vm1160, %v732, %v1128
        %v1193 = vsel %vm1161, %v734, %v1129
        %v1194 = vsel %vm1162, %v775, %v1130
        %v1195 = vsel %vm1163, %v777, %v1131
        %v1196 = vsel %vm1164, %v818, %v1132
        %v1197 = vsel %vm1165, %v820, %v1133
        %v1198 = vsel %vm1166, %v861, %v1134
        %v1199 = vsel %vm1167, %v863, %v1135
        %v1200 = vsel %vm1168, %v904, %v1136
        %v1201 = vsel %vm1169, %v906, %v1137
        %v1202 = vsel %vm1170, %v947, %v1138
        %v1203 = vsel %vm1171, %v949, %v1139
        %v1204 = vsel %vm1172, %v990, %v1140
        %v1205 = vsel %vm1173, %v992, %v1141
        %v1206 = vsel %vm1174, %v693, %v1142
        %v1207 = vsel %vm1175, %v695, %v1143
        %v1208 = vsel %vm1176, %v736, %v1144
        %v1209 = vsel %vm1177, %v738, %v1145
        %v1210 = vsel %vm1178, %v779, %v1146
        %v1211 = vsel %vm1179, %v781, %v1147
        %v1212 = vsel %vm1180, %v822, %v1148
        %v1213 = vsel %vm1181, %v824, %v1149
        %v1214 = vsel %vm1182, %v865, %v1150
        %v1215 = vsel %vm1183, %v867, %v1151
        %v1216 = vsel %vm1184, %v908, %v1152
        %v1217 = vsel %vm1185, %v910, %v1153
        %v1218 = vsel %vm1186, %v951, %v1154
        %v1219 = vsel %vm1187, %v953, %v1155
        %v1220 = vsel %vm1188, %v994, %v1156
        %v1221 = vsel %vm1189, %v996, %v1157
        %v1222 = vmul.f32 %v1190, 1.050701
        %v1223 = vmul.f32 %v1191, 1.050701
        %v1224 = vmul.f32 %v1192, 1.050701
        %v1225 = vmul.f32 %v1193, 1.050701
        %v1226 = vmul.f32 %v1194, 1.050701
        %v1227 = vmul.f32 %v1195, 1.050701
        %v1228 = vmul.f32 %v1196, 1.050701
        %v1229 = vmul.f32 %v1197, 1.050701
        %v1230 = vmul.f32 %v1198, 1.050701
        %v1231 = vmul.f32 %v1199, 1.050701
        %v1232 = vmul.f32 %v1200, 1.050701
        %v1233 = vmul.f32 %v1201, 1.050701
        %v1234 = vmul.f32 %v1202, 1.050701
        %v1235 = vmul.f32 %v1203, 1.050701
        %v1236 = vmul.f32 %v1204, 1.050701
        %v1237 = vmul.f32 %v1205, 1.050701
        %v1238 = vmul.f32 %v1206, 1.050701
        %v1239 = vmul.f32 %v1207, 1.050701
        %v1240 = vmul.f32 %v1208, 1.050701
        %v1241 = vmul.f32 %v1209, 1.050701
        %v1242 = vmul.f32 %v1210, 1.050701
        %v1243 = vmul.f32 %v1211, 1.050701
        %v1244 = vmul.f32 %v1212, 1.050701
        %v1245 = vmul.f32 %v1213, 1.050701
        %v1246 = vmul.f32 %v1214, 1.050701
        %v1247 = vmul.f32 %v1215, 1.050701
        %v1248 = vmul.f32 %v1216, 1.050701
        %v1249 = vmul.f32 %v1217, 1.050701
        %v1250 = vmul.f32 %v1218, 1.050701
        %v1251 = vmul.f32 %v1219, 1.050701
        %v1252 = vmul.f32 %v1220, 1.050701
        %v1253 = vmul.f32 %v1221, 1.050701
        %v1254 = vpack.c.bf16 %v1238, %v1222
        %v1255 = vpack.c.bf16 %v1239, %v1223
        %v1256 = vpack.c.bf16 %v1240, %v1224
        %v1257 = vpack.c.bf16 %v1241, %v1225
        %v1258 = vpack.c.bf16 %v1242, %v1226
        %v1259 = vpack.c.bf16 %v1243, %v1227
        %v1260 = vpack.c.bf16 %v1244, %v1228
        %v1261 = vpack.c.bf16 %v1245, %v1229
        %v1262 = vpack.c.bf16 %v1246, %v1230
        %v1263 = vpack.c.bf16 %v1247, %v1231
        %v1264 = vpack.c.bf16 %v1248, %v1232
        %v1265 = vpack.c.bf16 %v1249, %v1233
        %v1266 = vpack.c.bf16 %v1250, %v1234
        %v1267 = vpack.c.bf16 %v1251, %v1235
        %v1268 = vpack.c.bf16 %v1252, %v1236
        %v1269 = vpack.c.bf16 %v1253, %v1237
        %s1270 = smul.u32 0, 2
        %s1271 = smul.addr %s1270, 4
        %s1272 = scalar_lea.vmem [#allocation8], %s1271
        %v1273 = vld [vmem:[%s1272] sm:$0xff]
        %v1274 = vld [vmem:[%s1272 + $0x8] sm:$0xff]
        %v1275 = vld [vmem:[%s1272 + $0x10] sm:$0xff]
        %v1276 = vld [vmem:[%s1272 + $0x18] sm:$0xff]
        %v1277 = vld [vmem:[%s1272 + $0x20] sm:$0xff]
        %v1278 = vld [vmem:[%s1272 + $0x28] sm:$0xff]
        %v1279 = vld [vmem:[%s1272 + $0x30] sm:$0xff]
        %v1280 = vld [vmem:[%s1272 + $0x38] sm:$0xff]
        %v1281 = vld [vmem:[%s1272 + $0x40] sm:$0xff]
        %v1282 = vld [vmem:[%s1272 + $0x48] sm:$0xff]
        %v1283 = vld [vmem:[%s1272 + $0x50] sm:$0xff]
        %v1284 = vld [vmem:[%s1272 + $0x58] sm:$0xff]
        %v1285 = vld [vmem:[%s1272 + $0x60] sm:$0xff]
        %v1286 = vld [vmem:[%s1272 + $0x68] sm:$0xff]
        %v1287 = vld [vmem:[%s1272 + $0x70] sm:$0xff]
        %v1288 = vld [vmem:[%s1272 + $0x78] sm:$0xff]
        %v1289 = vld [vmem:[%s1272 + $0x80] sm:$0xff]
        %v1290 = vld [vmem:[%s1272 + $0x88] sm:$0xff]
        %v1291 = vld [vmem:[%s1272 + $0x90] sm:$0xff]
        %v1292 = vld [vmem:[%s1272 + $0x98] sm:$0xff]
        %v1293 = vld [vmem:[%s1272 + $0xa0] sm:$0xff]
        %v1294 = vld [vmem:[%s1272 + $0xa8] sm:$0xff]
        %v1295 = vld [vmem:[%s1272 + $0xb0] sm:$0xff]
        %v1296 = vld [vmem:[%s1272 + $0xb8] sm:$0xff]
        %v1297 = vld [vmem:[%s1272 + $0xc0] sm:$0xff]
        %v1298 = vld [vmem:[%s1272 + $0xc8] sm:$0xff]
        %v1299 = vld [vmem:[%s1272 + $0xd0] sm:$0xff]
        %v1300 = vld [vmem:[%s1272 + $0xd8] sm:$0xff]
        %v1301 = vld [vmem:[%s1272 + $0xe0] sm:$0xff]
        %v1302 = vld [vmem:[%s1272 + $0xe8] sm:$0xff]
        %v1303 = vld [vmem:[%s1272 + $0xf0] sm:$0xff]
        %v1304 = vld [vmem:[%s1272 + $0xf8] sm:$0xff]
        %v1305 = vld [vmem:[%s1272 + $0x100] sm:$0xff]
        %v1306 = vld [vmem:[%s1272 + $0x108] sm:$0xff]
        %v1307 = vld [vmem:[%s1272 + $0x110] sm:$0xff]
        %v1308 = vld [vmem:[%s1272 + $0x118] sm:$0xff]
        %v1309 = vld [vmem:[%s1272 + $0x120] sm:$0xff]
        %v1310 = vld [vmem:[%s1272 + $0x128] sm:$0xff]
        %v1311 = vld [vmem:[%s1272 + $0x130] sm:$0xff]
        %v1312 = vld [vmem:[%s1272 + $0x138] sm:$0xff]
        %v1313 = vld [vmem:[%s1272 + $0x140] sm:$0xff]
        %v1314 = vld [vmem:[%s1272 + $0x148] sm:$0xff]
        %v1315 = vld [vmem:[%s1272 + $0x150] sm:$0xff]
        %v1316 = vld [vmem:[%s1272 + $0x158] sm:$0xff]
        %v1317 = vld [vmem:[%s1272 + $0x160] sm:$0xff]
        %v1318 = vld [vmem:[%s1272 + $0x168] sm:$0xff]
        %v1319 = vld [vmem:[%s1272 + $0x170] sm:$0xff]
        %v1320 = vld [vmem:[%s1272 + $0x178] sm:$0xff]
        %v1321 = vld [vmem:[%s1272 + $0x180] sm:$0xff]
        %v1322 = vld [vmem:[%s1272 + $0x188] sm:$0xff]
        %v1323 = vld [vmem:[%s1272 + $0x190] sm:$0xff]
        %v1324 = vld [vmem:[%s1272 + $0x198] sm:$0xff]
        %v1325 = vld [vmem:[%s1272 + $0x1a0] sm:$0xff]
        %v1326 = vld [vmem:[%s1272 + $0x1a8] sm:$0xff]
        %v1327 = vld [vmem:[%s1272 + $0x1b0] sm:$0xff]
        %v1328 = vld [vmem:[%s1272 + $0x1b8] sm:$0xff]
        %v1329 = vld [vmem:[%s1272 + $0x1c0] sm:$0xff]
        %v1330 = vld [vmem:[%s1272 + $0x1c8] sm:$0xff]
        %v1331 = vld [vmem:[%s1272 + $0x1d0] sm:$0xff]
        %v1332 = vld [vmem:[%s1272 + $0x1d8] sm:$0xff]
        %v1333 = vld [vmem:[%s1272 + $0x1e0] sm:$0xff]
        %v1334 = vld [vmem:[%s1272 + $0x1e8] sm:$0xff]
        %v1335 = vld [vmem:[%s1272 + $0x1f0] sm:$0xff]
        %v1336 = vld [vmem:[%s1272 + $0x1f8] sm:$0xff]
        %v1337 = vld [vmem:[%s1272 + $0x200] sm:$0xff]
        %v1338 = vld [vmem:[%s1272 + $0x208] sm:$0xff]
        %v1339 = vld [vmem:[%s1272 + $0x210] sm:$0xff]
        %v1340 = vld [vmem:[%s1272 + $0x218] sm:$0xff]
        %v1341 = vld [vmem:[%s1272 + $0x220] sm:$0xff]
        %v1342 = vld [vmem:[%s1272 + $0x228] sm:$0xff]
        %v1343 = vld [vmem:[%s1272 + $0x230] sm:$0xff]
        %v1344 = vld [vmem:[%s1272 + $0x238] sm:$0xff]
        %v1345 = vld [vmem:[%s1272 + $0x240] sm:$0xff]
        %v1346 = vld [vmem:[%s1272 + $0x248] sm:$0xff]
        %v1347 = vld [vmem:[%s1272 + $0x250] sm:$0xff]
        %v1348 = vld [vmem:[%s1272 + $0x258] sm:$0xff]
        %v1349 = vld [vmem:[%s1272 + $0x260] sm:$0xff]
        %v1350 = vld [vmem:[%s1272 + $0x268] sm:$0xff]
        %v1351 = vld [vmem:[%s1272 + $0x270] sm:$0xff]
        %v1352 = vld [vmem:[%s1272 + $0x278] sm:$0xff]
        %v1353 = vld [vmem:[%s1272 + $0x280] sm:$0xff]
        %v1354 = vld [vmem:[%s1272 + $0x288] sm:$0xff]
        %v1355 = vld [vmem:[%s1272 + $0x290] sm:$0xff]
        %v1356 = vld [vmem:[%s1272 + $0x298] sm:$0xff]
        %v1357 = vld [vmem:[%s1272 + $0x2a0] sm:$0xff]
        %v1358 = vld [vmem:[%s1272 + $0x2a8] sm:$0xff]
        %v1359 = vld [vmem:[%s1272 + $0x2b0] sm:$0xff]
        %v1360 = vld [vmem:[%s1272 + $0x2b8] sm:$0xff]
        %v1361 = vld [vmem:[%s1272 + $0x2c0] sm:$0xff]
        %v1362 = vld [vmem:[%s1272 + $0x2c8] sm:$0xff]
        %v1363 = vld [vmem:[%s1272 + $0x2d0] sm:$0xff]
        %v1364 = vld [vmem:[%s1272 + $0x2d8] sm:$0xff]
        %v1365 = vld [vmem:[%s1272 + $0x2e0] sm:$0xff]
        %v1366 = vld [vmem:[%s1272 + $0x2e8] sm:$0xff]
        %v1367 = vld [vmem:[%s1272 + $0x2f0] sm:$0xff]
        %v1368 = vld [vmem:[%s1272 + $0x2f8] sm:$0xff]
        %v1369 = vld [vmem:[%s1272 + $0x300] sm:$0xff]
        %v1370 = vld [vmem:[%s1272 + $0x308] sm:$0xff]
        %v1371 = vld [vmem:[%s1272 + $0x310] sm:$0xff]
        %v1372 = vld [vmem:[%s1272 + $0x318] sm:$0xff]
        %v1373 = vld [vmem:[%s1272 + $0x320] sm:$0xff]
        %v1374 = vld [vmem:[%s1272 + $0x328] sm:$0xff]
        %v1375 = vld [vmem:[%s1272 + $0x330] sm:$0xff]
        %v1376 = vld [vmem:[%s1272 + $0x338] sm:$0xff]
        %v1377 = vld [vmem:[%s1272 + $0x340] sm:$0xff]
        %v1378 = vld [vmem:[%s1272 + $0x348] sm:$0xff]
        %v1379 = vld [vmem:[%s1272 + $0x350] sm:$0xff]
        %v1380 = vld [vmem:[%s1272 + $0x358] sm:$0xff]
        %v1381 = vld [vmem:[%s1272 + $0x360] sm:$0xff]
        %v1382 = vld [vmem:[%s1272 + $0x368] sm:$0xff]
        %v1383 = vld [vmem:[%s1272 + $0x370] sm:$0xff]
        %v1384 = vld [vmem:[%s1272 + $0x378] sm:$0xff]
        %v1385 = vld [vmem:[%s1272 + $0x380] sm:$0xff]
        %v1386 = vld [vmem:[%s1272 + $0x388] sm:$0xff]
        %v1387 = vld [vmem:[%s1272 + $0x390] sm:$0xff]
        %v1388 = vld [vmem:[%s1272 + $0x398] sm:$0xff]
        %v1389 = vld [vmem:[%s1272 + $0x3a0] sm:$0xff]
        %v1390 = vld [vmem:[%s1272 + $0x3a8] sm:$0xff]
        %v1391 = vld [vmem:[%s1272 + $0x3b0] sm:$0xff]
        %v1392 = vld [vmem:[%s1272 + $0x3b8] sm:$0xff]
        %v1393 = vld [vmem:[%s1272 + $0x3c0] sm:$0xff]
        %v1394 = vld [vmem:[%s1272 + $0x3c8] sm:$0xff]
        %v1395 = vld [vmem:[%s1272 + $0x3d0] sm:$0xff]
        %v1396 = vld [vmem:[%s1272 + $0x3d8] sm:$0xff]
        %v1397 = vld [vmem:[%s1272 + $0x3e0] sm:$0xff]
        %v1398 = vld [vmem:[%s1272 + $0x3e8] sm:$0xff]
        %v1399 = vld [vmem:[%s1272 + $0x3f0] sm:$0xff]
        %v1400 = vld [vmem:[%s1272 + $0x3f8] sm:$0xff]
        %v1401 = vld [vmem:[%s1272 + $0x400] sm:$0xff]
        %v1402 = vld [vmem:[%s1272 + $0x408] sm:$0xff]
        %v1403 = vld [vmem:[%s1272 + $0x410] sm:$0xff]
        %v1404 = vld [vmem:[%s1272 + $0x418] sm:$0xff]
        %v1405 = vld [vmem:[%s1272 + $0x420] sm:$0xff]
        %v1406 = vld [vmem:[%s1272 + $0x428] sm:$0xff]
        %v1407 = vld [vmem:[%s1272 + $0x430] sm:$0xff]
        %v1408 = vld [vmem:[%s1272 + $0x438] sm:$0xff]
        %v1409 = vld [vmem:[%s1272 + $0x440] sm:$0xff]
        %v1410 = vld [vmem:[%s1272 + $0x448] sm:$0xff]
        %v1411 = vld [vmem:[%s1272 + $0x450] sm:$0xff]
        %v1412 = vld [vmem:[%s1272 + $0x458] sm:$0xff]
        %v1413 = vld [vmem:[%s1272 + $0x460] sm:$0xff]
        %v1414 = vld [vmem:[%s1272 + $0x468] sm:$0xff]
        %v1415 = vld [vmem:[%s1272 + $0x470] sm:$0xff]
        %v1416 = vld [vmem:[%s1272 + $0x478] sm:$0xff]
        %v1417 = vld [vmem:[%s1272 + $0x480] sm:$0xff]
        %v1418 = vld [vmem:[%s1272 + $0x488] sm:$0xff]
        %v1419 = vld [vmem:[%s1272 + $0x490] sm:$0xff]
        %v1420 = vld [vmem:[%s1272 + $0x498] sm:$0xff]
        %v1421 = vld [vmem:[%s1272 + $0x4a0] sm:$0xff]
        %v1422 = vld [vmem:[%s1272 + $0x4a8] sm:$0xff]
        %v1423 = vld [vmem:[%s1272 + $0x4b0] sm:$0xff]
        %v1424 = vld [vmem:[%s1272 + $0x4b8] sm:$0xff]
        %v1425 = vld [vmem:[%s1272 + $0x4c0] sm:$0xff]
        %v1426 = vld [vmem:[%s1272 + $0x4c8] sm:$0xff]
        %v1427 = vld [vmem:[%s1272 + $0x4d0] sm:$0xff]
        %v1428 = vld [vmem:[%s1272 + $0x4d8] sm:$0xff]
        %v1429 = vld [vmem:[%s1272 + $0x4e0] sm:$0xff]
        %v1430 = vld [vmem:[%s1272 + $0x4e8] sm:$0xff]
        %v1431 = vld [vmem:[%s1272 + $0x4f0] sm:$0xff]
        %v1432 = vld [vmem:[%s1272 + $0x4f8] sm:$0xff]
        %v1433 = vld [vmem:[%s1272 + $0x500] sm:$0xff]
        %v1434 = vld [vmem:[%s1272 + $0x508] sm:$0xff]
        %v1435 = vld [vmem:[%s1272 + $0x510] sm:$0xff]
        %v1436 = vld [vmem:[%s1272 + $0x518] sm:$0xff]
        %v1437 = vld [vmem:[%s1272 + $0x520] sm:$0xff]
        %v1438 = vld [vmem:[%s1272 + $0x528] sm:$0xff]
        %v1439 = vld [vmem:[%s1272 + $0x530] sm:$0xff]
        %v1440 = vld [vmem:[%s1272 + $0x538] sm:$0xff]
        %v1441 = vld [vmem:[%s1272 + $0x540] sm:$0xff]
        %v1442 = vld [vmem:[%s1272 + $0x548] sm:$0xff]
        %v1443 = vld [vmem:[%s1272 + $0x550] sm:$0xff]
        %v1444 = vld [vmem:[%s1272 + $0x558] sm:$0xff]
        %v1445 = vld [vmem:[%s1272 + $0x560] sm:$0xff]
        %v1446 = vld [vmem:[%s1272 + $0x568] sm:$0xff]
        %v1447 = vld [vmem:[%s1272 + $0x570] sm:$0xff]
        %v1448 = vld [vmem:[%s1272 + $0x578] sm:$0xff]
        %v1449 = vld [vmem:[%s1272 + $0x580] sm:$0xff]
        %v1450 = vld [vmem:[%s1272 + $0x588] sm:$0xff]
        %v1451 = vld [vmem:[%s1272 + $0x590] sm:$0xff]
        %v1452 = vld [vmem:[%s1272 + $0x598] sm:$0xff]
        %v1453 = vld [vmem:[%s1272 + $0x5a0] sm:$0xff]
        %v1454 = vld [vmem:[%s1272 + $0x5a8] sm:$0xff]
        %v1455 = vld [vmem:[%s1272 + $0x5b0] sm:$0xff]
        %v1456 = vld [vmem:[%s1272 + $0x5b8] sm:$0xff]
        %v1457 = vld [vmem:[%s1272 + $0x5c0] sm:$0xff]
        %v1458 = vld [vmem:[%s1272 + $0x5c8] sm:$0xff]
        %v1459 = vld [vmem:[%s1272 + $0x5d0] sm:$0xff]
        %v1460 = vld [vmem:[%s1272 + $0x5d8] sm:$0xff]
        %v1461 = vld [vmem:[%s1272 + $0x5e0] sm:$0xff]
        %v1462 = vld [vmem:[%s1272 + $0x5e8] sm:$0xff]
        %v1463 = vld [vmem:[%s1272 + $0x5f0] sm:$0xff]
        %v1464 = vld [vmem:[%s1272 + $0x5f8] sm:$0xff]
        %v1465 = vld [vmem:[%s1272 + $0x600] sm:$0xff]
        %v1466 = vld [vmem:[%s1272 + $0x608] sm:$0xff]
        %v1467 = vld [vmem:[%s1272 + $0x610] sm:$0xff]
        %v1468 = vld [vmem:[%s1272 + $0x618] sm:$0xff]
        %v1469 = vld [vmem:[%s1272 + $0x620] sm:$0xff]
        %v1470 = vld [vmem:[%s1272 + $0x628] sm:$0xff]
        %v1471 = vld [vmem:[%s1272 + $0x630] sm:$0xff]
        %v1472 = vld [vmem:[%s1272 + $0x638] sm:$0xff]
        %v1473 = vld [vmem:[%s1272 + $0x640] sm:$0xff]
        %v1474 = vld [vmem:[%s1272 + $0x648] sm:$0xff]
        %v1475 = vld [vmem:[%s1272 + $0x650] sm:$0xff]
        %v1476 = vld [vmem:[%s1272 + $0x658] sm:$0xff]
        %v1477 = vld [vmem:[%s1272 + $0x660] sm:$0xff]
        %v1478 = vld [vmem:[%s1272 + $0x668] sm:$0xff]
        %v1479 = vld [vmem:[%s1272 + $0x670] sm:$0xff]
        %v1480 = vld [vmem:[%s1272 + $0x678] sm:$0xff]
        %v1481 = vld [vmem:[%s1272 + $0x680] sm:$0xff]
        %v1482 = vld [vmem:[%s1272 + $0x688] sm:$0xff]
        %v1483 = vld [vmem:[%s1272 + $0x690] sm:$0xff]
        %v1484 = vld [vmem:[%s1272 + $0x698] sm:$0xff]
        %v1485 = vld [vmem:[%s1272 + $0x6a0] sm:$0xff]
        %v1486 = vld [vmem:[%s1272 + $0x6a8] sm:$0xff]
        %v1487 = vld [vmem:[%s1272 + $0x6b0] sm:$0xff]
        %v1488 = vld [vmem:[%s1272 + $0x6b8] sm:$0xff]
        %v1489 = vld [vmem:[%s1272 + $0x6c0] sm:$0xff]
        %v1490 = vld [vmem:[%s1272 + $0x6c8] sm:$0xff]
        %v1491 = vld [vmem:[%s1272 + $0x6d0] sm:$0xff]
        %v1492 = vld [vmem:[%s1272 + $0x6d8] sm:$0xff]
        %v1493 = vld [vmem:[%s1272 + $0x6e0] sm:$0xff]
        %v1494 = vld [vmem:[%s1272 + $0x6e8] sm:$0xff]
        %v1495 = vld [vmem:[%s1272 + $0x6f0] sm:$0xff]
        %v1496 = vld [vmem:[%s1272 + $0x6f8] sm:$0xff]
        %v1497 = vld [vmem:[%s1272 + $0x700] sm:$0xff]
        %v1498 = vld [vmem:[%s1272 + $0x708] sm:$0xff]
        %v1499 = vld [vmem:[%s1272 + $0x710] sm:$0xff]
        %v1500 = vld [vmem:[%s1272 + $0x718] sm:$0xff]
        %v1501 = vld [vmem:[%s1272 + $0x720] sm:$0xff]
        %v1502 = vld [vmem:[%s1272 + $0x728] sm:$0xff]
        %v1503 = vld [vmem:[%s1272 + $0x730] sm:$0xff]
        %v1504 = vld [vmem:[%s1272 + $0x738] sm:$0xff]
        %v1505 = vld [vmem:[%s1272 + $0x740] sm:$0xff]
        %v1506 = vld [vmem:[%s1272 + $0x748] sm:$0xff]
        %v1507 = vld [vmem:[%s1272 + $0x750] sm:$0xff]
        %v1508 = vld [vmem:[%s1272 + $0x758] sm:$0xff]
        %v1509 = vld [vmem:[%s1272 + $0x760] sm:$0xff]
        %v1510 = vld [vmem:[%s1272 + $0x768] sm:$0xff]
        %v1511 = vld [vmem:[%s1272 + $0x770] sm:$0xff]
        %v1512 = vld [vmem:[%s1272 + $0x778] sm:$0xff]
        %v1513 = vld [vmem:[%s1272 + $0x780] sm:$0xff]
        %v1514 = vld [vmem:[%s1272 + $0x788] sm:$0xff]
        %v1515 = vld [vmem:[%s1272 + $0x790] sm:$0xff]
        %v1516 = vld [vmem:[%s1272 + $0x798] sm:$0xff]
        %v1517 = vld [vmem:[%s1272 + $0x7a0] sm:$0xff]
        %v1518 = vld [vmem:[%s1272 + $0x7a8] sm:$0xff]
        %v1519 = vld [vmem:[%s1272 + $0x7b0] sm:$0xff]
        %v1520 = vld [vmem:[%s1272 + $0x7b8] sm:$0xff]
        %v1521 = vld [vmem:[%s1272 + $0x7c0] sm:$0xff]
        %v1522 = vld [vmem:[%s1272 + $0x7c8] sm:$0xff]
        %v1523 = vld [vmem:[%s1272 + $0x7d0] sm:$0xff]
        %v1524 = vld [vmem:[%s1272 + $0x7d8] sm:$0xff]
        %v1525 = vld [vmem:[%s1272 + $0x7e0] sm:$0xff]
        %v1526 = vld [vmem:[%s1272 + $0x7e8] sm:$0xff]
        %v1527 = vld [vmem:[%s1272 + $0x7f0] sm:$0xff]
        %v1528 = vld [vmem:[%s1272 + $0x7f8] sm:$0xff]
        %s1529 = scalar_lea.vmem [#allocation5], 64
        %v1530 = vld [vmem:[%s1529] sm:$0xff]
        %v1531 = vld [vmem:[%s1529 + $0x8] sm:$0xff]
        %v1532 = vld [vmem:[%s1529 + $0x10] sm:$0xff]
        %v1533 = vld [vmem:[%s1529 + $0x18] sm:$0xff]
        %v1534 = vld [vmem:[%s1529 + $0x20] sm:$0xff]
        %v1535 = vld [vmem:[%s1529 + $0x28] sm:$0xff]
        %v1536 = vld [vmem:[%s1529 + $0x30] sm:$0xff]
        %v1537 = vld [vmem:[%s1529 + $0x38] sm:$0xff]
        %v1538 = vld [vmem:[%s1529 + $0xc0] sm:$0xff]
        %v1539 = vld [vmem:[%s1529 + $0xc8] sm:$0xff]
        %v1540 = vld [vmem:[%s1529 + $0xd0] sm:$0xff]
        %v1541 = vld [vmem:[%s1529 + $0xd8] sm:$0xff]
        %v1542 = vld [vmem:[%s1529 + $0xe0] sm:$0xff]
        %v1543 = vld [vmem:[%s1529 + $0xe8] sm:$0xff]
        %v1544 = vld [vmem:[%s1529 + $0xf0] sm:$0xff]
        %v1545 = vld [vmem:[%s1529 + $0xf8] sm:$0xff]
        %v1546 = vld [vmem:[%s1529 + $0x180] sm:$0xff]
        %v1547 = vld [vmem:[%s1529 + $0x188] sm:$0xff]
        %v1548 = vld [vmem:[%s1529 + $0x190] sm:$0xff]
        %v1549 = vld [vmem:[%s1529 + $0x198] sm:$0xff]
        %v1550 = vld [vmem:[%s1529 + $0x1a0] sm:$0xff]
        %v1551 = vld [vmem:[%s1529 + $0x1a8] sm:$0xff]
        %v1552 = vld [vmem:[%s1529 + $0x1b0] sm:$0xff]
        %v1553 = vld [vmem:[%s1529 + $0x1b8] sm:$0xff]
        %v1554 = vld [vmem:[%s1529 + $0x240] sm:$0xff]
        %v1555 = vld [vmem:[%s1529 + $0x248] sm:$0xff]
        %v1556 = vld [vmem:[%s1529 + $0x250] sm:$0xff]
        %v1557 = vld [vmem:[%s1529 + $0x258] sm:$0xff]
        %v1558 = vld [vmem:[%s1529 + $0x260] sm:$0xff]
        %v1559 = vld [vmem:[%s1529 + $0x268] sm:$0xff]
        %v1560 = vld [vmem:[%s1529 + $0x270] sm:$0xff]
        %v1561 = vld [vmem:[%s1529 + $0x278] sm:$0xff]
        %s1562 = scalar_lea.vmem [#allocation7], 16
        %v1563 = vld [vmem:[%s1562] sm:$0xff]
        %v1564 = vld [vmem:[%s1562 + $0x8] sm:$0xff]
        %v1567 = vlaneseq
        %v1568 = vshrl.u32 %v1567, 7
        %v1569 = vsub.s32 0, %v1568
        %v1570 = vrot.slane %v1563, %v1569
        %v1571 = vlaneseq
        %v1572 = vshrl.u32 %v1571, 7
        %v1573 = vsub.s32 1, %v1572
        %v1574 = vrot.slane %v1563, %v1573
        %v1575 = vlaneseq
        %v1576 = vshrl.u32 %v1575, 7
        %v1577 = vsub.s32 2, %v1576
        %v1578 = vrot.slane %v1563, %v1577
        %v1579 = vlaneseq
        %v1580 = vshrl.u32 %v1579, 7
        %v1581 = vsub.s32 3, %v1580
        %v1582 = vrot.slane %v1563, %v1581
        %v1583 = vlaneseq
        %v1584 = vshrl.u32 %v1583, 7
        %v1585 = vsub.s32 4, %v1584
        %v1586 = vrot.slane %v1563, %v1585
        %v1587 = vlaneseq
        %v1588 = vshrl.u32 %v1587, 7
        %v1589 = vsub.s32 5, %v1588
        %v1590 = vrot.slane %v1563, %v1589
        %v1591 = vlaneseq
        %v1592 = vshrl.u32 %v1591, 7
        %v1593 = vsub.s32 6, %v1592
        %v1594 = vrot.slane %v1563, %v1593
        %v1595 = vlaneseq
        %v1596 = vshrl.u32 %v1595, 7
        %v1597 = vsub.s32 7, %v1596
        %v1598 = vrot.slane %v1563, %v1597
        %v1599 = vlaneseq
        %v1600 = vshrl.u32 %v1599, 7
        %v1601 = vsub.s32 0, %v1600
        %v1602 = vrot.slane %v1564, %v1601
        %v1603 = vlaneseq
        %v1604 = vshrl.u32 %v1603, 7
        %v1605 = vsub.s32 1, %v1604
        %v1606 = vrot.slane %v1564, %v1605
        %v1607 = vlaneseq
        %v1608 = vshrl.u32 %v1607, 7
        %v1609 = vsub.s32 2, %v1608
        %v1610 = vrot.slane %v1564, %v1609
        %v1611 = vlaneseq
        %v1612 = vshrl.u32 %v1611, 7
        %v1613 = vsub.s32 3, %v1612
        %v1614 = vrot.slane %v1564, %v1613
        %v1615 = vlaneseq
        %v1616 = vshrl.u32 %v1615, 7
        %v1617 = vsub.s32 4, %v1616
        %v1618 = vrot.slane %v1564, %v1617
        %v1619 = vlaneseq
        %v1620 = vshrl.u32 %v1619, 7
        %v1621 = vsub.s32 5, %v1620
        %v1622 = vrot.slane %v1564, %v1621
        %v1623 = vlaneseq
        %v1624 = vshrl.u32 %v1623, 7
        %v1625 = vsub.s32 6, %v1624
        %v1626 = vrot.slane %v1564, %v1625
        %v1627 = vlaneseq
        %v1628 = vshrl.u32 %v1627, 7
        %v1629 = vsub.s32 7, %v1628
        %v1630 = vrot.slane %v1564, %v1629
        %v1679 = vunpack.c.l.b16 %v1530
        %v1680 = vunpack.c.h.b16 %v1530
        %v1681 = vunpack.c.l.b16 %v1531
        %v1682 = vunpack.c.h.b16 %v1531
        %v1683 = vunpack.c.l.b16 %v1532
        %v1684 = vunpack.c.h.b16 %v1532
        %v1685 = vunpack.c.l.b16 %v1533
        %v1686 = vunpack.c.h.b16 %v1533
        %v1687 = vunpack.c.l.b16 %v1534
        %v1688 = vunpack.c.h.b16 %v1534
        %v1689 = vunpack.c.l.b16 %v1535
        %v1690 = vunpack.c.h.b16 %v1535
        %v1691 = vunpack.c.l.b16 %v1536
        %v1692 = vunpack.c.h.b16 %v1536
        %v1693 = vunpack.c.l.b16 %v1537
        %v1694 = vunpack.c.h.b16 %v1537
        %v1695 = vunpack.c.l.b16 %v1538
        %v1696 = vunpack.c.h.b16 %v1538
        %v1697 = vunpack.c.l.b16 %v1539
        %v1698 = vunpack.c.h.b16 %v1539
        %v1699 = vunpack.c.l.b16 %v1540
        %v1700 = vunpack.c.h.b16 %v1540
        %v1701 = vunpack.c.l.b16 %v1541
        %v1702 = vunpack.c.h.b16 %v1541
        %v1703 = vunpack.c.l.b16 %v1542
        %v1704 = vunpack.c.h.b16 %v1542
        %v1705 = vunpack.c.l.b16 %v1543
        %v1706 = vunpack.c.h.b16 %v1543
        %v1707 = vunpack.c.l.b16 %v1544
        %v1708 = vunpack.c.h.b16 %v1544
        %v1709 = vunpack.c.l.b16 %v1545
        %v1710 = vunpack.c.h.b16 %v1545
        %v1711 = vunpack.c.l.b16 %v1546
        %v1712 = vunpack.c.h.b16 %v1546
        %v1713 = vunpack.c.l.b16 %v1547
        %v1714 = vunpack.c.h.b16 %v1547
        %v1715 = vunpack.c.l.b16 %v1548
        %v1716 = vunpack.c.h.b16 %v1548
        %v1717 = vunpack.c.l.b16 %v1549
        %v1718 = vunpack.c.h.b16 %v1549
        %v1719 = vunpack.c.l.b16 %v1550
        %v1720 = vunpack.c.h.b16 %v1550
        %v1721 = vunpack.c.l.b16 %v1551
        %v1722 = vunpack.c.h.b16 %v1551
        %v1723 = vunpack.c.l.b16 %v1552
        %v1724 = vunpack.c.h.b16 %v1552
        %v1725 = vunpack.c.l.b16 %v1553
        %v1726 = vunpack.c.h.b16 %v1553
        %v1727 = vunpack.c.l.b16 %v1554
        %v1728 = vunpack.c.h.b16 %v1554
        %v1729 = vunpack.c.l.b16 %v1555
        %v1730 = vunpack.c.h.b16 %v1555
        %v1731 = vunpack.c.l.b16 %v1556
        %v1732 = vunpack.c.h.b16 %v1556
        %v1733 = vunpack.c.l.b16 %v1557
        %v1734 = vunpack.c.h.b16 %v1557
        %v1735 = vunpack.c.l.b16 %v1558
        %v1736 = vunpack.c.h.b16 %v1558
        %v1737 = vunpack.c.l.b16 %v1559
        %v1738 = vunpack.c.h.b16 %v1559
        %v1739 = vunpack.c.l.b16 %v1560
        %v1740 = vunpack.c.h.b16 %v1560
        %v1741 = vunpack.c.l.b16 %v1561
        %v1742 = vunpack.c.h.b16 %v1561
        %v1743 = vpack.c.b16 %v1695, %v1679
        %v1744 = vpack.c.b16 %v1696, %v1680
        %v1745 = vpack.c.b16 %v1697, %v1681
        %v1746 = vpack.c.b16 %v1698, %v1682
        %v1747 = vpack.c.b16 %v1699, %v1683
        %v1748 = vpack.c.b16 %v1700, %v1684
        %v1749 = vpack.c.b16 %v1701, %v1685
        %v1750 = vpack.c.b16 %v1702, %v1686
        %v1751 = vpack.c.b16 %v1703, %v1687
        %v1752 = vpack.c.b16 %v1704, %v1688
        %v1753 = vpack.c.b16 %v1705, %v1689
        %v1754 = vpack.c.b16 %v1706, %v1690
        %v1755 = vpack.c.b16 %v1707, %v1691
        %v1756 = vpack.c.b16 %v1708, %v1692
        %v1757 = vpack.c.b16 %v1709, %v1693
        %v1758 = vpack.c.b16 %v1710, %v1694
        %v1759 = vpack.c.b16 %v1727, %v1711
        %v1760 = vpack.c.b16 %v1728, %v1712
        %v1761 = vpack.c.b16 %v1729, %v1713
        %v1762 = vpack.c.b16 %v1730, %v1714
        %v1763 = vpack.c.b16 %v1731, %v1715
        %v1764 = vpack.c.b16 %v1732, %v1716
        %v1765 = vpack.c.b16 %v1733, %v1717
        %v1766 = vpack.c.b16 %v1734, %v1718
        %v1767 = vpack.c.b16 %v1735, %v1719
        %v1768 = vpack.c.b16 %v1736, %v1720
        %v1769 = vpack.c.b16 %v1737, %v1721
        %v1770 = vpack.c.b16 %v1738, %v1722
        %v1771 = vpack.c.b16 %v1739, %v1723
        %v1772 = vpack.c.b16 %v1740, %v1724
        %v1773 = vpack.c.b16 %v1741, %v1725
        %v1774 = vpack.c.b16 %v1742, %v1726
        %1807 = vmatprep.subr.bf16.mxu0 0
        %1808 = vmatpush1.bf16.msra.mxu0 0
        %1809 = vmatprep.subr.bf16.mxu0 0
        %1810 = vmatpush1.bf16.msra.mxu0 0
        %1811 = vmatprep.subr.bf16.mxu0 0
        %1812 = vmatpush1.bf16.msra.mxu0 0
        %1813 = vmatprep.subr.bf16.mxu0 0
        %1814 = vmatpush1.bf16.msra.mxu0 0
        %1815 = vmatprep.subr.bf16.mxu0 0
        %1816 = vmatpush1.bf16.msra.mxu0 0
        %1817 = vmatprep.subr.bf16.mxu0 0
        %1818 = vmatpush1.bf16.msra.mxu0 0
        %1819 = vmatprep.subr.bf16.mxu0 %v1760
        %1820 = vmatpush1.bf16.msra.mxu0 %v1759
        %1821 = vmatprep.subr.bf16.mxu0 %v1744
        %1822 = vmatpush1.bf16.msra.mxu0 %v1743
        %1823 = vmatprep.subr.bf16.mxu0 0
        %1824 = vmatpush2.bf16.msra.mxu0 0
        %1825 = vmatprep.subr.bf16.mxu0 0
        %1826 = vmatpush2.bf16.msra.mxu0 0
        %1827 = vmatprep.subr.bf16.mxu0 0
        %1828 = vmatpush2.bf16.msra.mxu0 0
        %1829 = vmatprep.subr.bf16.mxu0 0
        %1830 = vmatpush2.bf16.msra.mxu0 0
        %1831 = vmatprep.subr.bf16.mxu0 0
        %1832 = vmatpush2.bf16.msra.mxu0 0
        %1833 = vmatprep.subr.bf16.mxu0 0
        %1834 = vmatpush2.bf16.msra.mxu0 0
        %1835 = vmatprep.subr.bf16.mxu0 0
        %1836 = vmatpush2.bf16.msra.mxu0 0
        %1837 = vmatprep.subr.bf16.mxu0 0
        %1838 = vmatpush2.bf16.msra.mxu0 0
        %1839 = vmatprep.mubr.bf16.mxu0 0
        %1840 = vmatmul.mubr.bf16.gmra.mxu0 %v652
        %v1841 = vpop.f32.mrf.mxu0
        %v1842 = vadd.f32 %v1570, %v1841
        %v1843 = vpop.f32.mrf.mxu0
        %v1844 = vadd.f32 %v1574, %v1843
        %v1845 = vpop.f32.mrf.mxu0
        %v1846 = vadd.f32 %v1570, %v1845
        %v1847 = vpop.f32.mrf.mxu0
        %v1848 = vadd.f32 %v1574, %v1847
        %1849 = vdwg.mxu0
        %1850 = vmatprep.subr.bf16.mxu0 0
        %1851 = vmatpush1.bf16.msra.mxu0 0
        %1852 = vmatprep.subr.bf16.mxu0 0
        %1853 = vmatpush1.bf16.msra.mxu0 0
        %1854 = vmatprep.subr.bf16.mxu0 0
        %1855 = vmatpush1.bf16.msra.mxu0 0
        %1856 = vmatprep.subr.bf16.mxu0 0
        %1857 = vmatpush1.bf16.msra.mxu0 0
        %1858 = vmatprep.subr.bf16.mxu0 0
        %1859 = vmatpush1.bf16.msra.mxu0 0
        %1860 = vmatprep.subr.bf16.mxu0 0
        %1861 = vmatpush1.bf16.msra.mxu0 0
        %1862 = vmatprep.subr.bf16.mxu0 %v1762
        %1863 = vmatpush1.bf16.msra.mxu0 %v1761
        %1864 = vmatprep.subr.bf16.mxu0 %v1746
        %1865 = vmatpush1.bf16.msra.mxu0 %v1745
        %1866 = vmatprep.subr.bf16.mxu0 0
        %1867 = vmatpush2.bf16.msra.mxu0 0
        %1868 = vmatprep.subr.bf16.mxu0 0
        %1869 = vmatpush2.bf16.msra.mxu0 0
        %1870 = vmatprep.subr.bf16.mxu0 0
        %1871 = vmatpush2.bf16.msra.mxu0 0
        %1872 = vmatprep.subr.bf16.mxu0 0
        %1873 = vmatpush2.bf16.msra.mxu0 0
        %1874 = vmatprep.subr.bf16.mxu0 0
        %1875 = vmatpush2.bf16.msra.mxu0 0
        %1876 = vmatprep.subr.bf16.mxu0 0
        %1877 = vmatpush2.bf16.msra.mxu0 0
        %1878 = vmatprep.subr.bf16.mxu0 0
        %1879 = vmatpush2.bf16.msra.mxu0 0
        %1880 = vmatprep.subr.bf16.mxu0 0
        %1881 = vmatpush2.bf16.msra.mxu0 0
        %1882 = vmatprep.mubr.bf16.mxu0 0
        %1883 = vmatmul.mubr.bf16.gmra.mxu0 %v652
        %v1884 = vpop.f32.mrf.mxu0
        %v1885 = vadd.f32 %v1578, %v1884
        %v1886 = vpop.f32.mrf.mxu0
        %v1887 = vadd.f32 %v1582, %v1886
        %v1888 = vpop.f32.mrf.mxu0
        %v1889 = vadd.f32 %v1578, %v1888
        %v1890 = vpop.f32.mrf.mxu0
        %v1891 = vadd.f32 %v1582, %v1890
        %1892 = vdwg.mxu0
        %1893 = vmatprep.subr.bf16.mxu0 0
        %1894 = vmatpush1.bf16.msra.mxu0 0
        %1895 = vmatprep.subr.bf16.mxu0 0
        %1896 = vmatpush1.bf16.msra.mxu0 0
        %1897 = vmatprep.subr.bf16.mxu0 0
        %1898 = vmatpush1.bf16.msra.mxu0 0
        %1899 = vmatprep.subr.bf16.mxu0 0
        %1900 = vmatpush1.bf16.msra.mxu0 0
        %1901 = vmatprep.subr.bf16.mxu0 0
        %1902 = vmatpush1.bf16.msra.mxu0 0
        %1903 = vmatprep.subr.bf16.mxu0 0
        %1904 = vmatpush1.bf16.msra.mxu0 0
        %1905 = vmatprep.subr.bf16.mxu0 %v1764
        %1906 = vmatpush1.bf16.msra.mxu0 %v1763
        %1907 = vmatprep.subr.bf16.mxu0 %v1748
        %1908 = vmatpush1.bf16.msra.mxu0 %v1747
        %1909 = vmatprep.subr.bf16.mxu0 0
        %1910 = vmatpush2.bf16.msra.mxu0 0
        %1911 = vmatprep.subr.bf16.mxu0 0
        %1912 = vmatpush2.bf16.msra.mxu0 0
        %1913 = vmatprep.subr.bf16.mxu0 0
        %1914 = vmatpush2.bf16.msra.mxu0 0
        %1915 = vmatprep.subr.bf16.mxu0 0
        %1916 = vmatpush2.bf16.msra.mxu0 0
        %1917 = vmatprep.subr.bf16.mxu0 0
        %1918 = vmatpush2.bf16.msra.mxu0 0
        %1919 = vmatprep.subr.bf16.mxu0 0
        %1920 = vmatpush2.bf16.msra.mxu0 0
        %1921 = vmatprep.subr.bf16.mxu0 0
        %1922 = vmatpush2.bf16.msra.mxu0 0
        %1923 = vmatprep.subr.bf16.mxu0 0
        %1924 = vmatpush2.bf16.msra.mxu0 0
        %1925 = vmatprep.mubr.bf16.mxu0 0
        %1926 = vmatmul.mubr.bf16.gmra.mxu0 %v652
        %v1927 = vpop.f32.mrf.mxu0
        %v1928 = vadd.f32 %v1586, %v1927
        %v1929 = vpop.f32.mrf.mxu0
        %v1930 = vadd.f32 %v1590, %v1929
        %v1931 = vpop.f32.mrf.mxu0
        %v1932 = vadd.f32 %v1586, %v1931
        %v1933 = vpop.f32.mrf.mxu0
        %v1934 = vadd.f32 %v1590, %v1933
        %1935 = vdwg.mxu0
        %1936 = vmatprep.subr.bf16.mxu0 0
        %1937 = vmatpush1.bf16.msra.mxu0 0
        %1938 = vmatprep.subr.bf16.mxu0 0
        %1939 = vmatpush1.bf16.msra.mxu0 0
        %1940 = vmatprep.subr.bf16.mxu0 0
        %1941 = vmatpush1.bf16.msra.mxu0 0
        %1942 = vmatprep.subr.bf16.mxu0 0
        %1943 = vmatpush1.bf16.msra.mxu0 0
        %1944 = vmatprep.subr.bf16.mxu0 0
        %1945 = vmatpush1.bf16.msra.mxu0 0
        %1946 = vmatprep.subr.bf16.mxu0 0
        %1947 = vmatpush1.bf16.msra.mxu0 0
        %1948 = vmatprep.subr.bf16.mxu0 %v1766
        %1949 = vmatpush1.bf16.msra.mxu0 %v1765
        %1950 = vmatprep.subr.bf16.mxu0 %v1750
        %1951 = vmatpush1.bf16.msra.mxu0 %v1749
        %1952 = vmatprep.subr.bf16.mxu0 0
        %1953 = vmatpush2.bf16.msra.mxu0 0
        %1954 = vmatprep.subr.bf16.mxu0 0
        %1955 = vmatpush2.bf16.msra.mxu0 0
        %1956 = vmatprep.subr.bf16.mxu0 0
        %1957 = vmatpush2.bf16.msra.mxu0 0
        %1958 = vmatprep.subr.bf16.mxu0 0
        %1959 = vmatpush2.bf16.msra.mxu0 0
        %1960 = vmatprep.subr.bf16.mxu0 0
        %1961 = vmatpush2.bf16.msra.mxu0 0
        %1962 = vmatprep.subr.bf16.mxu0 0
        %1963 = vmatpush2.bf16.msra.mxu0 0
        %1964 = vmatprep.subr.bf16.mxu0 0
        %1965 = vmatpush2.bf16.msra.mxu0 0
        %1966 = vmatprep.subr.bf16.mxu0 0
        %1967 = vmatpush2.bf16.msra.mxu0 0
        %1968 = vmatprep.mubr.bf16.mxu0 0
        %1969 = vmatmul.mubr.bf16.gmra.mxu0 %v652
        %v1970 = vpop.f32.mrf.mxu0
        %v1971 = vadd.f32 %v1594, %v1970
        %v1972 = vpop.f32.mrf.mxu0
        %v1973 = vadd.f32 %v1598, %v1972
        %v1974 = vpop.f32.mrf.mxu0
        %v1975 = vadd.f32 %v1594, %v1974
        %v1976 = vpop.f32.mrf.mxu0
        %v1977 = vadd.f32 %v1598, %v1976
        %1978 = vdwg.mxu0
        %1979 = vmatprep.subr.bf16.mxu0 0
        %1980 = vmatpush1.bf16.msra.mxu0 0
        %1981 = vmatprep.subr.bf16.mxu0 0
        %1982 = vmatpush1.bf16.msra.mxu0 0
        %1983 = vmatprep.subr.bf16.mxu0 0
        %1984 = vmatpush1.bf16.msra.mxu0 0
        %1985 = vmatprep.subr.bf16.mxu0 0
        %1986 = vmatpush1.bf16.msra.mxu0 0
        %1987 = vmatprep.subr.bf16.mxu0 0
        %1988 = vmatpush1.bf16.msra.mxu0 0
        %1989 = vmatprep.subr.bf16.mxu0 0
        %1990 = vmatpush1.bf16.msra.mxu0 0
        %1991 = vmatprep.subr.bf16.mxu0 %v1768
        %1992 = vmatpush1.bf16.msra.mxu0 %v1767
        %1993 = vmatprep.subr.bf16.mxu0 %v1752
        %1994 = vmatpush1.bf16.msra.mxu0 %v1751
        %1995 = vmatprep.subr.bf16.mxu0 0
        %1996 = vmatpush2.bf16.msra.mxu0 0
        %1997 = vmatprep.subr.bf16.mxu0 0
        %1998 = vmatpush2.bf16.msra.mxu0 0
        %1999 = vmatprep.subr.bf16.mxu0 0
        %2000 = vmatpush2.bf16.msra.mxu0 0
        %2001 = vmatprep.subr.bf16.mxu0 0
        %2002 = vmatpush2.bf16.msra.mxu0 0
        %2003 = vmatprep.subr.bf16.mxu0 0
        %2004 = vmatpush2.bf16.msra.mxu0 0
        %2005 = vmatprep.subr.bf16.mxu0 0
        %2006 = vmatpush2.bf16.msra.mxu0 0
        %2007 = vmatprep.subr.bf16.mxu0 0
        %2008 = vmatpush2.bf16.msra.mxu0 0
        %2009 = vmatprep.subr.bf16.mxu0 0
        %2010 = vmatpush2.bf16.msra.mxu0 0
        %2011 = vmatprep.mubr.bf16.mxu0 0
        %2012 = vmatmul.mubr.bf16.gmra.mxu0 %v652
        %v2013 = vpop.f32.mrf.mxu0
        %v2014 = vadd.f32 %v1602, %v2013
        %v2015 = vpop.f32.mrf.mxu0
        %v2016 = vadd.f32 %v1606, %v2015
        %v2017 = vpop.f32.mrf.mxu0
        %v2018 = vadd.f32 %v1602, %v2017
        %v2019 = vpop.f32.mrf.mxu0
        %v2020 = vadd.f32 %v1606, %v2019
        %2021 = vdwg.mxu0
        %2022 = vmatprep.subr.bf16.mxu0 0
        %2023 = vmatpush1.bf16.msra.mxu0 0
        %2024 = vmatprep.subr.bf16.mxu0 0
        %2025 = vmatpush1.bf16.msra.mxu0 0
        %2026 = vmatprep.subr.bf16.mxu0 0
        %2027 = vmatpush1.bf16.msra.mxu0 0
        %2028 = vmatprep.subr.bf16.mxu0 0
        %2029 = vmatpush1.bf16.msra.mxu0 0
        %2030 = vmatprep.subr.bf16.mxu0 0
        %2031 = vmatpush1.bf16.msra.mxu0 0
        %2032 = vmatprep.subr.bf16.mxu0 0
        %2033 = vmatpush1.bf16.msra.mxu0 0
        %2034 = vmatprep.subr.bf16.mxu0 %v1770
        %2035 = vmatpush1.bf16.msra.mxu0 %v1769
        %2036 = vmatprep.subr.bf16.mxu0 %v1754
        %2037 = vmatpush1.bf16.msra.mxu0 %v1753
        %2038 = vmatprep.subr.bf16.mxu0 0
        %2039 = vmatpush2.bf16.msra.mxu0 0
        %2040 = vmatprep.subr.bf16.mxu0 0
        %2041 = vmatpush2.bf16.msra.mxu0 0
        %2042 = vmatprep.subr.bf16.mxu0 0
        %2043 = vmatpush2.bf16.msra.mxu0 0
        %2044 = vmatprep.subr.bf16.mxu0 0
        %2045 = vmatpush2.bf16.msra.mxu0 0
        %2046 = vmatprep.subr.bf16.mxu0 0
        %2047 = vmatpush2.bf16.msra.mxu0 0
        %2048 = vmatprep.subr.bf16.mxu0 0
        %2049 = vmatpush2.bf16.msra.mxu0 0
        %2050 = vmatprep.subr.bf16.mxu0 0
        %2051 = vmatpush2.bf16.msra.mxu0 0
        %2052 = vmatprep.subr.bf16.mxu0 0
        %2053 = vmatpush2.bf16.msra.mxu0 0
        %2054 = vmatprep.mubr.bf16.mxu0 0
        %2055 = vmatmul.mubr.bf16.gmra.mxu0 %v652
        %v2056 = vpop.f32.mrf.mxu0
        %v2057 = vadd.f32 %v1610, %v2056
        %v2058 = vpop.f32.mrf.mxu0
        %v2059 = vadd.f32 %v1614, %v2058
        %v2060 = vpop.f32.mrf.mxu0
        %v2061 = vadd.f32 %v1610, %v2060
        %v2062 = vpop.f32.mrf.mxu0
        %v2063 = vadd.f32 %v1614, %v2062
        %2064 = vdwg.mxu0
        %2065 = vmatprep.subr.bf16.mxu0 0
        %2066 = vmatpush1.bf16.msra.mxu0 0
        %2067 = vmatprep.subr.bf16.mxu0 0
        %2068 = vmatpush1.bf16.msra.mxu0 0
        %2069 = vmatprep.subr.bf16.mxu0 0
        %2070 = vmatpush1.bf16.msra.mxu0 0
        %2071 = vmatprep.subr.bf16.mxu0 0
        %2072 = vmatpush1.bf16.msra.mxu0 0
        %2073 = vmatprep.subr.bf16.mxu0 0
        %2074 = vmatpush1.bf16.msra.mxu0 0
        %2075 = vmatprep.subr.bf16.mxu0 0
        %2076 = vmatpush1.bf16.msra.mxu0 0
        %2077 = vmatprep.subr.bf16.mxu0 %v1772
        %2078 = vmatpush1.bf16.msra.mxu0 %v1771
        %2079 = vmatprep.subr.bf16.mxu0 %v1756
        %2080 = vmatpush1.bf16.msra.mxu0 %v1755
        %2081 = vmatprep.subr.bf16.mxu0 0
        %2082 = vmatpush2.bf16.msra.mxu0 0
        %2083 = vmatprep.subr.bf16.mxu0 0
        %2084 = vmatpush2.bf16.msra.mxu0 0
        %2085 = vmatprep.subr.bf16.mxu0 0
        %2086 = vmatpush2.bf16.msra.mxu0 0
        %2087 = vmatprep.subr.bf16.mxu0 0
        %2088 = vmatpush2.bf16.msra.mxu0 0
        %2089 = vmatprep.subr.bf16.mxu0 0
        %2090 = vmatpush2.bf16.msra.mxu0 0
        %2091 = vmatprep.subr.bf16.mxu0 0
        %2092 = vmatpush2.bf16.msra.mxu0 0
        %2093 = vmatprep.subr.bf16.mxu0 0
        %2094 = vmatpush2.bf16.msra.mxu0 0
        %2095 = vmatprep.subr.bf16.mxu0 0
        %2096 = vmatpush2.bf16.msra.mxu0 0
        %2097 = vmatprep.mubr.bf16.mxu0 0
        %2098 = vmatmul.mubr.bf16.gmra.mxu0 %v652
        %v2099 = vpop.f32.mrf.mxu0
        %v2100 = vadd.f32 %v1618, %v2099
        %v2101 = vpop.f32.mrf.mxu0
        %v2102 = vadd.f32 %v1622, %v2101
        %v2103 = vpop.f32.mrf.mxu0
        %v2104 = vadd.f32 %v1618, %v2103
        %v2105 = vpop.f32.mrf.mxu0
        %v2106 = vadd.f32 %v1622, %v2105
        %2107 = vdwg.mxu0
        %2108 = vmatprep.subr.bf16.mxu0 0
        %2109 = vmatpush1.bf16.msra.mxu0 0
        %2110 = vmatprep.subr.bf16.mxu0 0
        %2111 = vmatpush1.bf16.msra.mxu0 0
        %2112 = vmatprep.subr.bf16.mxu0 0
        %2113 = vmatpush1.bf16.msra.mxu0 0
        %2114 = vmatprep.subr.bf16.mxu0 0
        %2115 = vmatpush1.bf16.msra.mxu0 0
        %2116 = vmatprep.subr.bf16.mxu0 0
        %2117 = vmatpush1.bf16.msra.mxu0 0
        %2118 = vmatprep.subr.bf16.mxu0 0
        %2119 = vmatpush1.bf16.msra.mxu0 0
        %2120 = vmatprep.subr.bf16.mxu0 %v1774
        %2121 = vmatpush1.bf16.msra.mxu0 %v1773
        %2122 = vmatprep.subr.bf16.mxu0 %v1758
        %2123 = vmatpush1.bf16.msra.mxu0 %v1757
        %2124 = vmatprep.subr.bf16.mxu0 0
        %2125 = vmatpush2.bf16.msra.mxu0 0
        %2126 = vmatprep.subr.bf16.mxu0 0
        %2127 = vmatpush2.bf16.msra.mxu0 0
        %2128 = vmatprep.subr.bf16.mxu0 0
        %2129 = vmatpush2.bf16.msra.mxu0 0
        %2130 = vmatprep.subr.bf16.mxu0 0
        %2131 = vmatpush2.bf16.msra.mxu0 0
        %2132 = vmatprep.subr.bf16.mxu0 0
        %2133 = vmatpush2.bf16.msra.mxu0 0
        %2134 = vmatprep.subr.bf16.mxu0 0
        %2135 = vmatpush2.bf16.msra.mxu0 0
        %2136 = vmatprep.subr.bf16.mxu0 0
        %2137 = vmatpush2.bf16.msra.mxu0 0
        %2138 = vmatprep.subr.bf16.mxu0 0
        %2139 = vmatpush2.bf16.msra.mxu0 0
        %2140 = vmatprep.mubr.bf16.mxu0 0
        %2141 = vmatmul.mubr.bf16.gmra.mxu0 %v652
        %v2142 = vpop.f32.mrf.mxu0
        %v2143 = vadd.f32 %v1626, %v2142
        %v2144 = vpop.f32.mrf.mxu0
        %v2145 = vadd.f32 %v1630, %v2144
        %v2146 = vpop.f32.mrf.mxu0
        %v2147 = vadd.f32 %v1626, %v2146
        %v2148 = vpop.f32.mrf.mxu0
        %v2149 = vadd.f32 %v1630, %v2148
        %2150 = vdwg.mxu0
        %v2151 = vmin.f32 %v1842, 0.0
        %v2152 = vmin.f32 %v1844, 0.0
        %v2153 = vmin.f32 %v1885, 0.0
        %v2154 = vmin.f32 %v1887, 0.0
        %v2155 = vmin.f32 %v1928, 0.0
        %v2156 = vmin.f32 %v1930, 0.0
        %v2157 = vmin.f32 %v1971, 0.0
        %v2158 = vmin.f32 %v1973, 0.0
        %v2159 = vmin.f32 %v2014, 0.0
        %v2160 = vmin.f32 %v2016, 0.0
        %v2161 = vmin.f32 %v2057, 0.0
        %v2162 = vmin.f32 %v2059, 0.0
        %v2163 = vmin.f32 %v2100, 0.0
        %v2164 = vmin.f32 %v2102, 0.0
        %v2165 = vmin.f32 %v2143, 0.0
        %v2166 = vmin.f32 %v2145, 0.0
        %v2167 = vmin.f32 %v1846, 0.0
        %v2168 = vmin.f32 %v1848, 0.0
        %v2169 = vmin.f32 %v1889, 0.0
        %v2170 = vmin.f32 %v1891, 0.0
        %v2171 = vmin.f32 %v1932, 0.0
        %v2172 = vmin.f32 %v1934, 0.0
        %v2173 = vmin.f32 %v1975, 0.0
        %v2174 = vmin.f32 %v1977, 0.0
        %v2175 = vmin.f32 %v2018, 0.0
        %v2176 = vmin.f32 %v2020, 0.0
        %v2177 = vmin.f32 %v2061, 0.0
        %v2178 = vmin.f32 %v2063, 0.0
        %v2179 = vmin.f32 %v2104, 0.0
        %v2180 = vmin.f32 %v2106, 0.0
        %v2181 = vmin.f32 %v2147, 0.0
        %v2182 = vmin.f32 %v2149, 0.0
        %v2183 = vmul.f32 %v2151, 1.442695
        %v2184 = vpow.pop %v2183
        %v2185 = vmul.f32 %v2152, 1.442695
        %v2186 = vpow.pop %v2185
        %v2187 = vmul.f32 %v2153, 1.442695
        %v2188 = vpow.pop %v2187
        %v2189 = vmul.f32 %v2154, 1.442695
        %v2190 = vpow.pop %v2189
        %v2191 = vmul.f32 %v2155, 1.442695
        %v2192 = vpow.pop %v2191
        %v2193 = vmul.f32 %v2156, 1.442695
        %v2194 = vpow.pop %v2193
        %v2195 = vmul.f32 %v2157, 1.442695
        %v2196 = vpow.pop %v2195
        %v2197 = vmul.f32 %v2158, 1.442695
        %v2198 = vpow.pop %v2197
        %v2199 = vmul.f32 %v2159, 1.442695
        %v2200 = vpow.pop %v2199
        %v2201 = vmul.f32 %v2160, 1.442695
        %v2202 = vpow.pop %v2201
        %v2203 = vmul.f32 %v2161, 1.442695
        %v2204 = vpow.pop %v2203
        %v2205 = vmul.f32 %v2162, 1.442695
        %v2206 = vpow.pop %v2205
        %v2207 = vmul.f32 %v2163, 1.442695
        %v2208 = vpow.pop %v2207
        %v2209 = vmul.f32 %v2164, 1.442695
        %v2210 = vpow.pop %v2209
        %v2211 = vmul.f32 %v2165, 1.442695
        %v2212 = vpow.pop %v2211
        %v2213 = vmul.f32 %v2166, 1.442695
        %v2214 = vpow.pop %v2213
        %v2215 = vmul.f32 %v2167, 1.442695
        %v2216 = vpow.pop %v2215
        %v2217 = vmul.f32 %v2168, 1.442695
        %v2218 = vpow.pop %v2217
        %v2219 = vmul.f32 %v2169, 1.442695
        %v2220 = vpow.pop %v2219
        %v2221 = vmul.f32 %v2170, 1.442695
        %v2222 = vpow.pop %v2221
        %v2223 = vmul.f32 %v2171, 1.442695
        %v2224 = vpow.pop %v2223
        %v2225 = vmul.f32 %v2172, 1.442695
        %v2226 = vpow.pop %v2225
        %v2227 = vmul.f32 %v2173, 1.442695
        %v2228 = vpow.pop %v2227
        %v2229 = vmul.f32 %v2174, 1.442695
        %v2230 = vpow.pop %v2229
        %v2231 = vmul.f32 %v2175, 1.442695
        %v2232 = vpow.pop %v2231
        %v2233 = vmul.f32 %v2176, 1.442695
        %v2234 = vpow.pop %v2233
        %v2235 = vmul.f32 %v2177, 1.442695
        %v2236 = vpow.pop %v2235
        %v2237 = vmul.f32 %v2178, 1.442695
        %v2238 = vpow.pop %v2237
        %v2239 = vmul.f32 %v2179, 1.442695
        %v2240 = vpow.pop %v2239
        %v2241 = vmul.f32 %v2180, 1.442695
        %v2242 = vpow.pop %v2241
        %v2243 = vmul.f32 %v2181, 1.442695
        %v2244 = vpow.pop %v2243
        %v2245 = vmul.f32 %v2182, 1.442695
        %v2246 = vpow.pop %v2245
        %v2247 = vsub.f32 %v2184, 1.0
        %v2248 = vsub.f32 %v2186, 1.0
        %v2249 = vsub.f32 %v2188, 1.0
        %v2250 = vsub.f32 %v2190, 1.0
        %v2251 = vsub.f32 %v2192, 1.0
        %v2252 = vsub.f32 %v2194, 1.0
        %v2253 = vsub.f32 %v2196, 1.0
        %v2254 = vsub.f32 %v2198, 1.0
        %v2255 = vsub.f32 %v2200, 1.0
        %v2256 = vsub.f32 %v2202, 1.0
        %v2257 = vsub.f32 %v2204, 1.0
        %v2258 = vsub.f32 %v2206, 1.0
        %v2259 = vsub.f32 %v2208, 1.0
        %v2260 = vsub.f32 %v2210, 1.0
        %v2261 = vsub.f32 %v2212, 1.0
        %v2262 = vsub.f32 %v2214, 1.0
        %v2263 = vsub.f32 %v2216, 1.0
        %v2264 = vsub.f32 %v2218, 1.0
        %v2265 = vsub.f32 %v2220, 1.0
        %v2266 = vsub.f32 %v2222, 1.0
        %v2267 = vsub.f32 %v2224, 1.0
        %v2268 = vsub.f32 %v2226, 1.0
        %v2269 = vsub.f32 %v2228, 1.0
        %v2270 = vsub.f32 %v2230, 1.0
        %v2271 = vsub.f32 %v2232, 1.0
        %v2272 = vsub.f32 %v2234, 1.0
        %v2273 = vsub.f32 %v2236, 1.0
        %v2274 = vsub.f32 %v2238, 1.0
        %v2275 = vsub.f32 %v2240, 1.0
        %v2276 = vsub.f32 %v2242, 1.0
        %v2277 = vsub.f32 %v2244, 1.0
        %v2278 = vsub.f32 %v2246, 1.0
        %v2279 = vmul.f32 %v2247, 1.6732632
        %v2280 = vmul.f32 %v2248, 1.6732632
        %v2281 = vmul.f32 %v2249, 1.6732632
        %v2282 = vmul.f32 %v2250, 1.6732632
        %v2283 = vmul.f32 %v2251, 1.6732632
        %v2284 = vmul.f32 %v2252, 1.6732632
        %v2285 = vmul.f32 %v2253, 1.6732632
        %v2286 = vmul.f32 %v2254, 1.6732632
        %v2287 = vmul.f32 %v2255, 1.6732632
        %v2288 = vmul.f32 %v2256, 1.6732632
        %v2289 = vmul.f32 %v2257, 1.6732632
        %v2290 = vmul.f32 %v2258, 1.6732632
        %v2291 = vmul.f32 %v2259, 1.6732632
        %v2292 = vmul.f32 %v2260, 1.6732632
        %v2293 = vmul.f32 %v2261, 1.6732632
        %v2294 = vmul.f32 %v2262, 1.6732632
        %v2295 = vmul.f32 %v2263, 1.6732632
        %v2296 = vmul.f32 %v2264, 1.6732632
        %v2297 = vmul.f32 %v2265, 1.6732632
        %v2298 = vmul.f32 %v2266, 1.6732632
        %v2299 = vmul.f32 %v2267, 1.6732632
        %v2300 = vmul.f32 %v2268, 1.6732632
        %v2301 = vmul.f32 %v2269, 1.6732632
        %v2302 = vmul.f32 %v2270, 1.6732632
        %v2303 = vmul.f32 %v2271, 1.6732632
        %v2304 = vmul.f32 %v2272, 1.6732632
        %v2305 = vmul.f32 %v2273, 1.6732632
        %v2306 = vmul.f32 %v2274, 1.6732632
        %v2307 = vmul.f32 %v2275, 1.6732632
        %v2308 = vmul.f32 %v2276, 1.6732632
        %v2309 = vmul.f32 %v2277, 1.6732632
        %v2310 = vmul.f32 %v2278, 1.6732632
        %vm2311 = vcmp.gt.f32.partialorder %v1842, 0.0
        %vm2312 = vcmp.gt.f32.partialorder %v1844, 0.0
        %vm2313 = vcmp.gt.f32.partialorder %v1885, 0.0
        %vm2314 = vcmp.gt.f32.partialorder %v1887, 0.0
        %vm2315 = vcmp.gt.f32.partialorder %v1928, 0.0
        %vm2316 = vcmp.gt.f32.partialorder %v1930, 0.0
        %vm2317 = vcmp.gt.f32.partialorder %v1971, 0.0
        %vm2318 = vcmp.gt.f32.partialorder %v1973, 0.0
        %vm2319 = vcmp.gt.f32.partialorder %v2014, 0.0
        %vm2320 = vcmp.gt.f32.partialorder %v2016, 0.0
        %vm2321 = vcmp.gt.f32.partialorder %v2057, 0.0
        %vm2322 = vcmp.gt.f32.partialorder %v2059, 0.0
        %vm2323 = vcmp.gt.f32.partialorder %v2100, 0.0
        %vm2324 = vcmp.gt.f32.partialorder %v2102, 0.0
        %vm2325 = vcmp.gt.f32.partialorder %v2143, 0.0
        %vm2326 = vcmp.gt.f32.partialorder %v2145, 0.0
        %vm2327 = vcmp.gt.f32.partialorder %v1846, 0.0
        %vm2328 = vcmp.gt.f32.partialorder %v1848, 0.0
        %vm2329 = vcmp.gt.f32.partialorder %v1889, 0.0
        %vm2330 = vcmp.gt.f32.partialorder %v1891, 0.0
        %vm2331 = vcmp.gt.f32.partialorder %v1932, 0.0
        %vm2332 = vcmp.gt.f32.partialorder %v1934, 0.0
        %vm2333 = vcmp.gt.f32.partialorder %v1975, 0.0
        %vm2334 = vcmp.gt.f32.partialorder %v1977, 0.0
        %vm2335 = vcmp.gt.f32.partialorder %v2018, 0.0
        %vm2336 = vcmp.gt.f32.partialorder %v2020, 0.0
        %vm2337 = vcmp.gt.f32.partialorder %v2061, 0.0
        %vm2338 = vcmp.gt.f32.partialorder %v2063, 0.0
        %vm2339 = vcmp.gt.f32.partialorder %v2104, 0.0
        %vm2340 = vcmp.gt.f32.partialorder %v2106, 0.0
        %vm2341 = vcmp.gt.f32.partialorder %v2147, 0.0
        %vm2342 = vcmp.gt.f32.partialorder %v2149, 0.0
        %v2343 = vsel %vm2311, %v1842, %v2279
        %v2344 = vsel %vm2312, %v1844, %v2280
        %v2345 = vsel %vm2313, %v1885, %v2281
        %v2346 = vsel %vm2314, %v1887, %v2282
        %v2347 = vsel %vm2315, %v1928, %v2283
        %v2348 = vsel %vm2316, %v1930, %v2284
        %v2349 = vsel %vm2317, %v1971, %v2285
        %v2350 = vsel %vm2318, %v1973, %v2286
        %v2351 = vsel %vm2319, %v2014, %v2287
        %v2352 = vsel %vm2320, %v2016, %v2288
        %v2353 = vsel %vm2321, %v2057, %v2289
        %v2354 = vsel %vm2322, %v2059, %v2290
        %v2355 = vsel %vm2323, %v2100, %v2291
        %v2356 = vsel %vm2324, %v2102, %v2292
        %v2357 = vsel %vm2325, %v2143, %v2293
        %v2358 = vsel %vm2326, %v2145, %v2294
        %v2359 = vsel %vm2327, %v1846, %v2295
        %v2360 = vsel %vm2328, %v1848, %v2296
        %v2361 = vsel %vm2329, %v1889, %v2297
        %v2362 = vsel %vm2330, %v1891, %v2298
        %v2363 = vsel %vm2331, %v1932, %v2299
        %v2364 = vsel %vm2332, %v1934, %v2300
        %v2365 = vsel %vm2333, %v1975, %v2301
        %v2366 = vsel %vm2334, %v1977, %v2302
        %v2367 = vsel %vm2335, %v2018, %v2303
        %v2368 = vsel %vm2336, %v2020, %v2304
        %v2369 = vsel %vm2337, %v2061, %v2305
        %v2370 = vsel %vm2338, %v2063, %v2306
        %v2371 = vsel %vm2339, %v2104, %v2307
        %v2372 = vsel %vm2340, %v2106, %v2308
        %v2373 = vsel %vm2341, %v2147, %v2309
        %v2374 = vsel %vm2342, %v2149, %v2310
        %v2375 = vmul.f32 %v2343, 1.050701
        %v2376 = vmul.f32 %v2344, 1.050701
        %v2377 = vmul.f32 %v2345, 1.050701
        %v2378 = vmul.f32 %v2346, 1.050701
        %v2379 = vmul.f32 %v2347, 1.050701
        %v2380 = vmul.f32 %v2348, 1.050701
        %v2381 = vmul.f32 %v2349, 1.050701
        %v2382 = vmul.f32 %v2350, 1.050701
        %v2383 = vmul.f32 %v2351, 1.050701
        %v2384 = vmul.f32 %v2352, 1.050701
        %v2385 = vmul.f32 %v2353, 1.050701
        %v2386 = vmul.f32 %v2354, 1.050701
        %v2387 = vmul.f32 %v2355, 1.050701
        %v2388 = vmul.f32 %v2356, 1.050701
        %v2389 = vmul.f32 %v2357, 1.050701
        %v2390 = vmul.f32 %v2358, 1.050701
        %v2391 = vmul.f32 %v2359, 1.050701
        %v2392 = vmul.f32 %v2360, 1.050701
        %v2393 = vmul.f32 %v2361, 1.050701
        %v2394 = vmul.f32 %v2362, 1.050701
        %v2395 = vmul.f32 %v2363, 1.050701
        %v2396 = vmul.f32 %v2364, 1.050701
        %v2397 = vmul.f32 %v2365, 1.050701
        %v2398 = vmul.f32 %v2366, 1.050701
        %v2399 = vmul.f32 %v2367, 1.050701
        %v2400 = vmul.f32 %v2368, 1.050701
        %v2401 = vmul.f32 %v2369, 1.050701
        %v2402 = vmul.f32 %v2370, 1.050701
        %v2403 = vmul.f32 %v2371, 1.050701
        %v2404 = vmul.f32 %v2372, 1.050701
        %v2405 = vmul.f32 %v2373, 1.050701
        %v2406 = vmul.f32 %v2374, 1.050701
        %v2407 = vpack.c.bf16 %v2391, %v2375
        %v2408 = vpack.c.bf16 %v2392, %v2376
        %v2409 = vpack.c.bf16 %v2393, %v2377
        %v2410 = vpack.c.bf16 %v2394, %v2378
        %v2411 = vpack.c.bf16 %v2395, %v2379
        %v2412 = vpack.c.bf16 %v2396, %v2380
        %v2413 = vpack.c.bf16 %v2397, %v2381
        %v2414 = vpack.c.bf16 %v2398, %v2382
        %v2415 = vpack.c.bf16 %v2399, %v2383
        %v2416 = vpack.c.bf16 %v2400, %v2384
        %v2417 = vpack.c.bf16 %v2401, %v2385
        %v2418 = vpack.c.bf16 %v2402, %v2386
        %v2419 = vpack.c.bf16 %v2403, %v2387
        %v2420 = vpack.c.bf16 %v2404, %v2388
        %v2421 = vpack.c.bf16 %v2405, %v2389
        %v2422 = vpack.c.bf16 %v2406, %v2390
        %s2423 = smul.u32 256, 2
        %s2424 = smul.addr %s2423, 4
        %s2425 = scalar_lea.vmem [#allocation8], %s2424
        %v2426 = vld [vmem:[%s2425] sm:$0xff]
        %v2427 = vld [vmem:[%s2425 + $0x8] sm:$0xff]
        %v2428 = vld [vmem:[%s2425 + $0x10] sm:$0xff]
        %v2429 = vld [vmem:[%s2425 + $0x18] sm:$0xff]
        %v2430 = vld [vmem:[%s2425 + $0x20] sm:$0xff]
        %v2431 = vld [vmem:[%s2425 + $0x28] sm:$0xff]
        %v2432 = vld [vmem:[%s2425 + $0x30] sm:$0xff]
        %v2433 = vld [vmem:[%s2425 + $0x38] sm:$0xff]
        %v2434 = vld [vmem:[%s2425 + $0x40] sm:$0xff]
        %v2435 = vld [vmem:[%s2425 + $0x48] sm:$0xff]
        %v2436 = vld [vmem:[%s2425 + $0x50] sm:$0xff]
        %v2437 = vld [vmem:[%s2425 + $0x58] sm:$0xff]
        %v2438 = vld [vmem:[%s2425 + $0x60] sm:$0xff]
        %v2439 = vld [vmem:[%s2425 + $0x68] sm:$0xff]
        %v2440 = vld [vmem:[%s2425 + $0x70] sm:$0xff]
        %v2441 = vld [vmem:[%s2425 + $0x78] sm:$0xff]
        %v2442 = vld [vmem:[%s2425 + $0x80] sm:$0xff]
        %v2443 = vld [vmem:[%s2425 + $0x88] sm:$0xff]
        %v2444 = vld [vmem:[%s2425 + $0x90] sm:$0xff]
        %v2445 = vld [vmem:[%s2425 + $0x98] sm:$0xff]
        %v2446 = vld [vmem:[%s2425 + $0xa0] sm:$0xff]
        %v2447 = vld [vmem:[%s2425 + $0xa8] sm:$0xff]
        %v2448 = vld [vmem:[%s2425 + $0xb0] sm:$0xff]
        %v2449 = vld [vmem:[%s2425 + $0xb8] sm:$0xff]
        %v2450 = vld [vmem:[%s2425 + $0xc0] sm:$0xff]
        %v2451 = vld [vmem:[%s2425 + $0xc8] sm:$0xff]
        %v2452 = vld [vmem:[%s2425 + $0xd0] sm:$0xff]
        %v2453 = vld [vmem:[%s2425 + $0xd8] sm:$0xff]
        %v2454 = vld [vmem:[%s2425 + $0xe0] sm:$0xff]
        %v2455 = vld [vmem:[%s2425 + $0xe8] sm:$0xff]
        %v2456 = vld [vmem:[%s2425 + $0xf0] sm:$0xff]
        %v2457 = vld [vmem:[%s2425 + $0xf8] sm:$0xff]
        %v2458 = vld [vmem:[%s2425 + $0x100] sm:$0xff]
        %v2459 = vld [vmem:[%s2425 + $0x108] sm:$0xff]
        %v2460 = vld [vmem:[%s2425 + $0x110] sm:$0xff]
        %v2461 = vld [vmem:[%s2425 + $0x118] sm:$0xff]
        %v2462 = vld [vmem:[%s2425 + $0x120] sm:$0xff]
        %v2463 = vld [vmem:[%s2425 + $0x128] sm:$0xff]
        %v2464 = vld [vmem:[%s2425 + $0x130] sm:$0xff]
        %v2465 = vld [vmem:[%s2425 + $0x138] sm:$0xff]
        %v2466 = vld [vmem:[%s2425 + $0x140] sm:$0xff]
        %v2467 = vld [vmem:[%s2425 + $0x148] sm:$0xff]
        %v2468 = vld [vmem:[%s2425 + $0x150] sm:$0xff]
        %v2469 = vld [vmem:[%s2425 + $0x158] sm:$0xff]
        %v2470 = vld [vmem:[%s2425 + $0x160] sm:$0xff]
        %v2471 = vld [vmem:[%s2425 + $0x168] sm:$0xff]
        %v2472 = vld [vmem:[%s2425 + $0x170] sm:$0xff]
        %v2473 = vld [vmem:[%s2425 + $0x178] sm:$0xff]
        %v2474 = vld [vmem:[%s2425 + $0x180] sm:$0xff]
        %v2475 = vld [vmem:[%s2425 + $0x188] sm:$0xff]
        %v2476 = vld [vmem:[%s2425 + $0x190] sm:$0xff]
        %v2477 = vld [vmem:[%s2425 + $0x198] sm:$0xff]
        %v2478 = vld [vmem:[%s2425 + $0x1a0] sm:$0xff]
        %v2479 = vld [vmem:[%s2425 + $0x1a8] sm:$0xff]
        %v2480 = vld [vmem:[%s2425 + $0x1b0] sm:$0xff]
        %v2481 = vld [vmem:[%s2425 + $0x1b8] sm:$0xff]
        %v2482 = vld [vmem:[%s2425 + $0x1c0] sm:$0xff]
        %v2483 = vld [vmem:[%s2425 + $0x1c8] sm:$0xff]
        %v2484 = vld [vmem:[%s2425 + $0x1d0] sm:$0xff]
        %v2485 = vld [vmem:[%s2425 + $0x1d8] sm:$0xff]
        %v2486 = vld [vmem:[%s2425 + $0x1e0] sm:$0xff]
        %v2487 = vld [vmem:[%s2425 + $0x1e8] sm:$0xff]
        %v2488 = vld [vmem:[%s2425 + $0x1f0] sm:$0xff]
        %v2489 = vld [vmem:[%s2425 + $0x1f8] sm:$0xff]
        %v2490 = vld [vmem:[%s2425 + $0x200] sm:$0xff]
        %v2491 = vld [vmem:[%s2425 + $0x208] sm:$0xff]
        %v2492 = vld [vmem:[%s2425 + $0x210] sm:$0xff]
        %v2493 = vld [vmem:[%s2425 + $0x218] sm:$0xff]
        %v2494 = vld [vmem:[%s2425 + $0x220] sm:$0xff]
        %v2495 = vld [vmem:[%s2425 + $0x228] sm:$0xff]
        %v2496 = vld [vmem:[%s2425 + $0x230] sm:$0xff]
        %v2497 = vld [vmem:[%s2425 + $0x238] sm:$0xff]
        %v2498 = vld [vmem:[%s2425 + $0x240] sm:$0xff]
        %v2499 = vld [vmem:[%s2425 + $0x248] sm:$0xff]
        %v2500 = vld [vmem:[%s2425 + $0x250] sm:$0xff]
        %v2501 = vld [vmem:[%s2425 + $0x258] sm:$0xff]
        %v2502 = vld [vmem:[%s2425 + $0x260] sm:$0xff]
        %v2503 = vld [vmem:[%s2425 + $0x268] sm:$0xff]
        %v2504 = vld [vmem:[%s2425 + $0x270] sm:$0xff]
        %v2505 = vld [vmem:[%s2425 + $0x278] sm:$0xff]
        %v2506 = vld [vmem:[%s2425 + $0x280] sm:$0xff]
        %v2507 = vld [vmem:[%s2425 + $0x288] sm:$0xff]
        %v2508 = vld [vmem:[%s2425 + $0x290] sm:$0xff]
        %v2509 = vld [vmem:[%s2425 + $0x298] sm:$0xff]
        %v2510 = vld [vmem:[%s2425 + $0x2a0] sm:$0xff]
        %v2511 = vld [vmem:[%s2425 + $0x2a8] sm:$0xff]
        %v2512 = vld [vmem:[%s2425 + $0x2b0] sm:$0xff]
        %v2513 = vld [vmem:[%s2425 + $0x2b8] sm:$0xff]
        %v2514 = vld [vmem:[%s2425 + $0x2c0] sm:$0xff]
        %v2515 = vld [vmem:[%s2425 + $0x2c8] sm:$0xff]
        %v2516 = vld [vmem:[%s2425 + $0x2d0] sm:$0xff]
        %v2517 = vld [vmem:[%s2425 + $0x2d8] sm:$0xff]
        %v2518 = vld [vmem:[%s2425 + $0x2e0] sm:$0xff]
        %v2519 = vld [vmem:[%s2425 + $0x2e8] sm:$0xff]
        %v2520 = vld [vmem:[%s2425 + $0x2f0] sm:$0xff]
        %v2521 = vld [vmem:[%s2425 + $0x2f8] sm:$0xff]
        %v2522 = vld [vmem:[%s2425 + $0x300] sm:$0xff]
        %v2523 = vld [vmem:[%s2425 + $0x308] sm:$0xff]
        %v2524 = vld [vmem:[%s2425 + $0x310] sm:$0xff]
        %v2525 = vld [vmem:[%s2425 + $0x318] sm:$0xff]
        %v2526 = vld [vmem:[%s2425 + $0x320] sm:$0xff]
        %v2527 = vld [vmem:[%s2425 + $0x328] sm:$0xff]
        %v2528 = vld [vmem:[%s2425 + $0x330] sm:$0xff]
        %v2529 = vld [vmem:[%s2425 + $0x338] sm:$0xff]
        %v2530 = vld [vmem:[%s2425 + $0x340] sm:$0xff]
        %v2531 = vld [vmem:[%s2425 + $0x348] sm:$0xff]
        %v2532 = vld [vmem:[%s2425 + $0x350] sm:$0xff]
        %v2533 = vld [vmem:[%s2425 + $0x358] sm:$0xff]
        %v2534 = vld [vmem:[%s2425 + $0x360] sm:$0xff]
        %v2535 = vld [vmem:[%s2425 + $0x368] sm:$0xff]
        %v2536 = vld [vmem:[%s2425 + $0x370] sm:$0xff]
        %v2537 = vld [vmem:[%s2425 + $0x378] sm:$0xff]
        %v2538 = vld [vmem:[%s2425 + $0x380] sm:$0xff]
        %v2539 = vld [vmem:[%s2425 + $0x388] sm:$0xff]
        %v2540 = vld [vmem:[%s2425 + $0x390] sm:$0xff]
        %v2541 = vld [vmem:[%s2425 + $0x398] sm:$0xff]
        %v2542 = vld [vmem:[%s2425 + $0x3a0] sm:$0xff]
        %v2543 = vld [vmem:[%s2425 + $0x3a8] sm:$0xff]
        %v2544 = vld [vmem:[%s2425 + $0x3b0] sm:$0xff]
        %v2545 = vld [vmem:[%s2425 + $0x3b8] sm:$0xff]
        %v2546 = vld [vmem:[%s2425 + $0x3c0] sm:$0xff]
        %v2547 = vld [vmem:[%s2425 + $0x3c8] sm:$0xff]
        %v2548 = vld [vmem:[%s2425 + $0x3d0] sm:$0xff]
        %v2549 = vld [vmem:[%s2425 + $0x3d8] sm:$0xff]
        %v2550 = vld [vmem:[%s2425 + $0x3e0] sm:$0xff]
        %v2551 = vld [vmem:[%s2425 + $0x3e8] sm:$0xff]
        %v2552 = vld [vmem:[%s2425 + $0x3f0] sm:$0xff]
        %v2553 = vld [vmem:[%s2425 + $0x3f8] sm:$0xff]
        %v2554 = vld [vmem:[%s2425 + $0x400] sm:$0xff]
        %v2555 = vld [vmem:[%s2425 + $0x408] sm:$0xff]
        %v2556 = vld [vmem:[%s2425 + $0x410] sm:$0xff]
        %v2557 = vld [vmem:[%s2425 + $0x418] sm:$0xff]
        %v2558 = vld [vmem:[%s2425 + $0x420] sm:$0xff]
        %v2559 = vld [vmem:[%s2425 + $0x428] sm:$0xff]
        %v2560 = vld [vmem:[%s2425 + $0x430] sm:$0xff]
        %v2561 = vld [vmem:[%s2425 + $0x438] sm:$0xff]
        %v2562 = vld [vmem:[%s2425 + $0x440] sm:$0xff]
        %v2563 = vld [vmem:[%s2425 + $0x448] sm:$0xff]
        %v2564 = vld [vmem:[%s2425 + $0x450] sm:$0xff]
        %v2565 = vld [vmem:[%s2425 + $0x458] sm:$0xff]
        %v2566 = vld [vmem:[%s2425 + $0x460] sm:$0xff]
        %v2567 = vld [vmem:[%s2425 + $0x468] sm:$0xff]
        %v2568 = vld [vmem:[%s2425 + $0x470] sm:$0xff]
        %v2569 = vld [vmem:[%s2425 + $0x478] sm:$0xff]
        %v2570 = vld [vmem:[%s2425 + $0x480] sm:$0xff]
        %v2571 = vld [vmem:[%s2425 + $0x488] sm:$0xff]
        %v2572 = vld [vmem:[%s2425 + $0x490] sm:$0xff]
        %v2573 = vld [vmem:[%s2425 + $0x498] sm:$0xff]
        %v2574 = vld [vmem:[%s2425 + $0x4a0] sm:$0xff]
        %v2575 = vld [vmem:[%s2425 + $0x4a8] sm:$0xff]
        %v2576 = vld [vmem:[%s2425 + $0x4b0] sm:$0xff]
        %v2577 = vld [vmem:[%s2425 + $0x4b8] sm:$0xff]
        %v2578 = vld [vmem:[%s2425 + $0x4c0] sm:$0xff]
        %v2579 = vld [vmem:[%s2425 + $0x4c8] sm:$0xff]
        %v2580 = vld [vmem:[%s2425 + $0x4d0] sm:$0xff]
        %v2581 = vld [vmem:[%s2425 + $0x4d8] sm:$0xff]
        %v2582 = vld [vmem:[%s2425 + $0x4e0] sm:$0xff]
        %v2583 = vld [vmem:[%s2425 + $0x4e8] sm:$0xff]
        %v2584 = vld [vmem:[%s2425 + $0x4f0] sm:$0xff]
        %v2585 = vld [vmem:[%s2425 + $0x4f8] sm:$0xff]
        %v2586 = vld [vmem:[%s2425 + $0x500] sm:$0xff]
        %v2587 = vld [vmem:[%s2425 + $0x508] sm:$0xff]
        %v2588 = vld [vmem:[%s2425 + $0x510] sm:$0xff]
        %v2589 = vld [vmem:[%s2425 + $0x518] sm:$0xff]
        %v2590 = vld [vmem:[%s2425 + $0x520] sm:$0xff]
        %v2591 = vld [vmem:[%s2425 + $0x528] sm:$0xff]
        %v2592 = vld [vmem:[%s2425 + $0x530] sm:$0xff]
        %v2593 = vld [vmem:[%s2425 + $0x538] sm:$0xff]
        %v2594 = vld [vmem:[%s2425 + $0x540] sm:$0xff]
        %v2595 = vld [vmem:[%s2425 + $0x548] sm:$0xff]
        %v2596 = vld [vmem:[%s2425 + $0x550] sm:$0xff]
        %v2597 = vld [vmem:[%s2425 + $0x558] sm:$0xff]
        %v2598 = vld [vmem:[%s2425 + $0x560] sm:$0xff]
        %v2599 = vld [vmem:[%s2425 + $0x568] sm:$0xff]
        %v2600 = vld [vmem:[%s2425 + $0x570] sm:$0xff]
        %v2601 = vld [vmem:[%s2425 + $0x578] sm:$0xff]
        %v2602 = vld [vmem:[%s2425 + $0x580] sm:$0xff]
        %v2603 = vld [vmem:[%s2425 + $0x588] sm:$0xff]
        %v2604 = vld [vmem:[%s2425 + $0x590] sm:$0xff]
        %v2605 = vld [vmem:[%s2425 + $0x598] sm:$0xff]
        %v2606 = vld [vmem:[%s2425 + $0x5a0] sm:$0xff]
        %v2607 = vld [vmem:[%s2425 + $0x5a8] sm:$0xff]
        %v2608 = vld [vmem:[%s2425 + $0x5b0] sm:$0xff]
        %v2609 = vld [vmem:[%s2425 + $0x5b8] sm:$0xff]
        %v2610 = vld [vmem:[%s2425 + $0x5c0] sm:$0xff]
        %v2611 = vld [vmem:[%s2425 + $0x5c8] sm:$0xff]
        %v2612 = vld [vmem:[%s2425 + $0x5d0] sm:$0xff]
        %v2613 = vld [vmem:[%s2425 + $0x5d8] sm:$0xff]
        %v2614 = vld [vmem:[%s2425 + $0x5e0] sm:$0xff]
        %v2615 = vld [vmem:[%s2425 + $0x5e8] sm:$0xff]
        %v2616 = vld [vmem:[%s2425 + $0x5f0] sm:$0xff]
        %v2617 = vld [vmem:[%s2425 + $0x5f8] sm:$0xff]
        %v2618 = vld [vmem:[%s2425 + $0x600] sm:$0xff]
        %v2619 = vld [vmem:[%s2425 + $0x608] sm:$0xff]
        %v2620 = vld [vmem:[%s2425 + $0x610] sm:$0xff]
        %v2621 = vld [vmem:[%s2425 + $0x618] sm:$0xff]
        %v2622 = vld [vmem:[%s2425 + $0x620] sm:$0xff]
        %v2623 = vld [vmem:[%s2425 + $0x628] sm:$0xff]
        %v2624 = vld [vmem:[%s2425 + $0x630] sm:$0xff]
        %v2625 = vld [vmem:[%s2425 + $0x638] sm:$0xff]
        %v2626 = vld [vmem:[%s2425 + $0x640] sm:$0xff]
        %v2627 = vld [vmem:[%s2425 + $0x648] sm:$0xff]
        %v2628 = vld [vmem:[%s2425 + $0x650] sm:$0xff]
        %v2629 = vld [vmem:[%s2425 + $0x658] sm:$0xff]
        %v2630 = vld [vmem:[%s2425 + $0x660] sm:$0xff]
        %v2631 = vld [vmem:[%s2425 + $0x668] sm:$0xff]
        %v2632 = vld [vmem:[%s2425 + $0x670] sm:$0xff]
        %v2633 = vld [vmem:[%s2425 + $0x678] sm:$0xff]
        %v2634 = vld [vmem:[%s2425 + $0x680] sm:$0xff]
        %v2635 = vld [vmem:[%s2425 + $0x688] sm:$0xff]
        %v2636 = vld [vmem:[%s2425 + $0x690] sm:$0xff]
        %v2637 = vld [vmem:[%s2425 + $0x698] sm:$0xff]
        %v2638 = vld [vmem:[%s2425 + $0x6a0] sm:$0xff]
        %v2639 = vld [vmem:[%s2425 + $0x6a8] sm:$0xff]
        %v2640 = vld [vmem:[%s2425 + $0x6b0] sm:$0xff]
        %v2641 = vld [vmem:[%s2425 + $0x6b8] sm:$0xff]
        %v2642 = vld [vmem:[%s2425 + $0x6c0] sm:$0xff]
        %v2643 = vld [vmem:[%s2425 + $0x6c8] sm:$0xff]
        %v2644 = vld [vmem:[%s2425 + $0x6d0] sm:$0xff]
        %v2645 = vld [vmem:[%s2425 + $0x6d8] sm:$0xff]
        %v2646 = vld [vmem:[%s2425 + $0x6e0] sm:$0xff]
        %v2647 = vld [vmem:[%s2425 + $0x6e8] sm:$0xff]
        %v2648 = vld [vmem:[%s2425 + $0x6f0] sm:$0xff]
        %v2649 = vld [vmem:[%s2425 + $0x6f8] sm:$0xff]
        %v2650 = vld [vmem:[%s2425 + $0x700] sm:$0xff]
        %v2651 = vld [vmem:[%s2425 + $0x708] sm:$0xff]
        %v2652 = vld [vmem:[%s2425 + $0x710] sm:$0xff]
        %v2653 = vld [vmem:[%s2425 + $0x718] sm:$0xff]
        %v2654 = vld [vmem:[%s2425 + $0x720] sm:$0xff]
        %v2655 = vld [vmem:[%s2425 + $0x728] sm:$0xff]
        %v2656 = vld [vmem:[%s2425 + $0x730] sm:$0xff]
        %v2657 = vld [vmem:[%s2425 + $0x738] sm:$0xff]
        %v2658 = vld [vmem:[%s2425 + $0x740] sm:$0xff]
        %v2659 = vld [vmem:[%s2425 + $0x748] sm:$0xff]
        %v2660 = vld [vmem:[%s2425 + $0x750] sm:$0xff]
        %v2661 = vld [vmem:[%s2425 + $0x758] sm:$0xff]
        %v2662 = vld [vmem:[%s2425 + $0x760] sm:$0xff]
        %v2663 = vld [vmem:[%s2425 + $0x768] sm:$0xff]
        %v2664 = vld [vmem:[%s2425 + $0x770] sm:$0xff]
        %v2665 = vld [vmem:[%s2425 + $0x778] sm:$0xff]
        %v2666 = vld [vmem:[%s2425 + $0x780] sm:$0xff]
        %v2667 = vld [vmem:[%s2425 + $0x788] sm:$0xff]
        %v2668 = vld [vmem:[%s2425 + $0x790] sm:$0xff]
        %v2669 = vld [vmem:[%s2425 + $0x798] sm:$0xff]
        %v2670 = vld [vmem:[%s2425 + $0x7a0] sm:$0xff]
        %v2671 = vld [vmem:[%s2425 + $0x7a8] sm:$0xff]
        %v2672 = vld [vmem:[%s2425 + $0x7b0] sm:$0xff]
        %v2673 = vld [vmem:[%s2425 + $0x7b8] sm:$0xff]
        %v2674 = vld [vmem:[%s2425 + $0x7c0] sm:$0xff]
        %v2675 = vld [vmem:[%s2425 + $0x7c8] sm:$0xff]
        %v2676 = vld [vmem:[%s2425 + $0x7d0] sm:$0xff]
        %v2677 = vld [vmem:[%s2425 + $0x7d8] sm:$0xff]
        %v2678 = vld [vmem:[%s2425 + $0x7e0] sm:$0xff]
        %v2679 = vld [vmem:[%s2425 + $0x7e8] sm:$0xff]
        %v2680 = vld [vmem:[%s2425 + $0x7f0] sm:$0xff]
        %v2681 = vld [vmem:[%s2425 + $0x7f8] sm:$0xff]
        %v2938 = vunpack.c.l.b16 %v2426
        %v2939 = vunpack.c.h.b16 %v2426
        %v2940 = vunpack.c.l.b16 %v2427
        %v2941 = vunpack.c.h.b16 %v2427
        %v2942 = vunpack.c.l.b16 %v2428
        %v2943 = vunpack.c.h.b16 %v2428
        %v2944 = vunpack.c.l.b16 %v2429
        %v2945 = vunpack.c.h.b16 %v2429
        %v2946 = vunpack.c.l.b16 %v2430
        %v2947 = vunpack.c.h.b16 %v2430
        %v2948 = vunpack.c.l.b16 %v2431
        %v2949 = vunpack.c.h.b16 %v2431
        %v2950 = vunpack.c.l.b16 %v2432
        %v2951 = vunpack.c.h.b16 %v2432
        %v2952 = vunpack.c.l.b16 %v2433
        %v2953 = vunpack.c.h.b16 %v2433
        %v2954 = vunpack.c.l.b16 %v2434
        %v2955 = vunpack.c.h.b16 %v2434
        %v2956 = vunpack.c.l.b16 %v2435
        %v2957 = vunpack.c.h.b16 %v2435
        %v2958 = vunpack.c.l.b16 %v2436
        %v2959 = vunpack.c.h.b16 %v2436
        %v2960 = vunpack.c.l.b16 %v2437
        %v2961 = vunpack.c.h.b16 %v2437
        %v2962 = vunpack.c.l.b16 %v2438
        %v2963 = vunpack.c.h.b16 %v2438
        %v2964 = vunpack.c.l.b16 %v2439
        %v2965 = vunpack.c.h.b16 %v2439
        %v2966 = vunpack.c.l.b16 %v2440
        %v2967 = vunpack.c.h.b16 %v2440
        %v2968 = vunpack.c.l.b16 %v2441
        %v2969 = vunpack.c.h.b16 %v2441
        %v2970 = vunpack.c.l.b16 %v2442
        %v2971 = vunpack.c.h.b16 %v2442
        %v2972 = vunpack.c.l.b16 %v2443
        %v2973 = vunpack.c.h.b16 %v2443
        %v2974 = vunpack.c.l.b16 %v2444
        %v2975 = vunpack.c.h.b16 %v2444
        %v2976 = vunpack.c.l.b16 %v2445
        %v2977 = vunpack.c.h.b16 %v2445
        %v2978 = vunpack.c.l.b16 %v2446
        %v2979 = vunpack.c.h.b16 %v2446
        %v2980 = vunpack.c.l.b16 %v2447
        %v2981 = vunpack.c.h.b16 %v2447
        %v2982 = vunpack.c.l.b16 %v2448
        %v2983 = vunpack.c.h.b16 %v2448
        %v2984 = vunpack.c.l.b16 %v2449
        %v2985 = vunpack.c.h.b16 %v2449
        %v2986 = vunpack.c.l.b16 %v2450
        %v2987 = vunpack.c.h.b16 %v2450
        %v2988 = vunpack.c.l.b16 %v2451
        %v2989 = vunpack.c.h.b16 %v2451
        %v2990 = vunpack.c.l.b16 %v2452
        %v2991 = vunpack.c.h.b16 %v2452
        %v2992 = vunpack.c.l.b16 %v2453
        %v2993 = vunpack.c.h.b16 %v2453
        %v2994 = vunpack.c.l.b16 %v2454
        %v2995 = vunpack.c.h.b16 %v2454
        %v2996 = vunpack.c.l.b16 %v2455
        %v2997 = vunpack.c.h.b16 %v2455
        %v2998 = vunpack.c.l.b16 %v2456
        %v2999 = vunpack.c.h.b16 %v2456
        %v3000 = vunpack.c.l.b16 %v2457
        %v3001 = vunpack.c.h.b16 %v2457
        %v3002 = vunpack.c.l.b16 %v2458
        %v3003 = vunpack.c.h.b16 %v2458
        %v3004 = vunpack.c.l.b16 %v2459
        %v3005 = vunpack.c.h.b16 %v2459
        %v3006 = vunpack.c.l.b16 %v2460
        %v3007 = vunpack.c.h.b16 %v2460
        %v3008 = vunpack.c.l.b16 %v2461
        %v3009 = vunpack.c.h.b16 %v2461
        %v3010 = vunpack.c.l.b16 %v2462
        %v3011 = vunpack.c.h.b16 %v2462
        %v3012 = vunpack.c.l.b16 %v2463
        %v3013 = vunpack.c.h.b16 %v2463
        %v3014 = vunpack.c.l.b16 %v2464
        %v3015 = vunpack.c.h.b16 %v2464
        %v3016 = vunpack.c.l.b16 %v2465
        %v3017 = vunpack.c.h.b16 %v2465
        %v3018 = vunpack.c.l.b16 %v2466
        %v3019 = vunpack.c.h.b16 %v2466
        %v3020 = vunpack.c.l.b16 %v2467
        %v3021 = vunpack.c.h.b16 %v2467
        %v3022 = vunpack.c.l.b16 %v2468
        %v3023 = vunpack.c.h.b16 %v2468
        %v3024 = vunpack.c.l.b16 %v2469
        %v3025 = vunpack.c.h.b16 %v2469
        %v3026 = vunpack.c.l.b16 %v2470
        %v3027 = vunpack.c.h.b16 %v2470
        %v3028 = vunpack.c.l.b16 %v2471
        %v3029 = vunpack.c.h.b16 %v2471
        %v3030 = vunpack.c.l.b16 %v2472
        %v3031 = vunpack.c.h.b16 %v2472
        %v3032 = vunpack.c.l.b16 %v2473
        %v3033 = vunpack.c.h.b16 %v2473
        %v3034 = vunpack.c.l.b16 %v2474
        %v3035 = vunpack.c.h.b16 %v2474
        %v3036 = vunpack.c.l.b16 %v2475
        %v3037 = vunpack.c.h.b16 %v2475
        %v3038 = vunpack.c.l.b16 %v2476
        %v3039 = vunpack.c.h.b16 %v2476
        %v3040 = vunpack.c.l.b16 %v2477
        %v3041 = vunpack.c.h.b16 %v2477
        %v3042 = vunpack.c.l.b16 %v2478
        %v3043 = vunpack.c.h.b16 %v2478
        %v3044 = vunpack.c.l.b16 %v2479
        %v3045 = vunpack.c.h.b16 %v2479
        %v3046 = vunpack.c.l.b16 %v2480
        %v3047 = vunpack.c.h.b16 %v2480
        %v3048 = vunpack.c.l.b16 %v2481
        %v3049 = vunpack.c.h.b16 %v2481
        %v3050 = vunpack.c.l.b16 %v2482
        %v3051 = vunpack.c.h.b16 %v2482
        %v3052 = vunpack.c.l.b16 %v2483
        %v3053 = vunpack.c.h.b16 %v2483
        %v3054 = vunpack.c.l.b16 %v2484
        %v3055 = vunpack.c.h.b16 %v2484
        %v3056 = vunpack.c.l.b16 %v2485
        %v3057 = vunpack.c.h.b16 %v2485
        %v3058 = vunpack.c.l.b16 %v2486
        %v3059 = vunpack.c.h.b16 %v2486
        %v3060 = vunpack.c.l.b16 %v2487
        %v3061 = vunpack.c.h.b16 %v2487
        %v3062 = vunpack.c.l.b16 %v2488
        %v3063 = vunpack.c.h.b16 %v2488
        %v3064 = vunpack.c.l.b16 %v2489
        %v3065 = vunpack.c.h.b16 %v2489
        %v3066 = vunpack.c.l.b16 %v2490
        %v3067 = vunpack.c.h.b16 %v2490
        %v3068 = vunpack.c.l.b16 %v2491
        %v3069 = vunpack.c.h.b16 %v2491
        %v3070 = vunpack.c.l.b16 %v2492
        %v3071 = vunpack.c.h.b16 %v2492
        %v3072 = vunpack.c.l.b16 %v2493
        %v3073 = vunpack.c.h.b16 %v2493
        %v3074 = vunpack.c.l.b16 %v2494
        %v3075 = vunpack.c.h.b16 %v2494
        %v3076 = vunpack.c.l.b16 %v2495
        %v3077 = vunpack.c.h.b16 %v2495
        %v3078 = vunpack.c.l.b16 %v2496
        %v3079 = vunpack.c.h.b16 %v2496
        %v3080 = vunpack.c.l.b16 %v2497
        %v3081 = vunpack.c.h.b16 %v2497
        %v3082 = vunpack.c.l.b16 %v2498
        %v3083 = vunpack.c.h.b16 %v2498
        %v3084 = vunpack.c.l.b16 %v2499
        %v3085 = vunpack.c.h.b16 %v2499
        %v3086 = vunpack.c.l.b16 %v2500
        %v3087 = vunpack.c.h.b16 %v2500
        %v3088 = vunpack.c.l.b16 %v2501
        %v3089 = vunpack.c.h.b16 %v2501
        %v3090 = vunpack.c.l.b16 %v2502
        %v3091 = vunpack.c.h.b16 %v2502
        %v3092 = vunpack.c.l.b16 %v2503
        %v3093 = vunpack.c.h.b16 %v2503
        %v3094 = vunpack.c.l.b16 %v2504
        %v3095 = vunpack.c.h.b16 %v2504
        %v3096 = vunpack.c.l.b16 %v2505
        %v3097 = vunpack.c.h.b16 %v2505
        %v3098 = vunpack.c.l.b16 %v2506
        %v3099 = vunpack.c.h.b16 %v2506
        %v3100 = vunpack.c.l.b16 %v2507
        %v3101 = vunpack.c.h.b16 %v2507
        %v3102 = vunpack.c.l.b16 %v2508
        %v3103 = vunpack.c.h.b16 %v2508
        %v3104 = vunpack.c.l.b16 %v2509
        %v3105 = vunpack.c.h.b16 %v2509
        %v3106 = vunpack.c.l.b16 %v2510
        %v3107 = vunpack.c.h.b16 %v2510
        %v3108 = vunpack.c.l.b16 %v2511
        %v3109 = vunpack.c.h.b16 %v2511
        %v3110 = vunpack.c.l.b16 %v2512
        %v3111 = vunpack.c.h.b16 %v2512
        %v3112 = vunpack.c.l.b16 %v2513
        %v3113 = vunpack.c.h.b16 %v2513
        %v3114 = vunpack.c.l.b16 %v2514
        %v3115 = vunpack.c.h.b16 %v2514
        %v3116 = vunpack.c.l.b16 %v2515
        %v3117 = vunpack.c.h.b16 %v2515
        %v3118 = vunpack.c.l.b16 %v2516
        %v3119 = vunpack.c.h.b16 %v2516
        %v3120 = vunpack.c.l.b16 %v2517
        %v3121 = vunpack.c.h.b16 %v2517
        %v3122 = vunpack.c.l.b16 %v2518
        %v3123 = vunpack.c.h.b16 %v2518
        %v3124 = vunpack.c.l.b16 %v2519
        %v3125 = vunpack.c.h.b16 %v2519
        %v3126 = vunpack.c.l.b16 %v2520
        %v3127 = vunpack.c.h.b16 %v2520
        %v3128 = vunpack.c.l.b16 %v2521
        %v3129 = vunpack.c.h.b16 %v2521
        %v3130 = vunpack.c.l.b16 %v2522
        %v3131 = vunpack.c.h.b16 %v2522
        %v3132 = vunpack.c.l.b16 %v2523
        %v3133 = vunpack.c.h.b16 %v2523
        %v3134 = vunpack.c.l.b16 %v2524
        %v3135 = vunpack.c.h.b16 %v2524
        %v3136 = vunpack.c.l.b16 %v2525
        %v3137 = vunpack.c.h.b16 %v2525
        %v3138 = vunpack.c.l.b16 %v2526
        %v3139 = vunpack.c.h.b16 %v2526
        %v3140 = vunpack.c.l.b16 %v2527
        %v3141 = vunpack.c.h.b16 %v2527
        %v3142 = vunpack.c.l.b16 %v2528
        %v3143 = vunpack.c.h.b16 %v2528
        %v3144 = vunpack.c.l.b16 %v2529
        %v3145 = vunpack.c.h.b16 %v2529
        %v3146 = vunpack.c.l.b16 %v2530
        %v3147 = vunpack.c.h.b16 %v2530
        %v3148 = vunpack.c.l.b16 %v2531
        %v3149 = vunpack.c.h.b16 %v2531
        %v3150 = vunpack.c.l.b16 %v2532
        %v3151 = vunpack.c.h.b16 %v2532
        %v3152 = vunpack.c.l.b16 %v2533
        %v3153 = vunpack.c.h.b16 %v2533
        %v3154 = vunpack.c.l.b16 %v2534
        %v3155 = vunpack.c.h.b16 %v2534
        %v3156 = vunpack.c.l.b16 %v2535
        %v3157 = vunpack.c.h.b16 %v2535
        %v3158 = vunpack.c.l.b16 %v2536
        %v3159 = vunpack.c.h.b16 %v2536
        %v3160 = vunpack.c.l.b16 %v2537
        %v3161 = vunpack.c.h.b16 %v2537
        %v3162 = vunpack.c.l.b16 %v2538
        %v3163 = vunpack.c.h.b16 %v2538
        %v3164 = vunpack.c.l.b16 %v2539
        %v3165 = vunpack.c.h.b16 %v2539
        %v3166 = vunpack.c.l.b16 %v2540
        %v3167 = vunpack.c.h.b16 %v2540
        %v3168 = vunpack.c.l.b16 %v2541
        %v3169 = vunpack.c.h.b16 %v2541
        %v3170 = vunpack.c.l.b16 %v2542
        %v3171 = vunpack.c.h.b16 %v2542
        %v3172 = vunpack.c.l.b16 %v2543
        %v3173 = vunpack.c.h.b16 %v2543
        %v3174 = vunpack.c.l.b16 %v2544
        %v3175 = vunpack.c.h.b16 %v2544
        %v3176 = vunpack.c.l.b16 %v2545
        %v3177 = vunpack.c.h.b16 %v2545
        %v3178 = vunpack.c.l.b16 %v2546
        %v3179 = vunpack.c.h.b16 %v2546
        %v3180 = vunpack.c.l.b16 %v2547
        %v3181 = vunpack.c.h.b16 %v2547
        %v3182 = vunpack.c.l.b16 %v2548
        %v3183 = vunpack.c.h.b16 %v2548
        %v3184 = vunpack.c.l.b16 %v2549
        %v3185 = vunpack.c.h.b16 %v2549
        %v3186 = vunpack.c.l.b16 %v2550
        %v3187 = vunpack.c.h.b16 %v2550
        %v3188 = vunpack.c.l.b16 %v2551
        %v3189 = vunpack.c.h.b16 %v2551
        %v3190 = vunpack.c.l.b16 %v2552
        %v3191 = vunpack.c.h.b16 %v2552
        %v3192 = vunpack.c.l.b16 %v2553
        %v3193 = vunpack.c.h.b16 %v2553
        %v3194 = vunpack.c.l.b16 %v2554
        %v3195 = vunpack.c.h.b16 %v2554
        %v3196 = vunpack.c.l.b16 %v2555
        %v3197 = vunpack.c.h.b16 %v2555
        %v3198 = vunpack.c.l.b16 %v2556
        %v3199 = vunpack.c.h.b16 %v2556
        %v3200 = vunpack.c.l.b16 %v2557
        %v3201 = vunpack.c.h.b16 %v2557
        %v3202 = vunpack.c.l.b16 %v2558
        %v3203 = vunpack.c.h.b16 %v2558
        %v3204 = vunpack.c.l.b16 %v2559
        %v3205 = vunpack.c.h.b16 %v2559
        %v3206 = vunpack.c.l.b16 %v2560
        %v3207 = vunpack.c.h.b16 %v2560
        %v3208 = vunpack.c.l.b16 %v2561
        %v3209 = vunpack.c.h.b16 %v2561
        %v3210 = vunpack.c.l.b16 %v2562
        %v3211 = vunpack.c.h.b16 %v2562
        %v3212 = vunpack.c.l.b16 %v2563
        %v3213 = vunpack.c.h.b16 %v2563
        %v3214 = vunpack.c.l.b16 %v2564
        %v3215 = vunpack.c.h.b16 %v2564
        %v3216 = vunpack.c.l.b16 %v2565
        %v3217 = vunpack.c.h.b16 %v2565
        %v3218 = vunpack.c.l.b16 %v2566
        %v3219 = vunpack.c.h.b16 %v2566
        %v3220 = vunpack.c.l.b16 %v2567
        %v3221 = vunpack.c.h.b16 %v2567
        %v3222 = vunpack.c.l.b16 %v2568
        %v3223 = vunpack.c.h.b16 %v2568
        %v3224 = vunpack.c.l.b16 %v2569
        %v3225 = vunpack.c.h.b16 %v2569
        %v3226 = vunpack.c.l.b16 %v2570
        %v3227 = vunpack.c.h.b16 %v2570
        %v3228 = vunpack.c.l.b16 %v2571
        %v3229 = vunpack.c.h.b16 %v2571
        %v3230 = vunpack.c.l.b16 %v2572
        %v3231 = vunpack.c.h.b16 %v2572
        %v3232 = vunpack.c.l.b16 %v2573
        %v3233 = vunpack.c.h.b16 %v2573
        %v3234 = vunpack.c.l.b16 %v2574
        %v3235 = vunpack.c.h.b16 %v2574
        %v3236 = vunpack.c.l.b16 %v2575
        %v3237 = vunpack.c.h.b16 %v2575
        %v3238 = vunpack.c.l.b16 %v2576
        %v3239 = vunpack.c.h.b16 %v2576
        %v3240 = vunpack.c.l.b16 %v2577
        %v3241 = vunpack.c.h.b16 %v2577
        %v3242 = vunpack.c.l.b16 %v2578
        %v3243 = vunpack.c.h.b16 %v2578
        %v3244 = vunpack.c.l.b16 %v2579
        %v3245 = vunpack.c.h.b16 %v2579
        %v3246 = vunpack.c.l.b16 %v2580
        %v3247 = vunpack.c.h.b16 %v2580
        %v3248 = vunpack.c.l.b16 %v2581
        %v3249 = vunpack.c.h.b16 %v2581
        %v3250 = vunpack.c.l.b16 %v2582
        %v3251 = vunpack.c.h.b16 %v2582
        %v3252 = vunpack.c.l.b16 %v2583
        %v3253 = vunpack.c.h.b16 %v2583
        %v3254 = vunpack.c.l.b16 %v2584
        %v3255 = vunpack.c.h.b16 %v2584
        %v3256 = vunpack.c.l.b16 %v2585
        %v3257 = vunpack.c.h.b16 %v2585
        %v3258 = vunpack.c.l.b16 %v2586
        %v3259 = vunpack.c.h.b16 %v2586
        %v3260 = vunpack.c.l.b16 %v2587
        %v3261 = vunpack.c.h.b16 %v2587
        %v3262 = vunpack.c.l.b16 %v2588
        %v3263 = vunpack.c.h.b16 %v2588
        %v3264 = vunpack.c.l.b16 %v2589
        %v3265 = vunpack.c.h.b16 %v2589
        %v3266 = vunpack.c.l.b16 %v2590
        %v3267 = vunpack.c.h.b16 %v2590
        %v3268 = vunpack.c.l.b16 %v2591
        %v3269 = vunpack.c.h.b16 %v2591
        %v3270 = vunpack.c.l.b16 %v2592
        %v3271 = vunpack.c.h.b16 %v2592
        %v3272 = vunpack.c.l.b16 %v2593
        %v3273 = vunpack.c.h.b16 %v2593
        %v3274 = vunpack.c.l.b16 %v2594
        %v3275 = vunpack.c.h.b16 %v2594
        %v3276 = vunpack.c.l.b16 %v2595
        %v3277 = vunpack.c.h.b16 %v2595
        %v3278 = vunpack.c.l.b16 %v2596
        %v3279 = vunpack.c.h.b16 %v2596
        %v3280 = vunpack.c.l.b16 %v2597
        %v3281 = vunpack.c.h.b16 %v2597
        %v3282 = vunpack.c.l.b16 %v2598
        %v3283 = vunpack.c.h.b16 %v2598
        %v3284 = vunpack.c.l.b16 %v2599
        %v3285 = vunpack.c.h.b16 %v2599
        %v3286 = vunpack.c.l.b16 %v2600
        %v3287 = vunpack.c.h.b16 %v2600
        %v3288 = vunpack.c.l.b16 %v2601
        %v3289 = vunpack.c.h.b16 %v2601
        %v3290 = vunpack.c.l.b16 %v2602
        %v3291 = vunpack.c.h.b16 %v2602
        %v3292 = vunpack.c.l.b16 %v2603
        %v3293 = vunpack.c.h.b16 %v2603
        %v3294 = vunpack.c.l.b16 %v2604
        %v3295 = vunpack.c.h.b16 %v2604
        %v3296 = vunpack.c.l.b16 %v2605
        %v3297 = vunpack.c.h.b16 %v2605
        %v3298 = vunpack.c.l.b16 %v2606
        %v3299 = vunpack.c.h.b16 %v2606
        %v3300 = vunpack.c.l.b16 %v2607
        %v3301 = vunpack.c.h.b16 %v2607
        %v3302 = vunpack.c.l.b16 %v2608
        %v3303 = vunpack.c.h.b16 %v2608
        %v3304 = vunpack.c.l.b16 %v2609
        %v3305 = vunpack.c.h.b16 %v2609
        %v3306 = vunpack.c.l.b16 %v2610
        %v3307 = vunpack.c.h.b16 %v2610
        %v3308 = vunpack.c.l.b16 %v2611
        %v3309 = vunpack.c.h.b16 %v2611
        %v3310 = vunpack.c.l.b16 %v2612
        %v3311 = vunpack.c.h.b16 %v2612
        %v3312 = vunpack.c.l.b16 %v2613
        %v3313 = vunpack.c.h.b16 %v2613
        %v3314 = vunpack.c.l.b16 %v2614
        %v3315 = vunpack.c.h.b16 %v2614
        %v3316 = vunpack.c.l.b16 %v2615
        %v3317 = vunpack.c.h.b16 %v2615
        %v3318 = vunpack.c.l.b16 %v2616
        %v3319 = vunpack.c.h.b16 %v2616
        %v3320 = vunpack.c.l.b16 %v2617
        %v3321 = vunpack.c.h.b16 %v2617
        %v3322 = vunpack.c.l.b16 %v2618
        %v3323 = vunpack.c.h.b16 %v2618
        %v3324 = vunpack.c.l.b16 %v2619
        %v3325 = vunpack.c.h.b16 %v2619
        %v3326 = vunpack.c.l.b16 %v2620
        %v3327 = vunpack.c.h.b16 %v2620
        %v3328 = vunpack.c.l.b16 %v2621
        %v3329 = vunpack.c.h.b16 %v2621
        %v3330 = vunpack.c.l.b16 %v2622
        %v3331 = vunpack.c.h.b16 %v2622
        %v3332 = vunpack.c.l.b16 %v2623
        %v3333 = vunpack.c.h.b16 %v2623
        %v3334 = vunpack.c.l.b16 %v2624
        %v3335 = vunpack.c.h.b16 %v2624
        %v3336 = vunpack.c.l.b16 %v2625
        %v3337 = vunpack.c.h.b16 %v2625
        %v3338 = vunpack.c.l.b16 %v2626
        %v3339 = vunpack.c.h.b16 %v2626
        %v3340 = vunpack.c.l.b16 %v2627
        %v3341 = vunpack.c.h.b16 %v2627
        %v3342 = vunpack.c.l.b16 %v2628
        %v3343 = vunpack.c.h.b16 %v2628
        %v3344 = vunpack.c.l.b16 %v2629
        %v3345 = vunpack.c.h.b16 %v2629
        %v3346 = vunpack.c.l.b16 %v2630
        %v3347 = vunpack.c.h.b16 %v2630
        %v3348 = vunpack.c.l.b16 %v2631
        %v3349 = vunpack.c.h.b16 %v2631
        %v3350 = vunpack.c.l.b16 %v2632
        %v3351 = vunpack.c.h.b16 %v2632
        %v3352 = vunpack.c.l.b16 %v2633
        %v3353 = vunpack.c.h.b16 %v2633
        %v3354 = vunpack.c.l.b16 %v2634
        %v3355 = vunpack.c.h.b16 %v2634
        %v3356 = vunpack.c.l.b16 %v2635
        %v3357 = vunpack.c.h.b16 %v2635
        %v3358 = vunpack.c.l.b16 %v2636
        %v3359 = vunpack.c.h.b16 %v2636
        %v3360 = vunpack.c.l.b16 %v2637
        %v3361 = vunpack.c.h.b16 %v2637
        %v3362 = vunpack.c.l.b16 %v2638
        %v3363 = vunpack.c.h.b16 %v2638
        %v3364 = vunpack.c.l.b16 %v2639
        %v3365 = vunpack.c.h.b16 %v2639
        %v3366 = vunpack.c.l.b16 %v2640
        %v3367 = vunpack.c.h.b16 %v2640
        %v3368 = vunpack.c.l.b16 %v2641
        %v3369 = vunpack.c.h.b16 %v2641
        %v3370 = vunpack.c.l.b16 %v2642
        %v3371 = vunpack.c.h.b16 %v2642
        %v3372 = vunpack.c.l.b16 %v2643
        %v3373 = vunpack.c.h.b16 %v2643
        %v3374 = vunpack.c.l.b16 %v2644
        %v3375 = vunpack.c.h.b16 %v2644
        %v3376 = vunpack.c.l.b16 %v2645
        %v3377 = vunpack.c.h.b16 %v2645
        %v3378 = vunpack.c.l.b16 %v2646
        %v3379 = vunpack.c.h.b16 %v2646
        %v3380 = vunpack.c.l.b16 %v2647
        %v3381 = vunpack.c.h.b16 %v2647
        %v3382 = vunpack.c.l.b16 %v2648
        %v3383 = vunpack.c.h.b16 %v2648
        %v3384 = vunpack.c.l.b16 %v2649
        %v3385 = vunpack.c.h.b16 %v2649
        %v3386 = vunpack.c.l.b16 %v2650
        %v3387 = vunpack.c.h.b16 %v2650
        %v3388 = vunpack.c.l.b16 %v2651
        %v3389 = vunpack.c.h.b16 %v2651
        %v3390 = vunpack.c.l.b16 %v2652
        %v3391 = vunpack.c.h.b16 %v2652
        %v3392 = vunpack.c.l.b16 %v2653
        %v3393 = vunpack.c.h.b16 %v2653
        %v3394 = vunpack.c.l.b16 %v2654
        %v3395 = vunpack.c.h.b16 %v2654
        %v3396 = vunpack.c.l.b16 %v2655
        %v3397 = vunpack.c.h.b16 %v2655
        %v3398 = vunpack.c.l.b16 %v2656
        %v3399 = vunpack.c.h.b16 %v2656
        %v3400 = vunpack.c.l.b16 %v2657
        %v3401 = vunpack.c.h.b16 %v2657
        %v3402 = vunpack.c.l.b16 %v2658
        %v3403 = vunpack.c.h.b16 %v2658
        %v3404 = vunpack.c.l.b16 %v2659
        %v3405 = vunpack.c.h.b16 %v2659
        %v3406 = vunpack.c.l.b16 %v2660
        %v3407 = vunpack.c.h.b16 %v2660
        %v3408 = vunpack.c.l.b16 %v2661
        %v3409 = vunpack.c.h.b16 %v2661
        %v3410 = vunpack.c.l.b16 %v2662
        %v3411 = vunpack.c.h.b16 %v2662
        %v3412 = vunpack.c.l.b16 %v2663
        %v3413 = vunpack.c.h.b16 %v2663
        %v3414 = vunpack.c.l.b16 %v2664
        %v3415 = vunpack.c.h.b16 %v2664
        %v3416 = vunpack.c.l.b16 %v2665
        %v3417 = vunpack.c.h.b16 %v2665
        %v3418 = vunpack.c.l.b16 %v2666
        %v3419 = vunpack.c.h.b16 %v2666
        %v3420 = vunpack.c.l.b16 %v2667
        %v3421 = vunpack.c.h.b16 %v2667
        %v3422 = vunpack.c.l.b16 %v2668
        %v3423 = vunpack.c.h.b16 %v2668
        %v3424 = vunpack.c.l.b16 %v2669
        %v3425 = vunpack.c.h.b16 %v2669
        %v3426 = vunpack.c.l.b16 %v2670
        %v3427 = vunpack.c.h.b16 %v2670
        %v3428 = vunpack.c.l.b16 %v2671
        %v3429 = vunpack.c.h.b16 %v2671
        %v3430 = vunpack.c.l.b16 %v2672
        %v3431 = vunpack.c.h.b16 %v2672
        %v3432 = vunpack.c.l.b16 %v2673
        %v3433 = vunpack.c.h.b16 %v2673
        %v3434 = vunpack.c.l.b16 %v2674
        %v3435 = vunpack.c.h.b16 %v2674
        %v3436 = vunpack.c.l.b16 %v2675
        %v3437 = vunpack.c.h.b16 %v2675
        %v3438 = vunpack.c.l.b16 %v2676
        %v3439 = vunpack.c.h.b16 %v2676
        %v3440 = vunpack.c.l.b16 %v2677
        %v3441 = vunpack.c.h.b16 %v2677
        %v3442 = vunpack.c.l.b16 %v2678
        %v3443 = vunpack.c.h.b16 %v2678
        %v3444 = vunpack.c.l.b16 %v2679
        %v3445 = vunpack.c.h.b16 %v2679
        %v3446 = vunpack.c.l.b16 %v2680
        %v3447 = vunpack.c.h.b16 %v2680
        %v3448 = vunpack.c.l.b16 %v2681
        %v3449 = vunpack.c.h.b16 %v2681
        %v3450 = vpack.c.b16 %v2940, %v2938
        %v3451 = vpack.c.b16 %v2941, %v2939
        %v3452 = vpack.c.b16 %v2944, %v2942
        %v3453 = vpack.c.b16 %v2945, %v2943
        %v3454 = vpack.c.b16 %v2948, %v2946
        %v3455 = vpack.c.b16 %v2949, %v2947
        %v3456 = vpack.c.b16 %v2952, %v2950
        %v3457 = vpack.c.b16 %v2953, %v2951
        %v3458 = vpack.c.b16 %v2956, %v2954
        %v3459 = vpack.c.b16 %v2957, %v2955
        %v3460 = vpack.c.b16 %v2960, %v2958
        %v3461 = vpack.c.b16 %v2961, %v2959
        %v3462 = vpack.c.b16 %v2964, %v2962
        %v3463 = vpack.c.b16 %v2965, %v2963
        %v3464 = vpack.c.b16 %v2968, %v2966
        %v3465 = vpack.c.b16 %v2969, %v2967
        %v3466 = vpack.c.b16 %v2972, %v2970
        %v3467 = vpack.c.b16 %v2973, %v2971
        %v3468 = vpack.c.b16 %v2976, %v2974
        %v3469 = vpack.c.b16 %v2977, %v2975
        %v3470 = vpack.c.b16 %v2980, %v2978
        %v3471 = vpack.c.b16 %v2981, %v2979
        %v3472 = vpack.c.b16 %v2984, %v2982
        %v3473 = vpack.c.b16 %v2985, %v2983
        %v3474 = vpack.c.b16 %v2988, %v2986
        %v3475 = vpack.c.b16 %v2989, %v2987
        %v3476 = vpack.c.b16 %v2992, %v2990
        %v3477 = vpack.c.b16 %v2993, %v2991
        %v3478 = vpack.c.b16 %v2996, %v2994
        %v3479 = vpack.c.b16 %v2997, %v2995
        %v3480 = vpack.c.b16 %v3000, %v2998
        %v3481 = vpack.c.b16 %v3001, %v2999
        %v3482 = vpack.c.b16 %v3004, %v3002
        %v3483 = vpack.c.b16 %v3005, %v3003
        %v3484 = vpack.c.b16 %v3008, %v3006
        %v3485 = vpack.c.b16 %v3009, %v3007
        %v3486 = vpack.c.b16 %v3012, %v3010
        %v3487 = vpack.c.b16 %v3013, %v3011
        %v3488 = vpack.c.b16 %v3016, %v3014
        %v3489 = vpack.c.b16 %v3017, %v3015
        %v3490 = vpack.c.b16 %v3020, %v3018
        %v3491 = vpack.c.b16 %v3021, %v3019
        %v3492 = vpack.c.b16 %v3024, %v3022
        %v3493 = vpack.c.b16 %v3025, %v3023
        %v3494 = vpack.c.b16 %v3028, %v3026
        %v3495 = vpack.c.b16 %v3029, %v3027
        %v3496 = vpack.c.b16 %v3032, %v3030
        %v3497 = vpack.c.b16 %v3033, %v3031
        %v3498 = vpack.c.b16 %v3036, %v3034
        %v3499 = vpack.c.b16 %v3037, %v3035
        %v3500 = vpack.c.b16 %v3040, %v3038
        %v3501 = vpack.c.b16 %v3041, %v3039
        %v3502 = vpack.c.b16 %v3044, %v3042
        %v3503 = vpack.c.b16 %v3045, %v3043
        %v3504 = vpack.c.b16 %v3048, %v3046
        %v3505 = vpack.c.b16 %v3049, %v3047
        %v3506 = vpack.c.b16 %v3052, %v3050
        %v3507 = vpack.c.b16 %v3053, %v3051
        %v3508 = vpack.c.b16 %v3056, %v3054
        %v3509 = vpack.c.b16 %v3057, %v3055
        %v3510 = vpack.c.b16 %v3060, %v3058
        %v3511 = vpack.c.b16 %v3061, %v3059
        %v3512 = vpack.c.b16 %v3064, %v3062
        %v3513 = vpack.c.b16 %v3065, %v3063
        %v3514 = vpack.c.b16 %v3068, %v3066
        %v3515 = vpack.c.b16 %v3069, %v3067
        %v3516 = vpack.c.b16 %v3072, %v3070
        %v3517 = vpack.c.b16 %v3073, %v3071
        %v3518 = vpack.c.b16 %v3076, %v3074
        %v3519 = vpack.c.b16 %v3077, %v3075
        %v3520 = vpack.c.b16 %v3080, %v3078
        %v3521 = vpack.c.b16 %v3081, %v3079
        %v3522 = vpack.c.b16 %v3084, %v3082
        %v3523 = vpack.c.b16 %v3085, %v3083
        %v3524 = vpack.c.b16 %v3088, %v3086
        %v3525 = vpack.c.b16 %v3089, %v3087
        %v3526 = vpack.c.b16 %v3092, %v3090
        %v3527 = vpack.c.b16 %v3093, %v3091
        %v3528 = vpack.c.b16 %v3096, %v3094
        %v3529 = vpack.c.b16 %v3097, %v3095
        %v3530 = vpack.c.b16 %v3100, %v3098
        %v3531 = vpack.c.b16 %v3101, %v3099
        %v3532 = vpack.c.b16 %v3104, %v3102
        %v3533 = vpack.c.b16 %v3105, %v3103
        %v3534 = vpack.c.b16 %v3108, %v3106
        %v3535 = vpack.c.b16 %v3109, %v3107
        %v3536 = vpack.c.b16 %v3112, %v3110
        %v3537 = vpack.c.b16 %v3113, %v3111
        %v3538 = vpack.c.b16 %v3116, %v3114
        %v3539 = vpack.c.b16 %v3117, %v3115
        %v3540 = vpack.c.b16 %v3120, %v3118
        %v3541 = vpack.c.b16 %v3121, %v3119
        %v3542 = vpack.c.b16 %v3124, %v3122
        %v3543 = vpack.c.b16 %v3125, %v3123
        %v3544 = vpack.c.b16 %v3128, %v3126
        %v3545 = vpack.c.b16 %v3129, %v3127
        %v3546 = vpack.c.b16 %v3132, %v3130
        %v3547 = vpack.c.b16 %v3133, %v3131
        %v3548 = vpack.c.b16 %v3136, %v3134
        %v3549 = vpack.c.b16 %v3137, %v3135
        %v3550 = vpack.c.b16 %v3140, %v3138
        %v3551 = vpack.c.b16 %v3141, %v3139
        %v3552 = vpack.c.b16 %v3144, %v3142
        %v3553 = vpack.c.b16 %v3145, %v3143
        %v3554 = vpack.c.b16 %v3148, %v3146
        %v3555 = vpack.c.b16 %v3149, %v3147
        %v3556 = vpack.c.b16 %v3152, %v3150
        %v3557 = vpack.c.b16 %v3153, %v3151
        %v3558 = vpack.c.b16 %v3156, %v3154
        %v3559 = vpack.c.b16 %v3157, %v3155
        %v3560 = vpack.c.b16 %v3160, %v3158
        %v3561 = vpack.c.b16 %v3161, %v3159
        %v3562 = vpack.c.b16 %v3164, %v3162
        %v3563 = vpack.c.b16 %v3165, %v3163
        %v3564 = vpack.c.b16 %v3168, %v3166
        %v3565 = vpack.c.b16 %v3169, %v3167
        %v3566 = vpack.c.b16 %v3172, %v3170
        %v3567 = vpack.c.b16 %v3173, %v3171
        %v3568 = vpack.c.b16 %v3176, %v3174
        %v3569 = vpack.c.b16 %v3177, %v3175
        %v3570 = vpack.c.b16 %v3180, %v3178
        %v3571 = vpack.c.b16 %v3181, %v3179
        %v3572 = vpack.c.b16 %v3184, %v3182
        %v3573 = vpack.c.b16 %v3185, %v3183
        %v3574 = vpack.c.b16 %v3188, %v3186
        %v3575 = vpack.c.b16 %v3189, %v3187
        %v3576 = vpack.c.b16 %v3192, %v3190
        %v3577 = vpack.c.b16 %v3193, %v3191
        %v3578 = vpack.c.b16 %v3196, %v3194
        %v3579 = vpack.c.b16 %v3197, %v3195
        %v3580 = vpack.c.b16 %v3200, %v3198
        %v3581 = vpack.c.b16 %v3201, %v3199
        %v3582 = vpack.c.b16 %v3204, %v3202
        %v3583 = vpack.c.b16 %v3205, %v3203
        %v3584 = vpack.c.b16 %v3208, %v3206
        %v3585 = vpack.c.b16 %v3209, %v3207
        %v3586 = vpack.c.b16 %v3212, %v3210
        %v3587 = vpack.c.b16 %v3213, %v3211
        %v3588 = vpack.c.b16 %v3216, %v3214
        %v3589 = vpack.c.b16 %v3217, %v3215
        %v3590 = vpack.c.b16 %v3220, %v3218
        %v3591 = vpack.c.b16 %v3221, %v3219
        %v3592 = vpack.c.b16 %v3224, %v3222
        %v3593 = vpack.c.b16 %v3225, %v3223
        %v3594 = vpack.c.b16 %v3228, %v3226
        %v3595 = vpack.c.b16 %v3229, %v3227
        %v3596 = vpack.c.b16 %v3232, %v3230
        %v3597 = vpack.c.b16 %v3233, %v3231
        %v3598 = vpack.c.b16 %v3236, %v3234
        %v3599 = vpack.c.b16 %v3237, %v3235
        %v3600 = vpack.c.b16 %v3240, %v3238
        %v3601 = vpack.c.b16 %v3241, %v3239
        %v3602 = vpack.c.b16 %v3244, %v3242
        %v3603 = vpack.c.b16 %v3245, %v3243
        %v3604 = vpack.c.b16 %v3248, %v3246
        %v3605 = vpack.c.b16 %v3249, %v3247
        %v3606 = vpack.c.b16 %v3252, %v3250
        %v3607 = vpack.c.b16 %v3253, %v3251
        %v3608 = vpack.c.b16 %v3256, %v3254
        %v3609 = vpack.c.b16 %v3257, %v3255
        %v3610 = vpack.c.b16 %v3260, %v3258
        %v3611 = vpack.c.b16 %v3261, %v3259
        %v3612 = vpack.c.b16 %v3264, %v3262
        %v3613 = vpack.c.b16 %v3265, %v3263
        %v3614 = vpack.c.b16 %v3268, %v3266
        %v3615 = vpack.c.b16 %v3269, %v3267
        %v3616 = vpack.c.b16 %v3272, %v3270
        %v3617 = vpack.c.b16 %v3273, %v3271
        %v3618 = vpack.c.b16 %v3276, %v3274
        %v3619 = vpack.c.b16 %v3277, %v3275
        %v3620 = vpack.c.b16 %v3280, %v3278
        %v3621 = vpack.c.b16 %v3281, %v3279
        %v3622 = vpack.c.b16 %v3284, %v3282
        %v3623 = vpack.c.b16 %v3285, %v3283
        %v3624 = vpack.c.b16 %v3288, %v3286
        %v3625 = vpack.c.b16 %v3289, %v3287
        %v3626 = vpack.c.b16 %v3292, %v3290
        %v3627 = vpack.c.b16 %v3293, %v3291
        %v3628 = vpack.c.b16 %v3296, %v3294
        %v3629 = vpack.c.b16 %v3297, %v3295
        %v3630 = vpack.c.b16 %v3300, %v3298
        %v3631 = vpack.c.b16 %v3301, %v3299
        %v3632 = vpack.c.b16 %v3304, %v3302
        %v3633 = vpack.c.b16 %v3305, %v3303
        %v3634 = vpack.c.b16 %v3308, %v3306
        %v3635 = vpack.c.b16 %v3309, %v3307
        %v3636 = vpack.c.b16 %v3312, %v3310
        %v3637 = vpack.c.b16 %v3313, %v3311
        %v3638 = vpack.c.b16 %v3316, %v3314
        %v3639 = vpack.c.b16 %v3317, %v3315
        %v3640 = vpack.c.b16 %v3320, %v3318
        %v3641 = vpack.c.b16 %v3321, %v3319
        %v3642 = vpack.c.b16 %v3324, %v3322
        %v3643 = vpack.c.b16 %v3325, %v3323
        %v3644 = vpack.c.b16 %v3328, %v3326
        %v3645 = vpack.c.b16 %v3329, %v3327
        %v3646 = vpack.c.b16 %v3332, %v3330
        %v3647 = vpack.c.b16 %v3333, %v3331
        %v3648 = vpack.c.b16 %v3336, %v3334
        %v3649 = vpack.c.b16 %v3337, %v3335
        %v3650 = vpack.c.b16 %v3340, %v3338
        %v3651 = vpack.c.b16 %v3341, %v3339
        %v3652 = vpack.c.b16 %v3344, %v3342
        %v3653 = vpack.c.b16 %v3345, %v3343
        %v3654 = vpack.c.b16 %v3348, %v3346
        %v3655 = vpack.c.b16 %v3349, %v3347
        %v3656 = vpack.c.b16 %v3352, %v3350
        %v3657 = vpack.c.b16 %v3353, %v3351
        %v3658 = vpack.c.b16 %v3356, %v3354
        %v3659 = vpack.c.b16 %v3357, %v3355
        %v3660 = vpack.c.b16 %v3360, %v3358
        %v3661 = vpack.c.b16 %v3361, %v3359
        %v3662 = vpack.c.b16 %v3364, %v3362
        %v3663 = vpack.c.b16 %v3365, %v3363
        %v3664 = vpack.c.b16 %v3368, %v3366
        %v3665 = vpack.c.b16 %v3369, %v3367
        %v3666 = vpack.c.b16 %v3372, %v3370
        %v3667 = vpack.c.b16 %v3373, %v3371
        %v3668 = vpack.c.b16 %v3376, %v3374
        %v3669 = vpack.c.b16 %v3377, %v3375
        %v3670 = vpack.c.b16 %v3380, %v3378
        %v3671 = vpack.c.b16 %v3381, %v3379
        %v3672 = vpack.c.b16 %v3384, %v3382
        %v3673 = vpack.c.b16 %v3385, %v3383
        %v3674 = vpack.c.b16 %v3388, %v3386
        %v3675 = vpack.c.b16 %v3389, %v3387
        %v3676 = vpack.c.b16 %v3392, %v3390
        %v3677 = vpack.c.b16 %v3393, %v3391
        %v3678 = vpack.c.b16 %v3396, %v3394
        %v3679 = vpack.c.b16 %v3397, %v3395
        %v3680 = vpack.c.b16 %v3400, %v3398
        %v3681 = vpack.c.b16 %v3401, %v3399
        %v3682 = vpack.c.b16 %v3404, %v3402
        %v3683 = vpack.c.b16 %v3405, %v3403
        %v3684 = vpack.c.b16 %v3408, %v3406
        %v3685 = vpack.c.b16 %v3409, %v3407
        %v3686 = vpack.c.b16 %v3412, %v3410
        %v3687 = vpack.c.b16 %v3413, %v3411
        %v3688 = vpack.c.b16 %v3416, %v3414
        %v3689 = vpack.c.b16 %v3417, %v3415
        %v3690 = vpack.c.b16 %v3420, %v3418
        %v3691 = vpack.c.b16 %v3421, %v3419
        %v3692 = vpack.c.b16 %v3424, %v3422
        %v3693 = vpack.c.b16 %v3425, %v3423
        %v3694 = vpack.c.b16 %v3428, %v3426
        %v3695 = vpack.c.b16 %v3429, %v3427
        %v3696 = vpack.c.b16 %v3432, %v3430
        %v3697 = vpack.c.b16 %v3433, %v3431
        %v3698 = vpack.c.b16 %v3436, %v3434
        %v3699 = vpack.c.b16 %v3437, %v3435
        %v3700 = vpack.c.b16 %v3440, %v3438
        %v3701 = vpack.c.b16 %v3441, %v3439
        %v3702 = vpack.c.b16 %v3444, %v3442
        %v3703 = vpack.c.b16 %v3445, %v3443
        %v3704 = vpack.c.b16 %v3448, %v3446
        %v3705 = vpack.c.b16 %v3449, %v3447
        %3962 = vmatprep.subr.bf16.mxu0 %v3465
        %3963 = vmatpush1.bf16.msra.mxu0 %v3464
        %3964 = vmatprep.subr.bf16.mxu0 %v3463
        %3965 = vmatpush1.bf16.msra.mxu0 %v3462
        %3966 = vmatprep.subr.bf16.mxu0 %v3461
        %3967 = vmatpush1.bf16.msra.mxu0 %v3460
        %3968 = vmatprep.subr.bf16.mxu0 %v3459
        %3969 = vmatpush1.bf16.msra.mxu0 %v3458
        %3970 = vmatprep.subr.bf16.mxu0 %v3457
        %3971 = vmatpush1.bf16.msra.mxu0 %v3456
        %3972 = vmatprep.subr.bf16.mxu0 %v3455
        %3973 = vmatpush1.bf16.msra.mxu0 %v3454
        %3974 = vmatprep.subr.bf16.mxu0 %v3453
        %3975 = vmatpush1.bf16.msra.mxu0 %v3452
        %3976 = vmatprep.subr.bf16.mxu0 %v3451
        %3977 = vmatpush1.bf16.msra.mxu0 %v3450
        %3978 = vmatprep.subr.bf16.mxu0 %v3481
        %3979 = vmatpush2.bf16.msra.mxu0 %v3480
        %3980 = vmatprep.subr.bf16.mxu0 %v3479
        %3981 = vmatpush2.bf16.msra.mxu0 %v3478
        %3982 = vmatprep.subr.bf16.mxu0 %v3477
        %3983 = vmatpush2.bf16.msra.mxu0 %v3476
        %3984 = vmatprep.subr.bf16.mxu0 %v3475
        %3985 = vmatpush2.bf16.msra.mxu0 %v3474
        %3986 = vmatprep.subr.bf16.mxu0 %v3473
        %3987 = vmatpush2.bf16.msra.mxu0 %v3472
        %3988 = vmatprep.subr.bf16.mxu0 %v3471
        %3989 = vmatpush2.bf16.msra.mxu0 %v3470
        %3990 = vmatprep.subr.bf16.mxu0 %v3469
        %3991 = vmatpush2.bf16.msra.mxu0 %v3468
        %3992 = vmatprep.subr.bf16.mxu0 %v3467
        %3993 = vmatpush2.bf16.msra.mxu0 %v3466
        %3994 = vmatprep.mubr.bf16.mxu0 %v2408
        %3995 = vmatmul.mubr.bf16.gmra.mxu0 %v2407
        %v3996 = vpop.f32.mrf.mxu0
        %v3997 = vadd.f32 0.0, %v3996
        %v3998 = vpop.f32.mrf.mxu0
        %v3999 = vadd.f32 0.0, %v3998
        %v4000 = vpop.f32.mrf.mxu0
        %v4001 = vadd.f32 0.0, %v4000
        %v4002 = vpop.f32.mrf.mxu0
        %v4003 = vadd.f32 0.0, %v4002
        %4004 = vdwg.mxu0
        %4005 = vmatprep.subr.bf16.mxu0 %v3497
        %4006 = vmatpush1.bf16.msra.mxu0 %v3496
        %4007 = vmatprep.subr.bf16.mxu0 %v3495
        %4008 = vmatpush1.bf16.msra.mxu0 %v3494
        %4009 = vmatprep.subr.bf16.mxu0 %v3493
        %4010 = vmatpush1.bf16.msra.mxu0 %v3492
        %4011 = vmatprep.subr.bf16.mxu0 %v3491
        %4012 = vmatpush1.bf16.msra.mxu0 %v3490
        %4013 = vmatprep.subr.bf16.mxu0 %v3489
        %4014 = vmatpush1.bf16.msra.mxu0 %v3488
        %4015 = vmatprep.subr.bf16.mxu0 %v3487
        %4016 = vmatpush1.bf16.msra.mxu0 %v3486
        %4017 = vmatprep.subr.bf16.mxu0 %v3485
        %4018 = vmatpush1.bf16.msra.mxu0 %v3484
        %4019 = vmatprep.subr.bf16.mxu0 %v3483
        %4020 = vmatpush1.bf16.msra.mxu0 %v3482
        %4021 = vmatprep.subr.bf16.mxu0 %v3513
        %4022 = vmatpush2.bf16.msra.mxu0 %v3512
        %4023 = vmatprep.subr.bf16.mxu0 %v3511
        %4024 = vmatpush2.bf16.msra.mxu0 %v3510
        %4025 = vmatprep.subr.bf16.mxu0 %v3509
        %4026 = vmatpush2.bf16.msra.mxu0 %v3508
        %4027 = vmatprep.subr.bf16.mxu0 %v3507
        %4028 = vmatpush2.bf16.msra.mxu0 %v3506
        %4029 = vmatprep.subr.bf16.mxu0 %v3505
        %4030 = vmatpush2.bf16.msra.mxu0 %v3504
        %4031 = vmatprep.subr.bf16.mxu0 %v3503
        %4032 = vmatpush2.bf16.msra.mxu0 %v3502
        %4033 = vmatprep.subr.bf16.mxu0 %v3501
        %4034 = vmatpush2.bf16.msra.mxu0 %v3500
        %4035 = vmatprep.subr.bf16.mxu0 %v3499
        %4036 = vmatpush2.bf16.msra.mxu0 %v3498
        %4037 = vmatprep.mubr.bf16.mxu0 %v2410
        %4038 = vmatmul.mubr.bf16.gmra.mxu0 %v2409
        %v4039 = vpop.f32.mrf.mxu0
        %v4040 = vadd.f32 %v3997, %v4039
        %v4041 = vpop.f32.mrf.mxu0
        %v4042 = vadd.f32 %v3999, %v4041
        %v4043 = vpop.f32.mrf.mxu0
        %v4044 = vadd.f32 %v4001, %v4043
        %v4045 = vpop.f32.mrf.mxu0
        %v4046 = vadd.f32 %v4003, %v4045
        %4047 = vdwg.mxu0
        %4048 = vmatprep.subr.bf16.mxu0 %v3529
        %4049 = vmatpush1.bf16.msra.mxu0 %v3528
        %4050 = vmatprep.subr.bf16.mxu0 %v3527
        %4051 = vmatpush1.bf16.msra.mxu0 %v3526
        %4052 = vmatprep.subr.bf16.mxu0 %v3525
        %4053 = vmatpush1.bf16.msra.mxu0 %v3524
        %4054 = vmatprep.subr.bf16.mxu0 %v3523
        %4055 = vmatpush1.bf16.msra.mxu0 %v3522
        %4056 = vmatprep.subr.bf16.mxu0 %v3521
        %4057 = vmatpush1.bf16.msra.mxu0 %v3520
        %4058 = vmatprep.subr.bf16.mxu0 %v3519
        %4059 = vmatpush1.bf16.msra.mxu0 %v3518
        %4060 = vmatprep.subr.bf16.mxu0 %v3517
        %4061 = vmatpush1.bf16.msra.mxu0 %v3516
        %4062 = vmatprep.subr.bf16.mxu0 %v3515
        %4063 = vmatpush1.bf16.msra.mxu0 %v3514
        %4064 = vmatprep.subr.bf16.mxu0 %v3545
        %4065 = vmatpush2.bf16.msra.mxu0 %v3544
        %4066 = vmatprep.subr.bf16.mxu0 %v3543
        %4067 = vmatpush2.bf16.msra.mxu0 %v3542
        %4068 = vmatprep.subr.bf16.mxu0 %v3541
        %4069 = vmatpush2.bf16.msra.mxu0 %v3540
        %4070 = vmatprep.subr.bf16.mxu0 %v3539
        %4071 = vmatpush2.bf16.msra.mxu0 %v3538
        %4072 = vmatprep.subr.bf16.mxu0 %v3537
        %4073 = vmatpush2.bf16.msra.mxu0 %v3536
        %4074 = vmatprep.subr.bf16.mxu0 %v3535
        %4075 = vmatpush2.bf16.msra.mxu0 %v3534
        %4076 = vmatprep.subr.bf16.mxu0 %v3533
        %4077 = vmatpush2.bf16.msra.mxu0 %v3532
        %4078 = vmatprep.subr.bf16.mxu0 %v3531
        %4079 = vmatpush2.bf16.msra.mxu0 %v3530
        %4080 = vmatprep.mubr.bf16.mxu0 %v2412
        %4081 = vmatmul.mubr.bf16.gmra.mxu0 %v2411
        %v4082 = vpop.f32.mrf.mxu0
        %v4083 = vadd.f32 %v4040, %v4082
        %v4084 = vpop.f32.mrf.mxu0
        %v4085 = vadd.f32 %v4042, %v4084
        %v4086 = vpop.f32.mrf.mxu0
        %v4087 = vadd.f32 %v4044, %v4086
        %v4088 = vpop.f32.mrf.mxu0
        %v4089 = vadd.f32 %v4046, %v4088
        %4090 = vdwg.mxu0
        %4091 = vmatprep.subr.bf16.mxu0 %v3561
        %4092 = vmatpush1.bf16.msra.mxu0 %v3560
        %4093 = vmatprep.subr.bf16.mxu0 %v3559
        %4094 = vmatpush1.bf16.msra.mxu0 %v3558
        %4095 = vmatprep.subr.bf16.mxu0 %v3557
        %4096 = vmatpush1.bf16.msra.mxu0 %v3556
        %4097 = vmatprep.subr.bf16.mxu0 %v3555
        %4098 = vmatpush1.bf16.msra.mxu0 %v3554
        %4099 = vmatprep.subr.bf16.mxu0 %v3553
        %4100 = vmatpush1.bf16.msra.mxu0 %v3552
        %4101 = vmatprep.subr.bf16.mxu0 %v3551
        %4102 = vmatpush1.bf16.msra.mxu0 %v3550
        %4103 = vmatprep.subr.bf16.mxu0 %v3549
        %4104 = vmatpush1.bf16.msra.mxu0 %v3548
        %4105 = vmatprep.subr.bf16.mxu0 %v3547
        %4106 = vmatpush1.bf16.msra.mxu0 %v3546
        %4107 = vmatprep.subr.bf16.mxu0 %v3577
        %4108 = vmatpush2.bf16.msra.mxu0 %v3576
        %4109 = vmatprep.subr.bf16.mxu0 %v3575
        %4110 = vmatpush2.bf16.msra.mxu0 %v3574
        %4111 = vmatprep.subr.bf16.mxu0 %v3573
        %4112 = vmatpush2.bf16.msra.mxu0 %v3572
        %4113 = vmatprep.subr.bf16.mxu0 %v3571
        %4114 = vmatpush2.bf16.msra.mxu0 %v3570
        %4115 = vmatprep.subr.bf16.mxu0 %v3569
        %4116 = vmatpush2.bf16.msra.mxu0 %v3568
        %4117 = vmatprep.subr.bf16.mxu0 %v3567
        %4118 = vmatpush2.bf16.msra.mxu0 %v3566
        %4119 = vmatprep.subr.bf16.mxu0 %v3565
        %4120 = vmatpush2.bf16.msra.mxu0 %v3564
        %4121 = vmatprep.subr.bf16.mxu0 %v3563
        %4122 = vmatpush2.bf16.msra.mxu0 %v3562
        %4123 = vmatprep.mubr.bf16.mxu0 %v2414
        %4124 = vmatmul.mubr.bf16.gmra.mxu0 %v2413
        %v4125 = vpop.f32.mrf.mxu0
        %v4126 = vadd.f32 %v4083, %v4125
        %v4127 = vpop.f32.mrf.mxu0
        %v4128 = vadd.f32 %v4085, %v4127
        %v4129 = vpop.f32.mrf.mxu0
        %v4130 = vadd.f32 %v4087, %v4129
        %v4131 = vpop.f32.mrf.mxu0
        %v4132 = vadd.f32 %v4089, %v4131
        %4133 = vdwg.mxu0
        %4134 = vmatprep.subr.bf16.mxu0 %v3593
        %4135 = vmatpush1.bf16.msra.mxu0 %v3592
        %4136 = vmatprep.subr.bf16.mxu0 %v3591
        %4137 = vmatpush1.bf16.msra.mxu0 %v3590
        %4138 = vmatprep.subr.bf16.mxu0 %v3589
        %4139 = vmatpush1.bf16.msra.mxu0 %v3588
        %4140 = vmatprep.subr.bf16.mxu0 %v3587
        %4141 = vmatpush1.bf16.msra.mxu0 %v3586
        %4142 = vmatprep.subr.bf16.mxu0 %v3585
        %4143 = vmatpush1.bf16.msra.mxu0 %v3584
        %4144 = vmatprep.subr.bf16.mxu0 %v3583
        %4145 = vmatpush1.bf16.msra.mxu0 %v3582
        %4146 = vmatprep.subr.bf16.mxu0 %v3581
        %4147 = vmatpush1.bf16.msra.mxu0 %v3580
        %4148 = vmatprep.subr.bf16.mxu0 %v3579
        %4149 = vmatpush1.bf16.msra.mxu0 %v3578
        %4150 = vmatprep.subr.bf16.mxu0 %v3609
        %4151 = vmatpush2.bf16.msra.mxu0 %v3608
        %4152 = vmatprep.subr.bf16.mxu0 %v3607
        %4153 = vmatpush2.bf16.msra.mxu0 %v3606
        %4154 = vmatprep.subr.bf16.mxu0 %v3605
        %4155 = vmatpush2.bf16.msra.mxu0 %v3604
        %4156 = vmatprep.subr.bf16.mxu0 %v3603
        %4157 = vmatpush2.bf16.msra.mxu0 %v3602
        %4158 = vmatprep.subr.bf16.mxu0 %v3601
        %4159 = vmatpush2.bf16.msra.mxu0 %v3600
        %4160 = vmatprep.subr.bf16.mxu0 %v3599
        %4161 = vmatpush2.bf16.msra.mxu0 %v3598
        %4162 = vmatprep.subr.bf16.mxu0 %v3597
        %4163 = vmatpush2.bf16.msra.mxu0 %v3596
        %4164 = vmatprep.subr.bf16.mxu0 %v3595
        %4165 = vmatpush2.bf16.msra.mxu0 %v3594
        %4166 = vmatprep.mubr.bf16.mxu0 %v2416
        %4167 = vmatmul.mubr.bf16.gmra.mxu0 %v2415
        %v4168 = vpop.f32.mrf.mxu0
        %v4169 = vadd.f32 %v4126, %v4168
        %v4170 = vpop.f32.mrf.mxu0
        %v4171 = vadd.f32 %v4128, %v4170
        %v4172 = vpop.f32.mrf.mxu0
        %v4173 = vadd.f32 %v4130, %v4172
        %v4174 = vpop.f32.mrf.mxu0
        %v4175 = vadd.f32 %v4132, %v4174
        %4176 = vdwg.mxu0
        %4177 = vmatprep.subr.bf16.mxu0 %v3625
        %4178 = vmatpush1.bf16.msra.mxu0 %v3624
        %4179 = vmatprep.subr.bf16.mxu0 %v3623
        %4180 = vmatpush1.bf16.msra.mxu0 %v3622
        %4181 = vmatprep.subr.bf16.mxu0 %v3621
        %4182 = vmatpush1.bf16.msra.mxu0 %v3620
        %4183 = vmatprep.subr.bf16.mxu0 %v3619
        %4184 = vmatpush1.bf16.msra.mxu0 %v3618
        %4185 = vmatprep.subr.bf16.mxu0 %v3617
        %4186 = vmatpush1.bf16.msra.mxu0 %v3616
        %4187 = vmatprep.subr.bf16.mxu0 %v3615
        %4188 = vmatpush1.bf16.msra.mxu0 %v3614
        %4189 = vmatprep.subr.bf16.mxu0 %v3613
        %4190 = vmatpush1.bf16.msra.mxu0 %v3612
        %4191 = vmatprep.subr.bf16.mxu0 %v3611
        %4192 = vmatpush1.bf16.msra.mxu0 %v3610
        %4193 = vmatprep.subr.bf16.mxu0 %v3641
        %4194 = vmatpush2.bf16.msra.mxu0 %v3640
        %4195 = vmatprep.subr.bf16.mxu0 %v3639
        %4196 = vmatpush2.bf16.msra.mxu0 %v3638
        %4197 = vmatprep.subr.bf16.mxu0 %v3637
        %4198 = vmatpush2.bf16.msra.mxu0 %v3636
        %4199 = vmatprep.subr.bf16.mxu0 %v3635
        %4200 = vmatpush2.bf16.msra.mxu0 %v3634
        %4201 = vmatprep.subr.bf16.mxu0 %v3633
        %4202 = vmatpush2.bf16.msra.mxu0 %v3632
        %4203 = vmatprep.subr.bf16.mxu0 %v3631
        %4204 = vmatpush2.bf16.msra.mxu0 %v3630
        %4205 = vmatprep.subr.bf16.mxu0 %v3629
        %4206 = vmatpush2.bf16.msra.mxu0 %v3628
        %4207 = vmatprep.subr.bf16.mxu0 %v3627
        %4208 = vmatpush2.bf16.msra.mxu0 %v3626
        %4209 = vmatprep.mubr.bf16.mxu0 %v2418
        %4210 = vmatmul.mubr.bf16.gmra.mxu0 %v2417
        %v4211 = vpop.f32.mrf.mxu0
        %v4212 = vadd.f32 %v4169, %v4211
        %v4213 = vpop.f32.mrf.mxu0
        %v4214 = vadd.f32 %v4171, %v4213
        %v4215 = vpop.f32.mrf.mxu0
        %v4216 = vadd.f32 %v4173, %v4215
        %v4217 = vpop.f32.mrf.mxu0
        %v4218 = vadd.f32 %v4175, %v4217
        %4219 = vdwg.mxu0
        %4220 = vmatprep.subr.bf16.mxu0 %v3657
        %4221 = vmatpush1.bf16.msra.mxu0 %v3656
        %4222 = vmatprep.subr.bf16.mxu0 %v3655
        %4223 = vmatpush1.bf16.msra.mxu0 %v3654
        %4224 = vmatprep.subr.bf16.mxu0 %v3653
        %4225 = vmatpush1.bf16.msra.mxu0 %v3652
        %4226 = vmatprep.subr.bf16.mxu0 %v3651
        %4227 = vmatpush1.bf16.msra.mxu0 %v3650
        %4228 = vmatprep.subr.bf16.mxu0 %v3649
        %4229 = vmatpush1.bf16.msra.mxu0 %v3648
        %4230 = vmatprep.subr.bf16.mxu0 %v3647
        %4231 = vmatpush1.bf16.msra.mxu0 %v3646
        %4232 = vmatprep.subr.bf16.mxu0 %v3645
        %4233 = vmatpush1.bf16.msra.mxu0 %v3644
        %4234 = vmatprep.subr.bf16.mxu0 %v3643
        %4235 = vmatpush1.bf16.msra.mxu0 %v3642
        %4236 = vmatprep.subr.bf16.mxu0 %v3673
        %4237 = vmatpush2.bf16.msra.mxu0 %v3672
        %4238 = vmatprep.subr.bf16.mxu0 %v3671
        %4239 = vmatpush2.bf16.msra.mxu0 %v3670
        %4240 = vmatprep.subr.bf16.mxu0 %v3669
        %4241 = vmatpush2.bf16.msra.mxu0 %v3668
        %4242 = vmatprep.subr.bf16.mxu0 %v3667
        %4243 = vmatpush2.bf16.msra.mxu0 %v3666
        %4244 = vmatprep.subr.bf16.mxu0 %v3665
        %4245 = vmatpush2.bf16.msra.mxu0 %v3664
        %4246 = vmatprep.subr.bf16.mxu0 %v3663
        %4247 = vmatpush2.bf16.msra.mxu0 %v3662
        %4248 = vmatprep.subr.bf16.mxu0 %v3661
        %4249 = vmatpush2.bf16.msra.mxu0 %v3660
        %4250 = vmatprep.subr.bf16.mxu0 %v3659
        %4251 = vmatpush2.bf16.msra.mxu0 %v3658
        %4252 = vmatprep.mubr.bf16.mxu0 %v2420
        %4253 = vmatmul.mubr.bf16.gmra.mxu0 %v2419
        %v4254 = vpop.f32.mrf.mxu0
        %v4255 = vadd.f32 %v4212, %v4254
        %v4256 = vpop.f32.mrf.mxu0
        %v4257 = vadd.f32 %v4214, %v4256
        %v4258 = vpop.f32.mrf.mxu0
        %v4259 = vadd.f32 %v4216, %v4258
        %v4260 = vpop.f32.mrf.mxu0
        %v4261 = vadd.f32 %v4218, %v4260
        %4262 = vdwg.mxu0
        %4263 = vmatprep.subr.bf16.mxu0 %v3689
        %4264 = vmatpush1.bf16.msra.mxu0 %v3688
        %4265 = vmatprep.subr.bf16.mxu0 %v3687
        %4266 = vmatpush1.bf16.msra.mxu0 %v3686
        %4267 = vmatprep.subr.bf16.mxu0 %v3685
        %4268 = vmatpush1.bf16.msra.mxu0 %v3684
        %4269 = vmatprep.subr.bf16.mxu0 %v3683
        %4270 = vmatpush1.bf16.msra.mxu0 %v3682
        %4271 = vmatprep.subr.bf16.mxu0 %v3681
        %4272 = vmatpush1.bf16.msra.mxu0 %v3680
        %4273 = vmatprep.subr.bf16.mxu0 %v3679
        %4274 = vmatpush1.bf16.msra.mxu0 %v3678
        %4275 = vmatprep.subr.bf16.mxu0 %v3677
        %4276 = vmatpush1.bf16.msra.mxu0 %v3676
        %4277 = vmatprep.subr.bf16.mxu0 %v3675
        %4278 = vmatpush1.bf16.msra.mxu0 %v3674
        %4279 = vmatprep.subr.bf16.mxu0 %v3705
        %4280 = vmatpush2.bf16.msra.mxu0 %v3704
        %4281 = vmatprep.subr.bf16.mxu0 %v3703
        %4282 = vmatpush2.bf16.msra.mxu0 %v3702
        %4283 = vmatprep.subr.bf16.mxu0 %v3701
        %4284 = vmatpush2.bf16.msra.mxu0 %v3700
        %4285 = vmatprep.subr.bf16.mxu0 %v3699
        %4286 = vmatpush2.bf16.msra.mxu0 %v3698
        %4287 = vmatprep.subr.bf16.mxu0 %v3697
        %4288 = vmatpush2.bf16.msra.mxu0 %v3696
        %4289 = vmatprep.subr.bf16.mxu0 %v3695
        %4290 = vmatpush2.bf16.msra.mxu0 %v3694
        %4291 = vmatprep.subr.bf16.mxu0 %v3693
        %4292 = vmatpush2.bf16.msra.mxu0 %v3692
        %4293 = vmatprep.subr.bf16.mxu0 %v3691
        %4294 = vmatpush2.bf16.msra.mxu0 %v3690
        %4295 = vmatprep.mubr.bf16.mxu0 %v2422
        %4296 = vmatmul.mubr.bf16.gmra.mxu0 %v2421
        %v4297 = vpop.f32.mrf.mxu0
        %v4298 = vadd.f32 %v4255, %v4297
        %v4299 = vpop.f32.mrf.mxu0
        %v4300 = vadd.f32 %v4257, %v4299
        %v4301 = vpop.f32.mrf.mxu0
        %v4302 = vadd.f32 %v4259, %v4301
        %v4303 = vpop.f32.mrf.mxu0
        %v4304 = vadd.f32 %v4261, %v4303
        %4305 = vdwg.mxu0
        %v4562 = vunpack.c.l.b16 %v1273
        %v4563 = vunpack.c.h.b16 %v1273
        %v4564 = vunpack.c.l.b16 %v1274
        %v4565 = vunpack.c.h.b16 %v1274
        %v4566 = vunpack.c.l.b16 %v1275
        %v4567 = vunpack.c.h.b16 %v1275
        %v4568 = vunpack.c.l.b16 %v1276
        %v4569 = vunpack.c.h.b16 %v1276
        %v4570 = vunpack.c.l.b16 %v1277
        %v4571 = vunpack.c.h.b16 %v1277
        %v4572 = vunpack.c.l.b16 %v1278
        %v4573 = vunpack.c.h.b16 %v1278
        %v4574 = vunpack.c.l.b16 %v1279
        %v4575 = vunpack.c.h.b16 %v1279
        %v4576 = vunpack.c.l.b16 %v1280
        %v4577 = vunpack.c.h.b16 %v1280
        %v4578 = vunpack.c.l.b16 %v1281
        %v4579 = vunpack.c.h.b16 %v1281
        %v4580 = vunpack.c.l.b16 %v1282
        %v4581 = vunpack.c.h.b16 %v1282
        %v4582 = vunpack.c.l.b16 %v1283
        %v4583 = vunpack.c.h.b16 %v1283
        %v4584 = vunpack.c.l.b16 %v1284
        %v4585 = vunpack.c.h.b16 %v1284
        %v4586 = vunpack.c.l.b16 %v1285
        %v4587 = vunpack.c.h.b16 %v1285
        %v4588 = vunpack.c.l.b16 %v1286
        %v4589 = vunpack.c.h.b16 %v1286
        %v4590 = vunpack.c.l.b16 %v1287
        %v4591 = vunpack.c.h.b16 %v1287
        %v4592 = vunpack.c.l.b16 %v1288
        %v4593 = vunpack.c.h.b16 %v1288
        %v4594 = vunpack.c.l.b16 %v1289
        %v4595 = vunpack.c.h.b16 %v1289
        %v4596 = vunpack.c.l.b16 %v1290
        %v4597 = vunpack.c.h.b16 %v1290
        %v4598 = vunpack.c.l.b16 %v1291
        %v4599 = vunpack.c.h.b16 %v1291
        %v4600 = vunpack.c.l.b16 %v1292
        %v4601 = vunpack.c.h.b16 %v1292
        %v4602 = vunpack.c.l.b16 %v1293
        %v4603 = vunpack.c.h.b16 %v1293
        %v4604 = vunpack.c.l.b16 %v1294
        %v4605 = vunpack.c.h.b16 %v1294
        %v4606 = vunpack.c.l.b16 %v1295
        %v4607 = vunpack.c.h.b16 %v1295
        %v4608 = vunpack.c.l.b16 %v1296
        %v4609 = vunpack.c.h.b16 %v1296
        %v4610 = vunpack.c.l.b16 %v1297
        %v4611 = vunpack.c.h.b16 %v1297
        %v4612 = vunpack.c.l.b16 %v1298
        %v4613 = vunpack.c.h.b16 %v1298
        %v4614 = vunpack.c.l.b16 %v1299
        %v4615 = vunpack.c.h.b16 %v1299
        %v4616 = vunpack.c.l.b16 %v1300
        %v4617 = vunpack.c.h.b16 %v1300
        %v4618 = vunpack.c.l.b16 %v1301
        %v4619 = vunpack.c.h.b16 %v1301
        %v4620 = vunpack.c.l.b16 %v1302
        %v4621 = vunpack.c.h.b16 %v1302
        %v4622 = vunpack.c.l.b16 %v1303
        %v4623 = vunpack.c.h.b16 %v1303
        %v4624 = vunpack.c.l.b16 %v1304
        %v4625 = vunpack.c.h.b16 %v1304
        %v4626 = vunpack.c.l.b16 %v1305
        %v4627 = vunpack.c.h.b16 %v1305
        %v4628 = vunpack.c.l.b16 %v1306
        %v4629 = vunpack.c.h.b16 %v1306
        %v4630 = vunpack.c.l.b16 %v1307
        %v4631 = vunpack.c.h.b16 %v1307
        %v4632 = vunpack.c.l.b16 %v1308
        %v4633 = vunpack.c.h.b16 %v1308
        %v4634 = vunpack.c.l.b16 %v1309
        %v4635 = vunpack.c.h.b16 %v1309
        %v4636 = vunpack.c.l.b16 %v1310
        %v4637 = vunpack.c.h.b16 %v1310
        %v4638 = vunpack.c.l.b16 %v1311
        %v4639 = vunpack.c.h.b16 %v1311
        %v4640 = vunpack.c.l.b16 %v1312
        %v4641 = vunpack.c.h.b16 %v1312
        %v4642 = vunpack.c.l.b16 %v1313
        %v4643 = vunpack.c.h.b16 %v1313
        %v4644 = vunpack.c.l.b16 %v1314
        %v4645 = vunpack.c.h.b16 %v1314
        %v4646 = vunpack.c.l.b16 %v1315
        %v4647 = vunpack.c.h.b16 %v1315
        %v4648 = vunpack.c.l.b16 %v1316
        %v4649 = vunpack.c.h.b16 %v1316
        %v4650 = vunpack.c.l.b16 %v1317
        %v4651 = vunpack.c.h.b16 %v1317
        %v4652 = vunpack.c.l.b16 %v1318
        %v4653 = vunpack.c.h.b16 %v1318
        %v4654 = vunpack.c.l.b16 %v1319
        %v4655 = vunpack.c.h.b16 %v1319
        %v4656 = vunpack.c.l.b16 %v1320
        %v4657 = vunpack.c.h.b16 %v1320
        %v4658 = vunpack.c.l.b16 %v1321
        %v4659 = vunpack.c.h.b16 %v1321
        %v4660 = vunpack.c.l.b16 %v1322
        %v4661 = vunpack.c.h.b16 %v1322
        %v4662 = vunpack.c.l.b16 %v1323
        %v4663 = vunpack.c.h.b16 %v1323
        %v4664 = vunpack.c.l.b16 %v1324
        %v4665 = vunpack.c.h.b16 %v1324
        %v4666 = vunpack.c.l.b16 %v1325
        %v4667 = vunpack.c.h.b16 %v1325
        %v4668 = vunpack.c.l.b16 %v1326
        %v4669 = vunpack.c.h.b16 %v1326
        %v4670 = vunpack.c.l.b16 %v1327
        %v4671 = vunpack.c.h.b16 %v1327
        %v4672 = vunpack.c.l.b16 %v1328
        %v4673 = vunpack.c.h.b16 %v1328
        %v4674 = vunpack.c.l.b16 %v1329
        %v4675 = vunpack.c.h.b16 %v1329
        %v4676 = vunpack.c.l.b16 %v1330
        %v4677 = vunpack.c.h.b16 %v1330
        %v4678 = vunpack.c.l.b16 %v1331
        %v4679 = vunpack.c.h.b16 %v1331
        %v4680 = vunpack.c.l.b16 %v1332
        %v4681 = vunpack.c.h.b16 %v1332
        %v4682 = vunpack.c.l.b16 %v1333
        %v4683 = vunpack.c.h.b16 %v1333
        %v4684 = vunpack.c.l.b16 %v1334
        %v4685 = vunpack.c.h.b16 %v1334
        %v4686 = vunpack.c.l.b16 %v1335
        %v4687 = vunpack.c.h.b16 %v1335
        %v4688 = vunpack.c.l.b16 %v1336
        %v4689 = vunpack.c.h.b16 %v1336
        %v4690 = vunpack.c.l.b16 %v1337
        %v4691 = vunpack.c.h.b16 %v1337
        %v4692 = vunpack.c.l.b16 %v1338
        %v4693 = vunpack.c.h.b16 %v1338
        %v4694 = vunpack.c.l.b16 %v1339
        %v4695 = vunpack.c.h.b16 %v1339
        %v4696 = vunpack.c.l.b16 %v1340
        %v4697 = vunpack.c.h.b16 %v1340
        %v4698 = vunpack.c.l.b16 %v1341
        %v4699 = vunpack.c.h.b16 %v1341
        %v4700 = vunpack.c.l.b16 %v1342
        %v4701 = vunpack.c.h.b16 %v1342
        %v4702 = vunpack.c.l.b16 %v1343
        %v4703 = vunpack.c.h.b16 %v1343
        %v4704 = vunpack.c.l.b16 %v1344
        %v4705 = vunpack.c.h.b16 %v1344
        %v4706 = vunpack.c.l.b16 %v1345
        %v4707 = vunpack.c.h.b16 %v1345
        %v4708 = vunpack.c.l.b16 %v1346
        %v4709 = vunpack.c.h.b16 %v1346
        %v4710 = vunpack.c.l.b16 %v1347
        %v4711 = vunpack.c.h.b16 %v1347
        %v4712 = vunpack.c.l.b16 %v1348
        %v4713 = vunpack.c.h.b16 %v1348
        %v4714 = vunpack.c.l.b16 %v1349
        %v4715 = vunpack.c.h.b16 %v1349
        %v4716 = vunpack.c.l.b16 %v1350
        %v4717 = vunpack.c.h.b16 %v1350
        %v4718 = vunpack.c.l.b16 %v1351
        %v4719 = vunpack.c.h.b16 %v1351
        %v4720 = vunpack.c.l.b16 %v1352
        %v4721 = vunpack.c.h.b16 %v1352
        %v4722 = vunpack.c.l.b16 %v1353
        %v4723 = vunpack.c.h.b16 %v1353
        %v4724 = vunpack.c.l.b16 %v1354
        %v4725 = vunpack.c.h.b16 %v1354
        %v4726 = vunpack.c.l.b16 %v1355
        %v4727 = vunpack.c.h.b16 %v1355
        %v4728 = vunpack.c.l.b16 %v1356
        %v4729 = vunpack.c.h.b16 %v1356
        %v4730 = vunpack.c.l.b16 %v1357
        %v4731 = vunpack.c.h.b16 %v1357
        %v4732 = vunpack.c.l.b16 %v1358
        %v4733 = vunpack.c.h.b16 %v1358
        %v4734 = vunpack.c.l.b16 %v1359
        %v4735 = vunpack.c.h.b16 %v1359
        %v4736 = vunpack.c.l.b16 %v1360
        %v4737 = vunpack.c.h.b16 %v1360
        %v4738 = vunpack.c.l.b16 %v1361
        %v4739 = vunpack.c.h.b16 %v1361
        %v4740 = vunpack.c.l.b16 %v1362
        %v4741 = vunpack.c.h.b16 %v1362
        %v4742 = vunpack.c.l.b16 %v1363
        %v4743 = vunpack.c.h.b16 %v1363
        %v4744 = vunpack.c.l.b16 %v1364
        %v4745 = vunpack.c.h.b16 %v1364
        %v4746 = vunpack.c.l.b16 %v1365
        %v4747 = vunpack.c.h.b16 %v1365
        %v4748 = vunpack.c.l.b16 %v1366
        %v4749 = vunpack.c.h.b16 %v1366
        %v4750 = vunpack.c.l.b16 %v1367
        %v4751 = vunpack.c.h.b16 %v1367
        %v4752 = vunpack.c.l.b16 %v1368
        %v4753 = vunpack.c.h.b16 %v1368
        %v4754 = vunpack.c.l.b16 %v1369
        %v4755 = vunpack.c.h.b16 %v1369
        %v4756 = vunpack.c.l.b16 %v1370
        %v4757 = vunpack.c.h.b16 %v1370
        %v4758 = vunpack.c.l.b16 %v1371
        %v4759 = vunpack.c.h.b16 %v1371
        %v4760 = vunpack.c.l.b16 %v1372
        %v4761 = vunpack.c.h.b16 %v1372
        %v4762 = vunpack.c.l.b16 %v1373
        %v4763 = vunpack.c.h.b16 %v1373
        %v4764 = vunpack.c.l.b16 %v1374
        %v4765 = vunpack.c.h.b16 %v1374
        %v4766 = vunpack.c.l.b16 %v1375
        %v4767 = vunpack.c.h.b16 %v1375
        %v4768 = vunpack.c.l.b16 %v1376
        %v4769 = vunpack.c.h.b16 %v1376
        %v4770 = vunpack.c.l.b16 %v1377
        %v4771 = vunpack.c.h.b16 %v1377
        %v4772 = vunpack.c.l.b16 %v1378
        %v4773 = vunpack.c.h.b16 %v1378
        %v4774 = vunpack.c.l.b16 %v1379
        %v4775 = vunpack.c.h.b16 %v1379
        %v4776 = vunpack.c.l.b16 %v1380
        %v4777 = vunpack.c.h.b16 %v1380
        %v4778 = vunpack.c.l.b16 %v1381
        %v4779 = vunpack.c.h.b16 %v1381
        %v4780 = vunpack.c.l.b16 %v1382
        %v4781 = vunpack.c.h.b16 %v1382
        %v4782 = vunpack.c.l.b16 %v1383
        %v4783 = vunpack.c.h.b16 %v1383
        %v4784 = vunpack.c.l.b16 %v1384
        %v4785 = vunpack.c.h.b16 %v1384
        %v4786 = vunpack.c.l.b16 %v1385
        %v4787 = vunpack.c.h.b16 %v1385
        %v4788 = vunpack.c.l.b16 %v1386
        %v4789 = vunpack.c.h.b16 %v1386
        %v4790 = vunpack.c.l.b16 %v1387
        %v4791 = vunpack.c.h.b16 %v1387
        %v4792 = vunpack.c.l.b16 %v1388
        %v4793 = vunpack.c.h.b16 %v1388
        %v4794 = vunpack.c.l.b16 %v1389
        %v4795 = vunpack.c.h.b16 %v1389
        %v4796 = vunpack.c.l.b16 %v1390
        %v4797 = vunpack.c.h.b16 %v1390
        %v4798 = vunpack.c.l.b16 %v1391
        %v4799 = vunpack.c.h.b16 %v1391
        %v4800 = vunpack.c.l.b16 %v1392
        %v4801 = vunpack.c.h.b16 %v1392
        %v4802 = vunpack.c.l.b16 %v1393
        %v4803 = vunpack.c.h.b16 %v1393
        %v4804 = vunpack.c.l.b16 %v1394
        %v4805 = vunpack.c.h.b16 %v1394
        %v4806 = vunpack.c.l.b16 %v1395
        %v4807 = vunpack.c.h.b16 %v1395
        %v4808 = vunpack.c.l.b16 %v1396
        %v4809 = vunpack.c.h.b16 %v1396
        %v4810 = vunpack.c.l.b16 %v1397
        %v4811 = vunpack.c.h.b16 %v1397
        %v4812 = vunpack.c.l.b16 %v1398
        %v4813 = vunpack.c.h.b16 %v1398
        %v4814 = vunpack.c.l.b16 %v1399
        %v4815 = vunpack.c.h.b16 %v1399
        %v4816 = vunpack.c.l.b16 %v1400
        %v4817 = vunpack.c.h.b16 %v1400
        %v4818 = vunpack.c.l.b16 %v1401
        %v4819 = vunpack.c.h.b16 %v1401
        %v4820 = vunpack.c.l.b16 %v1402
        %v4821 = vunpack.c.h.b16 %v1402
        %v4822 = vunpack.c.l.b16 %v1403
        %v4823 = vunpack.c.h.b16 %v1403
        %v4824 = vunpack.c.l.b16 %v1404
        %v4825 = vunpack.c.h.b16 %v1404
        %v4826 = vunpack.c.l.b16 %v1405
        %v4827 = vunpack.c.h.b16 %v1405
        %v4828 = vunpack.c.l.b16 %v1406
        %v4829 = vunpack.c.h.b16 %v1406
        %v4830 = vunpack.c.l.b16 %v1407
        %v4831 = vunpack.c.h.b16 %v1407
        %v4832 = vunpack.c.l.b16 %v1408
        %v4833 = vunpack.c.h.b16 %v1408
        %v4834 = vunpack.c.l.b16 %v1409
        %v4835 = vunpack.c.h.b16 %v1409
        %v4836 = vunpack.c.l.b16 %v1410
        %v4837 = vunpack.c.h.b16 %v1410
        %v4838 = vunpack.c.l.b16 %v1411
        %v4839 = vunpack.c.h.b16 %v1411
        %v4840 = vunpack.c.l.b16 %v1412
        %v4841 = vunpack.c.h.b16 %v1412
        %v4842 = vunpack.c.l.b16 %v1413
        %v4843 = vunpack.c.h.b16 %v1413
        %v4844 = vunpack.c.l.b16 %v1414
        %v4845 = vunpack.c.h.b16 %v1414
        %v4846 = vunpack.c.l.b16 %v1415
        %v4847 = vunpack.c.h.b16 %v1415
        %v4848 = vunpack.c.l.b16 %v1416
        %v4849 = vunpack.c.h.b16 %v1416
        %v4850 = vunpack.c.l.b16 %v1417
        %v4851 = vunpack.c.h.b16 %v1417
        %v4852 = vunpack.c.l.b16 %v1418
        %v4853 = vunpack.c.h.b16 %v1418
        %v4854 = vunpack.c.l.b16 %v1419
        %v4855 = vunpack.c.h.b16 %v1419
        %v4856 = vunpack.c.l.b16 %v1420
        %v4857 = vunpack.c.h.b16 %v1420
        %v4858 = vunpack.c.l.b16 %v1421
        %v4859 = vunpack.c.h.b16 %v1421
        %v4860 = vunpack.c.l.b16 %v1422
        %v4861 = vunpack.c.h.b16 %v1422
        %v4862 = vunpack.c.l.b16 %v1423
        %v4863 = vunpack.c.h.b16 %v1423
        %v4864 = vunpack.c.l.b16 %v1424
        %v4865 = vunpack.c.h.b16 %v1424
        %v4866 = vunpack.c.l.b16 %v1425
        %v4867 = vunpack.c.h.b16 %v1425
        %v4868 = vunpack.c.l.b16 %v1426
        %v4869 = vunpack.c.h.b16 %v1426
        %v4870 = vunpack.c.l.b16 %v1427
        %v4871 = vunpack.c.h.b16 %v1427
        %v4872 = vunpack.c.l.b16 %v1428
        %v4873 = vunpack.c.h.b16 %v1428
        %v4874 = vunpack.c.l.b16 %v1429
        %v4875 = vunpack.c.h.b16 %v1429
        %v4876 = vunpack.c.l.b16 %v1430
        %v4877 = vunpack.c.h.b16 %v1430
        %v4878 = vunpack.c.l.b16 %v1431
        %v4879 = vunpack.c.h.b16 %v1431
        %v4880 = vunpack.c.l.b16 %v1432
        %v4881 = vunpack.c.h.b16 %v1432
        %v4882 = vunpack.c.l.b16 %v1433
        %v4883 = vunpack.c.h.b16 %v1433
        %v4884 = vunpack.c.l.b16 %v1434
        %v4885 = vunpack.c.h.b16 %v1434
        %v4886 = vunpack.c.l.b16 %v1435
        %v4887 = vunpack.c.h.b16 %v1435
        %v4888 = vunpack.c.l.b16 %v1436
        %v4889 = vunpack.c.h.b16 %v1436
        %v4890 = vunpack.c.l.b16 %v1437
        %v4891 = vunpack.c.h.b16 %v1437
        %v4892 = vunpack.c.l.b16 %v1438
        %v4893 = vunpack.c.h.b16 %v1438
        %v4894 = vunpack.c.l.b16 %v1439
        %v4895 = vunpack.c.h.b16 %v1439
        %v4896 = vunpack.c.l.b16 %v1440
        %v4897 = vunpack.c.h.b16 %v1440
        %v4898 = vunpack.c.l.b16 %v1441
        %v4899 = vunpack.c.h.b16 %v1441
        %v4900 = vunpack.c.l.b16 %v1442
        %v4901 = vunpack.c.h.b16 %v1442
        %v4902 = vunpack.c.l.b16 %v1443
        %v4903 = vunpack.c.h.b16 %v1443
        %v4904 = vunpack.c.l.b16 %v1444
        %v4905 = vunpack.c.h.b16 %v1444
        %v4906 = vunpack.c.l.b16 %v1445
        %v4907 = vunpack.c.h.b16 %v1445
        %v4908 = vunpack.c.l.b16 %v1446
        %v4909 = vunpack.c.h.b16 %v1446
        %v4910 = vunpack.c.l.b16 %v1447
        %v4911 = vunpack.c.h.b16 %v1447
        %v4912 = vunpack.c.l.b16 %v1448
        %v4913 = vunpack.c.h.b16 %v1448
        %v4914 = vunpack.c.l.b16 %v1449
        %v4915 = vunpack.c.h.b16 %v1449
        %v4916 = vunpack.c.l.b16 %v1450
        %v4917 = vunpack.c.h.b16 %v1450
        %v4918 = vunpack.c.l.b16 %v1451
        %v4919 = vunpack.c.h.b16 %v1451
        %v4920 = vunpack.c.l.b16 %v1452
        %v4921 = vunpack.c.h.b16 %v1452
        %v4922 = vunpack.c.l.b16 %v1453
        %v4923 = vunpack.c.h.b16 %v1453
        %v4924 = vunpack.c.l.b16 %v1454
        %v4925 = vunpack.c.h.b16 %v1454
        %v4926 = vunpack.c.l.b16 %v1455
        %v4927 = vunpack.c.h.b16 %v1455
        %v4928 = vunpack.c.l.b16 %v1456
        %v4929 = vunpack.c.h.b16 %v1456
        %v4930 = vunpack.c.l.b16 %v1457
        %v4931 = vunpack.c.h.b16 %v1457
        %v4932 = vunpack.c.l.b16 %v1458
        %v4933 = vunpack.c.h.b16 %v1458
        %v4934 = vunpack.c.l.b16 %v1459
        %v4935 = vunpack.c.h.b16 %v1459
        %v4936 = vunpack.c.l.b16 %v1460
        %v4937 = vunpack.c.h.b16 %v1460
        %v4938 = vunpack.c.l.b16 %v1461
        %v4939 = vunpack.c.h.b16 %v1461
        %v4940 = vunpack.c.l.b16 %v1462
        %v4941 = vunpack.c.h.b16 %v1462
        %v4942 = vunpack.c.l.b16 %v1463
        %v4943 = vunpack.c.h.b16 %v1463
        %v4944 = vunpack.c.l.b16 %v1464
        %v4945 = vunpack.c.h.b16 %v1464
        %v4946 = vunpack.c.l.b16 %v1465
        %v4947 = vunpack.c.h.b16 %v1465
        %v4948 = vunpack.c.l.b16 %v1466
        %v4949 = vunpack.c.h.b16 %v1466
        %v4950 = vunpack.c.l.b16 %v1467
        %v4951 = vunpack.c.h.b16 %v1467
        %v4952 = vunpack.c.l.b16 %v1468
        %v4953 = vunpack.c.h.b16 %v1468
        %v4954 = vunpack.c.l.b16 %v1469
        %v4955 = vunpack.c.h.b16 %v1469
        %v4956 = vunpack.c.l.b16 %v1470
        %v4957 = vunpack.c.h.b16 %v1470
        %v4958 = vunpack.c.l.b16 %v1471
        %v4959 = vunpack.c.h.b16 %v1471
        %v4960 = vunpack.c.l.b16 %v1472
        %v4961 = vunpack.c.h.b16 %v1472
        %v4962 = vunpack.c.l.b16 %v1473
        %v4963 = vunpack.c.h.b16 %v1473
        %v4964 = vunpack.c.l.b16 %v1474
        %v4965 = vunpack.c.h.b16 %v1474
        %v4966 = vunpack.c.l.b16 %v1475
        %v4967 = vunpack.c.h.b16 %v1475
        %v4968 = vunpack.c.l.b16 %v1476
        %v4969 = vunpack.c.h.b16 %v1476
        %v4970 = vunpack.c.l.b16 %v1477
        %v4971 = vunpack.c.h.b16 %v1477
        %v4972 = vunpack.c.l.b16 %v1478
        %v4973 = vunpack.c.h.b16 %v1478
        %v4974 = vunpack.c.l.b16 %v1479
        %v4975 = vunpack.c.h.b16 %v1479
        %v4976 = vunpack.c.l.b16 %v1480
        %v4977 = vunpack.c.h.b16 %v1480
        %v4978 = vunpack.c.l.b16 %v1481
        %v4979 = vunpack.c.h.b16 %v1481
        %v4980 = vunpack.c.l.b16 %v1482
        %v4981 = vunpack.c.h.b16 %v1482
        %v4982 = vunpack.c.l.b16 %v1483
        %v4983 = vunpack.c.h.b16 %v1483
        %v4984 = vunpack.c.l.b16 %v1484
        %v4985 = vunpack.c.h.b16 %v1484
        %v4986 = vunpack.c.l.b16 %v1485
        %v4987 = vunpack.c.h.b16 %v1485
        %v4988 = vunpack.c.l.b16 %v1486
        %v4989 = vunpack.c.h.b16 %v1486
        %v4990 = vunpack.c.l.b16 %v1487
        %v4991 = vunpack.c.h.b16 %v1487
        %v4992 = vunpack.c.l.b16 %v1488
        %v4993 = vunpack.c.h.b16 %v1488
        %v4994 = vunpack.c.l.b16 %v1489
        %v4995 = vunpack.c.h.b16 %v1489
        %v4996 = vunpack.c.l.b16 %v1490
        %v4997 = vunpack.c.h.b16 %v1490
        %v4998 = vunpack.c.l.b16 %v1491
        %v4999 = vunpack.c.h.b16 %v1491
        %v5000 = vunpack.c.l.b16 %v1492
        %v5001 = vunpack.c.h.b16 %v1492
        %v5002 = vunpack.c.l.b16 %v1493
        %v5003 = vunpack.c.h.b16 %v1493
        %v5004 = vunpack.c.l.b16 %v1494
        %v5005 = vunpack.c.h.b16 %v1494
        %v5006 = vunpack.c.l.b16 %v1495
        %v5007 = vunpack.c.h.b16 %v1495
        %v5008 = vunpack.c.l.b16 %v1496
        %v5009 = vunpack.c.h.b16 %v1496
        %v5010 = vunpack.c.l.b16 %v1497
        %v5011 = vunpack.c.h.b16 %v1497
        %v5012 = vunpack.c.l.b16 %v1498
        %v5013 = vunpack.c.h.b16 %v1498
        %v5014 = vunpack.c.l.b16 %v1499
        %v5015 = vunpack.c.h.b16 %v1499
        %v5016 = vunpack.c.l.b16 %v1500
        %v5017 = vunpack.c.h.b16 %v1500
        %v5018 = vunpack.c.l.b16 %v1501
        %v5019 = vunpack.c.h.b16 %v1501
        %v5020 = vunpack.c.l.b16 %v1502
        %v5021 = vunpack.c.h.b16 %v1502
        %v5022 = vunpack.c.l.b16 %v1503
        %v5023 = vunpack.c.h.b16 %v1503
        %v5024 = vunpack.c.l.b16 %v1504
        %v5025 = vunpack.c.h.b16 %v1504
        %v5026 = vunpack.c.l.b16 %v1505
        %v5027 = vunpack.c.h.b16 %v1505
        %v5028 = vunpack.c.l.b16 %v1506
        %v5029 = vunpack.c.h.b16 %v1506
        %v5030 = vunpack.c.l.b16 %v1507
        %v5031 = vunpack.c.h.b16 %v1507
        %v5032 = vunpack.c.l.b16 %v1508
        %v5033 = vunpack.c.h.b16 %v1508
        %v5034 = vunpack.c.l.b16 %v1509
        %v5035 = vunpack.c.h.b16 %v1509
        %v5036 = vunpack.c.l.b16 %v1510
        %v5037 = vunpack.c.h.b16 %v1510
        %v5038 = vunpack.c.l.b16 %v1511
        %v5039 = vunpack.c.h.b16 %v1511
        %v5040 = vunpack.c.l.b16 %v1512
        %v5041 = vunpack.c.h.b16 %v1512
        %v5042 = vunpack.c.l.b16 %v1513
        %v5043 = vunpack.c.h.b16 %v1513
        %v5044 = vunpack.c.l.b16 %v1514
        %v5045 = vunpack.c.h.b16 %v1514
        %v5046 = vunpack.c.l.b16 %v1515
        %v5047 = vunpack.c.h.b16 %v1515
        %v5048 = vunpack.c.l.b16 %v1516
        %v5049 = vunpack.c.h.b16 %v1516
        %v5050 = vunpack.c.l.b16 %v1517
        %v5051 = vunpack.c.h.b16 %v1517
        %v5052 = vunpack.c.l.b16 %v1518
        %v5053 = vunpack.c.h.b16 %v1518
        %v5054 = vunpack.c.l.b16 %v1519
        %v5055 = vunpack.c.h.b16 %v1519
        %v5056 = vunpack.c.l.b16 %v1520
        %v5057 = vunpack.c.h.b16 %v1520
        %v5058 = vunpack.c.l.b16 %v1521
        %v5059 = vunpack.c.h.b16 %v1521
        %v5060 = vunpack.c.l.b16 %v1522
        %v5061 = vunpack.c.h.b16 %v1522
        %v5062 = vunpack.c.l.b16 %v1523
        %v5063 = vunpack.c.h.b16 %v1523
        %v5064 = vunpack.c.l.b16 %v1524
        %v5065 = vunpack.c.h.b16 %v1524
        %v5066 = vunpack.c.l.b16 %v1525
        %v5067 = vunpack.c.h.b16 %v1525
        %v5068 = vunpack.c.l.b16 %v1526
        %v5069 = vunpack.c.h.b16 %v1526
        %v5070 = vunpack.c.l.b16 %v1527
        %v5071 = vunpack.c.h.b16 %v1527
        %v5072 = vunpack.c.l.b16 %v1528
        %v5073 = vunpack.c.h.b16 %v1528
        %v5074 = vpack.c.b16 %v4564, %v4562
        %v5075 = vpack.c.b16 %v4565, %v4563
        %v5076 = vpack.c.b16 %v4568, %v4566
        %v5077 = vpack.c.b16 %v4569, %v4567
        %v5078 = vpack.c.b16 %v4572, %v4570
        %v5079 = vpack.c.b16 %v4573, %v4571
        %v5080 = vpack.c.b16 %v4576, %v4574
        %v5081 = vpack.c.b16 %v4577, %v4575
        %v5082 = vpack.c.b16 %v4580, %v4578
        %v5083 = vpack.c.b16 %v4581, %v4579
        %v5084 = vpack.c.b16 %v4584, %v4582
        %v5085 = vpack.c.b16 %v4585, %v4583
        %v5086 = vpack.c.b16 %v4588, %v4586
        %v5087 = vpack.c.b16 %v4589, %v4587
        %v5088 = vpack.c.b16 %v4592, %v4590
        %v5089 = vpack.c.b16 %v4593, %v4591
        %v5090 = vpack.c.b16 %v4596, %v4594
        %v5091 = vpack.c.b16 %v4597, %v4595
        %v5092 = vpack.c.b16 %v4600, %v4598
        %v5093 = vpack.c.b16 %v4601, %v4599
        %v5094 = vpack.c.b16 %v4604, %v4602
        %v5095 = vpack.c.b16 %v4605, %v4603
        %v5096 = vpack.c.b16 %v4608, %v4606
        %v5097 = vpack.c.b16 %v4609, %v4607
        %v5098 = vpack.c.b16 %v4612, %v4610
        %v5099 = vpack.c.b16 %v4613, %v4611
        %v5100 = vpack.c.b16 %v4616, %v4614
        %v5101 = vpack.c.b16 %v4617, %v4615
        %v5102 = vpack.c.b16 %v4620, %v4618
        %v5103 = vpack.c.b16 %v4621, %v4619
        %v5104 = vpack.c.b16 %v4624, %v4622
        %v5105 = vpack.c.b16 %v4625, %v4623
        %v5106 = vpack.c.b16 %v4628, %v4626
        %v5107 = vpack.c.b16 %v4629, %v4627
        %v5108 = vpack.c.b16 %v4632, %v4630
        %v5109 = vpack.c.b16 %v4633, %v4631
        %v5110 = vpack.c.b16 %v4636, %v4634
        %v5111 = vpack.c.b16 %v4637, %v4635
        %v5112 = vpack.c.b16 %v4640, %v4638
        %v5113 = vpack.c.b16 %v4641, %v4639
        %v5114 = vpack.c.b16 %v4644, %v4642
        %v5115 = vpack.c.b16 %v4645, %v4643
        %v5116 = vpack.c.b16 %v4648, %v4646
        %v5117 = vpack.c.b16 %v4649, %v4647
        %v5118 = vpack.c.b16 %v4652, %v4650
        %v5119 = vpack.c.b16 %v4653, %v4651
        %v5120 = vpack.c.b16 %v4656, %v4654
        %v5121 = vpack.c.b16 %v4657, %v4655
        %v5122 = vpack.c.b16 %v4660, %v4658
        %v5123 = vpack.c.b16 %v4661, %v4659
        %v5124 = vpack.c.b16 %v4664, %v4662
        %v5125 = vpack.c.b16 %v4665, %v4663
        %v5126 = vpack.c.b16 %v4668, %v4666
        %v5127 = vpack.c.b16 %v4669, %v4667
        %v5128 = vpack.c.b16 %v4672, %v4670
        %v5129 = vpack.c.b16 %v4673, %v4671
        %v5130 = vpack.c.b16 %v4676, %v4674
        %v5131 = vpack.c.b16 %v4677, %v4675
        %v5132 = vpack.c.b16 %v4680, %v4678
        %v5133 = vpack.c.b16 %v4681, %v4679
        %v5134 = vpack.c.b16 %v4684, %v4682
        %v5135 = vpack.c.b16 %v4685, %v4683
        %v5136 = vpack.c.b16 %v4688, %v4686
        %v5137 = vpack.c.b16 %v4689, %v4687
        %v5138 = vpack.c.b16 %v4692, %v4690
        %v5139 = vpack.c.b16 %v4693, %v4691
        %v5140 = vpack.c.b16 %v4696, %v4694
        %v5141 = vpack.c.b16 %v4697, %v4695
        %v5142 = vpack.c.b16 %v4700, %v4698
        %v5143 = vpack.c.b16 %v4701, %v4699
        %v5144 = vpack.c.b16 %v4704, %v4702
        %v5145 = vpack.c.b16 %v4705, %v4703
        %v5146 = vpack.c.b16 %v4708, %v4706
        %v5147 = vpack.c.b16 %v4709, %v4707
        %v5148 = vpack.c.b16 %v4712, %v4710
        %v5149 = vpack.c.b16 %v4713, %v4711
        %v5150 = vpack.c.b16 %v4716, %v4714
        %v5151 = vpack.c.b16 %v4717, %v4715
        %v5152 = vpack.c.b16 %v4720, %v4718
        %v5153 = vpack.c.b16 %v4721, %v4719
        %v5154 = vpack.c.b16 %v4724, %v4722
        %v5155 = vpack.c.b16 %v4725, %v4723
        %v5156 = vpack.c.b16 %v4728, %v4726
        %v5157 = vpack.c.b16 %v4729, %v4727
        %v5158 = vpack.c.b16 %v4732, %v4730
        %v5159 = vpack.c.b16 %v4733, %v4731
        %v5160 = vpack.c.b16 %v4736, %v4734
        %v5161 = vpack.c.b16 %v4737, %v4735
        %v5162 = vpack.c.b16 %v4740, %v4738
        %v5163 = vpack.c.b16 %v4741, %v4739
        %v5164 = vpack.c.b16 %v4744, %v4742
        %v5165 = vpack.c.b16 %v4745, %v4743
        %v5166 = vpack.c.b16 %v4748, %v4746
        %v5167 = vpack.c.b16 %v4749, %v4747
        %v5168 = vpack.c.b16 %v4752, %v4750
        %v5169 = vpack.c.b16 %v4753, %v4751
        %v5170 = vpack.c.b16 %v4756, %v4754
        %v5171 = vpack.c.b16 %v4757, %v4755
        %v5172 = vpack.c.b16 %v4760, %v4758
        %v5173 = vpack.c.b16 %v4761, %v4759
        %v5174 = vpack.c.b16 %v4764, %v4762
        %v5175 = vpack.c.b16 %v4765, %v4763
        %v5176 = vpack.c.b16 %v4768, %v4766
        %v5177 = vpack.c.b16 %v4769, %v4767
        %v5178 = vpack.c.b16 %v4772, %v4770
        %v5179 = vpack.c.b16 %v4773, %v4771
        %v5180 = vpack.c.b16 %v4776, %v4774
        %v5181 = vpack.c.b16 %v4777, %v4775
        %v5182 = vpack.c.b16 %v4780, %v4778
        %v5183 = vpack.c.b16 %v4781, %v4779
        %v5184 = vpack.c.b16 %v4784, %v4782
        %v5185 = vpack.c.b16 %v4785, %v4783
        %v5186 = vpack.c.b16 %v4788, %v4786
        %v5187 = vpack.c.b16 %v4789, %v4787
        %v5188 = vpack.c.b16 %v4792, %v4790
        %v5189 = vpack.c.b16 %v4793, %v4791
        %v5190 = vpack.c.b16 %v4796, %v4794
        %v5191 = vpack.c.b16 %v4797, %v4795
        %v5192 = vpack.c.b16 %v4800, %v4798
        %v5193 = vpack.c.b16 %v4801, %v4799
        %v5194 = vpack.c.b16 %v4804, %v4802
        %v5195 = vpack.c.b16 %v4805, %v4803
        %v5196 = vpack.c.b16 %v4808, %v4806
        %v5197 = vpack.c.b16 %v4809, %v4807
        %v5198 = vpack.c.b16 %v4812, %v4810
        %v5199 = vpack.c.b16 %v4813, %v4811
        %v5200 = vpack.c.b16 %v4816, %v4814
        %v5201 = vpack.c.b16 %v4817, %v4815
        %v5202 = vpack.c.b16 %v4820, %v4818
        %v5203 = vpack.c.b16 %v4821, %v4819
        %v5204 = vpack.c.b16 %v4824, %v4822
        %v5205 = vpack.c.b16 %v4825, %v4823
        %v5206 = vpack.c.b16 %v4828, %v4826
        %v5207 = vpack.c.b16 %v4829, %v4827
        %v5208 = vpack.c.b16 %v4832, %v4830
        %v5209 = vpack.c.b16 %v4833, %v4831
        %v5210 = vpack.c.b16 %v4836, %v4834
        %v5211 = vpack.c.b16 %v4837, %v4835
        %v5212 = vpack.c.b16 %v4840, %v4838
        %v5213 = vpack.c.b16 %v4841, %v4839
        %v5214 = vpack.c.b16 %v4844, %v4842
        %v5215 = vpack.c.b16 %v4845, %v4843
        %v5216 = vpack.c.b16 %v4848, %v4846
        %v5217 = vpack.c.b16 %v4849, %v4847
        %v5218 = vpack.c.b16 %v4852, %v4850
        %v5219 = vpack.c.b16 %v4853, %v4851
        %v5220 = vpack.c.b16 %v4856, %v4854
        %v5221 = vpack.c.b16 %v4857, %v4855
        %v5222 = vpack.c.b16 %v4860, %v4858
        %v5223 = vpack.c.b16 %v4861, %v4859
        %v5224 = vpack.c.b16 %v4864, %v4862
        %v5225 = vpack.c.b16 %v4865, %v4863
        %v5226 = vpack.c.b16 %v4868, %v4866
        %v5227 = vpack.c.b16 %v4869, %v4867
        %v5228 = vpack.c.b16 %v4872, %v4870
        %v5229 = vpack.c.b16 %v4873, %v4871
        %v5230 = vpack.c.b16 %v4876, %v4874
        %v5231 = vpack.c.b16 %v4877, %v4875
        %v5232 = vpack.c.b16 %v4880, %v4878
        %v5233 = vpack.c.b16 %v4881, %v4879
        %v5234 = vpack.c.b16 %v4884, %v4882
        %v5235 = vpack.c.b16 %v4885, %v4883
        %v5236 = vpack.c.b16 %v4888, %v4886
        %v5237 = vpack.c.b16 %v4889, %v4887
        %v5238 = vpack.c.b16 %v4892, %v4890
        %v5239 = vpack.c.b16 %v4893, %v4891
        %v5240 = vpack.c.b16 %v4896, %v4894
        %v5241 = vpack.c.b16 %v4897, %v4895
        %v5242 = vpack.c.b16 %v4900, %v4898
        %v5243 = vpack.c.b16 %v4901, %v4899
        %v5244 = vpack.c.b16 %v4904, %v4902
        %v5245 = vpack.c.b16 %v4905, %v4903
        %v5246 = vpack.c.b16 %v4908, %v4906
        %v5247 = vpack.c.b16 %v4909, %v4907
        %v5248 = vpack.c.b16 %v4912, %v4910
        %v5249 = vpack.c.b16 %v4913, %v4911
        %v5250 = vpack.c.b16 %v4916, %v4914
        %v5251 = vpack.c.b16 %v4917, %v4915
        %v5252 = vpack.c.b16 %v4920, %v4918
        %v5253 = vpack.c.b16 %v4921, %v4919
        %v5254 = vpack.c.b16 %v4924, %v4922
        %v5255 = vpack.c.b16 %v4925, %v4923
        %v5256 = vpack.c.b16 %v4928, %v4926
        %v5257 = vpack.c.b16 %v4929, %v4927
        %v5258 = vpack.c.b16 %v4932, %v4930
        %v5259 = vpack.c.b16 %v4933, %v4931
        %v5260 = vpack.c.b16 %v4936, %v4934
        %v5261 = vpack.c.b16 %v4937, %v4935
        %v5262 = vpack.c.b16 %v4940, %v4938
        %v5263 = vpack.c.b16 %v4941, %v4939
        %v5264 = vpack.c.b16 %v4944, %v4942
        %v5265 = vpack.c.b16 %v4945, %v4943
        %v5266 = vpack.c.b16 %v4948, %v4946
        %v5267 = vpack.c.b16 %v4949, %v4947
        %v5268 = vpack.c.b16 %v4952, %v4950
        %v5269 = vpack.c.b16 %v4953, %v4951
        %v5270 = vpack.c.b16 %v4956, %v4954
        %v5271 = vpack.c.b16 %v4957, %v4955
        %v5272 = vpack.c.b16 %v4960, %v4958
        %v5273 = vpack.c.b16 %v4961, %v4959
        %v5274 = vpack.c.b16 %v4964, %v4962
        %v5275 = vpack.c.b16 %v4965, %v4963
        %v5276 = vpack.c.b16 %v4968, %v4966
        %v5277 = vpack.c.b16 %v4969, %v4967
        %v5278 = vpack.c.b16 %v4972, %v4970
        %v5279 = vpack.c.b16 %v4973, %v4971
        %v5280 = vpack.c.b16 %v4976, %v4974
        %v5281 = vpack.c.b16 %v4977, %v4975
        %v5282 = vpack.c.b16 %v4980, %v4978
        %v5283 = vpack.c.b16 %v4981, %v4979
        %v5284 = vpack.c.b16 %v4984, %v4982
        %v5285 = vpack.c.b16 %v4985, %v4983
        %v5286 = vpack.c.b16 %v4988, %v4986
        %v5287 = vpack.c.b16 %v4989, %v4987
        %v5288 = vpack.c.b16 %v4992, %v4990
        %v5289 = vpack.c.b16 %v4993, %v4991
        %v5290 = vpack.c.b16 %v4996, %v4994
        %v5291 = vpack.c.b16 %v4997, %v4995
        %v5292 = vpack.c.b16 %v5000, %v4998
        %v5293 = vpack.c.b16 %v5001, %v4999
        %v5294 = vpack.c.b16 %v5004, %v5002
        %v5295 = vpack.c.b16 %v5005, %v5003
        %v5296 = vpack.c.b16 %v5008, %v5006
        %v5297 = vpack.c.b16 %v5009, %v5007
        %v5298 = vpack.c.b16 %v5012, %v5010
        %v5299 = vpack.c.b16 %v5013, %v5011
        %v5300 = vpack.c.b16 %v5016, %v5014
        %v5301 = vpack.c.b16 %v5017, %v5015
        %v5302 = vpack.c.b16 %v5020, %v5018
        %v5303 = vpack.c.b16 %v5021, %v5019
        %v5304 = vpack.c.b16 %v5024, %v5022
        %v5305 = vpack.c.b16 %v5025, %v5023
        %v5306 = vpack.c.b16 %v5028, %v5026
        %v5307 = vpack.c.b16 %v5029, %v5027
        %v5308 = vpack.c.b16 %v5032, %v5030
        %v5309 = vpack.c.b16 %v5033, %v5031
        %v5310 = vpack.c.b16 %v5036, %v5034
        %v5311 = vpack.c.b16 %v5037, %v5035
        %v5312 = vpack.c.b16 %v5040, %v5038
        %v5313 = vpack.c.b16 %v5041, %v5039
        %v5314 = vpack.c.b16 %v5044, %v5042
        %v5315 = vpack.c.b16 %v5045, %v5043
        %v5316 = vpack.c.b16 %v5048, %v5046
        %v5317 = vpack.c.b16 %v5049, %v5047
        %v5318 = vpack.c.b16 %v5052, %v5050
        %v5319 = vpack.c.b16 %v5053, %v5051
        %v5320 = vpack.c.b16 %v5056, %v5054
        %v5321 = vpack.c.b16 %v5057, %v5055
        %v5322 = vpack.c.b16 %v5060, %v5058
        %v5323 = vpack.c.b16 %v5061, %v5059
        %v5324 = vpack.c.b16 %v5064, %v5062
        %v5325 = vpack.c.b16 %v5065, %v5063
        %v5326 = vpack.c.b16 %v5068, %v5066
        %v5327 = vpack.c.b16 %v5069, %v5067
        %v5328 = vpack.c.b16 %v5072, %v5070
        %v5329 = vpack.c.b16 %v5073, %v5071
        %5586 = vmatprep.subr.bf16.mxu0 %v5089
        %5587 = vmatpush1.bf16.msra.mxu0 %v5088
        %5588 = vmatprep.subr.bf16.mxu0 %v5087
        %5589 = vmatpush1.bf16.msra.mxu0 %v5086
        %5590 = vmatprep.subr.bf16.mxu0 %v5085
        %5591 = vmatpush1.bf16.msra.mxu0 %v5084
        %5592 = vmatprep.subr.bf16.mxu0 %v5083
        %5593 = vmatpush1.bf16.msra.mxu0 %v5082
        %5594 = vmatprep.subr.bf16.mxu0 %v5081
        %5595 = vmatpush1.bf16.msra.mxu0 %v5080
        %5596 = vmatprep.subr.bf16.mxu0 %v5079
        %5597 = vmatpush1.bf16.msra.mxu0 %v5078
        %5598 = vmatprep.subr.bf16.mxu0 %v5077
        %5599 = vmatpush1.bf16.msra.mxu0 %v5076
        %5600 = vmatprep.subr.bf16.mxu0 %v5075
        %5601 = vmatpush1.bf16.msra.mxu0 %v5074
        %5602 = vmatprep.subr.bf16.mxu0 %v5105
        %5603 = vmatpush2.bf16.msra.mxu0 %v5104
        %5604 = vmatprep.subr.bf16.mxu0 %v5103
        %5605 = vmatpush2.bf16.msra.mxu0 %v5102
        %5606 = vmatprep.subr.bf16.mxu0 %v5101
        %5607 = vmatpush2.bf16.msra.mxu0 %v5100
        %5608 = vmatprep.subr.bf16.mxu0 %v5099
        %5609 = vmatpush2.bf16.msra.mxu0 %v5098
        %5610 = vmatprep.subr.bf16.mxu0 %v5097
        %5611 = vmatpush2.bf16.msra.mxu0 %v5096
        %5612 = vmatprep.subr.bf16.mxu0 %v5095
        %5613 = vmatpush2.bf16.msra.mxu0 %v5094
        %5614 = vmatprep.subr.bf16.mxu0 %v5093
        %5615 = vmatpush2.bf16.msra.mxu0 %v5092
        %5616 = vmatprep.subr.bf16.mxu0 %v5091
        %5617 = vmatpush2.bf16.msra.mxu0 %v5090
        %5618 = vmatprep.mubr.bf16.mxu0 %v1255
        %5619 = vmatmul.mubr.bf16.gmra.mxu0 %v1254
        %v5620 = vpop.f32.mrf.mxu0
        %v5621 = vadd.f32 %v4298, %v5620
        %v5622 = vpop.f32.mrf.mxu0
        %v5623 = vadd.f32 %v4300, %v5622
        %v5624 = vpop.f32.mrf.mxu0
        %v5625 = vadd.f32 %v4302, %v5624
        %v5626 = vpop.f32.mrf.mxu0
        %v5627 = vadd.f32 %v4304, %v5626
        %5628 = vdwg.mxu0
        %5629 = vmatprep.subr.bf16.mxu0 %v5121
        %5630 = vmatpush1.bf16.msra.mxu0 %v5120
        %5631 = vmatprep.subr.bf16.mxu0 %v5119
        %5632 = vmatpush1.bf16.msra.mxu0 %v5118
        %5633 = vmatprep.subr.bf16.mxu0 %v5117
        %5634 = vmatpush1.bf16.msra.mxu0 %v5116
        %5635 = vmatprep.subr.bf16.mxu0 %v5115
        %5636 = vmatpush1.bf16.msra.mxu0 %v5114
        %5637 = vmatprep.subr.bf16.mxu0 %v5113
        %5638 = vmatpush1.bf16.msra.mxu0 %v5112
        %5639 = vmatprep.subr.bf16.mxu0 %v5111
        %5640 = vmatpush1.bf16.msra.mxu0 %v5110
        %5641 = vmatprep.subr.bf16.mxu0 %v5109
        %5642 = vmatpush1.bf16.msra.mxu0 %v5108
        %5643 = vmatprep.subr.bf16.mxu0 %v5107
        %5644 = vmatpush1.bf16.msra.mxu0 %v5106
        %5645 = vmatprep.subr.bf16.mxu0 %v5137
        %5646 = vmatpush2.bf16.msra.mxu0 %v5136
        %5647 = vmatprep.subr.bf16.mxu0 %v5135
        %5648 = vmatpush2.bf16.msra.mxu0 %v5134
        %5649 = vmatprep.subr.bf16.mxu0 %v5133
        %5650 = vmatpush2.bf16.msra.mxu0 %v5132
        %5651 = vmatprep.subr.bf16.mxu0 %v5131
        %5652 = vmatpush2.bf16.msra.mxu0 %v5130
        %5653 = vmatprep.subr.bf16.mxu0 %v5129
        %5654 = vmatpush2.bf16.msra.mxu0 %v5128
        %5655 = vmatprep.subr.bf16.mxu0 %v5127
        %5656 = vmatpush2.bf16.msra.mxu0 %v5126
        %5657 = vmatprep.subr.bf16.mxu0 %v5125
        %5658 = vmatpush2.bf16.msra.mxu0 %v5124
        %5659 = vmatprep.subr.bf16.mxu0 %v5123
        %5660 = vmatpush2.bf16.msra.mxu0 %v5122
        %5661 = vmatprep.mubr.bf16.mxu0 %v1257
        %5662 = vmatmul.mubr.bf16.gmra.mxu0 %v1256
        %v5663 = vpop.f32.mrf.mxu0
        %v5664 = vadd.f32 %v5621, %v5663
        %v5665 = vpop.f32.mrf.mxu0
        %v5666 = vadd.f32 %v5623, %v5665
        %v5667 = vpop.f32.mrf.mxu0
        %v5668 = vadd.f32 %v5625, %v5667
        %v5669 = vpop.f32.mrf.mxu0
        %v5670 = vadd.f32 %v5627, %v5669
        %5671 = vdwg.mxu0
        %5672 = vmatprep.subr.bf16.mxu0 %v5153
        %5673 = vmatpush1.bf16.msra.mxu0 %v5152
        %5674 = vmatprep.subr.bf16.mxu0 %v5151
        %5675 = vmatpush1.bf16.msra.mxu0 %v5150
        %5676 = vmatprep.subr.bf16.mxu0 %v5149
        %5677 = vmatpush1.bf16.msra.mxu0 %v5148
        %5678 = vmatprep.subr.bf16.mxu0 %v5147
        %5679 = vmatpush1.bf16.msra.mxu0 %v5146
        %5680 = vmatprep.subr.bf16.mxu0 %v5145
        %5681 = vmatpush1.bf16.msra.mxu0 %v5144
        %5682 = vmatprep.subr.bf16.mxu0 %v5143
        %5683 = vmatpush1.bf16.msra.mxu0 %v5142
        %5684 = vmatprep.subr.bf16.mxu0 %v5141
        %5685 = vmatpush1.bf16.msra.mxu0 %v5140
        %5686 = vmatprep.subr.bf16.mxu0 %v5139
        %5687 = vmatpush1.bf16.msra.mxu0 %v5138
        %5688 = vmatprep.subr.bf16.mxu0 %v5169
        %5689 = vmatpush2.bf16.msra.mxu0 %v5168
        %5690 = vmatprep.subr.bf16.mxu0 %v5167
        %5691 = vmatpush2.bf16.msra.mxu0 %v5166
        %5692 = vmatprep.subr.bf16.mxu0 %v5165
        %5693 = vmatpush2.bf16.msra.mxu0 %v5164
        %5694 = vmatprep.subr.bf16.mxu0 %v5163
        %5695 = vmatpush2.bf16.msra.mxu0 %v5162
        %5696 = vmatprep.subr.bf16.mxu0 %v5161
        %5697 = vmatpush2.bf16.msra.mxu0 %v5160
        %5698 = vmatprep.subr.bf16.mxu0 %v5159
        %5699 = vmatpush2.bf16.msra.mxu0 %v5158
        %5700 = vmatprep.subr.bf16.mxu0 %v5157
        %5701 = vmatpush2.bf16.msra.mxu0 %v5156
        %5702 = vmatprep.subr.bf16.mxu0 %v5155
        %5703 = vmatpush2.bf16.msra.mxu0 %v5154
        %5704 = vmatprep.mubr.bf16.mxu0 %v1259
        %5705 = vmatmul.mubr.bf16.gmra.mxu0 %v1258
        %v5706 = vpop.f32.mrf.mxu0
        %v5707 = vadd.f32 %v5664, %v5706
        %v5708 = vpop.f32.mrf.mxu0
        %v5709 = vadd.f32 %v5666, %v5708
        %v5710 = vpop.f32.mrf.mxu0
        %v5711 = vadd.f32 %v5668, %v5710
        %v5712 = vpop.f32.mrf.mxu0
        %v5713 = vadd.f32 %v5670, %v5712
        %5714 = vdwg.mxu0
        %5715 = vmatprep.subr.bf16.mxu0 %v5185
        %5716 = vmatpush1.bf16.msra.mxu0 %v5184
        %5717 = vmatprep.subr.bf16.mxu0 %v5183
        %5718 = vmatpush1.bf16.msra.mxu0 %v5182
        %5719 = vmatprep.subr.bf16.mxu0 %v5181
        %5720 = vmatpush1.bf16.msra.mxu0 %v5180
        %5721 = vmatprep.subr.bf16.mxu0 %v5179
        %5722 = vmatpush1.bf16.msra.mxu0 %v5178
        %5723 = vmatprep.subr.bf16.mxu0 %v5177
        %5724 = vmatpush1.bf16.msra.mxu0 %v5176
        %5725 = vmatprep.subr.bf16.mxu0 %v5175
        %5726 = vmatpush1.bf16.msra.mxu0 %v5174
        %5727 = vmatprep.subr.bf16.mxu0 %v5173
        %5728 = vmatpush1.bf16.msra.mxu0 %v5172
        %5729 = vmatprep.subr.bf16.mxu0 %v5171
        %5730 = vmatpush1.bf16.msra.mxu0 %v5170
        %5731 = vmatprep.subr.bf16.mxu0 %v5201
        %5732 = vmatpush2.bf16.msra.mxu0 %v5200
        %5733 = vmatprep.subr.bf16.mxu0 %v5199
        %5734 = vmatpush2.bf16.msra.mxu0 %v5198
        %5735 = vmatprep.subr.bf16.mxu0 %v5197
        %5736 = vmatpush2.bf16.msra.mxu0 %v5196
        %5737 = vmatprep.subr.bf16.mxu0 %v5195
        %5738 = vmatpush2.bf16.msra.mxu0 %v5194
        %5739 = vmatprep.subr.bf16.mxu0 %v5193
        %5740 = vmatpush2.bf16.msra.mxu0 %v5192
        %5741 = vmatprep.subr.bf16.mxu0 %v5191
        %5742 = vmatpush2.bf16.msra.mxu0 %v5190
        %5743 = vmatprep.subr.bf16.mxu0 %v5189
        %5744 = vmatpush2.bf16.msra.mxu0 %v5188
        %5745 = vmatprep.subr.bf16.mxu0 %v5187
        %5746 = vmatpush2.bf16.msra.mxu0 %v5186
        %5747 = vmatprep.mubr.bf16.mxu0 %v1261
        %5748 = vmatmul.mubr.bf16.gmra.mxu0 %v1260
        %v5749 = vpop.f32.mrf.mxu0
        %v5750 = vadd.f32 %v5707, %v5749
        %v5751 = vpop.f32.mrf.mxu0
        %v5752 = vadd.f32 %v5709, %v5751
        %v5753 = vpop.f32.mrf.mxu0
        %v5754 = vadd.f32 %v5711, %v5753
        %v5755 = vpop.f32.mrf.mxu0
        %v5756 = vadd.f32 %v5713, %v5755
        %5757 = vdwg.mxu0
        %5758 = vmatprep.subr.bf16.mxu0 %v5217
        %5759 = vmatpush1.bf16.msra.mxu0 %v5216
        %5760 = vmatprep.subr.bf16.mxu0 %v5215
        %5761 = vmatpush1.bf16.msra.mxu0 %v5214
        %5762 = vmatprep.subr.bf16.mxu0 %v5213
        %5763 = vmatpush1.bf16.msra.mxu0 %v5212
        %5764 = vmatprep.subr.bf16.mxu0 %v5211
        %5765 = vmatpush1.bf16.msra.mxu0 %v5210
        %5766 = vmatprep.subr.bf16.mxu0 %v5209
        %5767 = vmatpush1.bf16.msra.mxu0 %v5208
        %5768 = vmatprep.subr.bf16.mxu0 %v5207
        %5769 = vmatpush1.bf16.msra.mxu0 %v5206
        %5770 = vmatprep.subr.bf16.mxu0 %v5205
        %5771 = vmatpush1.bf16.msra.mxu0 %v5204
        %5772 = vmatprep.subr.bf16.mxu0 %v5203
        %5773 = vmatpush1.bf16.msra.mxu0 %v5202
        %5774 = vmatprep.subr.bf16.mxu0 %v5233
        %5775 = vmatpush2.bf16.msra.mxu0 %v5232
        %5776 = vmatprep.subr.bf16.mxu0 %v5231
        %5777 = vmatpush2.bf16.msra.mxu0 %v5230
        %5778 = vmatprep.subr.bf16.mxu0 %v5229
        %5779 = vmatpush2.bf16.msra.mxu0 %v5228
        %5780 = vmatprep.subr.bf16.mxu0 %v5227
        %5781 = vmatpush2.bf16.msra.mxu0 %v5226
        %5782 = vmatprep.subr.bf16.mxu0 %v5225
        %5783 = vmatpush2.bf16.msra.mxu0 %v5224
        %5784 = vmatprep.subr.bf16.mxu0 %v5223
        %5785 = vmatpush2.bf16.msra.mxu0 %v5222
        %5786 = vmatprep.subr.bf16.mxu0 %v5221
        %5787 = vmatpush2.bf16.msra.mxu0 %v5220
        %5788 = vmatprep.subr.bf16.mxu0 %v5219
        %5789 = vmatpush2.bf16.msra.mxu0 %v5218
        %5790 = vmatprep.mubr.bf16.mxu0 %v1263
        %5791 = vmatmul.mubr.bf16.gmra.mxu0 %v1262
        %v5792 = vpop.f32.mrf.mxu0
        %v5793 = vadd.f32 %v5750, %v5792
        %v5794 = vpop.f32.mrf.mxu0
        %v5795 = vadd.f32 %v5752, %v5794
        %v5796 = vpop.f32.mrf.mxu0
        %v5797 = vadd.f32 %v5754, %v5796
        %v5798 = vpop.f32.mrf.mxu0
        %v5799 = vadd.f32 %v5756, %v5798
        %5800 = vdwg.mxu0
        %5801 = vmatprep.subr.bf16.mxu0 %v5249
        %5802 = vmatpush1.bf16.msra.mxu0 %v5248
        %5803 = vmatprep.subr.bf16.mxu0 %v5247
        %5804 = vmatpush1.bf16.msra.mxu0 %v5246
        %5805 = vmatprep.subr.bf16.mxu0 %v5245
        %5806 = vmatpush1.bf16.msra.mxu0 %v5244
        %5807 = vmatprep.subr.bf16.mxu0 %v5243
        %5808 = vmatpush1.bf16.msra.mxu0 %v5242
        %5809 = vmatprep.subr.bf16.mxu0 %v5241
        %5810 = vmatpush1.bf16.msra.mxu0 %v5240
        %5811 = vmatprep.subr.bf16.mxu0 %v5239
        %5812 = vmatpush1.bf16.msra.mxu0 %v5238
        %5813 = vmatprep.subr.bf16.mxu0 %v5237
        %5814 = vmatpush1.bf16.msra.mxu0 %v5236
        %5815 = vmatprep.subr.bf16.mxu0 %v5235
        %5816 = vmatpush1.bf16.msra.mxu0 %v5234
        %5817 = vmatprep.subr.bf16.mxu0 %v5265
        %5818 = vmatpush2.bf16.msra.mxu0 %v5264
        %5819 = vmatprep.subr.bf16.mxu0 %v5263
        %5820 = vmatpush2.bf16.msra.mxu0 %v5262
        %5821 = vmatprep.subr.bf16.mxu0 %v5261
        %5822 = vmatpush2.bf16.msra.mxu0 %v5260
        %5823 = vmatprep.subr.bf16.mxu0 %v5259
        %5824 = vmatpush2.bf16.msra.mxu0 %v5258
        %5825 = vmatprep.subr.bf16.mxu0 %v5257
        %5826 = vmatpush2.bf16.msra.mxu0 %v5256
        %5827 = vmatprep.subr.bf16.mxu0 %v5255
        %5828 = vmatpush2.bf16.msra.mxu0 %v5254
        %5829 = vmatprep.subr.bf16.mxu0 %v5253
        %5830 = vmatpush2.bf16.msra.mxu0 %v5252
        %5831 = vmatprep.subr.bf16.mxu0 %v5251
        %5832 = vmatpush2.bf16.msra.mxu0 %v5250
        %5833 = vmatprep.mubr.bf16.mxu0 %v1265
        %5834 = vmatmul.mubr.bf16.gmra.mxu0 %v1264
        %v5835 = vpop.f32.mrf.mxu0
        %v5836 = vadd.f32 %v5793, %v5835
        %v5837 = vpop.f32.mrf.mxu0
        %v5838 = vadd.f32 %v5795, %v5837
        %v5839 = vpop.f32.mrf.mxu0
        %v5840 = vadd.f32 %v5797, %v5839
        %v5841 = vpop.f32.mrf.mxu0
        %v5842 = vadd.f32 %v5799, %v5841
        %5843 = vdwg.mxu0
        %5844 = vmatprep.subr.bf16.mxu0 %v5281
        %5845 = vmatpush1.bf16.msra.mxu0 %v5280
        %5846 = vmatprep.subr.bf16.mxu0 %v5279
        %5847 = vmatpush1.bf16.msra.mxu0 %v5278
        %5848 = vmatprep.subr.bf16.mxu0 %v5277
        %5849 = vmatpush1.bf16.msra.mxu0 %v5276
        %5850 = vmatprep.subr.bf16.mxu0 %v5275
        %5851 = vmatpush1.bf16.msra.mxu0 %v5274
        %5852 = vmatprep.subr.bf16.mxu0 %v5273
        %5853 = vmatpush1.bf16.msra.mxu0 %v5272
        %5854 = vmatprep.subr.bf16.mxu0 %v5271
        %5855 = vmatpush1.bf16.msra.mxu0 %v5270
        %5856 = vmatprep.subr.bf16.mxu0 %v5269
        %5857 = vmatpush1.bf16.msra.mxu0 %v5268
        %5858 = vmatprep.subr.bf16.mxu0 %v5267
        %5859 = vmatpush1.bf16.msra.mxu0 %v5266
        %5860 = vmatprep.subr.bf16.mxu0 %v5297
        %5861 = vmatpush2.bf16.msra.mxu0 %v5296
        %5862 = vmatprep.subr.bf16.mxu0 %v5295
        %5863 = vmatpush2.bf16.msra.mxu0 %v5294
        %5864 = vmatprep.subr.bf16.mxu0 %v5293
        %5865 = vmatpush2.bf16.msra.mxu0 %v5292
        %5866 = vmatprep.subr.bf16.mxu0 %v5291
        %5867 = vmatpush2.bf16.msra.mxu0 %v5290
        %5868 = vmatprep.subr.bf16.mxu0 %v5289
        %5869 = vmatpush2.bf16.msra.mxu0 %v5288
        %5870 = vmatprep.subr.bf16.mxu0 %v5287
        %5871 = vmatpush2.bf16.msra.mxu0 %v5286
        %5872 = vmatprep.subr.bf16.mxu0 %v5285
        %5873 = vmatpush2.bf16.msra.mxu0 %v5284
        %5874 = vmatprep.subr.bf16.mxu0 %v5283
        %5875 = vmatpush2.bf16.msra.mxu0 %v5282
        %5876 = vmatprep.mubr.bf16.mxu0 %v1267
        %5877 = vmatmul.mubr.bf16.gmra.mxu0 %v1266
        %v5878 = vpop.f32.mrf.mxu0
        %v5879 = vadd.f32 %v5836, %v5878
        %v5880 = vpop.f32.mrf.mxu0
        %v5881 = vadd.f32 %v5838, %v5880
        %v5882 = vpop.f32.mrf.mxu0
        %v5883 = vadd.f32 %v5840, %v5882
        %v5884 = vpop.f32.mrf.mxu0
        %v5885 = vadd.f32 %v5842, %v5884
        %5886 = vdwg.mxu0
        %5887 = vmatprep.subr.bf16.mxu0 %v5313
        %5888 = vmatpush1.bf16.msra.mxu0 %v5312
        %5889 = vmatprep.subr.bf16.mxu0 %v5311
        %5890 = vmatpush1.bf16.msra.mxu0 %v5310
        %5891 = vmatprep.subr.bf16.mxu0 %v5309
        %5892 = vmatpush1.bf16.msra.mxu0 %v5308
        %5893 = vmatprep.subr.bf16.mxu0 %v5307
        %5894 = vmatpush1.bf16.msra.mxu0 %v5306
        %5895 = vmatprep.subr.bf16.mxu0 %v5305
        %5896 = vmatpush1.bf16.msra.mxu0 %v5304
        %5897 = vmatprep.subr.bf16.mxu0 %v5303
        %5898 = vmatpush1.bf16.msra.mxu0 %v5302
        %5899 = vmatprep.subr.bf16.mxu0 %v5301
        %5900 = vmatpush1.bf16.msra.mxu0 %v5300
        %5901 = vmatprep.subr.bf16.mxu0 %v5299
        %5902 = vmatpush1.bf16.msra.mxu0 %v5298
        %5903 = vmatprep.subr.bf16.mxu0 %v5329
        %5904 = vmatpush2.bf16.msra.mxu0 %v5328
        %5905 = vmatprep.subr.bf16.mxu0 %v5327
        %5906 = vmatpush2.bf16.msra.mxu0 %v5326
        %5907 = vmatprep.subr.bf16.mxu0 %v5325
        %5908 = vmatpush2.bf16.msra.mxu0 %v5324
        %5909 = vmatprep.subr.bf16.mxu0 %v5323
        %5910 = vmatpush2.bf16.msra.mxu0 %v5322
        %5911 = vmatprep.subr.bf16.mxu0 %v5321
        %5912 = vmatpush2.bf16.msra.mxu0 %v5320
        %5913 = vmatprep.subr.bf16.mxu0 %v5319
        %5914 = vmatpush2.bf16.msra.mxu0 %v5318
        %5915 = vmatprep.subr.bf16.mxu0 %v5317
        %5916 = vmatpush2.bf16.msra.mxu0 %v5316
        %5917 = vmatprep.subr.bf16.mxu0 %v5315
        %5918 = vmatpush2.bf16.msra.mxu0 %v5314
        %5919 = vmatprep.mubr.bf16.mxu0 %v1269
        %5920 = vmatmul.mubr.bf16.gmra.mxu0 %v1268
        %v5921 = vpop.f32.mrf.mxu0
        %v5922 = vadd.f32 %v5879, %v5921
        %v5923 = vpop.f32.mrf.mxu0
        %v5924 = vadd.f32 %v5881, %v5923
        %v5925 = vpop.f32.mrf.mxu0
        %v5926 = vadd.f32 %v5883, %v5925
        %v5927 = vpop.f32.mrf.mxu0
        %v5928 = vadd.f32 %v5885, %v5927
        %5929 = vdwg.mxu0
        %s5930 = scalar_lea.vmem [#allocation5], 128
        %v5931 = vld [vmem:[%s5930] sm:$0xff]
        %v5932 = vld [vmem:[%s5930 + $0x8] sm:$0xff]
        %v5933 = vld [vmem:[%s5930 + $0x10] sm:$0xff]
        %v5934 = vld [vmem:[%s5930 + $0x18] sm:$0xff]
        %v5935 = vld [vmem:[%s5930 + $0x20] sm:$0xff]
        %v5936 = vld [vmem:[%s5930 + $0x28] sm:$0xff]
        %v5937 = vld [vmem:[%s5930 + $0x30] sm:$0xff]
        %v5938 = vld [vmem:[%s5930 + $0x38] sm:$0xff]
        %v5939 = vld [vmem:[%s5930 + $0xc0] sm:$0xff]
        %v5940 = vld [vmem:[%s5930 + $0xc8] sm:$0xff]
        %v5941 = vld [vmem:[%s5930 + $0xd0] sm:$0xff]
        %v5942 = vld [vmem:[%s5930 + $0xd8] sm:$0xff]
        %v5943 = vld [vmem:[%s5930 + $0xe0] sm:$0xff]
        %v5944 = vld [vmem:[%s5930 + $0xe8] sm:$0xff]
        %v5945 = vld [vmem:[%s5930 + $0xf0] sm:$0xff]
        %v5946 = vld [vmem:[%s5930 + $0xf8] sm:$0xff]
        %v5947 = vld [vmem:[%s5930 + $0x180] sm:$0xff]
        %v5948 = vld [vmem:[%s5930 + $0x188] sm:$0xff]
        %v5949 = vld [vmem:[%s5930 + $0x190] sm:$0xff]
        %v5950 = vld [vmem:[%s5930 + $0x198] sm:$0xff]
        %v5951 = vld [vmem:[%s5930 + $0x1a0] sm:$0xff]
        %v5952 = vld [vmem:[%s5930 + $0x1a8] sm:$0xff]
        %v5953 = vld [vmem:[%s5930 + $0x1b0] sm:$0xff]
        %v5954 = vld [vmem:[%s5930 + $0x1b8] sm:$0xff]
        %v5955 = vld [vmem:[%s5930 + $0x240] sm:$0xff]
        %v5956 = vld [vmem:[%s5930 + $0x248] sm:$0xff]
        %v5957 = vld [vmem:[%s5930 + $0x250] sm:$0xff]
        %v5958 = vld [vmem:[%s5930 + $0x258] sm:$0xff]
        %v5959 = vld [vmem:[%s5930 + $0x260] sm:$0xff]
        %v5960 = vld [vmem:[%s5930 + $0x268] sm:$0xff]
        %v5961 = vld [vmem:[%s5930 + $0x270] sm:$0xff]
        %v5962 = vld [vmem:[%s5930 + $0x278] sm:$0xff]
        %s5963 = scalar_lea.vmem [#allocation7], 32
        %v5964 = vld [vmem:[%s5963] sm:$0xff]
        %v5965 = vld [vmem:[%s5963 + $0x8] sm:$0xff]
        %v5968 = vlaneseq
        %v5969 = vshrl.u32 %v5968, 7
        %v5970 = vsub.s32 0, %v5969
        %v5971 = vrot.slane %v5964, %v5970
        %v5972 = vlaneseq
        %v5973 = vshrl.u32 %v5972, 7
        %v5974 = vsub.s32 1, %v5973
        %v5975 = vrot.slane %v5964, %v5974
        %v5976 = vlaneseq
        %v5977 = vshrl.u32 %v5976, 7
        %v5978 = vsub.s32 2, %v5977
        %v5979 = vrot.slane %v5964, %v5978
        %v5980 = vlaneseq
        %v5981 = vshrl.u32 %v5980, 7
        %v5982 = vsub.s32 3, %v5981
        %v5983 = vrot.slane %v5964, %v5982
        %v5984 = vlaneseq
        %v5985 = vshrl.u32 %v5984, 7
        %v5986 = vsub.s32 4, %v5985
        %v5987 = vrot.slane %v5964, %v5986
        %v5988 = vlaneseq
        %v5989 = vshrl.u32 %v5988, 7
        %v5990 = vsub.s32 5, %v5989
        %v5991 = vrot.slane %v5964, %v5990
        %v5992 = vlaneseq
        %v5993 = vshrl.u32 %v5992, 7
        %v5994 = vsub.s32 6, %v5993
        %v5995 = vrot.slane %v5964, %v5994
        %v5996 = vlaneseq
        %v5997 = vshrl.u32 %v5996, 7
        %v5998 = vsub.s32 7, %v5997
        %v5999 = vrot.slane %v5964, %v5998
        %v6000 = vlaneseq
        %v6001 = vshrl.u32 %v6000, 7
        %v6002 = vsub.s32 0, %v6001
        %v6003 = vrot.slane %v5965, %v6002
        %v6004 = vlaneseq
        %v6005 = vshrl.u32 %v6004, 7
        %v6006 = vsub.s32 1, %v6005
        %v6007 = vrot.slane %v5965, %v6006
        %v6008 = vlaneseq
        %v6009 = vshrl.u32 %v6008, 7
        %v6010 = vsub.s32 2, %v6009
        %v6011 = vrot.slane %v5965, %v6010
        %v6012 = vlaneseq
        %v6013 = vshrl.u32 %v6012, 7
        %v6014 = vsub.s32 3, %v6013
        %v6015 = vrot.slane %v5965, %v6014
        %v6016 = vlaneseq
        %v6017 = vshrl.u32 %v6016, 7
        %v6018 = vsub.s32 4, %v6017
        %v6019 = vrot.slane %v5965, %v6018
        %v6020 = vlaneseq
        %v6021 = vshrl.u32 %v6020, 7
        %v6022 = vsub.s32 5, %v6021
        %v6023 = vrot.slane %v5965, %v6022
        %v6024 = vlaneseq
        %v6025 = vshrl.u32 %v6024, 7
        %v6026 = vsub.s32 6, %v6025
        %v6027 = vrot.slane %v5965, %v6026
        %v6028 = vlaneseq
        %v6029 = vshrl.u32 %v6028, 7
        %v6030 = vsub.s32 7, %v6029
        %v6031 = vrot.slane %v5965, %v6030
        %v6080 = vunpack.c.l.b16 %v5931
        %v6081 = vunpack.c.h.b16 %v5931
        %v6082 = vunpack.c.l.b16 %v5932
        %v6083 = vunpack.c.h.b16 %v5932
        %v6084 = vunpack.c.l.b16 %v5933
        %v6085 = vunpack.c.h.b16 %v5933
        %v6086 = vunpack.c.l.b16 %v5934
        %v6087 = vunpack.c.h.b16 %v5934
        %v6088 = vunpack.c.l.b16 %v5935
        %v6089 = vunpack.c.h.b16 %v5935
        %v6090 = vunpack.c.l.b16 %v5936
        %v6091 = vunpack.c.h.b16 %v5936
        %v6092 = vunpack.c.l.b16 %v5937
        %v6093 = vunpack.c.h.b16 %v5937
        %v6094 = vunpack.c.l.b16 %v5938
        %v6095 = vunpack.c.h.b16 %v5938
        %v6096 = vunpack.c.l.b16 %v5939
        %v6097 = vunpack.c.h.b16 %v5939
        %v6098 = vunpack.c.l.b16 %v5940
        %v6099 = vunpack.c.h.b16 %v5940
        %v6100 = vunpack.c.l.b16 %v5941
        %v6101 = vunpack.c.h.b16 %v5941
        %v6102 = vunpack.c.l.b16 %v5942
        %v6103 = vunpack.c.h.b16 %v5942
        %v6104 = vunpack.c.l.b16 %v5943
        %v6105 = vunpack.c.h.b16 %v5943
        %v6106 = vunpack.c.l.b16 %v5944
        %v6107 = vunpack.c.h.b16 %v5944
        %v6108 = vunpack.c.l.b16 %v5945
        %v6109 = vunpack.c.h.b16 %v5945
        %v6110 = vunpack.c.l.b16 %v5946
        %v6111 = vunpack.c.h.b16 %v5946
        %v6112 = vunpack.c.l.b16 %v5947
        %v6113 = vunpack.c.h.b16 %v5947
        %v6114 = vunpack.c.l.b16 %v5948
        %v6115 = vunpack.c.h.b16 %v5948
        %v6116 = vunpack.c.l.b16 %v5949
        %v6117 = vunpack.c.h.b16 %v5949
        %v6118 = vunpack.c.l.b16 %v5950
        %v6119 = vunpack.c.h.b16 %v5950
        %v6120 = vunpack.c.l.b16 %v5951
        %v6121 = vunpack.c.h.b16 %v5951
        %v6122 = vunpack.c.l.b16 %v5952
        %v6123 = vunpack.c.h.b16 %v5952
        %v6124 = vunpack.c.l.b16 %v5953
        %v6125 = vunpack.c.h.b16 %v5953
        %v6126 = vunpack.c.l.b16 %v5954
        %v6127 = vunpack.c.h.b16 %v5954
        %v6128 = vunpack.c.l.b16 %v5955
        %v6129 = vunpack.c.h.b16 %v5955
        %v6130 = vunpack.c.l.b16 %v5956
        %v6131 = vunpack.c.h.b16 %v5956
        %v6132 = vunpack.c.l.b16 %v5957
        %v6133 = vunpack.c.h.b16 %v5957
        %v6134 = vunpack.c.l.b16 %v5958
        %v6135 = vunpack.c.h.b16 %v5958
        %v6136 = vunpack.c.l.b16 %v5959
        %v6137 = vunpack.c.h.b16 %v5959
        %v6138 = vunpack.c.l.b16 %v5960
        %v6139 = vunpack.c.h.b16 %v5960
        %v6140 = vunpack.c.l.b16 %v5961
        %v6141 = vunpack.c.h.b16 %v5961
        %v6142 = vunpack.c.l.b16 %v5962
        %v6143 = vunpack.c.h.b16 %v5962
        %v6144 = vpack.c.b16 %v6096, %v6080
        %v6145 = vpack.c.b16 %v6097, %v6081
        %v6146 = vpack.c.b16 %v6098, %v6082
        %v6147 = vpack.c.b16 %v6099, %v6083
        %v6148 = vpack.c.b16 %v6100, %v6084
        %v6149 = vpack.c.b16 %v6101, %v6085
        %v6150 = vpack.c.b16 %v6102, %v6086
        %v6151 = vpack.c.b16 %v6103, %v6087
        %v6152 = vpack.c.b16 %v6104, %v6088
        %v6153 = vpack.c.b16 %v6105, %v6089
        %v6154 = vpack.c.b16 %v6106, %v6090
        %v6155 = vpack.c.b16 %v6107, %v6091
        %v6156 = vpack.c.b16 %v6108, %v6092
        %v6157 = vpack.c.b16 %v6109, %v6093
        %v6158 = vpack.c.b16 %v6110, %v6094
        %v6159 = vpack.c.b16 %v6111, %v6095
        %v6160 = vpack.c.b16 %v6128, %v6112
        %v6161 = vpack.c.b16 %v6129, %v6113
        %v6162 = vpack.c.b16 %v6130, %v6114
        %v6163 = vpack.c.b16 %v6131, %v6115
        %v6164 = vpack.c.b16 %v6132, %v6116
        %v6165 = vpack.c.b16 %v6133, %v6117
        %v6166 = vpack.c.b16 %v6134, %v6118
        %v6167 = vpack.c.b16 %v6135, %v6119
        %v6168 = vpack.c.b16 %v6136, %v6120
        %v6169 = vpack.c.b16 %v6137, %v6121
        %v6170 = vpack.c.b16 %v6138, %v6122
        %v6171 = vpack.c.b16 %v6139, %v6123
        %v6172 = vpack.c.b16 %v6140, %v6124
        %v6173 = vpack.c.b16 %v6141, %v6125
        %v6174 = vpack.c.b16 %v6142, %v6126
        %v6175 = vpack.c.b16 %v6143, %v6127
        %6208 = vmatprep.subr.bf16.mxu0 0
        %6209 = vmatpush1.bf16.msra.mxu0 0
        %6210 = vmatprep.subr.bf16.mxu0 0
        %6211 = vmatpush1.bf16.msra.mxu0 0
        %6212 = vmatprep.subr.bf16.mxu0 0
        %6213 = vmatpush1.bf16.msra.mxu0 0
        %6214 = vmatprep.subr.bf16.mxu0 0
        %6215 = vmatpush1.bf16.msra.mxu0 0
        %6216 = vmatprep.subr.bf16.mxu0 0
        %6217 = vmatpush1.bf16.msra.mxu0 0
        %6218 = vmatprep.subr.bf16.mxu0 0
        %6219 = vmatpush1.bf16.msra.mxu0 0
        %6220 = vmatprep.subr.bf16.mxu0 %v6161
        %6221 = vmatpush1.bf16.msra.mxu0 %v6160
        %6222 = vmatprep.subr.bf16.mxu0 %v6145
        %6223 = vmatpush1.bf16.msra.mxu0 %v6144
        %6224 = vmatprep.subr.bf16.mxu0 0
        %6225 = vmatpush2.bf16.msra.mxu0 0
        %6226 = vmatprep.subr.bf16.mxu0 0
        %6227 = vmatpush2.bf16.msra.mxu0 0
        %6228 = vmatprep.subr.bf16.mxu0 0
        %6229 = vmatpush2.bf16.msra.mxu0 0
        %6230 = vmatprep.subr.bf16.mxu0 0
        %6231 = vmatpush2.bf16.msra.mxu0 0
        %6232 = vmatprep.subr.bf16.mxu0 0
        %6233 = vmatpush2.bf16.msra.mxu0 0
        %6234 = vmatprep.subr.bf16.mxu0 0
        %6235 = vmatpush2.bf16.msra.mxu0 0
        %6236 = vmatprep.subr.bf16.mxu0 0
        %6237 = vmatpush2.bf16.msra.mxu0 0
        %6238 = vmatprep.subr.bf16.mxu0 0
        %6239 = vmatpush2.bf16.msra.mxu0 0
        %6240 = vmatprep.mubr.bf16.mxu0 0
        %6241 = vmatmul.mubr.bf16.gmra.mxu0 %v652
        %v6242 = vpop.f32.mrf.mxu0
        %v6243 = vadd.f32 %v5971, %v6242
        %v6244 = vpop.f32.mrf.mxu0
        %v6245 = vadd.f32 %v5975, %v6244
        %v6246 = vpop.f32.mrf.mxu0
        %v6247 = vadd.f32 %v5971, %v6246
        %v6248 = vpop.f32.mrf.mxu0
        %v6249 = vadd.f32 %v5975, %v6248
        %6250 = vdwg.mxu0
        %6251 = vmatprep.subr.bf16.mxu0 0
        %6252 = vmatpush1.bf16.msra.mxu0 0
        %6253 = vmatprep.subr.bf16.mxu0 0
        %6254 = vmatpush1.bf16.msra.mxu0 0
        %6255 = vmatprep.subr.bf16.mxu0 0
        %6256 = vmatpush1.bf16.msra.mxu0 0
        %6257 = vmatprep.subr.bf16.mxu0 0
        %6258 = vmatpush1.bf16.msra.mxu0 0
        %6259 = vmatprep.subr.bf16.mxu0 0
        %6260 = vmatpush1.bf16.msra.mxu0 0
        %6261 = vmatprep.subr.bf16.mxu0 0
        %6262 = vmatpush1.bf16.msra.mxu0 0
        %6263 = vmatprep.subr.bf16.mxu0 %v6163
        %6264 = vmatpush1.bf16.msra.mxu0 %v6162
        %6265 = vmatprep.subr.bf16.mxu0 %v6147
        %6266 = vmatpush1.bf16.msra.mxu0 %v6146
        %6267 = vmatprep.subr.bf16.mxu0 0
        %6268 = vmatpush2.bf16.msra.mxu0 0
        %6269 = vmatprep.subr.bf16.mxu0 0
        %6270 = vmatpush2.bf16.msra.mxu0 0
        %6271 = vmatprep.subr.bf16.mxu0 0
        %6272 = vmatpush2.bf16.msra.mxu0 0
        %6273 = vmatprep.subr.bf16.mxu0 0
        %6274 = vmatpush2.bf16.msra.mxu0 0
        %6275 = vmatprep.subr.bf16.mxu0 0
        %6276 = vmatpush2.bf16.msra.mxu0 0
        %6277 = vmatprep.subr.bf16.mxu0 0
        %6278 = vmatpush2.bf16.msra.mxu0 0
        %6279 = vmatprep.subr.bf16.mxu0 0
        %6280 = vmatpush2.bf16.msra.mxu0 0
        %6281 = vmatprep.subr.bf16.mxu0 0
        %6282 = vmatpush2.bf16.msra.mxu0 0
        %6283 = vmatprep.mubr.bf16.mxu0 0
        %6284 = vmatmul.mubr.bf16.gmra.mxu0 %v652
        %v6285 = vpop.f32.mrf.mxu0
        %v6286 = vadd.f32 %v5979, %v6285
        %v6287 = vpop.f32.mrf.mxu0
        %v6288 = vadd.f32 %v5983, %v6287
        %v6289 = vpop.f32.mrf.mxu0
        %v6290 = vadd.f32 %v5979, %v6289
        %v6291 = vpop.f32.mrf.mxu0
        %v6292 = vadd.f32 %v5983, %v6291
        %6293 = vdwg.mxu0
        %6294 = vmatprep.subr.bf16.mxu0 0
        %6295 = vmatpush1.bf16.msra.mxu0 0
        %6296 = vmatprep.subr.bf16.mxu0 0
        %6297 = vmatpush1.bf16.msra.mxu0 0
        %6298 = vmatprep.subr.bf16.mxu0 0
        %6299 = vmatpush1.bf16.msra.mxu0 0
        %6300 = vmatprep.subr.bf16.mxu0 0
        %6301 = vmatpush1.bf16.msra.mxu0 0
        %6302 = vmatprep.subr.bf16.mxu0 0
        %6303 = vmatpush1.bf16.msra.mxu0 0
        %6304 = vmatprep.subr.bf16.mxu0 0
        %6305 = vmatpush1.bf16.msra.mxu0 0
        %6306 = vmatprep.subr.bf16.mxu0 %v6165
        %6307 = vmatpush1.bf16.msra.mxu0 %v6164
        %6308 = vmatprep.subr.bf16.mxu0 %v6149
        %6309 = vmatpush1.bf16.msra.mxu0 %v6148
        %6310 = vmatprep.subr.bf16.mxu0 0
        %6311 = vmatpush2.bf16.msra.mxu0 0
        %6312 = vmatprep.subr.bf16.mxu0 0
        %6313 = vmatpush2.bf16.msra.mxu0 0
        %6314 = vmatprep.subr.bf16.mxu0 0
        %6315 = vmatpush2.bf16.msra.mxu0 0
        %6316 = vmatprep.subr.bf16.mxu0 0
        %6317 = vmatpush2.bf16.msra.mxu0 0
        %6318 = vmatprep.subr.bf16.mxu0 0
        %6319 = vmatpush2.bf16.msra.mxu0 0
        %6320 = vmatprep.subr.bf16.mxu0 0
        %6321 = vmatpush2.bf16.msra.mxu0 0
        %6322 = vmatprep.subr.bf16.mxu0 0
        %6323 = vmatpush2.bf16.msra.mxu0 0
        %6324 = vmatprep.subr.bf16.mxu0 0
        %6325 = vmatpush2.bf16.msra.mxu0 0
        %6326 = vmatprep.mubr.bf16.mxu0 0
        %6327 = vmatmul.mubr.bf16.gmra.mxu0 %v652
        %v6328 = vpop.f32.mrf.mxu0
        %v6329 = vadd.f32 %v5987, %v6328
        %v6330 = vpop.f32.mrf.mxu0
        %v6331 = vadd.f32 %v5991, %v6330
        %v6332 = vpop.f32.mrf.mxu0
        %v6333 = vadd.f32 %v5987, %v6332
        %v6334 = vpop.f32.mrf.mxu0
        %v6335 = vadd.f32 %v5991, %v6334
        %6336 = vdwg.mxu0
        %6337 = vmatprep.subr.bf16.mxu0 0
        %6338 = vmatpush1.bf16.msra.mxu0 0
        %6339 = vmatprep.subr.bf16.mxu0 0
        %6340 = vmatpush1.bf16.msra.mxu0 0
        %6341 = vmatprep.subr.bf16.mxu0 0
        %6342 = vmatpush1.bf16.msra.mxu0 0
        %6343 = vmatprep.subr.bf16.mxu0 0
        %6344 = vmatpush1.bf16.msra.mxu0 0
        %6345 = vmatprep.subr.bf16.mxu0 0
        %6346 = vmatpush1.bf16.msra.mxu0 0
        %6347 = vmatprep.subr.bf16.mxu0 0
        %6348 = vmatpush1.bf16.msra.mxu0 0
        %6349 = vmatprep.subr.bf16.mxu0 %v6167
        %6350 = vmatpush1.bf16.msra.mxu0 %v6166
        %6351 = vmatprep.subr.bf16.mxu0 %v6151
        %6352 = vmatpush1.bf16.msra.mxu0 %v6150
        %6353 = vmatprep.subr.bf16.mxu0 0
        %6354 = vmatpush2.bf16.msra.mxu0 0
        %6355 = vmatprep.subr.bf16.mxu0 0
        %6356 = vmatpush2.bf16.msra.mxu0 0
        %6357 = vmatprep.subr.bf16.mxu0 0
        %6358 = vmatpush2.bf16.msra.mxu0 0
        %6359 = vmatprep.subr.bf16.mxu0 0
        %6360 = vmatpush2.bf16.msra.mxu0 0
        %6361 = vmatprep.subr.bf16.mxu0 0
        %6362 = vmatpush2.bf16.msra.mxu0 0
        %6363 = vmatprep.subr.bf16.mxu0 0
        %6364 = vmatpush2.bf16.msra.mxu0 0
        %6365 = vmatprep.subr.bf16.mxu0 0
        %6366 = vmatpush2.bf16.msra.mxu0 0
        %6367 = vmatprep.subr.bf16.mxu0 0
        %6368 = vmatpush2.bf16.msra.mxu0 0
        %6369 = vmatprep.mubr.bf16.mxu0 0
        %6370 = vmatmul.mubr.bf16.gmra.mxu0 %v652
        %v6371 = vpop.f32.mrf.mxu0
        %v6372 = vadd.f32 %v5995, %v6371
        %v6373 = vpop.f32.mrf.mxu0
        %v6374 = vadd.f32 %v5999, %v6373
        %v6375 = vpop.f32.mrf.mxu0
        %v6376 = vadd.f32 %v5995, %v6375
        %v6377 = vpop.f32.mrf.mxu0
        %v6378 = vadd.f32 %v5999, %v6377
        %6379 = vdwg.mxu0
        %6380 = vmatprep.subr.bf16.mxu0 0
        %6381 = vmatpush1.bf16.msra.mxu0 0
        %6382 = vmatprep.subr.bf16.mxu0 0
        %6383 = vmatpush1.bf16.msra.mxu0 0
        %6384 = vmatprep.subr.bf16.mxu0 0
        %6385 = vmatpush1.bf16.msra.mxu0 0
        %6386 = vmatprep.subr.bf16.mxu0 0
        %6387 = vmatpush1.bf16.msra.mxu0 0
        %6388 = vmatprep.subr.bf16.mxu0 0
        %6389 = vmatpush1.bf16.msra.mxu0 0
        %6390 = vmatprep.subr.bf16.mxu0 0
        %6391 = vmatpush1.bf16.msra.mxu0 0
        %6392 = vmatprep.subr.bf16.mxu0 %v6169
        %6393 = vmatpush1.bf16.msra.mxu0 %v6168
        %6394 = vmatprep.subr.bf16.mxu0 %v6153
        %6395 = vmatpush1.bf16.msra.mxu0 %v6152
        %6396 = vmatprep.subr.bf16.mxu0 0
        %6397 = vmatpush2.bf16.msra.mxu0 0
        %6398 = vmatprep.subr.bf16.mxu0 0
        %6399 = vmatpush2.bf16.msra.mxu0 0
        %6400 = vmatprep.subr.bf16.mxu0 0
        %6401 = vmatpush2.bf16.msra.mxu0 0
        %6402 = vmatprep.subr.bf16.mxu0 0
        %6403 = vmatpush2.bf16.msra.mxu0 0
        %6404 = vmatprep.subr.bf16.mxu0 0
        %6405 = vmatpush2.bf16.msra.mxu0 0
        %6406 = vmatprep.subr.bf16.mxu0 0
        %6407 = vmatpush2.bf16.msra.mxu0 0
        %6408 = vmatprep.subr.bf16.mxu0 0
        %6409 = vmatpush2.bf16.msra.mxu0 0
        %6410 = vmatprep.subr.bf16.mxu0 0
        %6411 = vmatpush2.bf16.msra.mxu0 0
        %6412 = vmatprep.mubr.bf16.mxu0 0
        %6413 = vmatmul.mubr.bf16.gmra.mxu0 %v652
        %v6414 = vpop.f32.mrf.mxu0
        %v6415 = vadd.f32 %v6003, %v6414
        %v6416 = vpop.f32.mrf.mxu0
        %v6417 = vadd.f32 %v6007, %v6416
        %v6418 = vpop.f32.mrf.mxu0
        %v6419 = vadd.f32 %v6003, %v6418
        %v6420 = vpop.f32.mrf.mxu0
        %v6421 = vadd.f32 %v6007, %v6420
        %6422 = vdwg.mxu0
        %6423 = vmatprep.subr.bf16.mxu0 0
        %6424 = vmatpush1.bf16.msra.mxu0 0
        %6425 = vmatprep.subr.bf16.mxu0 0
        %6426 = vmatpush1.bf16.msra.mxu0 0
        %6427 = vmatprep.subr.bf16.mxu0 0
        %6428 = vmatpush1.bf16.msra.mxu0 0
        %6429 = vmatprep.subr.bf16.mxu0 0
        %6430 = vmatpush1.bf16.msra.mxu0 0
        %6431 = vmatprep.subr.bf16.mxu0 0
        %6432 = vmatpush1.bf16.msra.mxu0 0
        %6433 = vmatprep.subr.bf16.mxu0 0
        %6434 = vmatpush1.bf16.msra.mxu0 0
        %6435 = vmatprep.subr.bf16.mxu0 %v6171
        %6436 = vmatpush1.bf16.msra.mxu0 %v6170
        %6437 = vmatprep.subr.bf16.mxu0 %v6155
        %6438 = vmatpush1.bf16.msra.mxu0 %v6154
        %6439 = vmatprep.subr.bf16.mxu0 0
        %6440 = vmatpush2.bf16.msra.mxu0 0
        %6441 = vmatprep.subr.bf16.mxu0 0
        %6442 = vmatpush2.bf16.msra.mxu0 0
        %6443 = vmatprep.subr.bf16.mxu0 0
        %6444 = vmatpush2.bf16.msra.mxu0 0
        %6445 = vmatprep.subr.bf16.mxu0 0
        %6446 = vmatpush2.bf16.msra.mxu0 0
        %6447 = vmatprep.subr.bf16.mxu0 0
        %6448 = vmatpush2.bf16.msra.mxu0 0
        %6449 = vmatprep.subr.bf16.mxu0 0
        %6450 = vmatpush2.bf16.msra.mxu0 0
        %6451 = vmatprep.subr.bf16.mxu0 0
        %6452 = vmatpush2.bf16.msra.mxu0 0
        %6453 = vmatprep.subr.bf16.mxu0 0
        %6454 = vmatpush2.bf16.msra.mxu0 0
        %6455 = vmatprep.mubr.bf16.mxu0 0
        %6456 = vmatmul.mubr.bf16.gmra.mxu0 %v652
        %v6457 = vpop.f32.mrf.mxu0
        %v6458 = vadd.f32 %v6011, %v6457
        %v6459 = vpop.f32.mrf.mxu0
        %v6460 = vadd.f32 %v6015, %v6459
        %v6461 = vpop.f32.mrf.mxu0
        %v6462 = vadd.f32 %v6011, %v6461
        %v6463 = vpop.f32.mrf.mxu0
        %v6464 = vadd.f32 %v6015, %v6463
        %6465 = vdwg.mxu0
        %6466 = vmatprep.subr.bf16.mxu0 0
        %6467 = vmatpush1.bf16.msra.mxu0 0
        %6468 = vmatprep.subr.bf16.mxu0 0
        %6469 = vmatpush1.bf16.msra.mxu0 0
        %6470 = vmatprep.subr.bf16.mxu0 0
        %6471 = vmatpush1.bf16.msra.mxu0 0
        %6472 = vmatprep.subr.bf16.mxu0 0
        %6473 = vmatpush1.bf16.msra.mxu0 0
        %6474 = vmatprep.subr.bf16.mxu0 0
        %6475 = vmatpush1.bf16.msra.mxu0 0
        %6476 = vmatprep.subr.bf16.mxu0 0
        %6477 = vmatpush1.bf16.msra.mxu0 0
        %6478 = vmatprep.subr.bf16.mxu0 %v6173
        %6479 = vmatpush1.bf16.msra.mxu0 %v6172
        %6480 = vmatprep.subr.bf16.mxu0 %v6157
        %6481 = vmatpush1.bf16.msra.mxu0 %v6156
        %6482 = vmatprep.subr.bf16.mxu0 0
        %6483 = vmatpush2.bf16.msra.mxu0 0
        %6484 = vmatprep.subr.bf16.mxu0 0
        %6485 = vmatpush2.bf16.msra.mxu0 0
        %6486 = vmatprep.subr.bf16.mxu0 0
        %6487 = vmatpush2.bf16.msra.mxu0 0
        %6488 = vmatprep.subr.bf16.mxu0 0
        %6489 = vmatpush2.bf16.msra.mxu0 0
        %6490 = vmatprep.subr.bf16.mxu0 0
        %6491 = vmatpush2.bf16.msra.mxu0 0
        %6492 = vmatprep.subr.bf16.mxu0 0
        %6493 = vmatpush2.bf16.msra.mxu0 0
        %6494 = vmatprep.subr.bf16.mxu0 0
        %6495 = vmatpush2.bf16.msra.mxu0 0
        %6496 = vmatprep.subr.bf16.mxu0 0
        %6497 = vmatpush2.bf16.msra.mxu0 0
        %6498 = vmatprep.mubr.bf16.mxu0 0
        %6499 = vmatmul.mubr.bf16.gmra.mxu0 %v652
        %v6500 = vpop.f32.mrf.mxu0
        %v6501 = vadd.f32 %v6019, %v6500
        %v6502 = vpop.f32.mrf.mxu0
        %v6503 = vadd.f32 %v6023, %v6502
        %v6504 = vpop.f32.mrf.mxu0
        %v6505 = vadd.f32 %v6019, %v6504
        %v6506 = vpop.f32.mrf.mxu0
        %v6507 = vadd.f32 %v6023, %v6506
        %6508 = vdwg.mxu0
        %6509 = vmatprep.subr.bf16.mxu0 0
        %6510 = vmatpush1.bf16.msra.mxu0 0
        %6511 = vmatprep.subr.bf16.mxu0 0
        %6512 = vmatpush1.bf16.msra.mxu0 0
        %6513 = vmatprep.subr.bf16.mxu0 0
        %6514 = vmatpush1.bf16.msra.mxu0 0
        %6515 = vmatprep.subr.bf16.mxu0 0
        %6516 = vmatpush1.bf16.msra.mxu0 0
        %6517 = vmatprep.subr.bf16.mxu0 0
        %6518 = vmatpush1.bf16.msra.mxu0 0
        %6519 = vmatprep.subr.bf16.mxu0 0
        %6520 = vmatpush1.bf16.msra.mxu0 0
        %6521 = vmatprep.subr.bf16.mxu0 %v6175
        %6522 = vmatpush1.bf16.msra.mxu0 %v6174
        %6523 = vmatprep.subr.bf16.mxu0 %v6159
        %6524 = vmatpush1.bf16.msra.mxu0 %v6158
        %6525 = vmatprep.subr.bf16.mxu0 0
        %6526 = vmatpush2.bf16.msra.mxu0 0
        %6527 = vmatprep.subr.bf16.mxu0 0
        %6528 = vmatpush2.bf16.msra.mxu0 0
        %6529 = vmatprep.subr.bf16.mxu0 0
        %6530 = vmatpush2.bf16.msra.mxu0 0
        %6531 = vmatprep.subr.bf16.mxu0 0
        %6532 = vmatpush2.bf16.msra.mxu0 0
        %6533 = vmatprep.subr.bf16.mxu0 0
        %6534 = vmatpush2.bf16.msra.mxu0 0
        %6535 = vmatprep.subr.bf16.mxu0 0
        %6536 = vmatpush2.bf16.msra.mxu0 0
        %6537 = vmatprep.subr.bf16.mxu0 0
        %6538 = vmatpush2.bf16.msra.mxu0 0
        %6539 = vmatprep.subr.bf16.mxu0 0
        %6540 = vmatpush2.bf16.msra.mxu0 0
        %6541 = vmatprep.mubr.bf16.mxu0 0
        %6542 = vmatmul.mubr.bf16.gmra.mxu0 %v652
        %v6543 = vpop.f32.mrf.mxu0
        %v6544 = vadd.f32 %v6027, %v6543
        %v6545 = vpop.f32.mrf.mxu0
        %v6546 = vadd.f32 %v6031, %v6545
        %v6547 = vpop.f32.mrf.mxu0
        %v6548 = vadd.f32 %v6027, %v6547
        %v6549 = vpop.f32.mrf.mxu0
        %v6550 = vadd.f32 %v6031, %v6549
        %6551 = vdwg.mxu0
        %v6552 = vmin.f32 %v6243, 0.0
        %v6553 = vmin.f32 %v6245, 0.0
        %v6554 = vmin.f32 %v6286, 0.0
        %v6555 = vmin.f32 %v6288, 0.0
        %v6556 = vmin.f32 %v6329, 0.0
        %v6557 = vmin.f32 %v6331, 0.0
        %v6558 = vmin.f32 %v6372, 0.0
        %v6559 = vmin.f32 %v6374, 0.0
        %v6560 = vmin.f32 %v6415, 0.0
        %v6561 = vmin.f32 %v6417, 0.0
        %v6562 = vmin.f32 %v6458, 0.0
        %v6563 = vmin.f32 %v6460, 0.0
        %v6564 = vmin.f32 %v6501, 0.0
        %v6565 = vmin.f32 %v6503, 0.0
        %v6566 = vmin.f32 %v6544, 0.0
        %v6567 = vmin.f32 %v6546, 0.0
        %v6568 = vmin.f32 %v6247, 0.0
        %v6569 = vmin.f32 %v6249, 0.0
        %v6570 = vmin.f32 %v6290, 0.0
        %v6571 = vmin.f32 %v6292, 0.0
        %v6572 = vmin.f32 %v6333, 0.0
        %v6573 = vmin.f32 %v6335, 0.0
        %v6574 = vmin.f32 %v6376, 0.0
        %v6575 = vmin.f32 %v6378, 0.0
        %v6576 = vmin.f32 %v6419, 0.0
        %v6577 = vmin.f32 %v6421, 0.0
        %v6578 = vmin.f32 %v6462, 0.0
        %v6579 = vmin.f32 %v6464, 0.0
        %v6580 = vmin.f32 %v6505, 0.0
        %v6581 = vmin.f32 %v6507, 0.0
        %v6582 = vmin.f32 %v6548, 0.0
        %v6583 = vmin.f32 %v6550, 0.0
        %v6584 = vmul.f32 %v6552, 1.442695
        %v6585 = vpow.pop %v6584
        %v6586 = vmul.f32 %v6553, 1.442695
        %v6587 = vpow.pop %v6586
        %v6588 = vmul.f32 %v6554, 1.442695
        %v6589 = vpow.pop %v6588
        %v6590 = vmul.f32 %v6555, 1.442695
        %v6591 = vpow.pop %v6590
        %v6592 = vmul.f32 %v6556, 1.442695
        %v6593 = vpow.pop %v6592
        %v6594 = vmul.f32 %v6557, 1.442695
        %v6595 = vpow.pop %v6594
        %v6596 = vmul.f32 %v6558, 1.442695
        %v6597 = vpow.pop %v6596
        %v6598 = vmul.f32 %v6559, 1.442695
        %v6599 = vpow.pop %v6598
        %v6600 = vmul.f32 %v6560, 1.442695
        %v6601 = vpow.pop %v6600
        %v6602 = vmul.f32 %v6561, 1.442695
        %v6603 = vpow.pop %v6602
        %v6604 = vmul.f32 %v6562, 1.442695
        %v6605 = vpow.pop %v6604
        %v6606 = vmul.f32 %v6563, 1.442695
        %v6607 = vpow.pop %v6606
        %v6608 = vmul.f32 %v6564, 1.442695
        %v6609 = vpow.pop %v6608
        %v6610 = vmul.f32 %v6565, 1.442695
        %v6611 = vpow.pop %v6610
        %v6612 = vmul.f32 %v6566, 1.442695
        %v6613 = vpow.pop %v6612
        %v6614 = vmul.f32 %v6567, 1.442695
        %v6615 = vpow.pop %v6614
        %v6616 = vmul.f32 %v6568, 1.442695
        %v6617 = vpow.pop %v6616
        %v6618 = vmul.f32 %v6569, 1.442695
        %v6619 = vpow.pop %v6618
        %v6620 = vmul.f32 %v6570, 1.442695
        %v6621 = vpow.pop %v6620
        %v6622 = vmul.f32 %v6571, 1.442695
        %v6623 = vpow.pop %v6622
        %v6624 = vmul.f32 %v6572, 1.442695
        %v6625 = vpow.pop %v6624
        %v6626 = vmul.f32 %v6573, 1.442695
        %v6627 = vpow.pop %v6626
        %v6628 = vmul.f32 %v6574, 1.442695
        %v6629 = vpow.pop %v6628
        %v6630 = vmul.f32 %v6575, 1.442695
        %v6631 = vpow.pop %v6630
        %v6632 = vmul.f32 %v6576, 1.442695
        %v6633 = vpow.pop %v6632
        %v6634 = vmul.f32 %v6577, 1.442695
        %v6635 = vpow.pop %v6634
        %v6636 = vmul.f32 %v6578, 1.442695
        %v6637 = vpow.pop %v6636
        %v6638 = vmul.f32 %v6579, 1.442695
        %v6639 = vpow.pop %v6638
        %v6640 = vmul.f32 %v6580, 1.442695
        %v6641 = vpow.pop %v6640
        %v6642 = vmul.f32 %v6581, 1.442695
        %v6643 = vpow.pop %v6642
        %v6644 = vmul.f32 %v6582, 1.442695
        %v6645 = vpow.pop %v6644
        %v6646 = vmul.f32 %v6583, 1.442695
        %v6647 = vpow.pop %v6646
        %v6648 = vsub.f32 %v6585, 1.0
        %v6649 = vsub.f32 %v6587, 1.0
        %v6650 = vsub.f32 %v6589, 1.0
        %v6651 = vsub.f32 %v6591, 1.0
        %v6652 = vsub.f32 %v6593, 1.0
        %v6653 = vsub.f32 %v6595, 1.0
        %v6654 = vsub.f32 %v6597, 1.0
        %v6655 = vsub.f32 %v6599, 1.0
        %v6656 = vsub.f32 %v6601, 1.0
        %v6657 = vsub.f32 %v6603, 1.0
        %v6658 = vsub.f32 %v6605, 1.0
        %v6659 = vsub.f32 %v6607, 1.0
        %v6660 = vsub.f32 %v6609, 1.0
        %v6661 = vsub.f32 %v6611, 1.0
        %v6662 = vsub.f32 %v6613, 1.0
        %v6663 = vsub.f32 %v6615, 1.0
        %v6664 = vsub.f32 %v6617, 1.0
        %v6665 = vsub.f32 %v6619, 1.0
        %v6666 = vsub.f32 %v6621, 1.0
        %v6667 = vsub.f32 %v6623, 1.0
        %v6668 = vsub.f32 %v6625, 1.0
        %v6669 = vsub.f32 %v6627, 1.0
        %v6670 = vsub.f32 %v6629, 1.0
        %v6671 = vsub.f32 %v6631, 1.0
        %v6672 = vsub.f32 %v6633, 1.0
        %v6673 = vsub.f32 %v6635, 1.0
        %v6674 = vsub.f32 %v6637, 1.0
        %v6675 = vsub.f32 %v6639, 1.0
        %v6676 = vsub.f32 %v6641, 1.0
        %v6677 = vsub.f32 %v6643, 1.0
        %v6678 = vsub.f32 %v6645, 1.0
        %v6679 = vsub.f32 %v6647, 1.0
        %v6680 = vmul.f32 %v6648, 1.6732632
        %v6681 = vmul.f32 %v6649, 1.6732632
        %v6682 = vmul.f32 %v6650, 1.6732632
        %v6683 = vmul.f32 %v6651, 1.6732632
        %v6684 = vmul.f32 %v6652, 1.6732632
        %v6685 = vmul.f32 %v6653, 1.6732632
        %v6686 = vmul.f32 %v6654, 1.6732632
        %v6687 = vmul.f32 %v6655, 1.6732632
        %v6688 = vmul.f32 %v6656, 1.6732632
        %v6689 = vmul.f32 %v6657, 1.6732632
        %v6690 = vmul.f32 %v6658, 1.6732632
        %v6691 = vmul.f32 %v6659, 1.6732632
        %v6692 = vmul.f32 %v6660, 1.6732632
        %v6693 = vmul.f32 %v6661, 1.6732632
        %v6694 = vmul.f32 %v6662, 1.6732632
        %v6695 = vmul.f32 %v6663, 1.6732632
        %v6696 = vmul.f32 %v6664, 1.6732632
        %v6697 = vmul.f32 %v6665, 1.6732632
        %v6698 = vmul.f32 %v6666, 1.6732632
        %v6699 = vmul.f32 %v6667, 1.6732632
        %v6700 = vmul.f32 %v6668, 1.6732632
        %v6701 = vmul.f32 %v6669, 1.6732632
        %v6702 = vmul.f32 %v6670, 1.6732632
        %v6703 = vmul.f32 %v6671, 1.6732632
        %v6704 = vmul.f32 %v6672, 1.6732632
        %v6705 = vmul.f32 %v6673, 1.6732632
        %v6706 = vmul.f32 %v6674, 1.6732632
        %v6707 = vmul.f32 %v6675, 1.6732632
        %v6708 = vmul.f32 %v6676, 1.6732632
        %v6709 = vmul.f32 %v6677, 1.6732632
        %v6710 = vmul.f32 %v6678, 1.6732632
        %v6711 = vmul.f32 %v6679, 1.6732632
        %vm6712 = vcmp.gt.f32.partialorder %v6243, 0.0
        %vm6713 = vcmp.gt.f32.partialorder %v6245, 0.0
        %vm6714 = vcmp.gt.f32.partialorder %v6286, 0.0
        %vm6715 = vcmp.gt.f32.partialorder %v6288, 0.0
        %vm6716 = vcmp.gt.f32.partialorder %v6329, 0.0
        %vm6717 = vcmp.gt.f32.partialorder %v6331, 0.0
        %vm6718 = vcmp.gt.f32.partialorder %v6372, 0.0
        %vm6719 = vcmp.gt.f32.partialorder %v6374, 0.0
        %vm6720 = vcmp.gt.f32.partialorder %v6415, 0.0
        %vm6721 = vcmp.gt.f32.partialorder %v6417, 0.0
        %vm6722 = vcmp.gt.f32.partialorder %v6458, 0.0
        %vm6723 = vcmp.gt.f32.partialorder %v6460, 0.0
        %vm6724 = vcmp.gt.f32.partialorder %v6501, 0.0
        %vm6725 = vcmp.gt.f32.partialorder %v6503, 0.0
        %vm6726 = vcmp.gt.f32.partialorder %v6544, 0.0
        %vm6727 = vcmp.gt.f32.partialorder %v6546, 0.0
        %vm6728 = vcmp.gt.f32.partialorder %v6247, 0.0
        %vm6729 = vcmp.gt.f32.partialorder %v6249, 0.0
        %vm6730 = vcmp.gt.f32.partialorder %v6290, 0.0
        %vm6731 = vcmp.gt.f32.partialorder %v6292, 0.0
        %vm6732 = vcmp.gt.f32.partialorder %v6333, 0.0
        %vm6733 = vcmp.gt.f32.partialorder %v6335, 0.0
        %vm6734 = vcmp.gt.f32.partialorder %v6376, 0.0
        %vm6735 = vcmp.gt.f32.partialorder %v6378, 0.0
        %vm6736 = vcmp.gt.f32.partialorder %v6419, 0.0
        %vm6737 = vcmp.gt.f32.partialorder %v6421, 0.0
        %vm6738 = vcmp.gt.f32.partialorder %v6462, 0.0
        %vm6739 = vcmp.gt.f32.partialorder %v6464, 0.0
        %vm6740 = vcmp.gt.f32.partialorder %v6505, 0.0
        %vm6741 = vcmp.gt.f32.partialorder %v6507, 0.0
        %vm6742 = vcmp.gt.f32.partialorder %v6548, 0.0
        %vm6743 = vcmp.gt.f32.partialorder %v6550, 0.0
        %v6744 = vsel %vm6712, %v6243, %v6680
        %v6745 = vsel %vm6713, %v6245, %v6681
        %v6746 = vsel %vm6714, %v6286, %v6682
        %v6747 = vsel %vm6715, %v6288, %v6683
        %v6748 = vsel %vm6716, %v6329, %v6684
        %v6749 = vsel %vm6717, %v6331, %v6685
        %v6750 = vsel %vm6718, %v6372, %v6686
        %v6751 = vsel %vm6719, %v6374, %v6687
        %v6752 = vsel %vm6720, %v6415, %v6688
        %v6753 = vsel %vm6721, %v6417, %v6689
        %v6754 = vsel %vm6722, %v6458, %v6690
        %v6755 = vsel %vm6723, %v6460, %v6691
        %v6756 = vsel %vm6724, %v6501, %v6692
        %v6757 = vsel %vm6725, %v6503, %v6693
        %v6758 = vsel %vm6726, %v6544, %v6694
        %v6759 = vsel %vm6727, %v6546, %v6695
        %v6760 = vsel %vm6728, %v6247, %v6696
        %v6761 = vsel %vm6729, %v6249, %v6697
        %v6762 = vsel %vm6730, %v6290, %v6698
        %v6763 = vsel %vm6731, %v6292, %v6699
        %v6764 = vsel %vm6732, %v6333, %v6700
        %v6765 = vsel %vm6733, %v6335, %v6701
        %v6766 = vsel %vm6734, %v6376, %v6702
        %v6767 = vsel %vm6735, %v6378, %v6703
        %v6768 = vsel %vm6736, %v6419, %v6704
        %v6769 = vsel %vm6737, %v6421, %v6705
        %v6770 = vsel %vm6738, %v6462, %v6706
        %v6771 = vsel %vm6739, %v6464, %v6707
        %v6772 = vsel %vm6740, %v6505, %v6708
        %v6773 = vsel %vm6741, %v6507, %v6709
        %v6774 = vsel %vm6742, %v6548, %v6710
        %v6775 = vsel %vm6743, %v6550, %v6711
        %v6776 = vmul.f32 %v6744, 1.050701
        %v6777 = vmul.f32 %v6745, 1.050701
        %v6778 = vmul.f32 %v6746, 1.050701
        %v6779 = vmul.f32 %v6747, 1.050701
        %v6780 = vmul.f32 %v6748, 1.050701
        %v6781 = vmul.f32 %v6749, 1.050701
        %v6782 = vmul.f32 %v6750, 1.050701
        %v6783 = vmul.f32 %v6751, 1.050701
        %v6784 = vmul.f32 %v6752, 1.050701
        %v6785 = vmul.f32 %v6753, 1.050701
        %v6786 = vmul.f32 %v6754, 1.050701
        %v6787 = vmul.f32 %v6755, 1.050701
        %v6788 = vmul.f32 %v6756, 1.050701
        %v6789 = vmul.f32 %v6757, 1.050701
        %v6790 = vmul.f32 %v6758, 1.050701
        %v6791 = vmul.f32 %v6759, 1.050701
        %v6792 = vmul.f32 %v6760, 1.050701
        %v6793 = vmul.f32 %v6761, 1.050701
        %v6794 = vmul.f32 %v6762, 1.050701
        %v6795 = vmul.f32 %v6763, 1.050701
        %v6796 = vmul.f32 %v6764, 1.050701
        %v6797 = vmul.f32 %v6765, 1.050701
        %v6798 = vmul.f32 %v6766, 1.050701
        %v6799 = vmul.f32 %v6767, 1.050701
        %v6800 = vmul.f32 %v6768, 1.050701
        %v6801 = vmul.f32 %v6769, 1.050701
        %v6802 = vmul.f32 %v6770, 1.050701
        %v6803 = vmul.f32 %v6771, 1.050701
        %v6804 = vmul.f32 %v6772, 1.050701
        %v6805 = vmul.f32 %v6773, 1.050701
        %v6806 = vmul.f32 %v6774, 1.050701
        %v6807 = vmul.f32 %v6775, 1.050701
        %v6808 = vpack.c.bf16 %v6792, %v6776
        %v6809 = vpack.c.bf16 %v6793, %v6777
        %v6810 = vpack.c.bf16 %v6794, %v6778
        %v6811 = vpack.c.bf16 %v6795, %v6779
        %v6812 = vpack.c.bf16 %v6796, %v6780
        %v6813 = vpack.c.bf16 %v6797, %v6781
        %v6814 = vpack.c.bf16 %v6798, %v6782
        %v6815 = vpack.c.bf16 %v6799, %v6783
        %v6816 = vpack.c.bf16 %v6800, %v6784
        %v6817 = vpack.c.bf16 %v6801, %v6785
        %v6818 = vpack.c.bf16 %v6802, %v6786
        %v6819 = vpack.c.bf16 %v6803, %v6787
        %v6820 = vpack.c.bf16 %v6804, %v6788
        %v6821 = vpack.c.bf16 %v6805, %v6789
        %v6822 = vpack.c.bf16 %v6806, %v6790
        %v6823 = vpack.c.bf16 %v6807, %v6791
        %s6824 = smul.u32 512, 2
        %s6825 = smul.addr %s6824, 4
        %s6826 = scalar_lea.vmem [#allocation8], %s6825
        %v6827 = vld [vmem:[%s6826] sm:$0xff]
        %v6828 = vld [vmem:[%s6826 + $0x8] sm:$0xff]
        %v6829 = vld [vmem:[%s6826 + $0x10] sm:$0xff]
        %v6830 = vld [vmem:[%s6826 + $0x18] sm:$0xff]
        %v6831 = vld [vmem:[%s6826 + $0x20] sm:$0xff]
        %v6832 = vld [vmem:[%s6826 + $0x28] sm:$0xff]
        %v6833 = vld [vmem:[%s6826 + $0x30] sm:$0xff]
        %v6834 = vld [vmem:[%s6826 + $0x38] sm:$0xff]
        %v6835 = vld [vmem:[%s6826 + $0x40] sm:$0xff]
        %v6836 = vld [vmem:[%s6826 + $0x48] sm:$0xff]
        %v6837 = vld [vmem:[%s6826 + $0x50] sm:$0xff]
        %v6838 = vld [vmem:[%s6826 + $0x58] sm:$0xff]
        %v6839 = vld [vmem:[%s6826 + $0x60] sm:$0xff]
        %v6840 = vld [vmem:[%s6826 + $0x68] sm:$0xff]
        %v6841 = vld [vmem:[%s6826 + $0x70] sm:$0xff]
        %v6842 = vld [vmem:[%s6826 + $0x78] sm:$0xff]
        %v6843 = vld [vmem:[%s6826 + $0x80] sm:$0xff]
        %v6844 = vld [vmem:[%s6826 + $0x88] sm:$0xff]
        %v6845 = vld [vmem:[%s6826 + $0x90] sm:$0xff]
        %v6846 = vld [vmem:[%s6826 + $0x98] sm:$0xff]
        %v6847 = vld [vmem:[%s6826 + $0xa0] sm:$0xff]
        %v6848 = vld [vmem:[%s6826 + $0xa8] sm:$0xff]
        %v6849 = vld [vmem:[%s6826 + $0xb0] sm:$0xff]
        %v6850 = vld [vmem:[%s6826 + $0xb8] sm:$0xff]
        %v6851 = vld [vmem:[%s6826 + $0xc0] sm:$0xff]
        %v6852 = vld [vmem:[%s6826 + $0xc8] sm:$0xff]
        %v6853 = vld [vmem:[%s6826 + $0xd0] sm:$0xff]
        %v6854 = vld [vmem:[%s6826 + $0xd8] sm:$0xff]
        %v6855 = vld [vmem:[%s6826 + $0xe0] sm:$0xff]
        %v6856 = vld [vmem:[%s6826 + $0xe8] sm:$0xff]
        %v6857 = vld [vmem:[%s6826 + $0xf0] sm:$0xff]
        %v6858 = vld [vmem:[%s6826 + $0xf8] sm:$0xff]
        %v6859 = vld [vmem:[%s6826 + $0x100] sm:$0xff]
        %v6860 = vld [vmem:[%s6826 + $0x108] sm:$0xff]
        %v6861 = vld [vmem:[%s6826 + $0x110] sm:$0xff]
        %v6862 = vld [vmem:[%s6826 + $0x118] sm:$0xff]
        %v6863 = vld [vmem:[%s6826 + $0x120] sm:$0xff]
        %v6864 = vld [vmem:[%s6826 + $0x128] sm:$0xff]
        %v6865 = vld [vmem:[%s6826 + $0x130] sm:$0xff]
        %v6866 = vld [vmem:[%s6826 + $0x138] sm:$0xff]
        %v6867 = vld [vmem:[%s6826 + $0x140] sm:$0xff]
        %v6868 = vld [vmem:[%s6826 + $0x148] sm:$0xff]
        %v6869 = vld [vmem:[%s6826 + $0x150] sm:$0xff]
        %v6870 = vld [vmem:[%s6826 + $0x158] sm:$0xff]
        %v6871 = vld [vmem:[%s6826 + $0x160] sm:$0xff]
        %v6872 = vld [vmem:[%s6826 + $0x168] sm:$0xff]
        %v6873 = vld [vmem:[%s6826 + $0x170] sm:$0xff]
        %v6874 = vld [vmem:[%s6826 + $0x178] sm:$0xff]
        %v6875 = vld [vmem:[%s6826 + $0x180] sm:$0xff]
        %v6876 = vld [vmem:[%s6826 + $0x188] sm:$0xff]
        %v6877 = vld [vmem:[%s6826 + $0x190] sm:$0xff]
        %v6878 = vld [vmem:[%s6826 + $0x198] sm:$0xff]
        %v6879 = vld [vmem:[%s6826 + $0x1a0] sm:$0xff]
        %v6880 = vld [vmem:[%s6826 + $0x1a8] sm:$0xff]
        %v6881 = vld [vmem:[%s6826 + $0x1b0] sm:$0xff]
        %v6882 = vld [vmem:[%s6826 + $0x1b8] sm:$0xff]
        %v6883 = vld [vmem:[%s6826 + $0x1c0] sm:$0xff]
        %v6884 = vld [vmem:[%s6826 + $0x1c8] sm:$0xff]
        %v6885 = vld [vmem:[%s6826 + $0x1d0] sm:$0xff]
        %v6886 = vld [vmem:[%s6826 + $0x1d8] sm:$0xff]
        %v6887 = vld [vmem:[%s6826 + $0x1e0] sm:$0xff]
        %v6888 = vld [vmem:[%s6826 + $0x1e8] sm:$0xff]
        %v6889 = vld [vmem:[%s6826 + $0x1f0] sm:$0xff]
        %v6890 = vld [vmem:[%s6826 + $0x1f8] sm:$0xff]
        %v6891 = vld [vmem:[%s6826 + $0x200] sm:$0xff]
        %v6892 = vld [vmem:[%s6826 + $0x208] sm:$0xff]
        %v6893 = vld [vmem:[%s6826 + $0x210] sm:$0xff]
        %v6894 = vld [vmem:[%s6826 + $0x218] sm:$0xff]
        %v6895 = vld [vmem:[%s6826 + $0x220] sm:$0xff]
        %v6896 = vld [vmem:[%s6826 + $0x228] sm:$0xff]
        %v6897 = vld [vmem:[%s6826 + $0x230] sm:$0xff]
        %v6898 = vld [vmem:[%s6826 + $0x238] sm:$0xff]
        %v6899 = vld [vmem:[%s6826 + $0x240] sm:$0xff]
        %v6900 = vld [vmem:[%s6826 + $0x248] sm:$0xff]
        %v6901 = vld [vmem:[%s6826 + $0x250] sm:$0xff]
        %v6902 = vld [vmem:[%s6826 + $0x258] sm:$0xff]
        %v6903 = vld [vmem:[%s6826 + $0x260] sm:$0xff]
        %v6904 = vld [vmem:[%s6826 + $0x268] sm:$0xff]
        %v6905 = vld [vmem:[%s6826 + $0x270] sm:$0xff]
        %v6906 = vld [vmem:[%s6826 + $0x278] sm:$0xff]
        %v6907 = vld [vmem:[%s6826 + $0x280] sm:$0xff]
        %v6908 = vld [vmem:[%s6826 + $0x288] sm:$0xff]
        %v6909 = vld [vmem:[%s6826 + $0x290] sm:$0xff]
        %v6910 = vld [vmem:[%s6826 + $0x298] sm:$0xff]
        %v6911 = vld [vmem:[%s6826 + $0x2a0] sm:$0xff]
        %v6912 = vld [vmem:[%s6826 + $0x2a8] sm:$0xff]
        %v6913 = vld [vmem:[%s6826 + $0x2b0] sm:$0xff]
        %v6914 = vld [vmem:[%s6826 + $0x2b8] sm:$0xff]
        %v6915 = vld [vmem:[%s6826 + $0x2c0] sm:$0xff]
        %v6916 = vld [vmem:[%s6826 + $0x2c8] sm:$0xff]
        %v6917 = vld [vmem:[%s6826 + $0x2d0] sm:$0xff]
        %v6918 = vld [vmem:[%s6826 + $0x2d8] sm:$0xff]
        %v6919 = vld [vmem:[%s6826 + $0x2e0] sm:$0xff]
        %v6920 = vld [vmem:[%s6826 + $0x2e8] sm:$0xff]
        %v6921 = vld [vmem:[%s6826 + $0x2f0] sm:$0xff]
        %v6922 = vld [vmem:[%s6826 + $0x2f8] sm:$0xff]
        %v6923 = vld [vmem:[%s6826 + $0x300] sm:$0xff]
        %v6924 = vld [vmem:[%s6826 + $0x308] sm:$0xff]
        %v6925 = vld [vmem:[%s6826 + $0x310] sm:$0xff]
        %v6926 = vld [vmem:[%s6826 + $0x318] sm:$0xff]
        %v6927 = vld [vmem:[%s6826 + $0x320] sm:$0xff]
        %v6928 = vld [vmem:[%s6826 + $0x328] sm:$0xff]
        %v6929 = vld [vmem:[%s6826 + $0x330] sm:$0xff]
        %v6930 = vld [vmem:[%s6826 + $0x338] sm:$0xff]
        %v6931 = vld [vmem:[%s6826 + $0x340] sm:$0xff]
        %v6932 = vld [vmem:[%s6826 + $0x348] sm:$0xff]
        %v6933 = vld [vmem:[%s6826 + $0x350] sm:$0xff]
        %v6934 = vld [vmem:[%s6826 + $0x358] sm:$0xff]
        %v6935 = vld [vmem:[%s6826 + $0x360] sm:$0xff]
        %v6936 = vld [vmem:[%s6826 + $0x368] sm:$0xff]
        %v6937 = vld [vmem:[%s6826 + $0x370] sm:$0xff]
        %v6938 = vld [vmem:[%s6826 + $0x378] sm:$0xff]
        %v6939 = vld [vmem:[%s6826 + $0x380] sm:$0xff]
        %v6940 = vld [vmem:[%s6826 + $0x388] sm:$0xff]
        %v6941 = vld [vmem:[%s6826 + $0x390] sm:$0xff]
        %v6942 = vld [vmem:[%s6826 + $0x398] sm:$0xff]
        %v6943 = vld [vmem:[%s6826 + $0x3a0] sm:$0xff]
        %v6944 = vld [vmem:[%s6826 + $0x3a8] sm:$0xff]
        %v6945 = vld [vmem:[%s6826 + $0x3b0] sm:$0xff]
        %v6946 = vld [vmem:[%s6826 + $0x3b8] sm:$0xff]
        %v6947 = vld [vmem:[%s6826 + $0x3c0] sm:$0xff]
        %v6948 = vld [vmem:[%s6826 + $0x3c8] sm:$0xff]
        %v6949 = vld [vmem:[%s6826 + $0x3d0] sm:$0xff]
        %v6950 = vld [vmem:[%s6826 + $0x3d8] sm:$0xff]
        %v6951 = vld [vmem:[%s6826 + $0x3e0] sm:$0xff]
        %v6952 = vld [vmem:[%s6826 + $0x3e8] sm:$0xff]
        %v6953 = vld [vmem:[%s6826 + $0x3f0] sm:$0xff]
        %v6954 = vld [vmem:[%s6826 + $0x3f8] sm:$0xff]
        %v6955 = vld [vmem:[%s6826 + $0x400] sm:$0xff]
        %v6956 = vld [vmem:[%s6826 + $0x408] sm:$0xff]
        %v6957 = vld [vmem:[%s6826 + $0x410] sm:$0xff]
        %v6958 = vld [vmem:[%s6826 + $0x418] sm:$0xff]
        %v6959 = vld [vmem:[%s6826 + $0x420] sm:$0xff]
        %v6960 = vld [vmem:[%s6826 + $0x428] sm:$0xff]
        %v6961 = vld [vmem:[%s6826 + $0x430] sm:$0xff]
        %v6962 = vld [vmem:[%s6826 + $0x438] sm:$0xff]
        %v6963 = vld [vmem:[%s6826 + $0x440] sm:$0xff]
        %v6964 = vld [vmem:[%s6826 + $0x448] sm:$0xff]
        %v6965 = vld [vmem:[%s6826 + $0x450] sm:$0xff]
        %v6966 = vld [vmem:[%s6826 + $0x458] sm:$0xff]
        %v6967 = vld [vmem:[%s6826 + $0x460] sm:$0xff]
        %v6968 = vld [vmem:[%s6826 + $0x468] sm:$0xff]
        %v6969 = vld [vmem:[%s6826 + $0x470] sm:$0xff]
        %v6970 = vld [vmem:[%s6826 + $0x478] sm:$0xff]
        %v6971 = vld [vmem:[%s6826 + $0x480] sm:$0xff]
        %v6972 = vld [vmem:[%s6826 + $0x488] sm:$0xff]
        %v6973 = vld [vmem:[%s6826 + $0x490] sm:$0xff]
        %v6974 = vld [vmem:[%s6826 + $0x498] sm:$0xff]
        %v6975 = vld [vmem:[%s6826 + $0x4a0] sm:$0xff]
        %v6976 = vld [vmem:[%s6826 + $0x4a8] sm:$0xff]
        %v6977 = vld [vmem:[%s6826 + $0x4b0] sm:$0xff]
        %v6978 = vld [vmem:[%s6826 + $0x4b8] sm:$0xff]
        %v6979 = vld [vmem:[%s6826 + $0x4c0] sm:$0xff]
        %v6980 = vld [vmem:[%s6826 + $0x4c8] sm:$0xff]
        %v6981 = vld [vmem:[%s6826 + $0x4d0] sm:$0xff]
        %v6982 = vld [vmem:[%s6826 + $0x4d8] sm:$0xff]
        %v6983 = vld [vmem:[%s6826 + $0x4e0] sm:$0xff]
        %v6984 = vld [vmem:[%s6826 + $0x4e8] sm:$0xff]
        %v6985 = vld [vmem:[%s6826 + $0x4f0] sm:$0xff]
        %v6986 = vld [vmem:[%s6826 + $0x4f8] sm:$0xff]
        %v6987 = vld [vmem:[%s6826 + $0x500] sm:$0xff]
        %v6988 = vld [vmem:[%s6826 + $0x508] sm:$0xff]
        %v6989 = vld [vmem:[%s6826 + $0x510] sm:$0xff]
        %v6990 = vld [vmem:[%s6826 + $0x518] sm:$0xff]
        %v6991 = vld [vmem:[%s6826 + $0x520] sm:$0xff]
        %v6992 = vld [vmem:[%s6826 + $0x528] sm:$0xff]
        %v6993 = vld [vmem:[%s6826 + $0x530] sm:$0xff]
        %v6994 = vld [vmem:[%s6826 + $0x538] sm:$0xff]
        %v6995 = vld [vmem:[%s6826 + $0x540] sm:$0xff]
        %v6996 = vld [vmem:[%s6826 + $0x548] sm:$0xff]
        %v6997 = vld [vmem:[%s6826 + $0x550] sm:$0xff]
        %v6998 = vld [vmem:[%s6826 + $0x558] sm:$0xff]
        %v6999 = vld [vmem:[%s6826 + $0x560] sm:$0xff]
        %v7000 = vld [vmem:[%s6826 + $0x568] sm:$0xff]
        %v7001 = vld [vmem:[%s6826 + $0x570] sm:$0xff]
        %v7002 = vld [vmem:[%s6826 + $0x578] sm:$0xff]
        %v7003 = vld [vmem:[%s6826 + $0x580] sm:$0xff]
        %v7004 = vld [vmem:[%s6826 + $0x588] sm:$0xff]
        %v7005 = vld [vmem:[%s6826 + $0x590] sm:$0xff]
        %v7006 = vld [vmem:[%s6826 + $0x598] sm:$0xff]
        %v7007 = vld [vmem:[%s6826 + $0x5a0] sm:$0xff]
        %v7008 = vld [vmem:[%s6826 + $0x5a8] sm:$0xff]
        %v7009 = vld [vmem:[%s6826 + $0x5b0] sm:$0xff]
        %v7010 = vld [vmem:[%s6826 + $0x5b8] sm:$0xff]
        %v7011 = vld [vmem:[%s6826 + $0x5c0] sm:$0xff]
        %v7012 = vld [vmem:[%s6826 + $0x5c8] sm:$0xff]
        %v7013 = vld [vmem:[%s6826 + $0x5d0] sm:$0xff]
        %v7014 = vld [vmem:[%s6826 + $0x5d8] sm:$0xff]
        %v7015 = vld [vmem:[%s6826 + $0x5e0] sm:$0xff]
        %v7016 = vld [vmem:[%s6826 + $0x5e8] sm:$0xff]
        %v7017 = vld [vmem:[%s6826 + $0x5f0] sm:$0xff]
        %v7018 = vld [vmem:[%s6826 + $0x5f8] sm:$0xff]
        %v7019 = vld [vmem:[%s6826 + $0x600] sm:$0xff]
        %v7020 = vld [vmem:[%s6826 + $0x608] sm:$0xff]
        %v7021 = vld [vmem:[%s6826 + $0x610] sm:$0xff]
        %v7022 = vld [vmem:[%s6826 + $0x618] sm:$0xff]
        %v7023 = vld [vmem:[%s6826 + $0x620] sm:$0xff]
        %v7024 = vld [vmem:[%s6826 + $0x628] sm:$0xff]
        %v7025 = vld [vmem:[%s6826 + $0x630] sm:$0xff]
        %v7026 = vld [vmem:[%s6826 + $0x638] sm:$0xff]
        %v7027 = vld [vmem:[%s6826 + $0x640] sm:$0xff]
        %v7028 = vld [vmem:[%s6826 + $0x648] sm:$0xff]
        %v7029 = vld [vmem:[%s6826 + $0x650] sm:$0xff]
        %v7030 = vld [vmem:[%s6826 + $0x658] sm:$0xff]
        %v7031 = vld [vmem:[%s6826 + $0x660] sm:$0xff]
        %v7032 = vld [vmem:[%s6826 + $0x668] sm:$0xff]
        %v7033 = vld [vmem:[%s6826 + $0x670] sm:$0xff]
        %v7034 = vld [vmem:[%s6826 + $0x678] sm:$0xff]
        %v7035 = vld [vmem:[%s6826 + $0x680] sm:$0xff]
        %v7036 = vld [vmem:[%s6826 + $0x688] sm:$0xff]
        %v7037 = vld [vmem:[%s6826 + $0x690] sm:$0xff]
        %v7038 = vld [vmem:[%s6826 + $0x698] sm:$0xff]
        %v7039 = vld [vmem:[%s6826 + $0x6a0] sm:$0xff]
        %v7040 = vld [vmem:[%s6826 + $0x6a8] sm:$0xff]
        %v7041 = vld [vmem:[%s6826 + $0x6b0] sm:$0xff]
        %v7042 = vld [vmem:[%s6826 + $0x6b8] sm:$0xff]
        %v7043 = vld [vmem:[%s6826 + $0x6c0] sm:$0xff]
        %v7044 = vld [vmem:[%s6826 + $0x6c8] sm:$0xff]
        %v7045 = vld [vmem:[%s6826 + $0x6d0] sm:$0xff]
        %v7046 = vld [vmem:[%s6826 + $0x6d8] sm:$0xff]
        %v7047 = vld [vmem:[%s6826 + $0x6e0] sm:$0xff]
        %v7048 = vld [vmem:[%s6826 + $0x6e8] sm:$0xff]
        %v7049 = vld [vmem:[%s6826 + $0x6f0] sm:$0xff]
        %v7050 = vld [vmem:[%s6826 + $0x6f8] sm:$0xff]
        %v7051 = vld [vmem:[%s6826 + $0x700] sm:$0xff]
        %v7052 = vld [vmem:[%s6826 + $0x708] sm:$0xff]
        %v7053 = vld [vmem:[%s6826 + $0x710] sm:$0xff]
        %v7054 = vld [vmem:[%s6826 + $0x718] sm:$0xff]
        %v7055 = vld [vmem:[%s6826 + $0x720] sm:$0xff]
        %v7056 = vld [vmem:[%s6826 + $0x728] sm:$0xff]
        %v7057 = vld [vmem:[%s6826 + $0x730] sm:$0xff]
        %v7058 = vld [vmem:[%s6826 + $0x738] sm:$0xff]
        %v7059 = vld [vmem:[%s6826 + $0x740] sm:$0xff]
        %v7060 = vld [vmem:[%s6826 + $0x748] sm:$0xff]
        %v7061 = vld [vmem:[%s6826 + $0x750] sm:$0xff]
        %v7062 = vld [vmem:[%s6826 + $0x758] sm:$0xff]
        %v7063 = vld [vmem:[%s6826 + $0x760] sm:$0xff]
        %v7064 = vld [vmem:[%s6826 + $0x768] sm:$0xff]
        %v7065 = vld [vmem:[%s6826 + $0x770] sm:$0xff]
        %v7066 = vld [vmem:[%s6826 + $0x778] sm:$0xff]
        %v7067 = vld [vmem:[%s6826 + $0x780] sm:$0xff]
        %v7068 = vld [vmem:[%s6826 + $0x788] sm:$0xff]
        %v7069 = vld [vmem:[%s6826 + $0x790] sm:$0xff]
        %v7070 = vld [vmem:[%s6826 + $0x798] sm:$0xff]
        %v7071 = vld [vmem:[%s6826 + $0x7a0] sm:$0xff]
        %v7072 = vld [vmem:[%s6826 + $0x7a8] sm:$0xff]
        %v7073 = vld [vmem:[%s6826 + $0x7b0] sm:$0xff]
        %v7074 = vld [vmem:[%s6826 + $0x7b8] sm:$0xff]
        %v7075 = vld [vmem:[%s6826 + $0x7c0] sm:$0xff]
        %v7076 = vld [vmem:[%s6826 + $0x7c8] sm:$0xff]
        %v7077 = vld [vmem:[%s6826 + $0x7d0] sm:$0xff]
        %v7078 = vld [vmem:[%s6826 + $0x7d8] sm:$0xff]
        %v7079 = vld [vmem:[%s6826 + $0x7e0] sm:$0xff]
        %v7080 = vld [vmem:[%s6826 + $0x7e8] sm:$0xff]
        %v7081 = vld [vmem:[%s6826 + $0x7f0] sm:$0xff]
        %v7082 = vld [vmem:[%s6826 + $0x7f8] sm:$0xff]
        %v7339 = vunpack.c.l.b16 %v6827
        %v7340 = vunpack.c.h.b16 %v6827
        %v7341 = vunpack.c.l.b16 %v6828
        %v7342 = vunpack.c.h.b16 %v6828
        %v7343 = vunpack.c.l.b16 %v6829
        %v7344 = vunpack.c.h.b16 %v6829
        %v7345 = vunpack.c.l.b16 %v6830
        %v7346 = vunpack.c.h.b16 %v6830
        %v7347 = vunpack.c.l.b16 %v6831
        %v7348 = vunpack.c.h.b16 %v6831
        %v7349 = vunpack.c.l.b16 %v6832
        %v7350 = vunpack.c.h.b16 %v6832
        %v7351 = vunpack.c.l.b16 %v6833
        %v7352 = vunpack.c.h.b16 %v6833
        %v7353 = vunpack.c.l.b16 %v6834
        %v7354 = vunpack.c.h.b16 %v6834
        %v7355 = vunpack.c.l.b16 %v6835
        %v7356 = vunpack.c.h.b16 %v6835
        %v7357 = vunpack.c.l.b16 %v6836
        %v7358 = vunpack.c.h.b16 %v6836
        %v7359 = vunpack.c.l.b16 %v6837
        %v7360 = vunpack.c.h.b16 %v6837
        %v7361 = vunpack.c.l.b16 %v6838
        %v7362 = vunpack.c.h.b16 %v6838
        %v7363 = vunpack.c.l.b16 %v6839
        %v7364 = vunpack.c.h.b16 %v6839
        %v7365 = vunpack.c.l.b16 %v6840
        %v7366 = vunpack.c.h.b16 %v6840
        %v7367 = vunpack.c.l.b16 %v6841
        %v7368 = vunpack.c.h.b16 %v6841
        %v7369 = vunpack.c.l.b16 %v6842
        %v7370 = vunpack.c.h.b16 %v6842
        %v7371 = vunpack.c.l.b16 %v6843
        %v7372 = vunpack.c.h.b16 %v6843
        %v7373 = vunpack.c.l.b16 %v6844
        %v7374 = vunpack.c.h.b16 %v6844
        %v7375 = vunpack.c.l.b16 %v6845
        %v7376 = vunpack.c.h.b16 %v6845
        %v7377 = vunpack.c.l.b16 %v6846
        %v7378 = vunpack.c.h.b16 %v6846
        %v7379 = vunpack.c.l.b16 %v6847
        %v7380 = vunpack.c.h.b16 %v6847
        %v7381 = vunpack.c.l.b16 %v6848
        %v7382 = vunpack.c.h.b16 %v6848
        %v7383 = vunpack.c.l.b16 %v6849
        %v7384 = vunpack.c.h.b16 %v6849
        %v7385 = vunpack.c.l.b16 %v6850
        %v7386 = vunpack.c.h.b16 %v6850
        %v7387 = vunpack.c.l.b16 %v6851
        %v7388 = vunpack.c.h.b16 %v6851
        %v7389 = vunpack.c.l.b16 %v6852
        %v7390 = vunpack.c.h.b16 %v6852
        %v7391 = vunpack.c.l.b16 %v6853
        %v7392 = vunpack.c.h.b16 %v6853
        %v7393 = vunpack.c.l.b16 %v6854
        %v7394 = vunpack.c.h.b16 %v6854
        %v7395 = vunpack.c.l.b16 %v6855
        %v7396 = vunpack.c.h.b16 %v6855
        %v7397 = vunpack.c.l.b16 %v6856
        %v7398 = vunpack.c.h.b16 %v6856
        %v7399 = vunpack.c.l.b16 %v6857
        %v7400 = vunpack.c.h.b16 %v6857
        %v7401 = vunpack.c.l.b16 %v6858
        %v7402 = vunpack.c.h.b16 %v6858
        %v7403 = vunpack.c.l.b16 %v6859
        %v7404 = vunpack.c.h.b16 %v6859
        %v7405 = vunpack.c.l.b16 %v6860
        %v7406 = vunpack.c.h.b16 %v6860
        %v7407 = vunpack.c.l.b16 %v6861
        %v7408 = vunpack.c.h.b16 %v6861
        %v7409 = vunpack.c.l.b16 %v6862
        %v7410 = vunpack.c.h.b16 %v6862
        %v7411 = vunpack.c.l.b16 %v6863
        %v7412 = vunpack.c.h.b16 %v6863
        %v7413 = vunpack.c.l.b16 %v6864
        %v7414 = vunpack.c.h.b16 %v6864
        %v7415 = vunpack.c.l.b16 %v6865
        %v7416 = vunpack.c.h.b16 %v6865
        %v7417 = vunpack.c.l.b16 %v6866
        %v7418 = vunpack.c.h.b16 %v6866
        %v7419 = vunpack.c.l.b16 %v6867
        %v7420 = vunpack.c.h.b16 %v6867
        %v7421 = vunpack.c.l.b16 %v6868
        %v7422 = vunpack.c.h.b16 %v6868
        %v7423 = vunpack.c.l.b16 %v6869
        %v7424 = vunpack.c.h.b16 %v6869
        %v7425 = vunpack.c.l.b16 %v6870
        %v7426 = vunpack.c.h.b16 %v6870
        %v7427 = vunpack.c.l.b16 %v6871
        %v7428 = vunpack.c.h.b16 %v6871
        %v7429 = vunpack.c.l.b16 %v6872
        %v7430 = vunpack.c.h.b16 %v6872
        %v7431 = vunpack.c.l.b16 %v6873
        %v7432 = vunpack.c.h.b16 %v6873
        %v7433 = vunpack.c.l.b16 %v6874
        %v7434 = vunpack.c.h.b16 %v6874
        %v7435 = vunpack.c.l.b16 %v6875
        %v7436 = vunpack.c.h.b16 %v6875
        %v7437 = vunpack.c.l.b16 %v6876
        %v7438 = vunpack.c.h.b16 %v6876
        %v7439 = vunpack.c.l.b16 %v6877
        %v7440 = vunpack.c.h.b16 %v6877
        %v7441 = vunpack.c.l.b16 %v6878
        %v7442 = vunpack.c.h.b16 %v6878
        %v7443 = vunpack.c.l.b16 %v6879
        %v7444 = vunpack.c.h.b16 %v6879
        %v7445 = vunpack.c.l.b16 %v6880
        %v7446 = vunpack.c.h.b16 %v6880
        %v7447 = vunpack.c.l.b16 %v6881
        %v7448 = vunpack.c.h.b16 %v6881
        %v7449 = vunpack.c.l.b16 %v6882
        %v7450 = vunpack.c.h.b16 %v6882
        %v7451 = vunpack.c.l.b16 %v6883
        %v7452 = vunpack.c.h.b16 %v6883
        %v7453 = vunpack.c.l.b16 %v6884
        %v7454 = vunpack.c.h.b16 %v6884
        %v7455 = vunpack.c.l.b16 %v6885
        %v7456 = vunpack.c.h.b16 %v6885
        %v7457 = vunpack.c.l.b16 %v6886
        %v7458 = vunpack.c.h.b16 %v6886
        %v7459 = vunpack.c.l.b16 %v6887
        %v7460 = vunpack.c.h.b16 %v6887
        %v7461 = vunpack.c.l.b16 %v6888
        %v7462 = vunpack.c.h.b16 %v6888
        %v7463 = vunpack.c.l.b16 %v6889
        %v7464 = vunpack.c.h.b16 %v6889
        %v7465 = vunpack.c.l.b16 %v6890
        %v7466 = vunpack.c.h.b16 %v6890
        %v7467 = vunpack.c.l.b16 %v6891
        %v7468 = vunpack.c.h.b16 %v6891
        %v7469 = vunpack.c.l.b16 %v6892
        %v7470 = vunpack.c.h.b16 %v6892
        %v7471 = vunpack.c.l.b16 %v6893
        %v7472 = vunpack.c.h.b16 %v6893
        %v7473 = vunpack.c.l.b16 %v6894
        %v7474 = vunpack.c.h.b16 %v6894
        %v7475 = vunpack.c.l.b16 %v6895
        %v7476 = vunpack.c.h.b16 %v6895
        %v7477 = vunpack.c.l.b16 %v6896
        %v7478 = vunpack.c.h.b16 %v6896
        %v7479 = vunpack.c.l.b16 %v6897
        %v7480 = vunpack.c.h.b16 %v6897
        %v7481 = vunpack.c.l.b16 %v6898
        %v7482 = vunpack.c.h.b16 %v6898
        %v7483 = vunpack.c.l.b16 %v6899
        %v7484 = vunpack.c.h.b16 %v6899
        %v7485 = vunpack.c.l.b16 %v6900
        %v7486 = vunpack.c.h.b16 %v6900
        %v7487 = vunpack.c.l.b16 %v6901
        %v7488 = vunpack.c.h.b16 %v6901
        %v7489 = vunpack.c.l.b16 %v6902
        %v7490 = vunpack.c.h.b16 %v6902
        %v7491 = vunpack.c.l.b16 %v6903
        %v7492 = vunpack.c.h.b16 %v6903
        %v7493 = vunpack.c.l.b16 %v6904
        %v7494 = vunpack.c.h.b16 %v6904
        %v7495 = vunpack.c.l.b16 %v6905
        %v7496 = vunpack.c.h.b16 %v6905
        %v7497 = vunpack.c.l.b16 %v6906
        %v7498 = vunpack.c.h.b16 %v6906
        %v7499 = vunpack.c.l.b16 %v6907
        %v7500 = vunpack.c.h.b16 %v6907
        %v7501 = vunpack.c.l.b16 %v6908
        %v7502 = vunpack.c.h.b16 %v6908
        %v7503 = vunpack.c.l.b16 %v6909
        %v7504 = vunpack.c.h.b16 %v6909
        %v7505 = vunpack.c.l.b16 %v6910
        %v7506 = vunpack.c.h.b16 %v6910
        %v7507 = vunpack.c.l.b16 %v6911
        %v7508 = vunpack.c.h.b16 %v6911
        %v7509 = vunpack.c.l.b16 %v6912
        %v7510 = vunpack.c.h.b16 %v6912
        %v7511 = vunpack.c.l.b16 %v6913
        %v7512 = vunpack.c.h.b16 %v6913
        %v7513 = vunpack.c.l.b16 %v6914
        %v7514 = vunpack.c.h.b16 %v6914
        %v7515 = vunpack.c.l.b16 %v6915
        %v7516 = vunpack.c.h.b16 %v6915
        %v7517 = vunpack.c.l.b16 %v6916
        %v7518 = vunpack.c.h.b16 %v6916
        %v7519 = vunpack.c.l.b16 %v6917
        %v7520 = vunpack.c.h.b16 %v6917
        %v7521 = vunpack.c.l.b16 %v6918
        %v7522 = vunpack.c.h.b16 %v6918
        %v7523 = vunpack.c.l.b16 %v6919
        %v7524 = vunpack.c.h.b16 %v6919
        %v7525 = vunpack.c.l.b16 %v6920
        %v7526 = vunpack.c.h.b16 %v6920
        %v7527 = vunpack.c.l.b16 %v6921
        %v7528 = vunpack.c.h.b16 %v6921
        %v7529 = vunpack.c.l.b16 %v6922
        %v7530 = vunpack.c.h.b16 %v6922
        %v7531 = vunpack.c.l.b16 %v6923
        %v7532 = vunpack.c.h.b16 %v6923
        %v7533 = vunpack.c.l.b16 %v6924
        %v7534 = vunpack.c.h.b16 %v6924
        %v7535 = vunpack.c.l.b16 %v6925
        %v7536 = vunpack.c.h.b16 %v6925
        %v7537 = vunpack.c.l.b16 %v6926
        %v7538 = vunpack.c.h.b16 %v6926
        %v7539 = vunpack.c.l.b16 %v6927
        %v7540 = vunpack.c.h.b16 %v6927
        %v7541 = vunpack.c.l.b16 %v6928
        %v7542 = vunpack.c.h.b16 %v6928
        %v7543 = vunpack.c.l.b16 %v6929
        %v7544 = vunpack.c.h.b16 %v6929
        %v7545 = vunpack.c.l.b16 %v6930
        %v7546 = vunpack.c.h.b16 %v6930
        %v7547 = vunpack.c.l.b16 %v6931
        %v7548 = vunpack.c.h.b16 %v6931
        %v7549 = vunpack.c.l.b16 %v6932
        %v7550 = vunpack.c.h.b16 %v6932
        %v7551 = vunpack.c.l.b16 %v6933
        %v7552 = vunpack.c.h.b16 %v6933
        %v7553 = vunpack.c.l.b16 %v6934
        %v7554 = vunpack.c.h.b16 %v6934
        %v7555 = vunpack.c.l.b16 %v6935
        %v7556 = vunpack.c.h.b16 %v6935
        %v7557 = vunpack.c.l.b16 %v6936
        %v7558 = vunpack.c.h.b16 %v6936
        %v7559 = vunpack.c.l.b16 %v6937
        %v7560 = vunpack.c.h.b16 %v6937
        %v7561 = vunpack.c.l.b16 %v6938
        %v7562 = vunpack.c.h.b16 %v6938
        %v7563 = vunpack.c.l.b16 %v6939
        %v7564 = vunpack.c.h.b16 %v6939
        %v7565 = vunpack.c.l.b16 %v6940
        %v7566 = vunpack.c.h.b16 %v6940
        %v7567 = vunpack.c.l.b16 %v6941
        %v7568 = vunpack.c.h.b16 %v6941
        %v7569 = vunpack.c.l.b16 %v6942
        %v7570 = vunpack.c.h.b16 %v6942
        %v7571 = vunpack.c.l.b16 %v6943
        %v7572 = vunpack.c.h.b16 %v6943
        %v7573 = vunpack.c.l.b16 %v6944
        %v7574 = vunpack.c.h.b16 %v6944
        %v7575 = vunpack.c.l.b16 %v6945
        %v7576 = vunpack.c.h.b16 %v6945
        %v7577 = vunpack.c.l.b16 %v6946
        %v7578 = vunpack.c.h.b16 %v6946
        %v7579 = vunpack.c.l.b16 %v6947
        %v7580 = vunpack.c.h.b16 %v6947
        %v7581 = vunpack.c.l.b16 %v6948
        %v7582 = vunpack.c.h.b16 %v6948
        %v7583 = vunpack.c.l.b16 %v6949
        %v7584 = vunpack.c.h.b16 %v6949
        %v7585 = vunpack.c.l.b16 %v6950
        %v7586 = vunpack.c.h.b16 %v6950
        %v7587 = vunpack.c.l.b16 %v6951
        %v7588 = vunpack.c.h.b16 %v6951
        %v7589 = vunpack.c.l.b16 %v6952
        %v7590 = vunpack.c.h.b16 %v6952
        %v7591 = vunpack.c.l.b16 %v6953
        %v7592 = vunpack.c.h.b16 %v6953
        %v7593 = vunpack.c.l.b16 %v6954
        %v7594 = vunpack.c.h.b16 %v6954
        %v7595 = vunpack.c.l.b16 %v6955
        %v7596 = vunpack.c.h.b16 %v6955
        %v7597 = vunpack.c.l.b16 %v6956
        %v7598 = vunpack.c.h.b16 %v6956
        %v7599 = vunpack.c.l.b16 %v6957
        %v7600 = vunpack.c.h.b16 %v6957
        %v7601 = vunpack.c.l.b16 %v6958
        %v7602 = vunpack.c.h.b16 %v6958
        %v7603 = vunpack.c.l.b16 %v6959
        %v7604 = vunpack.c.h.b16 %v6959
        %v7605 = vunpack.c.l.b16 %v6960
        %v7606 = vunpack.c.h.b16 %v6960
        %v7607 = vunpack.c.l.b16 %v6961
        %v7608 = vunpack.c.h.b16 %v6961
        %v7609 = vunpack.c.l.b16 %v6962
        %v7610 = vunpack.c.h.b16 %v6962
        %v7611 = vunpack.c.l.b16 %v6963
        %v7612 = vunpack.c.h.b16 %v6963
        %v7613 = vunpack.c.l.b16 %v6964
        %v7614 = vunpack.c.h.b16 %v6964
        %v7615 = vunpack.c.l.b16 %v6965
        %v7616 = vunpack.c.h.b16 %v6965
        %v7617 = vunpack.c.l.b16 %v6966
        %v7618 = vunpack.c.h.b16 %v6966
        %v7619 = vunpack.c.l.b16 %v6967
        %v7620 = vunpack.c.h.b16 %v6967
        %v7621 = vunpack.c.l.b16 %v6968
        %v7622 = vunpack.c.h.b16 %v6968
        %v7623 = vunpack.c.l.b16 %v6969
        %v7624 = vunpack.c.h.b16 %v6969
        %v7625 = vunpack.c.l.b16 %v6970
        %v7626 = vunpack.c.h.b16 %v6970
        %v7627 = vunpack.c.l.b16 %v6971
        %v7628 = vunpack.c.h.b16 %v6971
        %v7629 = vunpack.c.l.b16 %v6972
        %v7630 = vunpack.c.h.b16 %v6972
        %v7631 = vunpack.c.l.b16 %v6973
        %v7632 = vunpack.c.h.b16 %v6973
        %v7633 = vunpack.c.l.b16 %v6974
        %v7634 = vunpack.c.h.b16 %v6974
        %v7635 = vunpack.c.l.b16 %v6975
        %v7636 = vunpack.c.h.b16 %v6975
        %v7637 = vunpack.c.l.b16 %v6976
        %v7638 = vunpack.c.h.b16 %v6976
        %v7639 = vunpack.c.l.b16 %v6977
        %v7640 = vunpack.c.h.b16 %v6977
        %v7641 = vunpack.c.l.b16 %v6978
        %v7642 = vunpack.c.h.b16 %v6978
        %v7643 = vunpack.c.l.b16 %v6979
        %v7644 = vunpack.c.h.b16 %v6979
        %v7645 = vunpack.c.l.b16 %v6980
        %v7646 = vunpack.c.h.b16 %v6980
        %v7647 = vunpack.c.l.b16 %v6981
        %v7648 = vunpack.c.h.b16 %v6981
        %v7649 = vunpack.c.l.b16 %v6982
        %v7650 = vunpack.c.h.b16 %v6982
        %v7651 = vunpack.c.l.b16 %v6983
        %v7652 = vunpack.c.h.b16 %v6983
        %v7653 = vunpack.c.l.b16 %v6984
        %v7654 = vunpack.c.h.b16 %v6984
        %v7655 = vunpack.c.l.b16 %v6985
        %v7656 = vunpack.c.h.b16 %v6985
        %v7657 = vunpack.c.l.b16 %v6986
        %v7658 = vunpack.c.h.b16 %v6986
        %v7659 = vunpack.c.l.b16 %v6987
        %v7660 = vunpack.c.h.b16 %v6987
        %v7661 = vunpack.c.l.b16 %v6988
        %v7662 = vunpack.c.h.b16 %v6988
        %v7663 = vunpack.c.l.b16 %v6989
        %v7664 = vunpack.c.h.b16 %v6989
        %v7665 = vunpack.c.l.b16 %v6990
        %v7666 = vunpack.c.h.b16 %v6990
        %v7667 = vunpack.c.l.b16 %v6991
        %v7668 = vunpack.c.h.b16 %v6991
        %v7669 = vunpack.c.l.b16 %v6992
        %v7670 = vunpack.c.h.b16 %v6992
        %v7671 = vunpack.c.l.b16 %v6993
        %v7672 = vunpack.c.h.b16 %v6993
        %v7673 = vunpack.c.l.b16 %v6994
        %v7674 = vunpack.c.h.b16 %v6994
        %v7675 = vunpack.c.l.b16 %v6995
        %v7676 = vunpack.c.h.b16 %v6995
        %v7677 = vunpack.c.l.b16 %v6996
        %v7678 = vunpack.c.h.b16 %v6996
        %v7679 = vunpack.c.l.b16 %v6997
        %v7680 = vunpack.c.h.b16 %v6997
        %v7681 = vunpack.c.l.b16 %v6998
        %v7682 = vunpack.c.h.b16 %v6998
        %v7683 = vunpack.c.l.b16 %v6999
        %v7684 = vunpack.c.h.b16 %v6999
        %v7685 = vunpack.c.l.b16 %v7000
        %v7686 = vunpack.c.h.b16 %v7000
        %v7687 = vunpack.c.l.b16 %v7001
        %v7688 = vunpack.c.h.b16 %v7001
        %v7689 = vunpack.c.l.b16 %v7002
        %v7690 = vunpack.c.h.b16 %v7002
        %v7691 = vunpack.c.l.b16 %v7003
        %v7692 = vunpack.c.h.b16 %v7003
        %v7693 = vunpack.c.l.b16 %v7004
        %v7694 = vunpack.c.h.b16 %v7004
        %v7695 = vunpack.c.l.b16 %v7005
        %v7696 = vunpack.c.h.b16 %v7005
        %v7697 = vunpack.c.l.b16 %v7006
        %v7698 = vunpack.c.h.b16 %v7006
        %v7699 = vunpack.c.l.b16 %v7007
        %v7700 = vunpack.c.h.b16 %v7007
        %v7701 = vunpack.c.l.b16 %v7008
        %v7702 = vunpack.c.h.b16 %v7008
        %v7703 = vunpack.c.l.b16 %v7009
        %v7704 = vunpack.c.h.b16 %v7009
        %v7705 = vunpack.c.l.b16 %v7010
        %v7706 = vunpack.c.h.b16 %v7010
        %v7707 = vunpack.c.l.b16 %v7011
        %v7708 = vunpack.c.h.b16 %v7011
        %v7709 = vunpack.c.l.b16 %v7012
        %v7710 = vunpack.c.h.b16 %v7012
        %v7711 = vunpack.c.l.b16 %v7013
        %v7712 = vunpack.c.h.b16 %v7013
        %v7713 = vunpack.c.l.b16 %v7014
        %v7714 = vunpack.c.h.b16 %v7014
        %v7715 = vunpack.c.l.b16 %v7015
        %v7716 = vunpack.c.h.b16 %v7015
        %v7717 = vunpack.c.l.b16 %v7016
        %v7718 = vunpack.c.h.b16 %v7016
        %v7719 = vunpack.c.l.b16 %v7017
        %v7720 = vunpack.c.h.b16 %v7017
        %v7721 = vunpack.c.l.b16 %v7018
        %v7722 = vunpack.c.h.b16 %v7018
        %v7723 = vunpack.c.l.b16 %v7019
        %v7724 = vunpack.c.h.b16 %v7019
        %v7725 = vunpack.c.l.b16 %v7020
        %v7726 = vunpack.c.h.b16 %v7020
        %v7727 = vunpack.c.l.b16 %v7021
        %v7728 = vunpack.c.h.b16 %v7021
        %v7729 = vunpack.c.l.b16 %v7022
        %v7730 = vunpack.c.h.b16 %v7022
        %v7731 = vunpack.c.l.b16 %v7023
        %v7732 = vunpack.c.h.b16 %v7023
        %v7733 = vunpack.c.l.b16 %v7024
        %v7734 = vunpack.c.h.b16 %v7024
        %v7735 = vunpack.c.l.b16 %v7025
        %v7736 = vunpack.c.h.b16 %v7025
        %v7737 = vunpack.c.l.b16 %v7026
        %v7738 = vunpack.c.h.b16 %v7026
        %v7739 = vunpack.c.l.b16 %v7027
        %v7740 = vunpack.c.h.b16 %v7027
        %v7741 = vunpack.c.l.b16 %v7028
        %v7742 = vunpack.c.h.b16 %v7028
        %v7743 = vunpack.c.l.b16 %v7029
        %v7744 = vunpack.c.h.b16 %v7029
        %v7745 = vunpack.c.l.b16 %v7030
        %v7746 = vunpack.c.h.b16 %v7030
        %v7747 = vunpack.c.l.b16 %v7031
        %v7748 = vunpack.c.h.b16 %v7031
        %v7749 = vunpack.c.l.b16 %v7032
        %v7750 = vunpack.c.h.b16 %v7032
        %v7751 = vunpack.c.l.b16 %v7033
        %v7752 = vunpack.c.h.b16 %v7033
        %v7753 = vunpack.c.l.b16 %v7034
        %v7754 = vunpack.c.h.b16 %v7034
        %v7755 = vunpack.c.l.b16 %v7035
        %v7756 = vunpack.c.h.b16 %v7035
        %v7757 = vunpack.c.l.b16 %v7036
        %v7758 = vunpack.c.h.b16 %v7036
        %v7759 = vunpack.c.l.b16 %v7037
        %v7760 = vunpack.c.h.b16 %v7037
        %v7761 = vunpack.c.l.b16 %v7038
        %v7762 = vunpack.c.h.b16 %v7038
        %v7763 = vunpack.c.l.b16 %v7039
        %v7764 = vunpack.c.h.b16 %v7039
        %v7765 = vunpack.c.l.b16 %v7040
        %v7766 = vunpack.c.h.b16 %v7040
        %v7767 = vunpack.c.l.b16 %v7041
        %v7768 = vunpack.c.h.b16 %v7041
        %v7769 = vunpack.c.l.b16 %v7042
        %v7770 = vunpack.c.h.b16 %v7042
        %v7771 = vunpack.c.l.b16 %v7043
        %v7772 = vunpack.c.h.b16 %v7043
        %v7773 = vunpack.c.l.b16 %v7044
        %v7774 = vunpack.c.h.b16 %v7044
        %v7775 = vunpack.c.l.b16 %v7045
        %v7776 = vunpack.c.h.b16 %v7045
        %v7777 = vunpack.c.l.b16 %v7046
        %v7778 = vunpack.c.h.b16 %v7046
        %v7779 = vunpack.c.l.b16 %v7047
        %v7780 = vunpack.c.h.b16 %v7047
        %v7781 = vunpack.c.l.b16 %v7048
        %v7782 = vunpack.c.h.b16 %v7048
        %v7783 = vunpack.c.l.b16 %v7049
        %v7784 = vunpack.c.h.b16 %v7049
        %v7785 = vunpack.c.l.b16 %v7050
        %v7786 = vunpack.c.h.b16 %v7050
        %v7787 = vunpack.c.l.b16 %v7051
        %v7788 = vunpack.c.h.b16 %v7051
        %v7789 = vunpack.c.l.b16 %v7052
        %v7790 = vunpack.c.h.b16 %v7052
        %v7791 = vunpack.c.l.b16 %v7053
        %v7792 = vunpack.c.h.b16 %v7053
        %v7793 = vunpack.c.l.b16 %v7054
        %v7794 = vunpack.c.h.b16 %v7054
        %v7795 = vunpack.c.l.b16 %v7055
        %v7796 = vunpack.c.h.b16 %v7055
        %v7797 = vunpack.c.l.b16 %v7056
        %v7798 = vunpack.c.h.b16 %v7056
        %v7799 = vunpack.c.l.b16 %v7057
        %v7800 = vunpack.c.h.b16 %v7057
        %v7801 = vunpack.c.l.b16 %v7058
        %v7802 = vunpack.c.h.b16 %v7058
        %v7803 = vunpack.c.l.b16 %v7059
        %v7804 = vunpack.c.h.b16 %v7059
        %v7805 = vunpack.c.l.b16 %v7060
        %v7806 = vunpack.c.h.b16 %v7060
        %v7807 = vunpack.c.l.b16 %v7061
        %v7808 = vunpack.c.h.b16 %v7061
        %v7809 = vunpack.c.l.b16 %v7062
        %v7810 = vunpack.c.h.b16 %v7062
        %v7811 = vunpack.c.l.b16 %v7063
        %v7812 = vunpack.c.h.b16 %v7063
        %v7813 = vunpack.c.l.b16 %v7064
        %v7814 = vunpack.c.h.b16 %v7064
        %v7815 = vunpack.c.l.b16 %v7065
        %v7816 = vunpack.c.h.b16 %v7065
        %v7817 = vunpack.c.l.b16 %v7066
        %v7818 = vunpack.c.h.b16 %v7066
        %v7819 = vunpack.c.l.b16 %v7067
        %v7820 = vunpack.c.h.b16 %v7067
        %v7821 = vunpack.c.l.b16 %v7068
        %v7822 = vunpack.c.h.b16 %v7068
        %v7823 = vunpack.c.l.b16 %v7069
        %v7824 = vunpack.c.h.b16 %v7069
        %v7825 = vunpack.c.l.b16 %v7070
        %v7826 = vunpack.c.h.b16 %v7070
        %v7827 = vunpack.c.l.b16 %v7071
        %v7828 = vunpack.c.h.b16 %v7071
        %v7829 = vunpack.c.l.b16 %v7072
        %v7830 = vunpack.c.h.b16 %v7072
        %v7831 = vunpack.c.l.b16 %v7073
        %v7832 = vunpack.c.h.b16 %v7073
        %v7833 = vunpack.c.l.b16 %v7074
        %v7834 = vunpack.c.h.b16 %v7074
        %v7835 = vunpack.c.l.b16 %v7075
        %v7836 = vunpack.c.h.b16 %v7075
        %v7837 = vunpack.c.l.b16 %v7076
        %v7838 = vunpack.c.h.b16 %v7076
        %v7839 = vunpack.c.l.b16 %v7077
        %v7840 = vunpack.c.h.b16 %v7077
        %v7841 = vunpack.c.l.b16 %v7078
        %v7842 = vunpack.c.h.b16 %v7078
        %v7843 = vunpack.c.l.b16 %v7079
        %v7844 = vunpack.c.h.b16 %v7079
        %v7845 = vunpack.c.l.b16 %v7080
        %v7846 = vunpack.c.h.b16 %v7080
        %v7847 = vunpack.c.l.b16 %v7081
        %v7848 = vunpack.c.h.b16 %v7081
        %v7849 = vunpack.c.l.b16 %v7082
        %v7850 = vunpack.c.h.b16 %v7082
        %v7851 = vpack.c.b16 %v7341, %v7339
        %v7852 = vpack.c.b16 %v7342, %v7340
        %v7853 = vpack.c.b16 %v7345, %v7343
        %v7854 = vpack.c.b16 %v7346, %v7344
        %v7855 = vpack.c.b16 %v7349, %v7347
        %v7856 = vpack.c.b16 %v7350, %v7348
        %v7857 = vpack.c.b16 %v7353, %v7351
        %v7858 = vpack.c.b16 %v7354, %v7352
        %v7859 = vpack.c.b16 %v7357, %v7355
        %v7860 = vpack.c.b16 %v7358, %v7356
        %v7861 = vpack.c.b16 %v7361, %v7359
        %v7862 = vpack.c.b16 %v7362, %v7360
        %v7863 = vpack.c.b16 %v7365, %v7363
        %v7864 = vpack.c.b16 %v7366, %v7364
        %v7865 = vpack.c.b16 %v7369, %v7367
        %v7866 = vpack.c.b16 %v7370, %v7368
        %v7867 = vpack.c.b16 %v7373, %v7371
        %v7868 = vpack.c.b16 %v7374, %v7372
        %v7869 = vpack.c.b16 %v7377, %v7375
        %v7870 = vpack.c.b16 %v7378, %v7376
        %v7871 = vpack.c.b16 %v7381, %v7379
        %v7872 = vpack.c.b16 %v7382, %v7380
        %v7873 = vpack.c.b16 %v7385, %v7383
        %v7874 = vpack.c.b16 %v7386, %v7384
        %v7875 = vpack.c.b16 %v7389, %v7387
        %v7876 = vpack.c.b16 %v7390, %v7388
        %v7877 = vpack.c.b16 %v7393, %v7391
        %v7878 = vpack.c.b16 %v7394, %v7392
        %v7879 = vpack.c.b16 %v7397, %v7395
        %v7880 = vpack.c.b16 %v7398, %v7396
        %v7881 = vpack.c.b16 %v7401, %v7399
        %v7882 = vpack.c.b16 %v7402, %v7400
        %v7883 = vpack.c.b16 %v7405, %v7403
        %v7884 = vpack.c.b16 %v7406, %v7404
        %v7885 = vpack.c.b16 %v7409, %v7407
        %v7886 = vpack.c.b16 %v7410, %v7408
        %v7887 = vpack.c.b16 %v7413, %v7411
        %v7888 = vpack.c.b16 %v7414, %v7412
        %v7889 = vpack.c.b16 %v7417, %v7415
        %v7890 = vpack.c.b16 %v7418, %v7416
        %v7891 = vpack.c.b16 %v7421, %v7419
        %v7892 = vpack.c.b16 %v7422, %v7420
        %v7893 = vpack.c.b16 %v7425, %v7423
        %v7894 = vpack.c.b16 %v7426, %v7424
        %v7895 = vpack.c.b16 %v7429, %v7427
        %v7896 = vpack.c.b16 %v7430, %v7428
        %v7897 = vpack.c.b16 %v7433, %v7431
        %v7898 = vpack.c.b16 %v7434, %v7432
        %v7899 = vpack.c.b16 %v7437, %v7435
        %v7900 = vpack.c.b16 %v7438, %v7436
        %v7901 = vpack.c.b16 %v7441, %v7439
        %v7902 = vpack.c.b16 %v7442, %v7440
        %v7903 = vpack.c.b16 %v7445, %v7443
        %v7904 = vpack.c.b16 %v7446, %v7444
        %v7905 = vpack.c.b16 %v7449, %v7447
        %v7906 = vpack.c.b16 %v7450, %v7448
        %v7907 = vpack.c.b16 %v7453, %v7451
        %v7908 = vpack.c.b16 %v7454, %v7452
        %v7909 = vpack.c.b16 %v7457, %v7455
        %v7910 = vpack.c.b16 %v7458, %v7456
        %v7911 = vpack.c.b16 %v7461, %v7459
        %v7912 = vpack.c.b16 %v7462, %v7460
        %v7913 = vpack.c.b16 %v7465, %v7463
        %v7914 = vpack.c.b16 %v7466, %v7464
        %v7915 = vpack.c.b16 %v7469, %v7467
        %v7916 = vpack.c.b16 %v7470, %v7468
        %v7917 = vpack.c.b16 %v7473, %v7471
        %v7918 = vpack.c.b16 %v7474, %v7472
        %v7919 = vpack.c.b16 %v7477, %v7475
        %v7920 = vpack.c.b16 %v7478, %v7476
        %v7921 = vpack.c.b16 %v7481, %v7479
        %v7922 = vpack.c.b16 %v7482, %v7480
        %v7923 = vpack.c.b16 %v7485, %v7483
        %v7924 = vpack.c.b16 %v7486, %v7484
        %v7925 = vpack.c.b16 %v7489, %v7487
        %v7926 = vpack.c.b16 %v7490, %v7488
        %v7927 = vpack.c.b16 %v7493, %v7491
        %v7928 = vpack.c.b16 %v7494, %v7492
        %v7929 = vpack.c.b16 %v7497, %v7495
        %v7930 = vpack.c.b16 %v7498, %v7496
        %v7931 = vpack.c.b16 %v7501, %v7499
        %v7932 = vpack.c.b16 %v7502, %v7500
        %v7933 = vpack.c.b16 %v7505, %v7503
        %v7934 = vpack.c.b16 %v7506, %v7504
        %v7935 = vpack.c.b16 %v7509, %v7507
        %v7936 = vpack.c.b16 %v7510, %v7508
        %v7937 = vpack.c.b16 %v7513, %v7511
        %v7938 = vpack.c.b16 %v7514, %v7512
        %v7939 = vpack.c.b16 %v7517, %v7515
        %v7940 = vpack.c.b16 %v7518, %v7516
        %v7941 = vpack.c.b16 %v7521, %v7519
        %v7942 = vpack.c.b16 %v7522, %v7520
        %v7943 = vpack.c.b16 %v7525, %v7523
        %v7944 = vpack.c.b16 %v7526, %v7524
        %v7945 = vpack.c.b16 %v7529, %v7527
        %v7946 = vpack.c.b16 %v7530, %v7528
        %v7947 = vpack.c.b16 %v7533, %v7531
        %v7948 = vpack.c.b16 %v7534, %v7532
        %v7949 = vpack.c.b16 %v7537, %v7535
        %v7950 = vpack.c.b16 %v7538, %v7536
        %v7951 = vpack.c.b16 %v7541, %v7539
        %v7952 = vpack.c.b16 %v7542, %v7540
        %v7953 = vpack.c.b16 %v7545, %v7543
        %v7954 = vpack.c.b16 %v7546, %v7544
        %v7955 = vpack.c.b16 %v7549, %v7547
        %v7956 = vpack.c.b16 %v7550, %v7548
        %v7957 = vpack.c.b16 %v7553, %v7551
        %v7958 = vpack.c.b16 %v7554, %v7552
        %v7959 = vpack.c.b16 %v7557, %v7555
        %v7960 = vpack.c.b16 %v7558, %v7556
        %v7961 = vpack.c.b16 %v7561, %v7559
        %v7962 = vpack.c.b16 %v7562, %v7560
        %v7963 = vpack.c.b16 %v7565, %v7563
        %v7964 = vpack.c.b16 %v7566, %v7564
        %v7965 = vpack.c.b16 %v7569, %v7567
        %v7966 = vpack.c.b16 %v7570, %v7568
        %v7967 = vpack.c.b16 %v7573, %v7571
        %v7968 = vpack.c.b16 %v7574, %v7572
        %v7969 = vpack.c.b16 %v7577, %v7575
        %v7970 = vpack.c.b16 %v7578, %v7576
        %v7971 = vpack.c.b16 %v7581, %v7579
        %v7972 = vpack.c.b16 %v7582, %v7580
        %v7973 = vpack.c.b16 %v7585, %v7583
        %v7974 = vpack.c.b16 %v7586, %v7584
        %v7975 = vpack.c.b16 %v7589, %v7587
        %v7976 = vpack.c.b16 %v7590, %v7588
        %v7977 = vpack.c.b16 %v7593, %v7591
        %v7978 = vpack.c.b16 %v7594, %v7592
        %v7979 = vpack.c.b16 %v7597, %v7595
        %v7980 = vpack.c.b16 %v7598, %v7596
        %v7981 = vpack.c.b16 %v7601, %v7599
        %v7982 = vpack.c.b16 %v7602, %v7600
        %v7983 = vpack.c.b16 %v7605, %v7603
        %v7984 = vpack.c.b16 %v7606, %v7604
        %v7985 = vpack.c.b16 %v7609, %v7607
        %v7986 = vpack.c.b16 %v7610, %v7608
        %v7987 = vpack.c.b16 %v7613, %v7611
        %v7988 = vpack.c.b16 %v7614, %v7612
        %v7989 = vpack.c.b16 %v7617, %v7615
        %v7990 = vpack.c.b16 %v7618, %v7616
        %v7991 = vpack.c.b16 %v7621, %v7619
        %v7992 = vpack.c.b16 %v7622, %v7620
        %v7993 = vpack.c.b16 %v7625, %v7623
        %v7994 = vpack.c.b16 %v7626, %v7624
        %v7995 = vpack.c.b16 %v7629, %v7627
        %v7996 = vpack.c.b16 %v7630, %v7628
        %v7997 = vpack.c.b16 %v7633, %v7631
        %v7998 = vpack.c.b16 %v7634, %v7632
        %v7999 = vpack.c.b16 %v7637, %v7635
        %v8000 = vpack.c.b16 %v7638, %v7636
        %v8001 = vpack.c.b16 %v7641, %v7639
        %v8002 = vpack.c.b16 %v7642, %v7640
        %v8003 = vpack.c.b16 %v7645, %v7643
        %v8004 = vpack.c.b16 %v7646, %v7644
        %v8005 = vpack.c.b16 %v7649, %v7647
        %v8006 = vpack.c.b16 %v7650, %v7648
        %v8007 = vpack.c.b16 %v7653, %v7651
        %v8008 = vpack.c.b16 %v7654, %v7652
        %v8009 = vpack.c.b16 %v7657, %v7655
        %v8010 = vpack.c.b16 %v7658, %v7656
        %v8011 = vpack.c.b16 %v7661, %v7659
        %v8012 = vpack.c.b16 %v7662, %v7660
        %v8013 = vpack.c.b16 %v7665, %v7663
        %v8014 = vpack.c.b16 %v7666, %v7664
        %v8015 = vpack.c.b16 %v7669, %v7667
        %v8016 = vpack.c.b16 %v7670, %v7668
        %v8017 = vpack.c.b16 %v7673, %v7671
        %v8018 = vpack.c.b16 %v7674, %v7672
        %v8019 = vpack.c.b16 %v7677, %v7675
        %v8020 = vpack.c.b16 %v7678, %v7676
        %v8021 = vpack.c.b16 %v7681, %v7679
        %v8022 = vpack.c.b16 %v7682, %v7680
        %v8023 = vpack.c.b16 %v7685, %v7683
        %v8024 = vpack.c.b16 %v7686, %v7684
        %v8025 = vpack.c.b16 %v7689, %v7687
        %v8026 = vpack.c.b16 %v7690, %v7688
        %v8027 = vpack.c.b16 %v7693, %v7691
        %v8028 = vpack.c.b16 %v7694, %v7692
        %v8029 = vpack.c.b16 %v7697, %v7695
        %v8030 = vpack.c.b16 %v7698, %v7696
        %v8031 = vpack.c.b16 %v7701, %v7699
        %v8032 = vpack.c.b16 %v7702, %v7700
        %v8033 = vpack.c.b16 %v7705, %v7703
        %v8034 = vpack.c.b16 %v7706, %v7704
        %v8035 = vpack.c.b16 %v7709, %v7707
        %v8036 = vpack.c.b16 %v7710, %v7708
        %v8037 = vpack.c.b16 %v7713, %v7711
        %v8038 = vpack.c.b16 %v7714, %v7712
        %v8039 = vpack.c.b16 %v7717, %v7715
        %v8040 = vpack.c.b16 %v7718, %v7716
        %v8041 = vpack.c.b16 %v7721, %v7719
        %v8042 = vpack.c.b16 %v7722, %v7720
        %v8043 = vpack.c.b16 %v7725, %v7723
        %v8044 = vpack.c.b16 %v7726, %v7724
        %v8045 = vpack.c.b16 %v7729, %v7727
        %v8046 = vpack.c.b16 %v7730, %v7728
        %v8047 = vpack.c.b16 %v7733, %v7731
        %v8048 = vpack.c.b16 %v7734, %v7732
        %v8049 = vpack.c.b16 %v7737, %v7735
        %v8050 = vpack.c.b16 %v7738, %v7736
        %v8051 = vpack.c.b16 %v7741, %v7739
        %v8052 = vpack.c.b16 %v7742, %v7740
        %v8053 = vpack.c.b16 %v7745, %v7743
        %v8054 = vpack.c.b16 %v7746, %v7744
        %v8055 = vpack.c.b16 %v7749, %v7747
        %v8056 = vpack.c.b16 %v7750, %v7748
        %v8057 = vpack.c.b16 %v7753, %v7751
        %v8058 = vpack.c.b16 %v7754, %v7752
        %v8059 = vpack.c.b16 %v7757, %v7755
        %v8060 = vpack.c.b16 %v7758, %v7756
        %v8061 = vpack.c.b16 %v7761, %v7759
        %v8062 = vpack.c.b16 %v7762, %v7760
        %v8063 = vpack.c.b16 %v7765, %v7763
        %v8064 = vpack.c.b16 %v7766, %v7764
        %v8065 = vpack.c.b16 %v7769, %v7767
        %v8066 = vpack.c.b16 %v7770, %v7768
        %v8067 = vpack.c.b16 %v7773, %v7771
        %v8068 = vpack.c.b16 %v7774, %v7772
        %v8069 = vpack.c.b16 %v7777, %v7775
        %v8070 = vpack.c.b16 %v7778, %v7776
        %v8071 = vpack.c.b16 %v7781, %v7779
        %v8072 = vpack.c.b16 %v7782, %v7780
        %v8073 = vpack.c.b16 %v7785, %v7783
        %v8074 = vpack.c.b16 %v7786, %v7784
        %v8075 = vpack.c.b16 %v7789, %v7787
        %v8076 = vpack.c.b16 %v7790, %v7788
        %v8077 = vpack.c.b16 %v7793, %v7791
        %v8078 = vpack.c.b16 %v7794, %v7792
        %v8079 = vpack.c.b16 %v7797, %v7795
        %v8080 = vpack.c.b16 %v7798, %v7796
        %v8081 = vpack.c.b16 %v7801, %v7799
        %v8082 = vpack.c.b16 %v7802, %v7800
        %v8083 = vpack.c.b16 %v7805, %v7803
        %v8084 = vpack.c.b16 %v7806, %v7804
        %v8085 = vpack.c.b16 %v7809, %v7807
        %v8086 = vpack.c.b16 %v7810, %v7808
        %v8087 = vpack.c.b16 %v7813, %v7811
        %v8088 = vpack.c.b16 %v7814, %v7812
        %v8089 = vpack.c.b16 %v7817, %v7815
        %v8090 = vpack.c.b16 %v7818, %v7816
        %v8091 = vpack.c.b16 %v7821, %v7819
        %v8092 = vpack.c.b16 %v7822, %v7820
        %v8093 = vpack.c.b16 %v7825, %v7823
        %v8094 = vpack.c.b16 %v7826, %v7824
        %v8095 = vpack.c.b16 %v7829, %v7827
        %v8096 = vpack.c.b16 %v7830, %v7828
        %v8097 = vpack.c.b16 %v7833, %v7831
        %v8098 = vpack.c.b16 %v7834, %v7832
        %v8099 = vpack.c.b16 %v7837, %v7835
        %v8100 = vpack.c.b16 %v7838, %v7836
        %v8101 = vpack.c.b16 %v7841, %v7839
        %v8102 = vpack.c.b16 %v7842, %v7840
        %v8103 = vpack.c.b16 %v7845, %v7843
        %v8104 = vpack.c.b16 %v7846, %v7844
        %v8105 = vpack.c.b16 %v7849, %v7847
        %v8106 = vpack.c.b16 %v7850, %v7848
        %8363 = vmatprep.subr.bf16.mxu0 %v7866
        %8364 = vmatpush1.bf16.msra.mxu0 %v7865
        %8365 = vmatprep.subr.bf16.mxu0 %v7864
        %8366 = vmatpush1.bf16.msra.mxu0 %v7863
        %8367 = vmatprep.subr.bf16.mxu0 %v7862
        %8368 = vmatpush1.bf16.msra.mxu0 %v7861
        %8369 = vmatprep.subr.bf16.mxu0 %v7860
        %8370 = vmatpush1.bf16.msra.mxu0 %v7859
        %8371 = vmatprep.subr.bf16.mxu0 %v7858
        %8372 = vmatpush1.bf16.msra.mxu0 %v7857
        %8373 = vmatprep.subr.bf16.mxu0 %v7856
        %8374 = vmatpush1.bf16.msra.mxu0 %v7855
        %8375 = vmatprep.subr.bf16.mxu0 %v7854
        %8376 = vmatpush1.bf16.msra.mxu0 %v7853
        %8377 = vmatprep.subr.bf16.mxu0 %v7852
        %8378 = vmatpush1.bf16.msra.mxu0 %v7851
        %8379 = vmatprep.subr.bf16.mxu0 %v7882
        %8380 = vmatpush2.bf16.msra.mxu0 %v7881
        %8381 = vmatprep.subr.bf16.mxu0 %v7880
        %8382 = vmatpush2.bf16.msra.mxu0 %v7879
        %8383 = vmatprep.subr.bf16.mxu0 %v7878
        %8384 = vmatpush2.bf16.msra.mxu0 %v7877
        %8385 = vmatprep.subr.bf16.mxu0 %v7876
        %8386 = vmatpush2.bf16.msra.mxu0 %v7875
        %8387 = vmatprep.subr.bf16.mxu0 %v7874
        %8388 = vmatpush2.bf16.msra.mxu0 %v7873
        %8389 = vmatprep.subr.bf16.mxu0 %v7872
        %8390 = vmatpush2.bf16.msra.mxu0 %v7871
        %8391 = vmatprep.subr.bf16.mxu0 %v7870
        %8392 = vmatpush2.bf16.msra.mxu0 %v7869
        %8393 = vmatprep.subr.bf16.mxu0 %v7868
        %8394 = vmatpush2.bf16.msra.mxu0 %v7867
        %8395 = vmatprep.mubr.bf16.mxu0 %v6809
        %8396 = vmatmul.mubr.bf16.gmra.mxu0 %v6808
        %v8397 = vpop.f32.mrf.mxu0
        %v8398 = vadd.f32 0.0, %v8397
        %v8399 = vpop.f32.mrf.mxu0
        %v8400 = vadd.f32 0.0, %v8399
        %v8401 = vpop.f32.mrf.mxu0
        %v8402 = vadd.f32 0.0, %v8401
        %v8403 = vpop.f32.mrf.mxu0
        %v8404 = vadd.f32 0.0, %v8403
        %8405 = vdwg.mxu0
        %8406 = vmatprep.subr.bf16.mxu0 %v7898
        %8407 = vmatpush1.bf16.msra.mxu0 %v7897
        %8408 = vmatprep.subr.bf16.mxu0 %v7896
        %8409 = vmatpush1.bf16.msra.mxu0 %v7895
        %8410 = vmatprep.subr.bf16.mxu0 %v7894
        %8411 = vmatpush1.bf16.msra.mxu0 %v7893
        %8412 = vmatprep.subr.bf16.mxu0 %v7892
        %8413 = vmatpush1.bf16.msra.mxu0 %v7891
        %8414 = vmatprep.subr.bf16.mxu0 %v7890
        %8415 = vmatpush1.bf16.msra.mxu0 %v7889
        %8416 = vmatprep.subr.bf16.mxu0 %v7888
        %8417 = vmatpush1.bf16.msra.mxu0 %v7887
        %8418 = vmatprep.subr.bf16.mxu0 %v7886
        %8419 = vmatpush1.bf16.msra.mxu0 %v7885
        %8420 = vmatprep.subr.bf16.mxu0 %v7884
        %8421 = vmatpush1.bf16.msra.mxu0 %v7883
        %8422 = vmatprep.subr.bf16.mxu0 %v7914
        %8423 = vmatpush2.bf16.msra.mxu0 %v7913
        %8424 = vmatprep.subr.bf16.mxu0 %v7912
        %8425 = vmatpush2.bf16.msra.mxu0 %v7911
        %8426 = vmatprep.subr.bf16.mxu0 %v7910
        %8427 = vmatpush2.bf16.msra.mxu0 %v7909
        %8428 = vmatprep.subr.bf16.mxu0 %v7908
        %8429 = vmatpush2.bf16.msra.mxu0 %v7907
        %8430 = vmatprep.subr.bf16.mxu0 %v7906
        %8431 = vmatpush2.bf16.msra.mxu0 %v7905
        %8432 = vmatprep.subr.bf16.mxu0 %v7904
        %8433 = vmatpush2.bf16.msra.mxu0 %v7903
        %8434 = vmatprep.subr.bf16.mxu0 %v7902
        %8435 = vmatpush2.bf16.msra.mxu0 %v7901
        %8436 = vmatprep.subr.bf16.mxu0 %v7900
        %8437 = vmatpush2.bf16.msra.mxu0 %v7899
        %8438 = vmatprep.mubr.bf16.mxu0 %v6811
        %8439 = vmatmul.mubr.bf16.gmra.mxu0 %v6810
        %v8440 = vpop.f32.mrf.mxu0
        %v8441 = vadd.f32 %v8398, %v8440
        %v8442 = vpop.f32.mrf.mxu0
        %v8443 = vadd.f32 %v8400, %v8442
        %v8444 = vpop.f32.mrf.mxu0
        %v8445 = vadd.f32 %v8402, %v8444
        %v8446 = vpop.f32.mrf.mxu0
        %v8447 = vadd.f32 %v8404, %v8446
        %8448 = vdwg.mxu0
        %8449 = vmatprep.subr.bf16.mxu0 %v7930
        %8450 = vmatpush1.bf16.msra.mxu0 %v7929
        %8451 = vmatprep.subr.bf16.mxu0 %v7928
        %8452 = vmatpush1.bf16.msra.mxu0 %v7927
        %8453 = vmatprep.subr.bf16.mxu0 %v7926
        %8454 = vmatpush1.bf16.msra.mxu0 %v7925
        %8455 = vmatprep.subr.bf16.mxu0 %v7924
        %8456 = vmatpush1.bf16.msra.mxu0 %v7923
        %8457 = vmatprep.subr.bf16.mxu0 %v7922
        %8458 = vmatpush1.bf16.msra.mxu0 %v7921
        %8459 = vmatprep.subr.bf16.mxu0 %v7920
        %8460 = vmatpush1.bf16.msra.mxu0 %v7919
        %8461 = vmatprep.subr.bf16.mxu0 %v7918
        %8462 = vmatpush1.bf16.msra.mxu0 %v7917
        %8463 = vmatprep.subr.bf16.mxu0 %v7916
        %8464 = vmatpush1.bf16.msra.mxu0 %v7915
        %8465 = vmatprep.subr.bf16.mxu0 %v7946
        %8466 = vmatpush2.bf16.msra.mxu0 %v7945
        %8467 = vmatprep.subr.bf16.mxu0 %v7944
        %8468 = vmatpush2.bf16.msra.mxu0 %v7943
        %8469 = vmatprep.subr.bf16.mxu0 %v7942
        %8470 = vmatpush2.bf16.msra.mxu0 %v7941
        %8471 = vmatprep.subr.bf16.mxu0 %v7940
        %8472 = vmatpush2.bf16.msra.mxu0 %v7939
        %8473 = vmatprep.subr.bf16.mxu0 %v7938
        %8474 = vmatpush2.bf16.msra.mxu0 %v7937
        %8475 = vmatprep.subr.bf16.mxu0 %v7936
        %8476 = vmatpush2.bf16.msra.mxu0 %v7935
        %8477 = vmatprep.subr.bf16.mxu0 %v7934
        %8478 = vmatpush2.bf16.msra.mxu0 %v7933
        %8479 = vmatprep.subr.bf16.mxu0 %v7932
        %8480 = vmatpush2.bf16.msra.mxu0 %v7931
        %8481 = vmatprep.mubr.bf16.mxu0 %v6813
        %8482 = vmatmul.mubr.bf16.gmra.mxu0 %v6812
        %v8483 = vpop.f32.mrf.mxu0
        %v8484 = vadd.f32 %v8441, %v8483
        %v8485 = vpop.f32.mrf.mxu0
        %v8486 = vadd.f32 %v8443, %v8485
        %v8487 = vpop.f32.mrf.mxu0
        %v8488 = vadd.f32 %v8445, %v8487
        %v8489 = vpop.f32.mrf.mxu0
        %v8490 = vadd.f32 %v8447, %v8489
        %8491 = vdwg.mxu0
        %8492 = vmatprep.subr.bf16.mxu0 %v7962
        %8493 = vmatpush1.bf16.msra.mxu0 %v7961
        %8494 = vmatprep.subr.bf16.mxu0 %v7960
        %8495 = vmatpush1.bf16.msra.mxu0 %v7959
        %8496 = vmatprep.subr.bf16.mxu0 %v7958
        %8497 = vmatpush1.bf16.msra.mxu0 %v7957
        %8498 = vmatprep.subr.bf16.mxu0 %v7956
        %8499 = vmatpush1.bf16.msra.mxu0 %v7955
        %8500 = vmatprep.subr.bf16.mxu0 %v7954
        %8501 = vmatpush1.bf16.msra.mxu0 %v7953
        %8502 = vmatprep.subr.bf16.mxu0 %v7952
        %8503 = vmatpush1.bf16.msra.mxu0 %v7951
        %8504 = vmatprep.subr.bf16.mxu0 %v7950
        %8505 = vmatpush1.bf16.msra.mxu0 %v7949
        %8506 = vmatprep.subr.bf16.mxu0 %v7948
        %8507 = vmatpush1.bf16.msra.mxu0 %v7947
        %8508 = vmatprep.subr.bf16.mxu0 %v7978
        %8509 = vmatpush2.bf16.msra.mxu0 %v7977
        %8510 = vmatprep.subr.bf16.mxu0 %v7976
        %8511 = vmatpush2.bf16.msra.mxu0 %v7975
        %8512 = vmatprep.subr.bf16.mxu0 %v7974
        %8513 = vmatpush2.bf16.msra.mxu0 %v7973
        %8514 = vmatprep.subr.bf16.mxu0 %v7972
        %8515 = vmatpush2.bf16.msra.mxu0 %v7971
        %8516 = vmatprep.subr.bf16.mxu0 %v7970
        %8517 = vmatpush2.bf16.msra.mxu0 %v7969
        %8518 = vmatprep.subr.bf16.mxu0 %v7968
        %8519 = vmatpush2.bf16.msra.mxu0 %v7967
        %8520 = vmatprep.subr.bf16.mxu0 %v7966
        %8521 = vmatpush2.bf16.msra.mxu0 %v7965
        %8522 = vmatprep.subr.bf16.mxu0 %v7964
        %8523 = vmatpush2.bf16.msra.mxu0 %v7963
        %8524 = vmatprep.mubr.bf16.mxu0 %v6815
        %8525 = vmatmul.mubr.bf16.gmra.mxu0 %v6814
        %v8526 = vpop.f32.mrf.mxu0
        %v8527 = vadd.f32 %v8484, %v8526
        %v8528 = vpop.f32.mrf.mxu0
        %v8529 = vadd.f32 %v8486, %v8528
        %v8530 = vpop.f32.mrf.mxu0
        %v8531 = vadd.f32 %v8488, %v8530
        %v8532 = vpop.f32.mrf.mxu0
        %v8533 = vadd.f32 %v8490, %v8532
        %8534 = vdwg.mxu0
        %8535 = vmatprep.subr.bf16.mxu0 %v7994
        %8536 = vmatpush1.bf16.msra.mxu0 %v7993
        %8537 = vmatprep.subr.bf16.mxu0 %v7992
        %8538 = vmatpush1.bf16.msra.mxu0 %v7991
        %8539 = vmatprep.subr.bf16.mxu0 %v7990
        %8540 = vmatpush1.bf16.msra.mxu0 %v7989
        %8541 = vmatprep.subr.bf16.mxu0 %v7988
        %8542 = vmatpush1.bf16.msra.mxu0 %v7987
        %8543 = vmatprep.subr.bf16.mxu0 %v7986
        %8544 = vmatpush1.bf16.msra.mxu0 %v7985
        %8545 = vmatprep.subr.bf16.mxu0 %v7984
        %8546 = vmatpush1.bf16.msra.mxu0 %v7983
        %8547 = vmatprep.subr.bf16.mxu0 %v7982
        %8548 = vmatpush1.bf16.msra.mxu0 %v7981
        %8549 = vmatprep.subr.bf16.mxu0 %v7980
        %8550 = vmatpush1.bf16.msra.mxu0 %v7979
        %8551 = vmatprep.subr.bf16.mxu0 %v8010
        %8552 = vmatpush2.bf16.msra.mxu0 %v8009
        %8553 = vmatprep.subr.bf16.mxu0 %v8008
        %8554 = vmatpush2.bf16.msra.mxu0 %v8007
        %8555 = vmatprep.subr.bf16.mxu0 %v8006
        %8556 = vmatpush2.bf16.msra.mxu0 %v8005
        %8557 = vmatprep.subr.bf16.mxu0 %v8004
        %8558 = vmatpush2.bf16.msra.mxu0 %v8003
        %8559 = vmatprep.subr.bf16.mxu0 %v8002
        %8560 = vmatpush2.bf16.msra.mxu0 %v8001
        %8561 = vmatprep.subr.bf16.mxu0 %v8000
        %8562 = vmatpush2.bf16.msra.mxu0 %v7999
        %8563 = vmatprep.subr.bf16.mxu0 %v7998
        %8564 = vmatpush2.bf16.msra.mxu0 %v7997
        %8565 = vmatprep.subr.bf16.mxu0 %v7996
        %8566 = vmatpush2.bf16.msra.mxu0 %v7995
        %8567 = vmatprep.mubr.bf16.mxu0 %v6817
        %8568 = vmatmul.mubr.bf16.gmra.mxu0 %v6816
        %v8569 = vpop.f32.mrf.mxu0
        %v8570 = vadd.f32 %v8527, %v8569
        %v8571 = vpop.f32.mrf.mxu0
        %v8572 = vadd.f32 %v8529, %v8571
        %v8573 = vpop.f32.mrf.mxu0
        %v8574 = vadd.f32 %v8531, %v8573
        %v8575 = vpop.f32.mrf.mxu0
        %v8576 = vadd.f32 %v8533, %v8575
        %8577 = vdwg.mxu0
        %8578 = vmatprep.subr.bf16.mxu0 %v8026
        %8579 = vmatpush1.bf16.msra.mxu0 %v8025
        %8580 = vmatprep.subr.bf16.mxu0 %v8024
        %8581 = vmatpush1.bf16.msra.mxu0 %v8023
        %8582 = vmatprep.subr.bf16.mxu0 %v8022
        %8583 = vmatpush1.bf16.msra.mxu0 %v8021
        %8584 = vmatprep.subr.bf16.mxu0 %v8020
        %8585 = vmatpush1.bf16.msra.mxu0 %v8019
        %8586 = vmatprep.subr.bf16.mxu0 %v8018
        %8587 = vmatpush1.bf16.msra.mxu0 %v8017
        %8588 = vmatprep.subr.bf16.mxu0 %v8016
        %8589 = vmatpush1.bf16.msra.mxu0 %v8015
        %8590 = vmatprep.subr.bf16.mxu0 %v8014
        %8591 = vmatpush1.bf16.msra.mxu0 %v8013
        %8592 = vmatprep.subr.bf16.mxu0 %v8012
        %8593 = vmatpush1.bf16.msra.mxu0 %v8011
        %8594 = vmatprep.subr.bf16.mxu0 %v8042
        %8595 = vmatpush2.bf16.msra.mxu0 %v8041
        %8596 = vmatprep.subr.bf16.mxu0 %v8040
        %8597 = vmatpush2.bf16.msra.mxu0 %v8039
        %8598 = vmatprep.subr.bf16.mxu0 %v8038
        %8599 = vmatpush2.bf16.msra.mxu0 %v8037
        %8600 = vmatprep.subr.bf16.mxu0 %v8036
        %8601 = vmatpush2.bf16.msra.mxu0 %v8035
        %8602 = vmatprep.subr.bf16.mxu0 %v8034
        %8603 = vmatpush2.bf16.msra.mxu0 %v8033
        %8604 = vmatprep.subr.bf16.mxu0 %v8032
        %8605 = vmatpush2.bf16.msra.mxu0 %v8031
        %8606 = vmatprep.subr.bf16.mxu0 %v8030
        %8607 = vmatpush2.bf16.msra.mxu0 %v8029
        %8608 = vmatprep.subr.bf16.mxu0 %v8028
        %8609 = vmatpush2.bf16.msra.mxu0 %v8027
        %8610 = vmatprep.mubr.bf16.mxu0 %v6819
        %8611 = vmatmul.mubr.bf16.gmra.mxu0 %v6818
        %v8612 = vpop.f32.mrf.mxu0
        %v8613 = vadd.f32 %v8570, %v8612
        %v8614 = vpop.f32.mrf.mxu0
        %v8615 = vadd.f32 %v8572, %v8614
        %v8616 = vpop.f32.mrf.mxu0
        %v8617 = vadd.f32 %v8574, %v8616
        %v8618 = vpop.f32.mrf.mxu0
        %v8619 = vadd.f32 %v8576, %v8618
        %8620 = vdwg.mxu0
        %8621 = vmatprep.subr.bf16.mxu0 %v8058
        %8622 = vmatpush1.bf16.msra.mxu0 %v8057
        %8623 = vmatprep.subr.bf16.mxu0 %v8056
        %8624 = vmatpush1.bf16.msra.mxu0 %v8055
        %8625 = vmatprep.subr.bf16.mxu0 %v8054
        %8626 = vmatpush1.bf16.msra.mxu0 %v8053
        %8627 = vmatprep.subr.bf16.mxu0 %v8052
        %8628 = vmatpush1.bf16.msra.mxu0 %v8051
        %8629 = vmatprep.subr.bf16.mxu0 %v8050
        %8630 = vmatpush1.bf16.msra.mxu0 %v8049
        %8631 = vmatprep.subr.bf16.mxu0 %v8048
        %8632 = vmatpush1.bf16.msra.mxu0 %v8047
        %8633 = vmatprep.subr.bf16.mxu0 %v8046
        %8634 = vmatpush1.bf16.msra.mxu0 %v8045
        %8635 = vmatprep.subr.bf16.mxu0 %v8044
        %8636 = vmatpush1.bf16.msra.mxu0 %v8043
        %8637 = vmatprep.subr.bf16.mxu0 %v8074
        %8638 = vmatpush2.bf16.msra.mxu0 %v8073
        %8639 = vmatprep.subr.bf16.mxu0 %v8072
        %8640 = vmatpush2.bf16.msra.mxu0 %v8071
        %8641 = vmatprep.subr.bf16.mxu0 %v8070
        %8642 = vmatpush2.bf16.msra.mxu0 %v8069
        %8643 = vmatprep.subr.bf16.mxu0 %v8068
        %8644 = vmatpush2.bf16.msra.mxu0 %v8067
        %8645 = vmatprep.subr.bf16.mxu0 %v8066
        %8646 = vmatpush2.bf16.msra.mxu0 %v8065
        %8647 = vmatprep.subr.bf16.mxu0 %v8064
        %8648 = vmatpush2.bf16.msra.mxu0 %v8063
        %8649 = vmatprep.subr.bf16.mxu0 %v8062
        %8650 = vmatpush2.bf16.msra.mxu0 %v8061
        %8651 = vmatprep.subr.bf16.mxu0 %v8060
        %8652 = vmatpush2.bf16.msra.mxu0 %v8059
        %8653 = vmatprep.mubr.bf16.mxu0 %v6821
        %8654 = vmatmul.mubr.bf16.gmra.mxu0 %v6820
        %v8655 = vpop.f32.mrf.mxu0
        %v8656 = vadd.f32 %v8613, %v8655
        %v8657 = vpop.f32.mrf.mxu0
        %v8658 = vadd.f32 %v8615, %v8657
        %v8659 = vpop.f32.mrf.mxu0
        %v8660 = vadd.f32 %v8617, %v8659
        %v8661 = vpop.f32.mrf.mxu0
        %v8662 = vadd.f32 %v8619, %v8661
        %8663 = vdwg.mxu0
        %8664 = vmatprep.subr.bf16.mxu0 %v8090
        %8665 = vmatpush1.bf16.msra.mxu0 %v8089
        %8666 = vmatprep.subr.bf16.mxu0 %v8088
        %8667 = vmatpush1.bf16.msra.mxu0 %v8087
        %8668 = vmatprep.subr.bf16.mxu0 %v8086
        %8669 = vmatpush1.bf16.msra.mxu0 %v8085
        %8670 = vmatprep.subr.bf16.mxu0 %v8084
        %8671 = vmatpush1.bf16.msra.mxu0 %v8083
        %8672 = vmatprep.subr.bf16.mxu0 %v8082
        %8673 = vmatpush1.bf16.msra.mxu0 %v8081
        %8674 = vmatprep.subr.bf16.mxu0 %v8080
        %8675 = vmatpush1.bf16.msra.mxu0 %v8079
        %8676 = vmatprep.subr.bf16.mxu0 %v8078
        %8677 = vmatpush1.bf16.msra.mxu0 %v8077
        %8678 = vmatprep.subr.bf16.mxu0 %v8076
        %8679 = vmatpush1.bf16.msra.mxu0 %v8075
        %8680 = vmatprep.subr.bf16.mxu0 %v8106
        %8681 = vmatpush2.bf16.msra.mxu0 %v8105
        %8682 = vmatprep.subr.bf16.mxu0 %v8104
        %8683 = vmatpush2.bf16.msra.mxu0 %v8103
        %8684 = vmatprep.subr.bf16.mxu0 %v8102
        %8685 = vmatpush2.bf16.msra.mxu0 %v8101
        %8686 = vmatprep.subr.bf16.mxu0 %v8100
        %8687 = vmatpush2.bf16.msra.mxu0 %v8099
        %8688 = vmatprep.subr.bf16.mxu0 %v8098
        %8689 = vmatpush2.bf16.msra.mxu0 %v8097
        %8690 = vmatprep.subr.bf16.mxu0 %v8096
        %8691 = vmatpush2.bf16.msra.mxu0 %v8095
        %8692 = vmatprep.subr.bf16.mxu0 %v8094
        %8693 = vmatpush2.bf16.msra.mxu0 %v8093
        %8694 = vmatprep.subr.bf16.mxu0 %v8092
        %8695 = vmatpush2.bf16.msra.mxu0 %v8091
        %8696 = vmatprep.mubr.bf16.mxu0 %v6823
        %8697 = vmatmul.mubr.bf16.gmra.mxu0 %v6822
        %v8698 = vpop.f32.mrf.mxu0
        %v8699 = vadd.f32 %v8656, %v8698
        %v8700 = vpop.f32.mrf.mxu0
        %v8701 = vadd.f32 %v8658, %v8700
        %v8702 = vpop.f32.mrf.mxu0
        %v8703 = vadd.f32 %v8660, %v8702
        %v8704 = vpop.f32.mrf.mxu0
        %v8705 = vadd.f32 %v8662, %v8704
        %8706 = vdwg.mxu0
        %v8707 = vadd.f32 %v5922, %v8699
        %v8708 = vadd.f32 %v5924, %v8701
        %v8709 = vadd.f32 %v5926, %v8703
        %v8710 = vadd.f32 %v5928, %v8705
        %v8711 = vld [vmem:[#allocation10] sm:$0x3]
        %v8713 = vlaneseq
        %v8714 = vshrl.u32 %v8713, 7
        %v8715 = vsub.s32 0, %v8714
        %v8716 = vrot.slane %v8711, %v8715
        %v8717 = vlaneseq
        %v8718 = vshrl.u32 %v8717, 7
        %v8719 = vsub.s32 1, %v8718
        %v8720 = vrot.slane %v8711, %v8719
        %v8723 = vadd.f32 %v8707, %v8716
        %v8724 = vadd.f32 %v8708, %v8720
        %v8725 = vadd.f32 %v8709, %v8716
        %v8726 = vadd.f32 %v8710, %v8720
        %v8727 = vmin.f32 %v8723, 0.0
        %v8728 = vmin.f32 %v8724, 0.0
        %v8729 = vmin.f32 %v8725, 0.0
        %v8730 = vmin.f32 %v8726, 0.0
        %v8731 = vmul.f32 %v8727, 1.442695
        %v8732 = vpow.pop %v8731
        %v8733 = vmul.f32 %v8728, 1.442695
        %v8734 = vpow.pop %v8733
        %v8735 = vmul.f32 %v8729, 1.442695
        %v8736 = vpow.pop %v8735
        %v8737 = vmul.f32 %v8730, 1.442695
        %v8738 = vpow.pop %v8737
        %v8739 = vsub.f32 %v8732, 1.0
        %v8740 = vsub.f32 %v8734, 1.0
        %v8741 = vsub.f32 %v8736, 1.0
        %v8742 = vsub.f32 %v8738, 1.0
        %v8743 = vmul.f32 %v8739, 1.6732632
        %v8744 = vmul.f32 %v8740, 1.6732632
        %v8745 = vmul.f32 %v8741, 1.6732632
        %v8746 = vmul.f32 %v8742, 1.6732632
        %vm8747 = vcmp.gt.f32.partialorder %v8723, 0.0
        %vm8748 = vcmp.gt.f32.partialorder %v8724, 0.0
        %vm8749 = vcmp.gt.f32.partialorder %v8725, 0.0
        %vm8750 = vcmp.gt.f32.partialorder %v8726, 0.0
        %v8751 = vsel %vm8747, %v8723, %v8743
        %v8752 = vsel %vm8748, %v8724, %v8744
        %v8753 = vsel %vm8749, %v8725, %v8745
        %v8754 = vsel %vm8750, %v8726, %v8746
        %v8755 = vmul.f32 %v8751, 1.050701
        %v8756 = vmul.f32 %v8752, 1.050701
        %v8757 = vmul.f32 %v8753, 1.050701
        %v8758 = vmul.f32 %v8754, 1.050701
        %v8759 = vpack.c.bf16 %v8757, %v8755
        %v8760 = vpack.c.bf16 %v8758, %v8756
        %v8761 = vld [vmem:[%s5] sm:$0xf]
        %v8762 = vld [vmem:[%s5 + $0x4] sm:$0xf]
        %v8763 = vld [vmem:[%s5 + $0x8] sm:$0xf]
        %v8764 = vld [vmem:[%s5 + $0xc] sm:$0xf]
        %v8765 = vld [vmem:[%s5 + $0x10] sm:$0xf]
        %v8766 = vld [vmem:[%s5 + $0x14] sm:$0xf]
        %v8767 = vld [vmem:[%s5 + $0x18] sm:$0xf]
        %v8768 = vld [vmem:[%s5 + $0x1c] sm:$0xf]
        %v8769 = vld [vmem:[%s5 + $0x20] sm:$0xf]
        %v8770 = vld [vmem:[%s5 + $0x24] sm:$0xf]
        %v8771 = vld [vmem:[%s5 + $0x28] sm:$0xf]
        %v8772 = vld [vmem:[%s5 + $0x2c] sm:$0xf]
        %v8773 = vld [vmem:[%s5 + $0x30] sm:$0xf]
        %v8774 = vld [vmem:[%s5 + $0x34] sm:$0xf]
        %v8775 = vld [vmem:[%s5 + $0x38] sm:$0xf]
        %v8776 = vld [vmem:[%s5 + $0x3c] sm:$0xf]
        %v8777 = vld [vmem:[%s5 + $0x40] sm:$0xf]
        %v8778 = vld [vmem:[%s5 + $0x44] sm:$0xf]
        %v8779 = vld [vmem:[%s5 + $0x48] sm:$0xf]
        %v8780 = vld [vmem:[%s5 + $0x4c] sm:$0xf]
        %v8781 = vld [vmem:[%s5 + $0x50] sm:$0xf]
        %v8782 = vld [vmem:[%s5 + $0x54] sm:$0xf]
        %v8783 = vld [vmem:[%s5 + $0x58] sm:$0xf]
        %v8784 = vld [vmem:[%s5 + $0x5c] sm:$0xf]
        %v8785 = vld [vmem:[%s5 + $0x60] sm:$0xf]
        %v8786 = vld [vmem:[%s5 + $0x64] sm:$0xf]
        %v8787 = vld [vmem:[%s5 + $0x68] sm:$0xf]
        %v8788 = vld [vmem:[%s5 + $0x6c] sm:$0xf]
        %v8789 = vld [vmem:[%s5 + $0x70] sm:$0xf]
        %v8790 = vld [vmem:[%s5 + $0x74] sm:$0xf]
        %v8791 = vld [vmem:[%s5 + $0x78] sm:$0xf]
        %v8792 = vld [vmem:[%s5 + $0x7c] sm:$0xf]
        %v8793 = vld [vmem:[#allocation11] sm:$0x1]
        %v8795 = vlaneseq
        %v8796 = vshrl.u32 %v8795, 7
        %v8797 = vsub.s32 0, %v8796
        %v8798 = vrot.slane %v8793, %v8797
        %v8832 = vunpack.c.l.b16 %v8761
        %v8833 = vunpack.c.l.b16 %v8762
        %v8834 = vunpack.c.l.b16 %v8763
        %v8835 = vunpack.c.l.b16 %v8764
        %v8836 = vunpack.c.l.b16 %v8765
        %v8837 = vunpack.c.l.b16 %v8766
        %v8838 = vunpack.c.l.b16 %v8767
        %v8839 = vunpack.c.l.b16 %v8768
        %v8840 = vunpack.c.l.b16 %v8769
        %v8841 = vunpack.c.l.b16 %v8770
        %v8842 = vunpack.c.l.b16 %v8771
        %v8843 = vunpack.c.l.b16 %v8772
        %v8844 = vunpack.c.l.b16 %v8773
        %v8845 = vunpack.c.l.b16 %v8774
        %v8846 = vunpack.c.l.b16 %v8775
        %v8847 = vunpack.c.l.b16 %v8776
        %v8848 = vunpack.c.l.b16 %v8777
        %v8849 = vunpack.c.l.b16 %v8778
        %v8850 = vunpack.c.l.b16 %v8779
        %v8851 = vunpack.c.l.b16 %v8780
        %v8852 = vunpack.c.l.b16 %v8781
        %v8853 = vunpack.c.l.b16 %v8782
        %v8854 = vunpack.c.l.b16 %v8783
        %v8855 = vunpack.c.l.b16 %v8784
        %v8856 = vunpack.c.l.b16 %v8785
        %v8857 = vunpack.c.l.b16 %v8786
        %v8858 = vunpack.c.l.b16 %v8787
        %v8859 = vunpack.c.l.b16 %v8788
        %v8860 = vunpack.c.l.b16 %v8789
        %v8861 = vunpack.c.l.b16 %v8790
        %v8862 = vunpack.c.l.b16 %v8791
        %v8863 = vunpack.c.l.b16 %v8792
        %v8864 = vpack.c.b16 %v8833, %v8832
        %v8865 = vpack.c.b16 %v8835, %v8834
        %v8866 = vpack.c.b16 %v8837, %v8836
        %v8867 = vpack.c.b16 %v8839, %v8838
        %v8868 = vpack.c.b16 %v8841, %v8840
        %v8869 = vpack.c.b16 %v8843, %v8842
        %v8870 = vpack.c.b16 %v8845, %v8844
        %v8871 = vpack.c.b16 %v8847, %v8846
        %v8872 = vpack.c.b16 %v8849, %v8848
        %v8873 = vpack.c.b16 %v8851, %v8850
        %v8874 = vpack.c.b16 %v8853, %v8852
        %v8875 = vpack.c.b16 %v8855, %v8854
        %v8876 = vpack.c.b16 %v8857, %v8856
        %v8877 = vpack.c.b16 %v8859, %v8858
        %v8878 = vpack.c.b16 %v8861, %v8860
        %v8879 = vpack.c.b16 %v8863, %v8862
        %8896 = vmatprep.subr.bf16.mxu0 0
        %8897 = vmatpush1.bf16.msra.mxu0 %v8871
        %8898 = vmatprep.subr.bf16.mxu0 0
        %8899 = vmatpush1.bf16.msra.mxu0 %v8870
        %8900 = vmatprep.subr.bf16.mxu0 0
        %8901 = vmatpush1.bf16.msra.mxu0 %v8869
        %8902 = vmatprep.subr.bf16.mxu0 0
        %8903 = vmatpush1.bf16.msra.mxu0 %v8868
        %8904 = vmatprep.subr.bf16.mxu0 0
        %8905 = vmatpush1.bf16.msra.mxu0 %v8867
        %8906 = vmatprep.subr.bf16.mxu0 0
        %8907 = vmatpush1.bf16.msra.mxu0 %v8866
        %8908 = vmatprep.subr.bf16.mxu0 0
        %8909 = vmatpush1.bf16.msra.mxu0 %v8865
        %8910 = vmatprep.subr.bf16.mxu0 0
        %8911 = vmatpush1.bf16.msra.mxu0 %v8864
        %8912 = vmatprep.subr.bf16.mxu0 0
        %8913 = vmatpush2.bf16.msra.mxu0 %v8879
        %8914 = vmatprep.subr.bf16.mxu0 0
        %8915 = vmatpush2.bf16.msra.mxu0 %v8878
        %8916 = vmatprep.subr.bf16.mxu0 0
        %8917 = vmatpush2.bf16.msra.mxu0 %v8877
        %8918 = vmatprep.subr.bf16.mxu0 0
        %8919 = vmatpush2.bf16.msra.mxu0 %v8876
        %8920 = vmatprep.subr.bf16.mxu0 0
        %8921 = vmatpush2.bf16.msra.mxu0 %v8875
        %8922 = vmatprep.subr.bf16.mxu0 0
        %8923 = vmatpush2.bf16.msra.mxu0 %v8874
        %8924 = vmatprep.subr.bf16.mxu0 0
        %8925 = vmatpush2.bf16.msra.mxu0 %v8873
        %8926 = vmatprep.subr.bf16.mxu0 0
        %8927 = vmatpush2.bf16.msra.mxu0 %v8872
        %8928 = vmatprep.mubr.bf16.mxu0 %v8760
        %8929 = vmatmul.mubr.bf16.gmra.mxu0 %v8759
        %v8930 = vpop.f32.mrf.mxu0
        %v8931 = vadd.f32 %v8798, %v8930
        %v8932 = vpop.f32.mrf.mxu0
        %v8933 = vpop.f32.mrf.mxu0
        %v8934 = vadd.f32 %v8798, %v8933
        %v8935 = vpop.f32.mrf.mxu0
        %8936 = vdwg.mxu0
        %8937 = vst.msk [vmem:[%s363] sm:$0xff] %vm650, %v8931
        %8938 = vst.msk [vmem:[%s363 + $0x8] sm:$0xff] %vm650, %v8934
        %s8939 = sand.u32 %s187, 1
        %s8940 = scalar_lea.sflag [#allocation4], %s8939
        %s8941 = sand.u32 %s187, 1
        %s8942 = smul.addr %s8941, 16
        %s8943 = scalar_lea.vmem [#allocation13], %s8942
        // Predicated region
        $region73: #{tpu_custom_call.1} parent=47 // pred_check
          %p8944 = pneg %p197
        $region74: #{tpu_custom_call.1} parent=47 // pred_check_branch
          %8946 = sbr.rel (%p8944) target = $region76
        $region75: #{tpu_custom_call.1} parent=47 // pred_region
          %s8947 = smul.u32 2, %s27
          %s8949 = ssub.s32 256, 256
          %8950 = vsyncadd %s8940, %s8949
          %s8951 = smul.addr %s8947, 128
          %s8952 = scalar_lea.hbm %s7, %s8951
          %s8953 = sshll.u32 %s8943, 4
          %s8954 = int_to_ptr.vmem [resolvable:$true] %s8953
          %8959 = dma.vmem_to_hbm [thread:$0]  %s8954, 256, %s8952, %s8940, 128, 128, 8
        $region76: #{tpu_custom_call.1} parent=47 // pred_fallthru
          _
      $region48: #{tpu_custom_call.1} parent=5 // pred_fallthru
        _
      %p8960 = scmp.le.s32.totalorder 2, %s22
      // Predicated region
      $region77: #{tpu_custom_call.1} parent=5 // pred_check
        %p8961 = pneg %p8960
      $region78: #{tpu_custom_call.1} parent=5 // pred_check_branch
        %8963 = sbr.rel (%p8961) target = $region80
      $region79: #{tpu_custom_call.1} parent=5 // pred_region
        %s8964 = ssub.s32 %s22, 2
        // Predicated region
        $region81: #{tpu_custom_call.1} parent=79 // pred_check
          %p8965 = pneg %p203
        $region82: #{tpu_custom_call.1} parent=79 // pred_check_branch
          %8967 = sbr.rel (%p8965) target = $region84
        $region83: #{tpu_custom_call.1} parent=79 // pred_region
          %s8968 = sand.u32 %s188, 1
          %s8969 = scalar_lea.sflag [#allocation4], %s8968
          %s8970 = sand.u32 %s188, 1
          %s8971 = smul.addr %s8970, 16
          %s8972 = scalar_lea.vmem [#allocation13], %s8971
          %8973 = dma.done %s8969, 256
        $region84: #{tpu_custom_call.1} parent=79 // pred_fallthru
          _
      $region80: #{tpu_custom_call.1} parent=5 // pred_fallthru
        _
    $region6: #{tpu_custom_call.1} parent=1 // loop_footer
      %s26 = sadd.s32 1, %s22
    $region7: #{tpu_custom_call.1} parent=1 // loop_footer_branch
      %21 = sbr.rel target = $region3
    $region8: #{tpu_custom_call.1} parent=1 // loop_exit
      _
    %8974 = vsyncpa [#allocation3], 1
    %s8975 = scalar_lea.sflag [#allocation3], 1
    %8976 = vsyncpa %s8975, 1
    %8977 = vsyncpa [#allocation6], 1
    %8978 = vsyncpa [#allocation9], 1
    %8979 = vsyncpa [#allocation12], 1
    %8980 = vsyncpa [#allocation4], 1
    %s8981 = scalar_lea.sflag [#allocation4], 1
    %8982 = vsyncpa %s8981, 1

</llo_original>
